<compile_context>
chip_gen: v6e
topology: v6e:2x2x1
jax: 0.10.0
libtpu: 0.0.40
codegen_flags: <defaults>
</compile_context>

<pallas_src>
import math

import numpy as np
import jax
import jax.numpy as jnp
from jax import lax
from jax.experimental import pallas as pl
from jax.experimental.pallas import tpu as pltpu


# ----------------------------------------------------------------------------
# Kernel 1: channel-major fused matmul + bias + ReLU  (conv1, conv2)
#   o (Cout, tm) = relu(W (Cout, K) @ P (K, tm) + b (Cout, 1))
#   Lane (last) dim is M = B*Ho*Wo, so stores stay lane-dense even though
#   Cout is only 8/16.
# ----------------------------------------------------------------------------
def _convT_kernel(p_ref, w_ref, b_ref, o_ref):
    acc = jnp.dot(w_ref[...], p_ref[...], preferred_element_type=jnp.float32)
    acc = jnp.maximum(acc + b_ref[...], 0.0)
    o_ref[...] = acc.astype(o_ref.dtype)


def _round_up128(v):
    return ((v + 127) // 128) * 128


def convT_pallas(P, wT, bcol, *, num_tiles=1):
    """P: (K, M) bf16 patches.T, wT: (Cout, K) bf16, bcol: (Cout, 1) f32."""
    K, M = P.shape
    Cout, K2 = wT.shape
    assert K == K2 and bcol.shape == (Cout, 1)
    if num_tiles <= 1:
        tm = M                                  # one full-M block, no padding
    else:
        tm = min(M, _round_up128(pl.cdiv(M, num_tiles)))
    grid = (pl.cdiv(M, tm),)                    # ragged tail tile is masked
    cost = pl.CostEstimate(
        flops=2 * M * K * Cout,
        transcendentals=0,
        bytes_accessed=int(2 * (K * M + Cout * K + Cout * M) + 4 * Cout),
    )
    return pl.pallas_call(
        _convT_kernel,
        out_shape=jax.ShapeDtypeStruct((Cout, M), jnp.bfloat16),
        grid=grid,
        in_specs=[
            pl.BlockSpec((K, tm), lambda i: (0, i)),      # patch tile (lane = M)
            pl.BlockSpec((Cout, K), lambda i: (0, 0)),    # resident weight
            pl.BlockSpec((Cout, 1), lambda i: (0, 0)),    # bias column (f32)
        ],
        out_specs=pl.BlockSpec((Cout, tm), lambda i: (0, i)),
        compiler_params=pltpu.CompilerParams(
            dimension_semantics=("parallel",),
            # let XLA fuse the im2col producer into the patch operand
            allow_input_fusion=[True, False, False],
        ),
        cost_estimate=cost,
    )(P, wT, bcol)


# ----------------------------------------------------------------------------
# Kernel 2: fused tail  conv3 + conv4 + conv5 + conv6 + fc1 + fc2
#   Activations are row-major (row = b*H*W + y*W + x).  conv4/5/6 gather their
#   3x3 windows from the in-register previous activation with 0/1 selection
#   matmuls S[p] (M_out, M_in) (p = kh*3+kw), then do one matmul with the
#   (kh,kw,cin)-row-packed weight.  All ops are plain matmuls / lane concats,
#   which lower robustly on Mosaic (no strided in-register slicing).
# ----------------------------------------------------------------------------
def _tail_kernel(p3_ref, w3_ref, b3_ref,
                 s4_ref, w4_ref, b4_ref,
                 s5_ref, w5_ref, b5_ref,
                 s6_ref, w6_ref, b6_ref,
                 wf1_ref, bf1_ref, wf2_ref, bf2_ref,
                 o_ref):

    def conv_select(h, s_ref, w_ref, b_ref):
        # h: (M_in, Cin) bf16;  s_ref: (9, M_out, M_in) bf16 0/1 row-selectors
        # w_ref: (9*Cin, Cout) bf16 rows ordered (kh, kw, cin);  b_ref: (1, Cout) f32
        n = s_ref.shape[0]
        pieces = [jnp.dot(s_ref[p], h, preferred_element_type=jnp.float32)
                  for p in range(n)]                       # exact row gathers
        patches = jnp.concatenate(pieces, axis=1).astype(jnp.bfloat16)
        acc = jnp.dot(patches, w_ref[...], preferred_element_type=jnp.float32)
        return jnp.maximum(acc + b_ref[...], 0.0)

    # conv3 + ReLU on pre-im2col'd patches: (B*11*11, 144) @ (144, 32)
    h3 = jnp.dot(p3_ref[...], w3_ref[...], preferred_element_type=jnp.float32)
    h3 = jnp.maximum(h3 + b3_ref[...], 0.0).astype(jnp.bfloat16)      # (242, 32)

    h4 = conv_select(h3, s4_ref, w4_ref, b4_ref).astype(jnp.bfloat16)  # (50, 64)
    h5 = conv_select(h4, s5_ref, w5_ref, b5_ref).astype(jnp.bfloat16)  # (18, 128)
    h6 = conv_select(h5, s6_ref, w6_ref, b6_ref).astype(jnp.bfloat16)  # (B, 256)

    # fc1 + ReLU
    h7 = jnp.dot(h6, wf1_ref[...], preferred_element_type=jnp.float32)
    h7 = jnp.maximum(h7 + bf1_ref[...], 0.0)                           # (B, 100)

    # fc2 (100 -> 1): lane reduction on VPU/XLU instead of a 1-column matmul
    out = jnp.sum(h7 * wf2_ref[...], axis=1, keepdims=True) + bf2_ref[...]
    o_ref[...] = out.astype(o_ref.dtype)                               # (B, 1)


def tail_pallas(P3, S4, S5, S6, t, *, batch):
    args = (P3, t["w3"], t["b3"],
            S4, t["w4"], t["b4"],
            S5, t["w5"], t["b5"],
            S6, t["w6"], t["b6"],
            t["wf1"], t["bf1"], t["wf2"], t["bf2"])

    M3, K3 = P3.shape
    C3 = t["w3"].shape[1]
    M4, C4 = S4.shape[1], t["w4"].shape[1]
    M5, C5 = S5.shape[1], t["w5"].shape[1]
    M6, C6 = S6.shape[1], t["w6"].shape[1]
    F1 = t["wf1"].shape[1]
    flops = 2 * (M3 * K3 * C3
                 + 9 * M4 * M3 * C3 + M4 * 9 * C3 * C4
                 + 9 * M5 * M4 * C4 + M5 * 9 * C4 * C5
                 + 9 * M6 * M5 * C5 + M6 * 9 * C5 * C6
                 + M6 * C6 * F1 + M6 * F1)
    bytes_acc = int(sum(int(a.size) * a.dtype.itemsize for a in args) + batch * 4)

    in_specs = [pl.BlockSpec(a.shape, lambda i, _n=a.ndim: (0,) * _n) for a in args]

    # grid=(1,) leaves one v7x TensorCore idle; acceptable because the whole
    # tail is a few-hundred-KFLOP-per-matmul epilogue (per perf review).
    return pl.pallas_call(
        _tail_kernel,
        out_shape=jax.ShapeDtypeStruct((batch, 1), jnp.float32),
        grid=(1,),
        in_specs=in_specs,
        out_specs=pl.BlockSpec((batch, 1), lambda i: (0, 0)),
        compiler_params=pltpu.CompilerParams(
            dimension_semantics=("arbitrary",),
            allow_input_fusion=[True] + [False] * (len(args) - 1),
        ),
        cost_estimate=pl.CostEstimate(flops=flops, transcendentals=0,
                                      bytes_accessed=bytes_acc),
    )(*args)


# ----------------------------------------------------------------------------
# XLA glue: one im2col fusion for conv1, conv2 (channel-major) and conv3
# (row-major).  allow_input_fusion lets these fuse into the kernel operand.
# ----------------------------------------------------------------------------
def _im2colT(A, k, s):
    """A: (C, B, H, W) -> (k*k*C, B*Ho*Wo); rows (kh, kw, c), cols (b, ho, wo)."""
    C, B, H, W = A.shape
    Ho = (H - k) // s + 1
    Wo = (W - k) // s + 1
    pieces = [A[:, :, kh:kh + (Ho - 1) * s + 1:s, kw:kw + (Wo - 1) * s + 1:s]
              for kh in range(k) for kw in range(k)]
    P = jnp.concatenate(pieces, axis=0)                 # (k*k*C, B, Ho, Wo)
    return P.reshape(k * k * C, B * Ho * Wo), Ho, Wo


def _im2col_rows(A, k, s):
    """A: (C, B, H, W) -> (B*Ho*Wo, k*k*C); rows (b, ho, wo), cols (kh, kw, c)."""
    C, B, H, W = A.shape
    Ho = (H - k) // s + 1
    Wo = (W - k) // s + 1
    pieces = [A[:, :, kh:kh + (Ho - 1) * s + 1:s, kw:kw + (Wo - 1) * s + 1:s]
              for kh in range(k) for kw in range(k)]
    P = jnp.stack(pieces, axis=0)                       # (k*k, C, B, Ho, Wo)
    P = jnp.transpose(P, (2, 3, 4, 0, 1))               # (B, Ho, Wo, k*k, C)
    return P.reshape(B * Ho * Wo, k * k * C), Ho, Wo


def _selection_matrices(B, Hi, Wi, k, s):
    """0/1 row-selection matrices for an in-kernel k x k / stride-s im2col.
    S[p][r_out, r_in] = 1 iff input row r_in = (b*Hi + yo*s+kh)*Wi + xo*s+kw
    feeds output row r_out = (b*Ho + yo)*Wo + xo for p = kh*k + kw."""
    Ho = (Hi - k) // s + 1
    Wo = (Wi - k) // s + 1
    S = np.zeros((k * k, B * Ho * Wo, B * Hi * Wi), np.float32)
    for b in range(B):
        for yo in range(Ho):
            for xo in range(Wo):
                r = (b * Ho + yo) * Wo + xo
                for kh in range(k):
                    for kw in range(k):
                        c = (b * Hi + yo * s + kh) * Wi + (xo * s + kw)
                        S[kh * k + kw, r, c] = 1.0
    return jnp.asarray(S, jnp.bfloat16), Ho, Wo


# ----------------------------------------------------------------------------
# Parameter initialization (mirrors the PyTorch module's init scheme) plus a
# one-time repack into the layouts the kernels consume.
# ----------------------------------------------------------------------------
def _xavier_uniform(key, shape, gain, fan_in, fan_out):
    bound = gain * math.sqrt(6.0 / (fan_in + fan_out))
    return jax.random.uniform(key, shape, jnp.float32, -bound, bound)


def init_params(key, n_imgs):
    ch_in = int(math.log2(n_imgs))
    ch = [2 ** i for i in range(ch_in, ch_in + 7)]
    conv_cfg = [
        (ch[0], ch[1], 4, 2),
        (ch[1], ch[2], 3, 2),
        (ch[2], ch[3], 3, 2),
        (ch[3], ch[4], 3, 2),
        (ch[4], ch[5], 3, 1),
        (ch[5], ch[6], 3, 1),
    ]
    gain = math.sqrt(2.0)                       # nn.init.calculate_gain('relu')
    conv_raw = []
    for i, (cin, cout, k, s) in enumerate(conv_cfg):
        w = _xavier_uniform(jax.random.fold_in(key, i), (cout, cin, k, k), gain,
                            fan_in=cin * k * k, fan_out=cout * k * k)
        b = jnp.full((cout,), 0.1, jnp.float32)          # constant_(bias, 0.1)
        conv_raw.append((w, b, k, s))

    # conv1 / conv2: channel-major repack (Cout, kh*kw*Cin) bf16 + f32 bias col
    convT = []
    tiles = (2, 1)   # conv1: two balanced 128-aligned M tiles (v7x 2 TCs); conv2: 1
    for li, (w, b, k, s) in enumerate(conv_raw[:2]):
        cout, cin = w.shape[0], w.shape[1]
        wT = jnp.transpose(w, (0, 2, 3, 1)).reshape(cout, k * k * cin)
        convT.append((wT.astype(jnp.bfloat16), b.reshape(cout, 1), k, s, tiles[li]))

    def pack(w):     # (cout, cin, k, k) -> ((kh, kw, cin) rows, cout) bf16
        cout, cin, k, _ = w.shape
        return (jnp.transpose(w, (2, 3, 1, 0))
                .reshape(k * k * cin, cout).astype(jnp.bfloat16))

    (w3, b3, k3, s3) = conv_raw[2]
    (w4, b4, _, _) = conv_raw[3]
    (w5, b5, _, _) = conv_raw[4]
    (w6, b6, _, _) = conv_raw[5]

    # Linear layers: PyTorch default init (uniform +/- 1/sqrt(fan_in))
    fc_raw = []
    for j, (fin, fout) in enumerate([(ch[-1], 100), (100, 1)]):
        kk = jax.random.fold_in(key, 100 + j)
        bound = 1.0 / math.sqrt(fin)
        w = jax.random.uniform(jax.random.fold_in(kk, 0), (fout, fin),
                               jnp.float32, -bound, bound)   # torch (out, in)
        b = jax.random.uniform(jax.random.fold_in(kk, 1), (fout,),
                               jnp.float32, -bound, bound)
        fc_raw.append((w, b))
    (w_fc1, b_fc1), (w_fc2, b_fc2) = fc_raw

    tail = {
        "k3": k3, "s3": s3,
        "w3": pack(w3), "b3": b3.reshape(1, -1),       # (144, 32) / (1, 32)
        "w4": pack(w4), "b4": b4.reshape(1, -1),       # (288, 64)
        "w5": pack(w5), "b5": b5.reshape(1, -1),       # (576, 128)
        "w6": pack(w6), "b6": b6.reshape(1, -1),       # (1152, 256)
        "wf1": w_fc1.T.astype(jnp.bfloat16),           # (256, 100)
        "bf1": b_fc1.reshape(1, -1),                   # (1, 100) f32
        "wf2": w_fc2,                                  # (1, 100) f32 (VPU fc2)
        "bf2": b_fc2.reshape(1, 1),                    # (1, 1) f32
    }
    return {"conv_raw": conv_raw, "convT": convT, "tail": tail,
            "fc_raw": fc_raw, "ch_out": ch[-1]}


# ----------------------------------------------------------------------------
# Forward pass
# ----------------------------------------------------------------------------
def mlp_network_forward(params, X_nchw):
    """X_nchw: (B, C, H, W) float32 (PyTorch layout). Returns (B, 1) float32."""
    B = X_nchw.shape[0]
    A = jnp.transpose(X_nchw, (1, 0, 2, 3)).astype(jnp.bfloat16)   # (C, B, H, W)

    # conv1, conv2: channel-major Pallas matmul each (im2col fused into operand)
    for (wT, bcol, k, s, ntiles) in params["convT"]:
        P, Ho, Wo = _im2colT(A, k, s)
        O = convT_pallas(P, wT, bcol, num_tiles=ntiles)       # (Cout, B*Ho*Wo) bf16
        A = O.reshape(wT.shape[0], B, Ho, Wo)

    # fused tail: conv3 .. conv6 + fc1 + fc2 in a single Pallas kernel
    t = params["tail"]
    P3, H3, W3 = _im2col_rows(A, t["k3"], t["s3"])            # (B*11*11, 144)
    S4, H4, W4 = _selection_matrices(B, H3, W3, 3, 2)         # 11 -> 5
    S5, H5, W5 = _selection_matrices(B, H4, W4, 3, 1)         # 5 -> 3
    S6, H6, W6 = _selection_matrices(B, H5, W5, 3, 1)         # 3 -> 1
    # PyTorch's `x.view(-1, ch_out)` implicitly requires conv6's output be 1x1.
    assert H6 == 1 and W6 == 1, (H6, W6)
    return tail_pallas(P3, S4, S5, S6, t, batch=B)            # (B, 1)


# ----------------------------------------------------------------------------
# Pure-XLA f32 reference (numerical sanity check; bf16-MXU kernel is looser)
# ----------------------------------------------------------------------------
def reference_forward(params, X_nchw):
    a = X_nchw.astype(jnp.float32)
    for (w, b, _k, s) in params["conv_raw"]:
        a = lax.conv_general_dilated(
            a, w, window_strides=(s, s), padding="VALID",
            dimension_numbers=("NCHW", "OIHW", "NCHW"),
            precision=lax.Precision.HIGHEST)
        a = jnp.maximum(a + b.reshape(1, -1, 1, 1), 0.0)
    a = a.reshape(-1, params["ch_out"])
    (w1, b1), (w2, b2) = params["fc_raw"]
    a = jnp.maximum(jnp.dot(a, w1.T, precision=lax.Precision.HIGHEST) + b1, 0.0)
    return jnp.dot(a, w2.T, precision=lax.Precision.HIGHEST) + b2


if __name__ == "__main__":
    key = jax.random.PRNGKey(0)
    n_imgs = 4                      # ch_in = log2(4) = 2 -> channels 4..256
    params = init_params(key, n_imgs)

    # 96x96 is the smallest spatial size the 6-layer conv stack reduces to
    # exactly 1x1, which `x.view(-1, ch_out)` in the PyTorch module assumes.
    x = jax.random.normal(jax.random.fold_in(key, 999),
                          (2, n_imgs, 96, 96), jnp.float32)

    fwd = jax.jit(lambda inp: mlp_network_forward(params, inp))
    y = jax.block_until_ready(fwd(x))
    assert y.shape == (2, 1), y.shape

    # sanity check vs. pure-XLA f32 reference (bf16 MXU inputs => loose tol,
    # endorsed by the perf review; the f64 PyTorch parity is out of reach on TPU)
    y_ref = jax.block_until_ready(
        jax.jit(lambda inp: reference_forward(params, inp))(x))
    np.testing.assert_allclose(np.asarray(y), np.asarray(y_ref),
                               rtol=1e-1, atol=1e-1)

    print("KERNEL_OK")
</pallas_src>

<mosaic_0001>
module attributes {stable_mosaic.version = 11 : i64} {
  func.func @_convT_kernel(%arg0: i32, %arg1: memref<64x2304xbf16, #tpu.memory_space<vmem>>, %arg2: memref<8x64xbf16, #tpu.memory_space<vmem>>, %arg3: memref<8x1xf32, #tpu.memory_space<vmem>>, %arg4: memref<8x2304xbf16, #tpu.memory_space<vmem>>) attributes {dimension_semantics = [#tpu.dimension_semantics<parallel>], iteration_bounds = array<i64: 2>, scalar_prefetch = 0 : i64, scratch_operands = 0 : i64, tpu.core_type = #tpu.core_type<tc>, window_params = [{transform_indices = @transform_0, window_bounds = array<i64: 64, 2304>}, {pipeline_mode = #tpu.pipeline_mode<synchronous>, transform_indices = @transform_1, window_bounds = array<i64: 8, 64>}, {pipeline_mode = #tpu.pipeline_mode<synchronous>, transform_indices = @transform_2, window_bounds = array<i64: 8, 1>}, {transform_indices = @transform_3, window_bounds = array<i64: 8, 2304>}]} {
    %c0 = arith.constant 0 : index
    %c0_0 = arith.constant 0 : index
    %0 = vector.load %arg2[%c0, %c0_0] : memref<8x64xbf16, #tpu.memory_space<vmem>>, vector<8x64xbf16>
    %c0_1 = arith.constant 0 : index
    %c0_2 = arith.constant 0 : index
    %1 = vector.load %arg1[%c0_1, %c0_2] : memref<64x2304xbf16, #tpu.memory_space<vmem>>, vector<64x2304xbf16>
    %cst = arith.constant dense<0.000000e+00> : vector<8x2304xf32>
    %2 = tpu.matmul %0, %1, %cst {dimension_numbers = #tpu.dot_dimension_numbers<[1], [0], [0], [1], [0, 0, 1, 1], [], []>} : vector<8x64xbf16>, vector<64x2304xbf16>, vector<8x2304xf32> -> vector<8x2304xf32>
    %c0_3 = arith.constant 0 : index
    %c0_4 = arith.constant 0 : index
    %3 = vector.load %arg3[%c0_3, %c0_4] : memref<8x1xf32, #tpu.memory_space<vmem>>, vector<8x1xf32>
    %4 = vector.broadcast %3 : vector<8x1xf32> to vector<8x2304xf32>
    %5 = arith.addf %2, %4 : vector<8x2304xf32>
    %cst_5 = arith.constant 0.000000e+00 : f32
    %6 = vector.broadcast %cst_5 : f32 to vector<8x2304xf32>
    %7 = arith.maximumf %5, %6 : vector<8x2304xf32>
    %8 = arith.truncf %7 : vector<8x2304xf32> to vector<8x2304xbf16>
    %c0_6 = arith.constant 0 : index
    %c0_7 = arith.constant 0 : index
    %9 = vector.load %arg4[%c0_6, %c0_7] : memref<8x2304xbf16, #tpu.memory_space<vmem>>, vector<8x2304xbf16>
    tpu.vector_store %arg4[%c0_6, %c0_7], %8 {strides = array<i32>} : memref<8x2304xbf16, #tpu.memory_space<vmem>>, vector<8x2304xbf16>,
    return
  }
  func.func @transform_0(%arg0: i32) -> (i32, i32) {
    %c0_i32 = arith.constant 0 : i32
    %c0_i32_0 = arith.constant 0 : i32
    return %c0_i32, %arg0 : i32, i32
  }
  func.func @transform_1(%arg0: i32) -> (i32, i32) {
    %c0_i32 = arith.constant 0 : i32
    %c0_i32_0 = arith.constant 0 : i32
    %c0_i32_1 = arith.constant 0 : i32
    return %c0_i32, %c0_i32_0 : i32, i32
  }
  func.func @transform_2(%arg0: i32) -> (i32, i32) {
    %c0_i32 = arith.constant 0 : i32
    %c0_i32_0 = arith.constant 0 : i32
    %c0_i32_1 = arith.constant 0 : i32
    return %c0_i32, %c0_i32_0 : i32, i32
  }
  func.func @transform_3(%arg0: i32) -> (i32, i32) {
    %c0_i32 = arith.constant 0 : i32
    %c0_i32_0 = arith.constant 0 : i32
    return %c0_i32, %arg0 : i32, i32
  }
}

module attributes {stable_mosaic.version = 11 : i64} {
  func.func @_convT_kernel(%arg0: i32, %arg1: memref<72x1058xbf16, #tpu.memory_space<vmem>>, %arg2: memref<16x72xbf16, #tpu.memory_space<vmem>>, %arg3: memref<16x1xf32, #tpu.memory_space<vmem>>, %arg4: memref<16x1058xbf16, #tpu.memory_space<vmem>>) attributes {dimension_semantics = [#tpu.dimension_semantics<parallel>], iteration_bounds = array<i64: 1>, scalar_prefetch = 0 : i64, scratch_operands = 0 : i64, tpu.core_type = #tpu.core_type<tc>, window_params = [{transform_indices = @transform_0, window_bounds = array<i64: 72, 1058>}, {pipeline_mode = #tpu.pipeline_mode<synchronous>, transform_indices = @transform_1, window_bounds = array<i64: 16, 72>}, {pipeline_mode = #tpu.pipeline_mode<synchronous>, transform_indices = @transform_2, window_bounds = array<i64: 16, 1>}, {transform_indices = @transform_3, window_bounds = array<i64: 16, 1058>}]} {
    %c0 = arith.constant 0 : index
    %c0_0 = arith.constant 0 : index
    %0 = vector.load %arg2[%c0, %c0_0] : memref<16x72xbf16, #tpu.memory_space<vmem>>, vector<16x72xbf16>
    %c0_1 = arith.constant 0 : index
    %c0_2 = arith.constant 0 : index
    %1 = vector.load %arg1[%c0_1, %c0_2] : memref<72x1058xbf16, #tpu.memory_space<vmem>>, vector<72x1058xbf16>
    %cst = arith.constant dense<0.000000e+00> : vector<16x1058xf32>
    %2 = tpu.matmul %0, %1, %cst {dimension_numbers = #tpu.dot_dimension_numbers<[1], [0], [0], [1], [0, 0, 1, 1], [], []>} : vector<16x72xbf16>, vector<72x1058xbf16>, vector<16x1058xf32> -> vector<16x1058xf32>
    %c0_3 = arith.constant 0 : index
    %c0_4 = arith.constant 0 : index
    %3 = vector.load %arg3[%c0_3, %c0_4] : memref<16x1xf32, #tpu.memory_space<vmem>>, vector<16x1xf32>
    %4 = vector.broadcast %3 : vector<16x1xf32> to vector<16x1058xf32>
    %5 = arith.addf %2, %4 : vector<16x1058xf32>
    %cst_5 = arith.constant 0.000000e+00 : f32
    %6 = vector.broadcast %cst_5 : f32 to vector<16x1058xf32>
    %7 = arith.maximumf %5, %6 : vector<16x1058xf32>
    %8 = arith.truncf %7 : vector<16x1058xf32> to vector<16x1058xbf16>
    %c0_6 = arith.constant 0 : index
    %c0_7 = arith.constant 0 : index
    %9 = vector.load %arg4[%c0_6, %c0_7] : memref<16x1058xbf16, #tpu.memory_space<vmem>>, vector<16x1058xbf16>
    tpu.vector_store %arg4[%c0_6, %c0_7], %8 {strides = array<i32>} : memref<16x1058xbf16, #tpu.memory_space<vmem>>, vector<16x1058xbf16>,
    return
  }
  func.func @transform_0(%arg0: i32) -> (i32, i32) {
    %c0_i32 = arith.constant 0 : i32
    %c0_i32_0 = arith.constant 0 : i32
    return %c0_i32, %arg0 : i32, i32
  }
  func.func @transform_1(%arg0: i32) -> (i32, i32) {
    %c0_i32 = arith.constant 0 : i32
    %c0_i32_0 = arith.constant 0 : i32
    %c0_i32_1 = arith.constant 0 : i32
    return %c0_i32, %c0_i32_0 : i32, i32
  }
  func.func @transform_2(%arg0: i32) -> (i32, i32) {
    %c0_i32 = arith.constant 0 : i32
    %c0_i32_0 = arith.constant 0 : i32
    %c0_i32_1 = arith.constant 0 : i32
    return %c0_i32, %c0_i32_0 : i32, i32
  }
  func.func @transform_3(%arg0: i32) -> (i32, i32) {
    %c0_i32 = arith.constant 0 : i32
    %c0_i32_0 = arith.constant 0 : i32
    return %c0_i32, %arg0 : i32, i32
  }
}

module attributes {stable_mosaic.version = 11 : i64} {
  func.func @_tail_kernel(%arg0: i32, %arg1: memref<242x144xbf16, #tpu.memory_space<vmem>>, %arg2: memref<144x32xbf16, #tpu.memory_space<vmem>>, %arg3: memref<1x32xf32, #tpu.memory_space<vmem>>, %arg4: memref<9x50x242xbf16, #tpu.memory_space<vmem>>, %arg5: memref<288x64xbf16, #tpu.memory_space<vmem>>, %arg6: memref<1x64xf32, #tpu.memory_space<vmem>>, %arg7: memref<9x18x50xbf16, #tpu.memory_space<vmem>>, %arg8: memref<576x128xbf16, #tpu.memory_space<vmem>>, %arg9: memref<1x128xf32, #tpu.memory_space<vmem>>, %arg10: memref<9x2x18xbf16, #tpu.memory_space<vmem>>, %arg11: memref<1152x256xbf16, #tpu.memory_space<vmem>>, %arg12: memref<1x256xf32, #tpu.memory_space<vmem>>, %arg13: memref<256x100xbf16, #tpu.memory_space<vmem>>, %arg14: memref<1x100xf32, #tpu.memory_space<vmem>>, %arg15: memref<1x100xf32, #tpu.memory_space<vmem>>, %arg16: memref<1x1xf32, #tpu.memory_space<vmem>>, %arg17: memref<2x1xf32, #tpu.memory_space<vmem>>) attributes {dimension_semantics = [#tpu.dimension_semantics<arbitrary>], iteration_bounds = array<i64: 1>, scalar_prefetch = 0 : i64, scratch_operands = 0 : i64, tpu.core_type = #tpu.core_type<tc>, window_params = [{pipeline_mode = #tpu.pipeline_mode<synchronous>, transform_indices = @transform_0, window_bounds = array<i64: 242, 144>}, {pipeline_mode = #tpu.pipeline_mode<synchronous>, transform_indices = @transform_1, window_bounds = array<i64: 144, 32>}, {pipeline_mode = #tpu.pipeline_mode<synchronous>, transform_indices = @transform_2, window_bounds = array<i64: 1, 32>}, {pipeline_mode = #tpu.pipeline_mode<synchronous>, transform_indices = @transform_3, window_bounds = array<i64: 9, 50, 242>}, {pipeline_mode = #tpu.pipeline_mode<synchronous>, transform_indices = @transform_4, window_bounds = array<i64: 288, 64>}, {pipeline_mode = #tpu.pipeline_mode<synchronous>, transform_indices = @transform_5, window_bounds = array<i64: 1, 64>}, {pipeline_mode = #tpu.pipeline_mode<synchronous>, transform_indices = @transform_6, window_bounds = array<i64: 9, 18, 50>}, {pipeline_mode = #tpu.pipeline_mode<synchronous>, transform_indices = @transform_7, window_bounds = array<i64: 576, 128>}, {pipeline_mode = #tpu.pipeline_mode<synchronous>, transform_indices = @transform_8, window_bounds = array<i64: 1, 128>}, {pipeline_mode = #tpu.pipeline_mode<synchronous>, transform_indices = @transform_9, window_bounds = array<i64: 9, 2, 18>}, {pipeline_mode = #tpu.pipeline_mode<synchronous>, transform_indices = @transform_10, window_bounds = array<i64: 1152, 256>}, {pipeline_mode = #tpu.pipeline_mode<synchronous>, transform_indices = @transform_11, window_bounds = array<i64: 1, 256>}, {pipeline_mode = #tpu.pipeline_mode<synchronous>, transform_indices = @transform_12, window_bounds = array<i64: 256, 100>}, {pipeline_mode = #tpu.pipeline_mode<synchronous>, transform_indices = @transform_13, window_bounds = array<i64: 1, 100>}, {pipeline_mode = #tpu.pipeline_mode<synchronous>, transform_indices = @transform_14, window_bounds = array<i64: 1, 100>}, {pipeline_mode = #tpu.pipeline_mode<synchronous>, transform_indices = @transform_15, window_bounds = array<i64: 1, 1>}, {pipeline_mode = #tpu.pipeline_mode<synchronous>, transform_indices = @transform_16, window_bounds = array<i64: 2, 1>}]} {
    %c0 = arith.constant 0 : index
    %c0_0 = arith.constant 0 : index
    %0 = vector.load %arg1[%c0, %c0_0] : memref<242x144xbf16, #tpu.memory_space<vmem>>, vector<242x144xbf16>
    %c0_1 = arith.constant 0 : index
    %c0_2 = arith.constant 0 : index
    %1 = vector.load %arg2[%c0_1, %c0_2] : memref<144x32xbf16, #tpu.memory_space<vmem>>, vector<144x32xbf16>
    %cst = arith.constant dense<0.000000e+00> : vector<242x32xf32>
    %2 = tpu.matmul %0, %1, %cst {dimension_numbers = #tpu.dot_dimension_numbers<[1], [0], [0], [1], [0, 0, 1, 1], [], []>} : vector<242x144xbf16>, vector<144x32xbf16>, vector<242x32xf32> -> vector<242x32xf32>
    %c0_3 = arith.constant 0 : index
    %c0_4 = arith.constant 0 : index
    %3 = vector.load %arg3[%c0_3, %c0_4] : memref<1x32xf32, #tpu.memory_space<vmem>>, vector<1x32xf32>
    %4 = vector.broadcast %3 : vector<1x32xf32> to vector<242x32xf32>
    %5 = arith.addf %2, %4 : vector<242x32xf32>
    %cst_5 = arith.constant 0.000000e+00 : f32
    %6 = vector.broadcast %cst_5 : f32 to vector<242x32xf32>
    %7 = arith.maximumf %5, %6 : vector<242x32xf32>
    %8 = arith.truncf %7 : vector<242x32xf32> to vector<242x32xbf16>
    %c0_6 = arith.constant 0 : index
    %c0_7 = arith.constant 0 : index
    %c0_8 = arith.constant 0 : index
    %9 = vector.load %arg4[%c0_6, %c0_7, %c0_8] : memref<9x50x242xbf16, #tpu.memory_space<vmem>>, vector<1x50x242xbf16>
    %10 = vector.shape_cast %9 : vector<1x50x242xbf16> to vector<50x242xbf16>
    %cst_9 = arith.constant dense<0.000000e+00> : vector<50x32xf32>
    %11 = tpu.matmul %10, %8, %cst_9 {dimension_numbers = #tpu.dot_dimension_numbers<[1], [0], [0], [1], [0, 0, 1, 1], [], []>} : vector<50x242xbf16>, vector<242x32xbf16>, vector<50x32xf32> -> vector<50x32xf32>
    %c1 = arith.constant 1 : index
    %c0_10 = arith.constant 0 : index
    %c0_11 = arith.constant 0 : index
    %12 = vector.load %arg4[%c1, %c0_10, %c0_11] : memref<9x50x242xbf16, #tpu.memory_space<vmem>>, vector<1x50x242xbf16>
    %13 = vector.shape_cast %12 : vector<1x50x242xbf16> to vector<50x242xbf16>
    %cst_12 = arith.constant dense<0.000000e+00> : vector<50x32xf32>
    %14 = tpu.matmul %13, %8, %cst_12 {dimension_numbers = #tpu.dot_dimension_numbers<[1], [0], [0], [1], [0, 0, 1, 1], [], []>} : vector<50x242xbf16>, vector<242x32xbf16>, vector<50x32xf32> -> vector<50x32xf32>
    %c2 = arith.constant 2 : index
    %c0_13 = arith.constant 0 : index
    %c0_14 = arith.constant 0 : index
    %15 = vector.load %arg4[%c2, %c0_13, %c0_14] : memref<9x50x242xbf16, #tpu.memory_space<vmem>>, vector<1x50x242xbf16>
    %16 = vector.shape_cast %15 : vector<1x50x242xbf16> to vector<50x242xbf16>
    %cst_15 = arith.constant dense<0.000000e+00> : vector<50x32xf32>
    %17 = tpu.matmul %16, %8, %cst_15 {dimension_numbers = #tpu.dot_dimension_numbers<[1], [0], [0], [1], [0, 0, 1, 1], [], []>} : vector<50x242xbf16>, vector<242x32xbf16>, vector<50x32xf32> -> vector<50x32xf32>
    %c3 = arith.constant 3 : index
    %c0_16 = arith.constant 0 : index
    %c0_17 = arith.constant 0 : index
    %18 = vector.load %arg4[%c3, %c0_16, %c0_17] : memref<9x50x242xbf16, #tpu.memory_space<vmem>>, vector<1x50x242xbf16>
    %19 = vector.shape_cast %18 : vector<1x50x242xbf16> to vector<50x242xbf16>
    %cst_18 = arith.constant dense<0.000000e+00> : vector<50x32xf32>
    %20 = tpu.matmul %19, %8, %cst_18 {dimension_numbers = #tpu.dot_dimension_numbers<[1], [0], [0], [1], [0, 0, 1, 1], [], []>} : vector<50x242xbf16>, vector<242x32xbf16>, vector<50x32xf32> -> vector<50x32xf32>
    %c4 = arith.constant 4 : index
    %c0_19 = arith.constant 0 : index
    %c0_20 = arith.constant 0 : index
    %21 = vector.load %arg4[%c4, %c0_19, %c0_20] : memref<9x50x242xbf16, #tpu.memory_space<vmem>>, vector<1x50x242xbf16>
    %22 = vector.shape_cast %21 : vector<1x50x242xbf16> to vector<50x242xbf16>
    %cst_21 = arith.constant dense<0.000000e+00> : vector<50x32xf32>
    %23 = tpu.matmul %22, %8, %cst_21 {dimension_numbers = #tpu.dot_dimension_numbers<[1], [0], [0], [1], [0, 0, 1, 1], [], []>} : vector<50x242xbf16>, vector<242x32xbf16>, vector<50x32xf32> -> vector<50x32xf32>
    %c5 = arith.constant 5 : index
    %c0_22 = arith.constant 0 : index
    %c0_23 = arith.constant 0 : index
    %24 = vector.load %arg4[%c5, %c0_22, %c0_23] : memref<9x50x242xbf16, #tpu.memory_space<vmem>>, vector<1x50x242xbf16>
    %25 = vector.shape_cast %24 : vector<1x50x242xbf16> to vector<50x242xbf16>
    %cst_24 = arith.constant dense<0.000000e+00> : vector<50x32xf32>
    %26 = tpu.matmul %25, %8, %cst_24 {dimension_numbers = #tpu.dot_dimension_numbers<[1], [0], [0], [1], [0, 0, 1, 1], [], []>} : vector<50x242xbf16>, vector<242x32xbf16>, vector<50x32xf32> -> vector<50x32xf32>
    %c6 = arith.constant 6 : index
    %c0_25 = arith.constant 0 : index
    %c0_26 = arith.constant 0 : index
    %27 = vector.load %arg4[%c6, %c0_25, %c0_26] : memref<9x50x242xbf16, #tpu.memory_space<vmem>>, vector<1x50x242xbf16>
    %28 = vector.shape_cast %27 : vector<1x50x242xbf16> to vector<50x242xbf16>
    %cst_27 = arith.constant dense<0.000000e+00> : vector<50x32xf32>
    %29 = tpu.matmul %28, %8, %cst_27 {dimension_numbers = #tpu.dot_dimension_numbers<[1], [0], [0], [1], [0, 0, 1, 1], [], []>} : vector<50x242xbf16>, vector<242x32xbf16>, vector<50x32xf32> -> vector<50x32xf32>
    %c7 = arith.constant 7 : index
    %c0_28 = arith.constant 0 : index
    %c0_29 = arith.constant 0 : index
    %30 = vector.load %arg4[%c7, %c0_28, %c0_29] : memref<9x50x242xbf16, #tpu.memory_space<vmem>>, vector<1x50x242xbf16>
    %31 = vector.shape_cast %30 : vector<1x50x242xbf16> to vector<50x242xbf16>
    %cst_30 = arith.constant dense<0.000000e+00> : vector<50x32xf32>
    %32 = tpu.matmul %31, %8, %cst_30 {dimension_numbers = #tpu.dot_dimension_numbers<[1], [0], [0], [1], [0, 0, 1, 1], [], []>} : vector<50x242xbf16>, vector<242x32xbf16>, vector<50x32xf32> -> vector<50x32xf32>
    %c8 = arith.constant 8 : index
    %c0_31 = arith.constant 0 : index
    %c0_32 = arith.constant 0 : index
    %33 = vector.load %arg4[%c8, %c0_31, %c0_32] : memref<9x50x242xbf16, #tpu.memory_space<vmem>>, vector<1x50x242xbf16>
    %34 = vector.shape_cast %33 : vector<1x50x242xbf16> to vector<50x242xbf16>
    %cst_33 = arith.constant dense<0.000000e+00> : vector<50x32xf32>
    %35 = tpu.matmul %34, %8, %cst_33 {dimension_numbers = #tpu.dot_dimension_numbers<[1], [0], [0], [1], [0, 0, 1, 1], [], []>} : vector<50x242xbf16>, vector<242x32xbf16>, vector<50x32xf32> -> vector<50x32xf32>
    %36 = tpu.concatenate %11, %14, %17, %20, %23, %26, %29, %32, %35 in 1 : vector<50x32xf32>, vector<50x32xf32>, vector<50x32xf32>, vector<50x32xf32>, vector<50x32xf32>, vector<50x32xf32>, vector<50x32xf32>, vector<50x32xf32>, vector<50x32xf32> -> vector<50x288xf32>
    %37 = arith.truncf %36 : vector<50x288xf32> to vector<50x288xbf16>
    %c0_34 = arith.constant 0 : index
    %c0_35 = arith.constant 0 : index
    %38 = vector.load %arg5[%c0_34, %c0_35] : memref<288x64xbf16, #tpu.memory_space<vmem>>, vector<288x64xbf16>
    %cst_36 = arith.constant dense<0.000000e+00> : vector<50x64xf32>
    %39 = tpu.matmul %37, %38, %cst_36 {dimension_numbers = #tpu.dot_dimension_numbers<[1], [0], [0], [1], [0, 0, 1, 1], [], []>} : vector<50x288xbf16>, vector<288x64xbf16>, vector<50x64xf32> -> vector<50x64xf32>
    %c0_37 = arith.constant 0 : index
    %c0_38 = arith.constant 0 : index
    %40 = vector.load %arg6[%c0_37, %c0_38] : memref<1x64xf32, #tpu.memory_space<vmem>>, vector<1x64xf32>
    %41 = vector.broadcast %40 : vector<1x64xf32> to vector<50x64xf32>
    %42 = arith.addf %39, %41 : vector<50x64xf32>
    %cst_39 = arith.constant 0.000000e+00 : f32
    %43 = vector.broadcast %cst_39 : f32 to vector<50x64xf32>
    %44 = arith.maximumf %42, %43 : vector<50x64xf32>
    %45 = arith.truncf %44 : vector<50x64xf32> to vector<50x64xbf16>
    %c0_40 = arith.constant 0 : index
    %c0_41 = arith.constant 0 : index
    %c0_42 = arith.constant 0 : index
    %46 = vector.load %arg7[%c0_40, %c0_41, %c0_42] : memref<9x18x50xbf16, #tpu.memory_space<vmem>>, vector<1x18x50xbf16>
    %47 = vector.shape_cast %46 : vector<1x18x50xbf16> to vector<18x50xbf16>
    %cst_43 = arith.constant dense<0.000000e+00> : vector<18x64xf32>
    %48 = tpu.matmul %47, %45, %cst_43 {dimension_numbers = #tpu.dot_dimension_numbers<[1], [0], [0], [1], [0, 0, 1, 1], [], []>} : vector<18x50xbf16>, vector<50x64xbf16>, vector<18x64xf32> -> vector<18x64xf32>
    %c1_44 = arith.constant 1 : index
    %c0_45 = arith.constant 0 : index
    %c0_46 = arith.constant 0 : index
    %49 = vector.load %arg7[%c1_44, %c0_45, %c0_46] : memref<9x18x50xbf16, #tpu.memory_space<vmem>>, vector<1x18x50xbf16>
    %50 = vector.shape_cast %49 : vector<1x18x50xbf16> to vector<18x50xbf16>
    %cst_47 = arith.constant dense<0.000000e+00> : vector<18x64xf32>
    %51 = tpu.matmul %50, %45, %cst_47 {dimension_numbers = #tpu.dot_dimension_numbers<[1], [0], [0], [1], [0, 0, 1, 1], [], []>} : vector<18x50xbf16>, vector<50x64xbf16>, vector<18x64xf32> -> vector<18x64xf32>
    %c2_48 = arith.constant 2 : index
    %c0_49 = arith.constant 0 : index
    %c0_50 = arith.constant 0 : index
    %52 = vector.load %arg7[%c2_48, %c0_49, %c0_50] : memref<9x18x50xbf16, #tpu.memory_space<vmem>>, vector<1x18x50xbf16>
    %53 = vector.shape_cast %52 : vector<1x18x50xbf16> to vector<18x50xbf16>
    %cst_51 = arith.constant dense<0.000000e+00> : vector<18x64xf32>
    %54 = tpu.matmul %53, %45, %cst_51 {dimension_numbers = #tpu.dot_dimension_numbers<[1], [0], [0], [1], [0, 0, 1, 1], [], []>} : vector<18x50xbf16>, vector<50x64xbf16>, vector<18x64xf32> -> vector<18x64xf32>
    %c3_52 = arith.constant 3 : index
    %c0_53 = arith.constant 0 : index
    %c0_54 = arith.constant 0 : index
    %55 = vector.load %arg7[%c3_52, %c0_53, %c0_54] : memref<9x18x50xbf16, #tpu.memory_space<vmem>>, vector<1x18x50xbf16>
    %56 = vector.shape_cast %55 : vector<1x18x50xbf16> to vector<18x50xbf16>
    %cst_55 = arith.constant dense<0.000000e+00> : vector<18x64xf32>
    %57 = tpu.matmul %56, %45, %cst_55 {dimension_numbers = #tpu.dot_dimension_numbers<[1], [0], [0], [1], [0, 0, 1, 1], [], []>} : vector<18x50xbf16>, vector<50x64xbf16>, vector<18x64xf32> -> vector<18x64xf32>
    %c4_56 = arith.constant 4 : index
    %c0_57 = arith.constant 0 : index
    %c0_58 = arith.constant 0 : index
    %58 = vector.load %arg7[%c4_56, %c0_57, %c0_58] : memref<9x18x50xbf16, #tpu.memory_space<vmem>>, vector<1x18x50xbf16>
    %59 = vector.shape_cast %58 : vector<1x18x50xbf16> to vector<18x50xbf16>
    %cst_59 = arith.constant dense<0.000000e+00> : vector<18x64xf32>
    %60 = tpu.matmul %59, %45, %cst_59 {dimension_numbers = #tpu.dot_dimension_numbers<[1], [0], [0], [1], [0, 0, 1, 1], [], []>} : vector<18x50xbf16>, vector<50x64xbf16>, vector<18x64xf32> -> vector<18x64xf32>
    %c5_60 = arith.constant 5 : index
    %c0_61 = arith.constant 0 : index
    %c0_62 = arith.constant 0 : index
    %61 = vector.load %arg7[%c5_60, %c0_61, %c0_62] : memref<9x18x50xbf16, #tpu.memory_space<vmem>>, vector<1x18x50xbf16>
    %62 = vector.shape_cast %61 : vector<1x18x50xbf16> to vector<18x50xbf16>
    %cst_63 = arith.constant dense<0.000000e+00> : vector<18x64xf32>
    %63 = tpu.matmul %62, %45, %cst_63 {dimension_numbers = #tpu.dot_dimension_numbers<[1], [0], [0], [1], [0, 0, 1, 1], [], []>} : vector<18x50xbf16>, vector<50x64xbf16>, vector<18x64xf32> -> vector<18x64xf32>
    %c6_64 = arith.constant 6 : index
    %c0_65 = arith.constant 0 : index
    %c0_66 = arith.constant 0 : index
    %64 = vector.load %arg7[%c6_64, %c0_65, %c0_66] : memref<9x18x50xbf16, #tpu.memory_space<vmem>>, vector<1x18x50xbf16>
    %65 = vector.shape_cast %64 : vector<1x18x50xbf16> to vector<18x50xbf16>
    %cst_67 = arith.constant dense<0.000000e+00> : vector<18x64xf32>
    %66 = tpu.matmul %65, %45, %cst_67 {dimension_numbers = #tpu.dot_dimension_numbers<[1], [0], [0], [1], [0, 0, 1, 1], [], []>} : vector<18x50xbf16>, vector<50x64xbf16>, vector<18x64xf32> -> vector<18x64xf32>
    %c7_68 = arith.constant 7 : index
    %c0_69 = arith.constant 0 : index
    %c0_70 = arith.constant 0 : index
    %67 = vector.load %arg7[%c7_68, %c0_69, %c0_70] : memref<9x18x50xbf16, #tpu.memory_space<vmem>>, vector<1x18x50xbf16>
    %68 = vector.shape_cast %67 : vector<1x18x50xbf16> to vector<18x50xbf16>
    %cst_71 = arith.constant dense<0.000000e+00> : vector<18x64xf32>
    %69 = tpu.matmul %68, %45, %cst_71 {dimension_numbers = #tpu.dot_dimension_numbers<[1], [0], [0], [1], [0, 0, 1, 1], [], []>} : vector<18x50xbf16>, vector<50x64xbf16>, vector<18x64xf32> -> vector<18x64xf32>
    %c8_72 = arith.constant 8 : index
    %c0_73 = arith.constant 0 : index
    %c0_74 = arith.constant 0 : index
    %70 = vector.load %arg7[%c8_72, %c0_73, %c0_74] : memref<9x18x50xbf16, #tpu.memory_space<vmem>>, vector<1x18x50xbf16>
    %71 = vector.shape_cast %70 : vector<1x18x50xbf16> to vector<18x50xbf16>
    %cst_75 = arith.constant dense<0.000000e+00> : vector<18x64xf32>
    %72 = tpu.matmul %71, %45, %cst_75 {dimension_numbers = #tpu.dot_dimension_numbers<[1], [0], [0], [1], [0, 0, 1, 1], [], []>} : vector<18x50xbf16>, vector<50x64xbf16>, vector<18x64xf32> -> vector<18x64xf32>
    %73 = tpu.concatenate %48, %51, %54, %57, %60, %63, %66, %69, %72 in 1 : vector<18x64xf32>, vector<18x64xf32>, vector<18x64xf32>, vector<18x64xf32>, vector<18x64xf32>, vector<18x64xf32>, vector<18x64xf32>, vector<18x64xf32>, vector<18x64xf32> -> vector<18x576xf32>
    %74 = arith.truncf %73 : vector<18x576xf32> to vector<18x576xbf16>
    %c0_76 = arith.constant 0 : index
    %c0_77 = arith.constant 0 : index
    %75 = vector.load %arg8[%c0_76, %c0_77] : memref<576x128xbf16, #tpu.memory_space<vmem>>, vector<576x128xbf16>
    %cst_78 = arith.constant dense<0.000000e+00> : vector<18x128xf32>
    %76 = tpu.matmul %74, %75, %cst_78 {dimension_numbers = #tpu.dot_dimension_numbers<[1], [0], [0], [1], [0, 0, 1, 1], [], []>} : vector<18x576xbf16>, vector<576x128xbf16>, vector<18x128xf32> -> vector<18x128xf32>
    %c0_79 = arith.constant 0 : index
    %c0_80 = arith.constant 0 : index
    %77 = vector.load %arg9[%c0_79, %c0_80] : memref<1x128xf32, #tpu.memory_space<vmem>>, vector<1x128xf32>
    %78 = vector.broadcast %77 : vector<1x128xf32> to vector<18x128xf32>
    %79 = arith.addf %76, %78 : vector<18x128xf32>
    %cst_81 = arith.constant 0.000000e+00 : f32
    %80 = vector.broadcast %cst_81 : f32 to vector<18x128xf32>
    %81 = arith.maximumf %79, %80 : vector<18x128xf32>
    %82 = arith.truncf %81 : vector<18x128xf32> to vector<18x128xbf16>
    %c0_82 = arith.constant 0 : index
    %c0_83 = arith.constant 0 : index
    %c0_84 = arith.constant 0 : index
    %83 = vector.load %arg10[%c0_82, %c0_83, %c0_84] : memref<9x2x18xbf16, #tpu.memory_space<vmem>>, vector<1x2x18xbf16>
    %84 = vector.shape_cast %83 : vector<1x2x18xbf16> to vector<2x18xbf16>
    %cst_85 = arith.constant dense<0.000000e+00> : vector<2x128xf32>
    %85 = tpu.matmul %84, %82, %cst_85 {dimension_numbers = #tpu.dot_dimension_numbers<[1], [0], [0], [1], [0, 0, 1, 1], [], []>} : vector<2x18xbf16>, vector<18x128xbf16>, vector<2x128xf32> -> vector<2x128xf32>
    %c1_86 = arith.constant 1 : index
    %c0_87 = arith.constant 0 : index
    %c0_88 = arith.constant 0 : index
    %86 = vector.load %arg10[%c1_86, %c0_87, %c0_88] : memref<9x2x18xbf16, #tpu.memory_space<vmem>>, vector<1x2x18xbf16>
    %87 = vector.shape_cast %86 : vector<1x2x18xbf16> to vector<2x18xbf16>
    %cst_89 = arith.constant dense<0.000000e+00> : vector<2x128xf32>
    %88 = tpu.matmul %87, %82, %cst_89 {dimension_numbers = #tpu.dot_dimension_numbers<[1], [0], [0], [1], [0, 0, 1, 1], [], []>} : vector<2x18xbf16>, vector<18x128xbf16>, vector<2x128xf32> -> vector<2x128xf32>
    %c2_90 = arith.constant 2 : index
    %c0_91 = arith.constant 0 : index
    %c0_92 = arith.constant 0 : index
    %89 = vector.load %arg10[%c2_90, %c0_91, %c0_92] : memref<9x2x18xbf16, #tpu.memory_space<vmem>>, vector<1x2x18xbf16>
    %90 = vector.shape_cast %89 : vector<1x2x18xbf16> to vector<2x18xbf16>
    %cst_93 = arith.constant dense<0.000000e+00> : vector<2x128xf32>
    %91 = tpu.matmul %90, %82, %cst_93 {dimension_numbers = #tpu.dot_dimension_numbers<[1], [0], [0], [1], [0, 0, 1, 1], [], []>} : vector<2x18xbf16>, vector<18x128xbf16>, vector<2x128xf32> -> vector<2x128xf32>
    %c3_94 = arith.constant 3 : index
    %c0_95 = arith.constant 0 : index
    %c0_96 = arith.constant 0 : index
    %92 = vector.load %arg10[%c3_94, %c0_95, %c0_96] : memref<9x2x18xbf16, #tpu.memory_space<vmem>>, vector<1x2x18xbf16>
    %93 = vector.shape_cast %92 : vector<1x2x18xbf16> to vector<2x18xbf16>
    %cst_97 = arith.constant dense<0.000000e+00> : vector<2x128xf32>
    %94 = tpu.matmul %93, %82, %cst_97 {dimension_numbers = #tpu.dot_dimension_numbers<[1], [0], [0], [1], [0, 0, 1, 1], [], []>} : vector<2x18xbf16>, vector<18x128xbf16>, vector<2x128xf32> -> vector<2x128xf32>
    %c4_98 = arith.constant 4 : index
    %c0_99 = arith.constant 0 : index
    %c0_100 = arith.constant 0 : index
    %95 = vector.load %arg10[%c4_98, %c0_99, %c0_100] : memref<9x2x18xbf16, #tpu.memory_space<vmem>>, vector<1x2x18xbf16>
    %96 = vector.shape_cast %95 : vector<1x2x18xbf16> to vector<2x18xbf16>
    %cst_101 = arith.constant dense<0.000000e+00> : vector<2x128xf32>
    %97 = tpu.matmul %96, %82, %cst_101 {dimension_numbers = #tpu.dot_dimension_numbers<[1], [0], [0], [1], [0, 0, 1, 1], [], []>} : vector<2x18xbf16>, vector<18x128xbf16>, vector<2x128xf32> -> vector<2x128xf32>
    %c5_102 = arith.constant 5 : index
    %c0_103 = arith.constant 0 : index
    %c0_104 = arith.constant 0 : index
    %98 = vector.load %arg10[%c5_102, %c0_103, %c0_104] : memref<9x2x18xbf16, #tpu.memory_space<vmem>>, vector<1x2x18xbf16>
    %99 = vector.shape_cast %98 : vector<1x2x18xbf16> to vector<2x18xbf16>
    %cst_105 = arith.constant dense<0.000000e+00> : vector<2x128xf32>
    %100 = tpu.matmul %99, %82, %cst_105 {dimension_numbers = #tpu.dot_dimension_numbers<[1], [0], [0], [1], [0, 0, 1, 1], [], []>} : vector<2x18xbf16>, vector<18x128xbf16>, vector<2x128xf32> -> vector<2x128xf32>
    %c6_106 = arith.constant 6 : index
    %c0_107 = arith.constant 0 : index
    %c0_108 = arith.constant 0 : index
    %101 = vector.load %arg10[%c6_106, %c0_107, %c0_108] : memref<9x2x18xbf16, #tpu.memory_space<vmem>>, vector<1x2x18xbf16>
    %102 = vector.shape_cast %101 : vector<1x2x18xbf16> to vector<2x18xbf16>
    %cst_109 = arith.constant dense<0.000000e+00> : vector<2x128xf32>
    %103 = tpu.matmul %102, %82, %cst_109 {dimension_numbers = #tpu.dot_dimension_numbers<[1], [0], [0], [1], [0, 0, 1, 1], [], []>} : vector<2x18xbf16>, vector<18x128xbf16>, vector<2x128xf32> -> vector<2x128xf32>
    %c7_110 = arith.constant 7 : index
    %c0_111 = arith.constant 0 : index
    %c0_112 = arith.constant 0 : index
    %104 = vector.load %arg10[%c7_110, %c0_111, %c0_112] : memref<9x2x18xbf16, #tpu.memory_space<vmem>>, vector<1x2x18xbf16>
    %105 = vector.shape_cast %104 : vector<1x2x18xbf16> to vector<2x18xbf16>
    %cst_113 = arith.constant dense<0.000000e+00> : vector<2x128xf32>
    %106 = tpu.matmul %105, %82, %cst_113 {dimension_numbers = #tpu.dot_dimension_numbers<[1], [0], [0], [1], [0, 0, 1, 1], [], []>} : vector<2x18xbf16>, vector<18x128xbf16>, vector<2x128xf32> -> vector<2x128xf32>
    %c8_114 = arith.constant 8 : index
    %c0_115 = arith.constant 0 : index
    %c0_116 = arith.constant 0 : index
    %107 = vector.load %arg10[%c8_114, %c0_115, %c0_116] : memref<9x2x18xbf16, #tpu.memory_space<vmem>>, vector<1x2x18xbf16>
    %108 = vector.shape_cast %107 : vector<1x2x18xbf16> to vector<2x18xbf16>
    %cst_117 = arith.constant dense<0.000000e+00> : vector<2x128xf32>
    %109 = tpu.matmul %108, %82, %cst_117 {dimension_numbers = #tpu.dot_dimension_numbers<[1], [0], [0], [1], [0, 0, 1, 1], [], []>} : vector<2x18xbf16>, vector<18x128xbf16>, vector<2x128xf32> -> vector<2x128xf32>
    %110 = tpu.concatenate %85, %88, %91, %94, %97, %100, %103, %106, %109 in 1 : vector<2x128xf32>, vector<2x128xf32>, vector<2x128xf32>, vector<2x128xf32>, vector<2x128xf32>, vector<2x128xf32>, vector<2x128xf32>, vector<2x128xf32>, vector<2x128xf32> -> vector<2x1152xf32>
    %111 = arith.truncf %110 : vector<2x1152xf32> to vector<2x1152xbf16>
    %c0_118 = arith.constant 0 : index
    %c0_119 = arith.constant 0 : index
    %112 = vector.load %arg11[%c0_118, %c0_119] : memref<1152x256xbf16, #tpu.memory_space<vmem>>, vector<1152x256xbf16>
    %cst_120 = arith.constant dense<0.000000e+00> : vector<2x256xf32>
    %113 = tpu.matmul %111, %112, %cst_120 {dimension_numbers = #tpu.dot_dimension_numbers<[1], [0], [0], [1], [0, 0, 1, 1], [], []>} : vector<2x1152xbf16>, vector<1152x256xbf16>, vector<2x256xf32> -> vector<2x256xf32>
    %c0_121 = arith.constant 0 : index
    %c0_122 = arith.constant 0 : index
    %114 = vector.load %arg12[%c0_121, %c0_122] : memref<1x256xf32, #tpu.memory_space<vmem>>, vector<1x256xf32>
    %115 = vector.broadcast %114 : vector<1x256xf32> to vector<2x256xf32>
    %116 = arith.addf %113, %115 : vector<2x256xf32>
    %cst_123 = arith.constant 0.000000e+00 : f32
    %117 = vector.broadcast %cst_123 : f32 to vector<2x256xf32>
    %118 = arith.maximumf %116, %117 : vector<2x256xf32>
    %119 = arith.truncf %118 : vector<2x256xf32> to vector<2x256xbf16>
    %c0_124 = arith.constant 0 : index
    %c0_125 = arith.constant 0 : index
    %120 = vector.load %arg13[%c0_124, %c0_125] : memref<256x100xbf16, #tpu.memory_space<vmem>>, vector<256x100xbf16>
    %cst_126 = arith.constant dense<0.000000e+00> : vector<2x100xf32>
    %121 = tpu.matmul %119, %120, %cst_126 {dimension_numbers = #tpu.dot_dimension_numbers<[1], [0], [0], [1], [0, 0, 1, 1], [], []>} : vector<2x256xbf16>, vector<256x100xbf16>, vector<2x100xf32> -> vector<2x100xf32>
    %c0_127 = arith.constant 0 : index
    %c0_128 = arith.constant 0 : index
    %122 = vector.load %arg14[%c0_127, %c0_128] : memref<1x100xf32, #tpu.memory_space<vmem>>, vector<1x100xf32>
    %123 = vector.broadcast %122 : vector<1x100xf32> to vector<2x100xf32>
    %124 = arith.addf %121, %123 : vector<2x100xf32>
    %cst_129 = arith.constant 0.000000e+00 : f32
    %125 = vector.broadcast %cst_129 : f32 to vector<2x100xf32>
    %126 = arith.maximumf %124, %125 : vector<2x100xf32>
    %c0_130 = arith.constant 0 : index
    %c0_131 = arith.constant 0 : index
    %127 = vector.load %arg15[%c0_130, %c0_131] : memref<1x100xf32, #tpu.memory_space<vmem>>, vector<1x100xf32>
    %128 = vector.broadcast %127 : vector<1x100xf32> to vector<2x100xf32>
    %129 = arith.mulf %126, %128 : vector<2x100xf32>
    %cst_132 = arith.constant dense<0.000000e+00> : vector<2xf32>
    %130 = vector.multi_reduction <add>, %129, %cst_132 [1] : vector<2x100xf32> to vector<2xf32>
    %131 = vector.shape_cast %130 : vector<2xf32> to vector<2x1xf32>
    %c0_133 = arith.constant 0 : index
    %c0_134 = arith.constant 0 : index
    %132 = vector.load %arg16[%c0_133, %c0_134] : memref<1x1xf32, #tpu.memory_space<vmem>>, vector<1x1xf32>
    %133 = vector.broadcast %132 : vector<1x1xf32> to vector<2x1xf32>
    %134 = arith.addf %131, %133 : vector<2x1xf32>
    %c0_135 = arith.constant 0 : index
    %c0_136 = arith.constant 0 : index
    %135 = vector.load %arg17[%c0_135, %c0_136] : memref<2x1xf32, #tpu.memory_space<vmem>>, vector<2x1xf32>
    tpu.vector_store %arg17[%c0_135, %c0_136], %134 {strides = array<i32>} : memref<2x1xf32, #tpu.memory_space<vmem>>, vector<2x1xf32>,
    return
  }
  func.func @transform_0(%arg0: i32) -> (i32, i32) {
    %c0_i32 = arith.constant 0 : i32
    %c0_i32_0 = arith.constant 0 : i32
    %c0_i32_1 = arith.constant 0 : i32
    return %c0_i32, %c0_i32_0 : i32, i32
  }
  func.func @transform_1(%arg0: i32) -> (i32, i32) {
    %c0_i32 = arith.constant 0 : i32
    %c0_i32_0 = arith.constant 0 : i32
    %c0_i32_1 = arith.constant 0 : i32
    return %c0_i32, %c0_i32_0 : i32, i32
  }
  func.func @transform_2(%arg0: i32) -> (i32, i32) {
    %c0_i32 = arith.constant 0 : i32
    %c0_i32_0 = arith.constant 0 : i32
    %c0_i32_1 = arith.constant 0 : i32
    return %c0_i32, %c0_i32_0 : i32, i32
  }
  func.func @transform_3(%arg0: i32) -> (i32, i32, i32) {
    %c0_i32 = arith.constant 0 : i32
    %c0_i32_0 = arith.constant 0 : i32
    %c0_i32_1 = arith.constant 0 : i32
    %c0_i32_2 = arith.constant 0 : i32
    return %c0_i32, %c0_i32_0, %c0_i32_1 : i32, i32, i32
  }
  func.func @transform_4(%arg0: i32) -> (i32, i32) {
    %c0_i32 = arith.constant 0 : i32
    %c0_i32_0 = arith.constant 0 : i32
    %c0_i32_1 = arith.constant 0 : i32
    return %c0_i32, %c0_i32_0 : i32, i32
  }
  func.func @transform_5(%arg0: i32) -> (i32, i32) {
    %c0_i32 = arith.constant 0 : i32
    %c0_i32_0 = arith.constant 0 : i32
    %c0_i32_1 = arith.constant 0 : i32
    return %c0_i32, %c0_i32_0 : i32, i32
  }
  func.func @transform_6(%arg0: i32) -> (i32, i32, i32) {
    %c0_i32 = arith.constant 0 : i32
    %c0_i32_0 = arith.constant 0 : i32
    %c0_i32_1 = arith.constant 0 : i32
    %c0_i32_2 = arith.constant 0 : i32
    return %c0_i32, %c0_i32_0, %c0_i32_1 : i32, i32, i32
  }
  func.func @transform_7(%arg0: i32) -> (i32, i32) {
    %c0_i32 = arith.constant 0 : i32
    %c0_i32_0 = arith.constant 0 : i32
    %c0_i32_1 = arith.constant 0 : i32
    return %c0_i32, %c0_i32_0 : i32, i32
  }
  func.func @transform_8(%arg0: i32) -> (i32, i32) {
    %c0_i32 = arith.constant 0 : i32
    %c0_i32_0 = arith.constant 0 : i32
    %c0_i32_1 = arith.constant 0 : i32
    return %c0_i32, %c0_i32_0 : i32, i32
  }
  func.func @transform_9(%arg0: i32) -> (i32, i32, i32) {
    %c0_i32 = arith.constant 0 : i32
    %c0_i32_0 = arith.constant 0 : i32
    %c0_i32_1 = arith.constant 0 : i32
    %c0_i32_2 = arith.constant 0 : i32
    return %c0_i32, %c0_i32_0, %c0_i32_1 : i32, i32, i32
  }
  func.func @transform_10(%arg0: i32) -> (i32, i32) {
    %c0_i32 = arith.constant 0 : i32
    %c0_i32_0 = arith.constant 0 : i32
    %c0_i32_1 = arith.constant 0 : i32
    return %c0_i32, %c0_i32_0 : i32, i32
  }
  func.func @transform_11(%arg0: i32) -> (i32, i32) {
    %c0_i32 = arith.constant 0 : i32
    %c0_i32_0 = arith.constant 0 : i32
    %c0_i32_1 = arith.constant 0 : i32
    return %c0_i32, %c0_i32_0 : i32, i32
  }
  func.func @transform_12(%arg0: i32) -> (i32, i32) {
    %c0_i32 = arith.constant 0 : i32
    %c0_i32_0 = arith.constant 0 : i32
    %c0_i32_1 = arith.constant 0 : i32
    return %c0_i32, %c0_i32_0 : i32, i32
  }
  func.func @transform_13(%arg0: i32) -> (i32, i32) {
    %c0_i32 = arith.constant 0 : i32
    %c0_i32_0 = arith.constant 0 : i32
    %c0_i32_1 = arith.constant 0 : i32
    return %c0_i32, %c0_i32_0 : i32, i32
  }
  func.func @transform_14(%arg0: i32) -> (i32, i32) {
    %c0_i32 = arith.constant 0 : i32
    %c0_i32_0 = arith.constant 0 : i32
    %c0_i32_1 = arith.constant 0 : i32
    return %c0_i32, %c0_i32_0 : i32, i32
  }
  func.func @transform_15(%arg0: i32) -> (i32, i32) {
    %c0_i32 = arith.constant 0 : i32
    %c0_i32_0 = arith.constant 0 : i32
    %c0_i32_1 = arith.constant 0 : i32
    return %c0_i32, %c0_i32_0 : i32, i32
  }
  func.func @transform_16(%arg0: i32) -> (i32, i32) {
    %c0_i32 = arith.constant 0 : i32
    %c0_i32_0 = arith.constant 0 : i32
    %c0_i32_1 = arith.constant 0 : i32
    return %c0_i32, %c0_i32_0 : i32, i32
  }
}

</mosaic_0001>

<llo_original>
// kernel: _lambda_.3
$region0: #{_lambda_.3}
  #allocation0 [shape = 'u32[]', space=smem, size = 0x4, offset = 0x4, fixed_abs, tag = 'smem constant byte address 0x4 - core index']
  #allocation1 [shape = 'u32[144,128]{1,0:T(1,128)}', space=vmem, size = 0x12000, scoped, tag = 'internal scratch']
  %s0 = inlined_call_operand.vmem [shape: bf16[64,4418], index: 0, kind: input, shape index: {}]
  %s1 = inlined_call_operand.vmem [shape: bf16[8,64], index: 1, kind: input, shape index: {}]
  %s2 = inlined_call_operand.vmem [shape: f32[8,1], index: 2, kind: input, shape index: {}]
  %s3 = inlined_call_operand.vmem [shape: bf16[8,4418], index: 3, kind: output, shape index: {}]
  %s4 = sld [smem:[#allocation0]]
  $region173: #{_lambda_.3} parent=0
    _
  %s6 = ssub.s32 1, %s4
  %s7 = scalar_select 0, %s6, %s4
  $region1: #{_lambda_.3} parent=0
    #allocation2 [shape = 'u8[589824]{0}', space=vmem, size = 0x90000, scoped, tag = 'input window, operand 0']
    #allocation3 [shape = 'u8[73728]{0}', space=vmem, size = 0x12000, scoped, tag = 'output window, operand 0']
    loop: start=0, step=1, limit=4
    $region2: #{_lambda_.3} parent=1 // loop_pre_header
      _
    $region3: #{_lambda_.3} parent=1 // loop_header
      %s9 = sphi 0, %s13
      %p10 = scmp.ge.s32.totalorder %s9, 4
      %s19 = sphi 0, %s21
      %s22 = sphi 0, %s19
      %s23 = sphi 0, %s22
      %s39 = sphi 0, %s23
      %s43 = sphi 0, %s43
      %s45 = sphi 0, %s43
      %s46 = sphi 0, %s45
      %s60 = sphi 0, %s46
      %s64 = sphi 0, %s64
      %s66 = sphi 0, %s64
      %s67 = sphi 0, %s66
      %s81 = sphi 0, %s67
      %s87 = sphi 0, %s89
      %s90 = sphi 0, %s87
      %s91 = sphi 0, %s90
      %s107 = sphi 0, %s91
    $region4: #{_lambda_.3} parent=1 // loop_header_branch
      %12 = sbr.rel (%p10) target = $region8
    $region5: #{_lambda_.3} parent=1 // loop_body
      %s14 = ssub.s32 %s9, 1
      %s15 = ssub.s32 %s9, 2
      %s16 = sadd.s32 %s9, 1
      %s17 = ssub.s32 %s9, %s16
      %p18 = scmp.eq.s32.totalorder %s17, 0
      %s20 = sadd.s32 %s19, 1
      %s21 = scalar_select %p18, %s19, %s20
      %p24 = pneg %p18
      %p25 = scmp.eq.s32.totalorder %s9, 1
      %p26 = por %p24, %p25
      %p27 = scmp.ne.s32.totalorder %s19, %s22
      %p28 = scmp.eq.s32.totalorder %s9, 0
      %p29 = por %p27, %p28
      %p30 = scmp.ne.s32.totalorder %s19, %s22
      %p31 = scmp.eq.s32.totalorder %s14, 1
      %p32 = por %p30, %p31
      %p33 = scmp.ne.s32.totalorder %s22, %s23
      %p34 = scmp.eq.s32.totalorder %s14, 0
      %p35 = por %p33, %p34
      %p36 = scmp.ne.s32.totalorder %s22, %s23
      %p37 = scmp.eq.s32.totalorder %s15, 1
      %p38 = por %p36, %p37
      %p40 = scmp.ne.s32.totalorder %s23, %s39
      %p41 = scmp.eq.s32.totalorder %s15, 0
      %p42 = por %p40, %p41
      %s44 = sadd.s32 %s43, 1
      %p47 = scmp.eq.s32.totalorder %s9, 1
      %p48 = scmp.ne.s32.totalorder %s43, %s45
      %p49 = scmp.eq.s32.totalorder %s9, 0
      %p50 = por %p48, %p49
      %p51 = scmp.ne.s32.totalorder %s43, %s45
      %p52 = scmp.eq.s32.totalorder %s14, 1
      %p53 = por %p51, %p52
      %p54 = scmp.ne.s32.totalorder %s45, %s46
      %p55 = scmp.eq.s32.totalorder %s14, 0
      %p56 = por %p54, %p55
      %p57 = scmp.ne.s32.totalorder %s45, %s46
      %p58 = scmp.eq.s32.totalorder %s15, 1
      %p59 = por %p57, %p58
      %p61 = scmp.ne.s32.totalorder %s46, %s60
      %p62 = scmp.eq.s32.totalorder %s15, 0
      %p63 = por %p61, %p62
      %s65 = sadd.s32 %s64, 1
      %p68 = scmp.eq.s32.totalorder %s9, 1
      %p69 = scmp.ne.s32.totalorder %s64, %s66
      %p70 = scmp.eq.s32.totalorder %s9, 0
      %p71 = por %p69, %p70
      %p72 = scmp.ne.s32.totalorder %s64, %s66
      %p73 = scmp.eq.s32.totalorder %s14, 1
      %p74 = por %p72, %p73
      %p75 = scmp.ne.s32.totalorder %s66, %s67
      %p76 = scmp.eq.s32.totalorder %s14, 0
      %p77 = por %p75, %p76
      %p78 = scmp.ne.s32.totalorder %s66, %s67
      %p79 = scmp.eq.s32.totalorder %s15, 1
      %p80 = por %p78, %p79
      %p82 = scmp.ne.s32.totalorder %s67, %s81
      %p83 = scmp.eq.s32.totalorder %s15, 0
      %p84 = por %p82, %p83
      %s85 = ssub.s32 %s9, %s16
      %p86 = scmp.eq.s32.totalorder %s85, 0
      %s88 = sadd.s32 %s87, 1
      %s89 = scalar_select %p86, %s87, %s88
      %p92 = pneg %p86
      %p93 = scmp.eq.s32.totalorder %s9, 1
      %p94 = por %p92, %p93
      %p95 = scmp.ne.s32.totalorder %s87, %s90
      %p96 = scmp.eq.s32.totalorder %s9, 0
      %p97 = por %p95, %p96
      %p98 = scmp.ne.s32.totalorder %s87, %s90
      %p99 = scmp.eq.s32.totalorder %s14, 1
      %p100 = por %p98, %p99
      %p101 = scmp.ne.s32.totalorder %s90, %s91
      %p102 = scmp.eq.s32.totalorder %s14, 0
      %p103 = por %p101, %p102
      %p104 = scmp.ne.s32.totalorder %s90, %s91
      %p105 = scmp.eq.s32.totalorder %s15, 1
      %p106 = por %p104, %p105
      %p108 = scmp.ne.s32.totalorder %s91, %s107
      %p109 = scmp.eq.s32.totalorder %s15, 0
      %p110 = por %p108, %p109
      %p111 = scmp.le.s32.totalorder 1, %s9
      %p112 = scmp.lt.s32.totalorder %s9, 3
      %p113 = pnand %p111, %p112
      %p114 = pneg %p113
      // Predicated region
      $region9: #{_lambda_.3} parent=5 // pred_check
        _
      $region10: #{_lambda_.3} parent=5 // pred_check_branch
        %116 = sbr.rel (%p113) target = $region12
      $region11: #{_lambda_.3} parent=5 // pred_region
        %s117 = ssub.s32 %s9, 1
        // Predicated region
        $region13: #{_lambda_.3} parent=11 // pred_check
          %p118 = pneg %p56
        $region14: #{_lambda_.3} parent=11 // pred_check_branch
          %120 = sbr.rel (%p118) target = $region16
        $region15: #{_lambda_.3} parent=11 // pred_region
          _
        $region16: #{_lambda_.3} parent=11 // pred_fallthru
          _
        // Predicated region
        $region17: #{_lambda_.3} parent=11 // pred_check
          %p121 = pneg %p77
        $region18: #{_lambda_.3} parent=11 // pred_check_branch
          %123 = sbr.rel (%p121) target = $region20
        $region19: #{_lambda_.3} parent=11 // pred_region
          _
        $region20: #{_lambda_.3} parent=11 // pred_fallthru
          _
      $region12: #{_lambda_.3} parent=5 // pred_fallthru
        _
      %p124 = scmp.lt.s32.totalorder %s9, 2
      // Predicated region
      $region21: #{_lambda_.3} parent=5 // pred_check
        %p125 = pneg %p124
      $region22: #{_lambda_.3} parent=5 // pred_check_branch
        %127 = sbr.rel (%p125) target = $region24
      $region23: #{_lambda_.3} parent=5 // pred_region
        // Predicated region
        $region25: #{_lambda_.3} parent=23 // pred_check
          %p128 = pneg %p29
        $region26: #{_lambda_.3} parent=23 // pred_check_branch
          %130 = sbr.rel (%p128) target = $region28
        $region27: #{_lambda_.3} parent=23 // pred_region
          %s131 = sand.u32 %s19, 1
          %s132 = sand.u32 %s19, 1
          %s133 = smul.addr %s132, 576
          %s134 = scalar_lea.vmem [#allocation2], %s133
          %s135 = smul.u32 18, %s9
          %s136 = ssub.s32 35, %s135
          %p137 = scmp.lt.s32.totalorder %s136, 18
          %s138 = scalar_select %p137, %s136, 18
          %s139 = smul.u32 512, %s138
          %p140 = scmp.ne.s32.totalorder 0, %s139
          %s141 = smul.addr %s135, 4
          %s142 = scalar_lea.vmem %s0, %s141
          %s143 = smul.u32 %s138, 4
          // Predicated region
          $region29: #{_lambda_.3} parent=27 // pred_check
            %p144 = pneg %p140
          $region30: #{_lambda_.3} parent=27 // pred_check_branch
            %146 = sbr.rel (%p144) target = $region32
          $region31: #{_lambda_.3} parent=27 // pred_region
            %p147 = scmp.lt.u32.totalorder %s143, 8
            %p148 = pneg %p147
            // Predicated region
            $region33: #{_lambda_.3} parent=31 // pred_check
              _
            $region34: #{_lambda_.3} parent=31 // pred_check_branch
              %150 = sbr.rel (%p147) target = $region36
            $region35: #{_lambda_.3} parent=31 // pred_region
              %s180 = sand.u32 %s143, 7
              %p181 = scmp.eq.s32.totalorder %s180, 0
              // Predicated region
              $region48: #{_lambda_.3} parent=35 // pred_check
                %p182 = pneg %p181
              $region49: #{_lambda_.3} parent=35 // pred_check_branch
                %184 = sbr.rel (%p182) target = $region51
              $region50: #{_lambda_.3} parent=35 // pred_region
                %s185 = sshrl.u32 %s143, 3
                %s186 = sshrl.u32 %s185, 3
                // While loop
                $region52: #{_lambda_.3} parent=50 // loop_pre_header
                  _
                $region53: #{_lambda_.3} parent=50 // loop_header
                  %s190 = sphi 0, %s192
                  %p191 = scmp.ge.s32.totalorder %s190, %s186
                  %s195 = sphi 0, %s328
                  %s196 = sphi %s142, %s331
                  %s197 = sphi %s134, %s332
                $region54: #{_lambda_.3} parent=50 // loop_header_branch
                  %194 = sbr.rel (%p191) target = $region58
                $region55: #{_lambda_.3} parent=50 // loop_body
                  %v198 = vld [vmem:[%s196] sm:$0xff]
                  %199 = vst [vmem:[%s197] sm:$0xff] %v198
                  %v200 = vld [vmem:[%s196 + $0x8] sm:$0xff]
                  %201 = vst [vmem:[%s197 + $0x8] sm:$0xff] %v200
                  %v202 = vld [vmem:[%s196 + $0x10] sm:$0xff]
                  %203 = vst [vmem:[%s197 + $0x10] sm:$0xff] %v202
                  %v204 = vld [vmem:[%s196 + $0x18] sm:$0xff]
                  %205 = vst [vmem:[%s197 + $0x18] sm:$0xff] %v204
                  %v206 = vld [vmem:[%s196 + $0x20] sm:$0xff]
                  %207 = vst [vmem:[%s197 + $0x20] sm:$0xff] %v206
                  %v208 = vld [vmem:[%s196 + $0x28] sm:$0xff]
                  %209 = vst [vmem:[%s197 + $0x28] sm:$0xff] %v208
                  %v210 = vld [vmem:[%s196 + $0x30] sm:$0xff]
                  %211 = vst [vmem:[%s197 + $0x30] sm:$0xff] %v210
                  %v212 = vld [vmem:[%s196 + $0x38] sm:$0xff]
                  %213 = vst [vmem:[%s197 + $0x38] sm:$0xff] %v212
                  %v214 = vld [vmem:[%s196 + $0x8c] sm:$0xff]
                  %215 = vst [vmem:[%s197 + $0x48] sm:$0xff] %v214
                  %v216 = vld [vmem:[%s196 + $0x94] sm:$0xff]
                  %217 = vst [vmem:[%s197 + $0x50] sm:$0xff] %v216
                  %v218 = vld [vmem:[%s196 + $0x9c] sm:$0xff]
                  %219 = vst [vmem:[%s197 + $0x58] sm:$0xff] %v218
                  %v220 = vld [vmem:[%s196 + $0xa4] sm:$0xff]
                  %221 = vst [vmem:[%s197 + $0x60] sm:$0xff] %v220
                  %v222 = vld [vmem:[%s196 + $0xac] sm:$0xff]
                  %223 = vst [vmem:[%s197 + $0x68] sm:$0xff] %v222
                  %v224 = vld [vmem:[%s196 + $0xb4] sm:$0xff]
                  %225 = vst [vmem:[%s197 + $0x70] sm:$0xff] %v224
                  %v226 = vld [vmem:[%s196 + $0xbc] sm:$0xff]
                  %227 = vst [vmem:[%s197 + $0x78] sm:$0xff] %v226
                  %v228 = vld [vmem:[%s196 + $0xc4] sm:$0xff]
                  %229 = vst [vmem:[%s197 + $0x80] sm:$0xff] %v228
                  %v230 = vld [vmem:[%s196 + $0x118] sm:$0xff]
                  %231 = vst [vmem:[%s197 + $0x90] sm:$0xff] %v230
                  %v232 = vld [vmem:[%s196 + $0x120] sm:$0xff]
                  %233 = vst [vmem:[%s197 + $0x98] sm:$0xff] %v232
                  %v234 = vld [vmem:[%s196 + $0x128] sm:$0xff]
                  %235 = vst [vmem:[%s197 + $0xa0] sm:$0xff] %v234
                  %v236 = vld [vmem:[%s196 + $0x130] sm:$0xff]
                  %237 = vst [vmem:[%s197 + $0xa8] sm:$0xff] %v236
                  %v238 = vld [vmem:[%s196 + $0x138] sm:$0xff]
                  %239 = vst [vmem:[%s197 + $0xb0] sm:$0xff] %v238
                  %v240 = vld [vmem:[%s196 + $0x140] sm:$0xff]
                  %241 = vst [vmem:[%s197 + $0xb8] sm:$0xff] %v240
                  %v242 = vld [vmem:[%s196 + $0x148] sm:$0xff]
                  %243 = vst [vmem:[%s197 + $0xc0] sm:$0xff] %v242
                  %v244 = vld [vmem:[%s196 + $0x150] sm:$0xff]
                  %245 = vst [vmem:[%s197 + $0xc8] sm:$0xff] %v244
                  %v246 = vld [vmem:[%s196 + $0x1a4] sm:$0xff]
                  %247 = vst [vmem:[%s197 + $0xd8] sm:$0xff] %v246
                  %v248 = vld [vmem:[%s196 + $0x1ac] sm:$0xff]
                  %249 = vst [vmem:[%s197 + $0xe0] sm:$0xff] %v248
                  %v250 = vld [vmem:[%s196 + $0x1b4] sm:$0xff]
                  %251 = vst [vmem:[%s197 + $0xe8] sm:$0xff] %v250
                  %v252 = vld [vmem:[%s196 + $0x1bc] sm:$0xff]
                  %253 = vst [vmem:[%s197 + $0xf0] sm:$0xff] %v252
                  %v254 = vld [vmem:[%s196 + $0x1c4] sm:$0xff]
                  %255 = vst [vmem:[%s197 + $0xf8] sm:$0xff] %v254
                  %v256 = vld [vmem:[%s196 + $0x1cc] sm:$0xff]
                  %257 = vst [vmem:[%s197 + $0x100] sm:$0xff] %v256
                  %v258 = vld [vmem:[%s196 + $0x1d4] sm:$0xff]
                  %259 = vst [vmem:[%s197 + $0x108] sm:$0xff] %v258
                  %v260 = vld [vmem:[%s196 + $0x1dc] sm:$0xff]
                  %261 = vst [vmem:[%s197 + $0x110] sm:$0xff] %v260
                  %v262 = vld [vmem:[%s196 + $0x230] sm:$0xff]
                  %263 = vst [vmem:[%s197 + $0x120] sm:$0xff] %v262
                  %v264 = vld [vmem:[%s196 + $0x238] sm:$0xff]
                  %265 = vst [vmem:[%s197 + $0x128] sm:$0xff] %v264
                  %v266 = vld [vmem:[%s196 + $0x240] sm:$0xff]
                  %267 = vst [vmem:[%s197 + $0x130] sm:$0xff] %v266
                  %v268 = vld [vmem:[%s196 + $0x248] sm:$0xff]
                  %269 = vst [vmem:[%s197 + $0x138] sm:$0xff] %v268
                  %v270 = vld [vmem:[%s196 + $0x250] sm:$0xff]
                  %271 = vst [vmem:[%s197 + $0x140] sm:$0xff] %v270
                  %v272 = vld [vmem:[%s196 + $0x258] sm:$0xff]
                  %273 = vst [vmem:[%s197 + $0x148] sm:$0xff] %v272
                  %v274 = vld [vmem:[%s196 + $0x260] sm:$0xff]
                  %275 = vst [vmem:[%s197 + $0x150] sm:$0xff] %v274
                  %v276 = vld [vmem:[%s196 + $0x268] sm:$0xff]
                  %277 = vst [vmem:[%s197 + $0x158] sm:$0xff] %v276
                  %v278 = vld [vmem:[%s196 + $0x2bc] sm:$0xff]
                  %279 = vst [vmem:[%s197 + $0x168] sm:$0xff] %v278
                  %v280 = vld [vmem:[%s196 + $0x2c4] sm:$0xff]
                  %281 = vst [vmem:[%s197 + $0x170] sm:$0xff] %v280
                  %v282 = vld [vmem:[%s196 + $0x2cc] sm:$0xff]
                  %283 = vst [vmem:[%s197 + $0x178] sm:$0xff] %v282
                  %v284 = vld [vmem:[%s196 + $0x2d4] sm:$0xff]
                  %285 = vst [vmem:[%s197 + $0x180] sm:$0xff] %v284
                  %v286 = vld [vmem:[%s196 + $0x2dc] sm:$0xff]
                  %287 = vst [vmem:[%s197 + $0x188] sm:$0xff] %v286
                  %v288 = vld [vmem:[%s196 + $0x2e4] sm:$0xff]
                  %289 = vst [vmem:[%s197 + $0x190] sm:$0xff] %v288
                  %v290 = vld [vmem:[%s196 + $0x2ec] sm:$0xff]
                  %291 = vst [vmem:[%s197 + $0x198] sm:$0xff] %v290
                  %v292 = vld [vmem:[%s196 + $0x2f4] sm:$0xff]
                  %293 = vst [vmem:[%s197 + $0x1a0] sm:$0xff] %v292
                  %v294 = vld [vmem:[%s196 + $0x348] sm:$0xff]
                  %295 = vst [vmem:[%s197 + $0x1b0] sm:$0xff] %v294
                  %v296 = vld [vmem:[%s196 + $0x350] sm:$0xff]
                  %297 = vst [vmem:[%s197 + $0x1b8] sm:$0xff] %v296
                  %v298 = vld [vmem:[%s196 + $0x358] sm:$0xff]
                  %299 = vst [vmem:[%s197 + $0x1c0] sm:$0xff] %v298
                  %v300 = vld [vmem:[%s196 + $0x360] sm:$0xff]
                  %301 = vst [vmem:[%s197 + $0x1c8] sm:$0xff] %v300
                  %v302 = vld [vmem:[%s196 + $0x368] sm:$0xff]
                  %303 = vst [vmem:[%s197 + $0x1d0] sm:$0xff] %v302
                  %v304 = vld [vmem:[%s196 + $0x370] sm:$0xff]
                  %305 = vst [vmem:[%s197 + $0x1d8] sm:$0xff] %v304
                  %v306 = vld [vmem:[%s196 + $0x378] sm:$0xff]
                  %307 = vst [vmem:[%s197 + $0x1e0] sm:$0xff] %v306
                  %v308 = vld [vmem:[%s196 + $0x380] sm:$0xff]
                  %309 = vst [vmem:[%s197 + $0x1e8] sm:$0xff] %v308
                  %v310 = vld [vmem:[%s196 + $0x3d4] sm:$0xff]
                  %311 = vst [vmem:[%s197 + $0x1f8] sm:$0xff] %v310
                  %v312 = vld [vmem:[%s196 + $0x3dc] sm:$0xff]
                  %313 = vst [vmem:[%s197 + $0x200] sm:$0xff] %v312
                  %v314 = vld [vmem:[%s196 + $0x3e4] sm:$0xff]
                  %315 = vst [vmem:[%s197 + $0x208] sm:$0xff] %v314
                  %v316 = vld [vmem:[%s196 + $0x3ec] sm:$0xff]
                  %317 = vst [vmem:[%s197 + $0x210] sm:$0xff] %v316
                  %v318 = vld [vmem:[%s196 + $0x3f4] sm:$0xff]
                  %319 = vst [vmem:[%s197 + $0x218] sm:$0xff] %v318
                  %v320 = vld [vmem:[%s196 + $0x3fc] sm:$0xff]
                  %321 = vst [vmem:[%s197 + $0x220] sm:$0xff] %v320
                  %v322 = vld [vmem:[%s196 + $0x404] sm:$0xff]
                  %323 = vst [vmem:[%s197 + $0x228] sm:$0xff] %v322
                  %v324 = vld [vmem:[%s196 + $0x40c] sm:$0xff]
                  %325 = vst [vmem:[%s197 + $0x230] sm:$0xff] %v324
                  %s326 = sadd.s32 1, %s195
                  %p327 = scmp.ge.s32.totalorder %s326, %s186
                  %s328 = scalar_select %p327, 0, %s326
                  %s329 = smul.u32 %s328, 64
                  %s330 = smul.u32 %s328, 64
                  %s331 = scalar_lea.vmem %s142, %s329
                  %s332 = scalar_lea.vmem %s134, %s330 [#allocation2]
                $region56: #{_lambda_.3} parent=50 // loop_footer
                  %s192 = sadd.s32 %s190, 1
                $region57: #{_lambda_.3} parent=50 // loop_footer_branch
                  %189 = sbr.rel target = $region53
                $region58: #{_lambda_.3} parent=50 // loop_exit
                  _
                %s333 = sshrl.u32 %s185, 3
                %s334 = sand.u32 %s185, 7
                %s335 = smul.u32 %s333, 8
                %s336 = smul.u32 128, %s335
                %s337 = sshra.s32 %s336, 4
                %s338 = scalar_lea.vmem %s142, %s337
                %s339 = smul.u32 128, %s335
                %s340 = sshra.s32 %s339, 4
                %s341 = scalar_lea.vmem %s134, %s340 [#allocation2]
                // While loop
                $region59: #{_lambda_.3} parent=50 // loop_pre_header
                  _
                $region60: #{_lambda_.3} parent=50 // loop_header
                  %s345 = sphi 0, %s347
                  %p346 = scmp.ge.s32.totalorder %s345, %s334
                  %s350 = sphi 0, %s371
                  %s351 = sphi %s338, %s374
                  %s352 = sphi %s341, %s375
                $region61: #{_lambda_.3} parent=50 // loop_header_branch
                  %349 = sbr.rel (%p346) target = $region65
                $region62: #{_lambda_.3} parent=50 // loop_body
                  %v353 = vld [vmem:[%s351] sm:$0xff]
                  %354 = vst [vmem:[%s352] sm:$0xff] %v353
                  %v355 = vld [vmem:[%s351 + $0x8c] sm:$0xff]
                  %356 = vst [vmem:[%s352 + $0x48] sm:$0xff] %v355
                  %v357 = vld [vmem:[%s351 + $0x118] sm:$0xff]
                  %358 = vst [vmem:[%s352 + $0x90] sm:$0xff] %v357
                  %v359 = vld [vmem:[%s351 + $0x1a4] sm:$0xff]
                  %360 = vst [vmem:[%s352 + $0xd8] sm:$0xff] %v359
                  %v361 = vld [vmem:[%s351 + $0x230] sm:$0xff]
                  %362 = vst [vmem:[%s352 + $0x120] sm:$0xff] %v361
                  %v363 = vld [vmem:[%s351 + $0x2bc] sm:$0xff]
                  %364 = vst [vmem:[%s352 + $0x168] sm:$0xff] %v363
                  %v365 = vld [vmem:[%s351 + $0x348] sm:$0xff]
                  %366 = vst [vmem:[%s352 + $0x1b0] sm:$0xff] %v365
                  %v367 = vld [vmem:[%s351 + $0x3d4] sm:$0xff]
                  %368 = vst [vmem:[%s352 + $0x1f8] sm:$0xff] %v367
                  %s369 = sadd.s32 1, %s350
                  %p370 = scmp.ge.s32.totalorder %s369, %s334
                  %s371 = scalar_select %p370, 0, %s369
                  %s372 = smul.u32 %s371, 8
                  %s373 = smul.u32 %s371, 8
                  %s374 = scalar_lea.vmem %s338, %s372
                  %s375 = scalar_lea.vmem %s341, %s373 [#allocation2]
                $region63: #{_lambda_.3} parent=50 // loop_footer
                  %s347 = sadd.s32 %s345, 1
                $region64: #{_lambda_.3} parent=50 // loop_footer_branch
                  %344 = sbr.rel target = $region60
                $region65: #{_lambda_.3} parent=50 // loop_exit
                  _
              $region51: #{_lambda_.3} parent=35 // pred_fallthru
                _
              %p376 = pneg %p181
              // Predicated region
              $region66: #{_lambda_.3} parent=35 // pred_check
                _
              $region67: #{_lambda_.3} parent=35 // pred_check_branch
                %378 = sbr.rel (%p181) target = $region69
              $region68: #{_lambda_.3} parent=35 // pred_region
                %s379 = sand.u32 %s143, 7
                %s380 = ssub.s32 %s143, %s379
                %s381 = scalar_lea.vmem %s142, %s380
                %s382 = ssub.s32 %s143, %s379
                %s383 = scalar_lea.vmem %s134, %s382 [#allocation2]
                %s384 = sshrl.u32 %s143, 3
                %s385 = sshrl.u32 %s384, 3
                // While loop
                $region70: #{_lambda_.3} parent=68 // loop_pre_header
                  _
                $region71: #{_lambda_.3} parent=68 // loop_header
                  %s389 = sphi 0, %s391
                  %p390 = scmp.ge.s32.totalorder %s389, %s385
                  %s394 = sphi 0, %s527
                  %s395 = sphi %s142, %s530
                  %s396 = sphi %s134, %s531
                $region72: #{_lambda_.3} parent=68 // loop_header_branch
                  %393 = sbr.rel (%p390) target = $region76
                $region73: #{_lambda_.3} parent=68 // loop_body
                  %v397 = vld [vmem:[%s395] sm:$0xff]
                  %398 = vst [vmem:[%s396] sm:$0xff] %v397
                  %v399 = vld [vmem:[%s395 + $0x8] sm:$0xff]
                  %400 = vst [vmem:[%s396 + $0x8] sm:$0xff] %v399
                  %v401 = vld [vmem:[%s395 + $0x10] sm:$0xff]
                  %402 = vst [vmem:[%s396 + $0x10] sm:$0xff] %v401
                  %v403 = vld [vmem:[%s395 + $0x18] sm:$0xff]
                  %404 = vst [vmem:[%s396 + $0x18] sm:$0xff] %v403
                  %v405 = vld [vmem:[%s395 + $0x20] sm:$0xff]
                  %406 = vst [vmem:[%s396 + $0x20] sm:$0xff] %v405
                  %v407 = vld [vmem:[%s395 + $0x28] sm:$0xff]
                  %408 = vst [vmem:[%s396 + $0x28] sm:$0xff] %v407
                  %v409 = vld [vmem:[%s395 + $0x30] sm:$0xff]
                  %410 = vst [vmem:[%s396 + $0x30] sm:$0xff] %v409
                  %v411 = vld [vmem:[%s395 + $0x38] sm:$0xff]
                  %412 = vst [vmem:[%s396 + $0x38] sm:$0xff] %v411
                  %v413 = vld [vmem:[%s395 + $0x8c] sm:$0xff]
                  %414 = vst [vmem:[%s396 + $0x48] sm:$0xff] %v413
                  %v415 = vld [vmem:[%s395 + $0x94] sm:$0xff]
                  %416 = vst [vmem:[%s396 + $0x50] sm:$0xff] %v415
                  %v417 = vld [vmem:[%s395 + $0x9c] sm:$0xff]
                  %418 = vst [vmem:[%s396 + $0x58] sm:$0xff] %v417
                  %v419 = vld [vmem:[%s395 + $0xa4] sm:$0xff]
                  %420 = vst [vmem:[%s396 + $0x60] sm:$0xff] %v419
                  %v421 = vld [vmem:[%s395 + $0xac] sm:$0xff]
                  %422 = vst [vmem:[%s396 + $0x68] sm:$0xff] %v421
                  %v423 = vld [vmem:[%s395 + $0xb4] sm:$0xff]
                  %424 = vst [vmem:[%s396 + $0x70] sm:$0xff] %v423
                  %v425 = vld [vmem:[%s395 + $0xbc] sm:$0xff]
                  %426 = vst [vmem:[%s396 + $0x78] sm:$0xff] %v425
                  %v427 = vld [vmem:[%s395 + $0xc4] sm:$0xff]
                  %428 = vst [vmem:[%s396 + $0x80] sm:$0xff] %v427
                  %v429 = vld [vmem:[%s395 + $0x118] sm:$0xff]
                  %430 = vst [vmem:[%s396 + $0x90] sm:$0xff] %v429
                  %v431 = vld [vmem:[%s395 + $0x120] sm:$0xff]
                  %432 = vst [vmem:[%s396 + $0x98] sm:$0xff] %v431
                  %v433 = vld [vmem:[%s395 + $0x128] sm:$0xff]
                  %434 = vst [vmem:[%s396 + $0xa0] sm:$0xff] %v433
                  %v435 = vld [vmem:[%s395 + $0x130] sm:$0xff]
                  %436 = vst [vmem:[%s396 + $0xa8] sm:$0xff] %v435
                  %v437 = vld [vmem:[%s395 + $0x138] sm:$0xff]
                  %438 = vst [vmem:[%s396 + $0xb0] sm:$0xff] %v437
                  %v439 = vld [vmem:[%s395 + $0x140] sm:$0xff]
                  %440 = vst [vmem:[%s396 + $0xb8] sm:$0xff] %v439
                  %v441 = vld [vmem:[%s395 + $0x148] sm:$0xff]
                  %442 = vst [vmem:[%s396 + $0xc0] sm:$0xff] %v441
                  %v443 = vld [vmem:[%s395 + $0x150] sm:$0xff]
                  %444 = vst [vmem:[%s396 + $0xc8] sm:$0xff] %v443
                  %v445 = vld [vmem:[%s395 + $0x1a4] sm:$0xff]
                  %446 = vst [vmem:[%s396 + $0xd8] sm:$0xff] %v445
                  %v447 = vld [vmem:[%s395 + $0x1ac] sm:$0xff]
                  %448 = vst [vmem:[%s396 + $0xe0] sm:$0xff] %v447
                  %v449 = vld [vmem:[%s395 + $0x1b4] sm:$0xff]
                  %450 = vst [vmem:[%s396 + $0xe8] sm:$0xff] %v449
                  %v451 = vld [vmem:[%s395 + $0x1bc] sm:$0xff]
                  %452 = vst [vmem:[%s396 + $0xf0] sm:$0xff] %v451
                  %v453 = vld [vmem:[%s395 + $0x1c4] sm:$0xff]
                  %454 = vst [vmem:[%s396 + $0xf8] sm:$0xff] %v453
                  %v455 = vld [vmem:[%s395 + $0x1cc] sm:$0xff]
                  %456 = vst [vmem:[%s396 + $0x100] sm:$0xff] %v455
                  %v457 = vld [vmem:[%s395 + $0x1d4] sm:$0xff]
                  %458 = vst [vmem:[%s396 + $0x108] sm:$0xff] %v457
                  %v459 = vld [vmem:[%s395 + $0x1dc] sm:$0xff]
                  %460 = vst [vmem:[%s396 + $0x110] sm:$0xff] %v459
                  %v461 = vld [vmem:[%s395 + $0x230] sm:$0xff]
                  %462 = vst [vmem:[%s396 + $0x120] sm:$0xff] %v461
                  %v463 = vld [vmem:[%s395 + $0x238] sm:$0xff]
                  %464 = vst [vmem:[%s396 + $0x128] sm:$0xff] %v463
                  %v465 = vld [vmem:[%s395 + $0x240] sm:$0xff]
                  %466 = vst [vmem:[%s396 + $0x130] sm:$0xff] %v465
                  %v467 = vld [vmem:[%s395 + $0x248] sm:$0xff]
                  %468 = vst [vmem:[%s396 + $0x138] sm:$0xff] %v467
                  %v469 = vld [vmem:[%s395 + $0x250] sm:$0xff]
                  %470 = vst [vmem:[%s396 + $0x140] sm:$0xff] %v469
                  %v471 = vld [vmem:[%s395 + $0x258] sm:$0xff]
                  %472 = vst [vmem:[%s396 + $0x148] sm:$0xff] %v471
                  %v473 = vld [vmem:[%s395 + $0x260] sm:$0xff]
                  %474 = vst [vmem:[%s396 + $0x150] sm:$0xff] %v473
                  %v475 = vld [vmem:[%s395 + $0x268] sm:$0xff]
                  %476 = vst [vmem:[%s396 + $0x158] sm:$0xff] %v475
                  %v477 = vld [vmem:[%s395 + $0x2bc] sm:$0xff]
                  %478 = vst [vmem:[%s396 + $0x168] sm:$0xff] %v477
                  %v479 = vld [vmem:[%s395 + $0x2c4] sm:$0xff]
                  %480 = vst [vmem:[%s396 + $0x170] sm:$0xff] %v479
                  %v481 = vld [vmem:[%s395 + $0x2cc] sm:$0xff]
                  %482 = vst [vmem:[%s396 + $0x178] sm:$0xff] %v481
                  %v483 = vld [vmem:[%s395 + $0x2d4] sm:$0xff]
                  %484 = vst [vmem:[%s396 + $0x180] sm:$0xff] %v483
                  %v485 = vld [vmem:[%s395 + $0x2dc] sm:$0xff]
                  %486 = vst [vmem:[%s396 + $0x188] sm:$0xff] %v485
                  %v487 = vld [vmem:[%s395 + $0x2e4] sm:$0xff]
                  %488 = vst [vmem:[%s396 + $0x190] sm:$0xff] %v487
                  %v489 = vld [vmem:[%s395 + $0x2ec] sm:$0xff]
                  %490 = vst [vmem:[%s396 + $0x198] sm:$0xff] %v489
                  %v491 = vld [vmem:[%s395 + $0x2f4] sm:$0xff]
                  %492 = vst [vmem:[%s396 + $0x1a0] sm:$0xff] %v491
                  %v493 = vld [vmem:[%s395 + $0x348] sm:$0xff]
                  %494 = vst [vmem:[%s396 + $0x1b0] sm:$0xff] %v493
                  %v495 = vld [vmem:[%s395 + $0x350] sm:$0xff]
                  %496 = vst [vmem:[%s396 + $0x1b8] sm:$0xff] %v495
                  %v497 = vld [vmem:[%s395 + $0x358] sm:$0xff]
                  %498 = vst [vmem:[%s396 + $0x1c0] sm:$0xff] %v497
                  %v499 = vld [vmem:[%s395 + $0x360] sm:$0xff]
                  %500 = vst [vmem:[%s396 + $0x1c8] sm:$0xff] %v499
                  %v501 = vld [vmem:[%s395 + $0x368] sm:$0xff]
                  %502 = vst [vmem:[%s396 + $0x1d0] sm:$0xff] %v501
                  %v503 = vld [vmem:[%s395 + $0x370] sm:$0xff]
                  %504 = vst [vmem:[%s396 + $0x1d8] sm:$0xff] %v503
                  %v505 = vld [vmem:[%s395 + $0x378] sm:$0xff]
                  %506 = vst [vmem:[%s396 + $0x1e0] sm:$0xff] %v505
                  %v507 = vld [vmem:[%s395 + $0x380] sm:$0xff]
                  %508 = vst [vmem:[%s396 + $0x1e8] sm:$0xff] %v507
                  %v509 = vld [vmem:[%s395 + $0x3d4] sm:$0xff]
                  %510 = vst [vmem:[%s396 + $0x1f8] sm:$0xff] %v509
                  %v511 = vld [vmem:[%s395 + $0x3dc] sm:$0xff]
                  %512 = vst [vmem:[%s396 + $0x200] sm:$0xff] %v511
                  %v513 = vld [vmem:[%s395 + $0x3e4] sm:$0xff]
                  %514 = vst [vmem:[%s396 + $0x208] sm:$0xff] %v513
                  %v515 = vld [vmem:[%s395 + $0x3ec] sm:$0xff]
                  %516 = vst [vmem:[%s396 + $0x210] sm:$0xff] %v515
                  %v517 = vld [vmem:[%s395 + $0x3f4] sm:$0xff]
                  %518 = vst [vmem:[%s396 + $0x218] sm:$0xff] %v517
                  %v519 = vld [vmem:[%s395 + $0x3fc] sm:$0xff]
                  %520 = vst [vmem:[%s396 + $0x220] sm:$0xff] %v519
                  %v521 = vld [vmem:[%s395 + $0x404] sm:$0xff]
                  %522 = vst [vmem:[%s396 + $0x228] sm:$0xff] %v521
                  %v523 = vld [vmem:[%s395 + $0x40c] sm:$0xff]
                  %524 = vst [vmem:[%s396 + $0x230] sm:$0xff] %v523
                  %s525 = sadd.s32 1, %s394
                  %p526 = scmp.ge.s32.totalorder %s525, %s385
                  %s527 = scalar_select %p526, 0, %s525
                  %s528 = smul.u32 %s527, 64
                  %s529 = smul.u32 %s527, 64
                  %s530 = scalar_lea.vmem %s142, %s528
                  %s531 = scalar_lea.vmem %s134, %s529 [#allocation2]
                $region74: #{_lambda_.3} parent=68 // loop_footer
                  %s391 = sadd.s32 %s389, 1
                $region75: #{_lambda_.3} parent=68 // loop_footer_branch
                  %388 = sbr.rel target = $region71
                $region76: #{_lambda_.3} parent=68 // loop_exit
                  _
                %s532 = sshrl.u32 %s384, 3
                %s533 = sand.u32 %s384, 7
                %s534 = smul.u32 %s532, 8
                %s535 = smul.u32 128, %s534
                %s536 = sshra.s32 %s535, 4
                %s537 = scalar_lea.vmem %s142, %s536
                %s538 = smul.u32 128, %s534
                %s539 = sshra.s32 %s538, 4
                %s540 = scalar_lea.vmem %s134, %s539 [#allocation2]
                // While loop
                $region77: #{_lambda_.3} parent=68 // loop_pre_header
                  _
                $region78: #{_lambda_.3} parent=68 // loop_header
                  %s544 = sphi 0, %s546
                  %p545 = scmp.ge.s32.totalorder %s544, %s533
                  %s549 = sphi 0, %s570
                  %s550 = sphi %s537, %s573
                  %s551 = sphi %s540, %s574
                $region79: #{_lambda_.3} parent=68 // loop_header_branch
                  %548 = sbr.rel (%p545) target = $region83
                $region80: #{_lambda_.3} parent=68 // loop_body
                  %v552 = vld [vmem:[%s550] sm:$0xff]
                  %553 = vst [vmem:[%s551] sm:$0xff] %v552
                  %v554 = vld [vmem:[%s550 + $0x8c] sm:$0xff]
                  %555 = vst [vmem:[%s551 + $0x48] sm:$0xff] %v554
                  %v556 = vld [vmem:[%s550 + $0x118] sm:$0xff]
                  %557 = vst [vmem:[%s551 + $0x90] sm:$0xff] %v556
                  %v558 = vld [vmem:[%s550 + $0x1a4] sm:$0xff]
                  %559 = vst [vmem:[%s551 + $0xd8] sm:$0xff] %v558
                  %v560 = vld [vmem:[%s550 + $0x230] sm:$0xff]
                  %561 = vst [vmem:[%s551 + $0x120] sm:$0xff] %v560
                  %v562 = vld [vmem:[%s550 + $0x2bc] sm:$0xff]
                  %563 = vst [vmem:[%s551 + $0x168] sm:$0xff] %v562
                  %v564 = vld [vmem:[%s550 + $0x348] sm:$0xff]
                  %565 = vst [vmem:[%s551 + $0x1b0] sm:$0xff] %v564
                  %v566 = vld [vmem:[%s550 + $0x3d4] sm:$0xff]
                  %567 = vst [vmem:[%s551 + $0x1f8] sm:$0xff] %v566
                  %s568 = sadd.s32 1, %s549
                  %p569 = scmp.ge.s32.totalorder %s568, %s533
                  %s570 = scalar_select %p569, 0, %s568
                  %s571 = smul.u32 %s570, 8
                  %s572 = smul.u32 %s570, 8
                  %s573 = scalar_lea.vmem %s537, %s571
                  %s574 = scalar_lea.vmem %s540, %s572 [#allocation2]
                $region81: #{_lambda_.3} parent=68 // loop_footer
                  %s546 = sadd.s32 %s544, 1
                $region82: #{_lambda_.3} parent=68 // loop_footer_branch
                  %543 = sbr.rel target = $region78
                $region83: #{_lambda_.3} parent=68 // loop_exit
                  _
                %s575 = sshll.u32 1, %s379
                %s576 = ssub.s32 %s575, 1
                loop: start=0, step=1, limit=1
                $region84: #{_lambda_.3} parent=68 // loop_pre_header
                  _
                $region85: #{_lambda_.3} parent=68 // loop_header
                  %s578 = sphi 0, %s582
                  %p579 = scmp.ge.s32.totalorder %s578, 1
                  %s583 = sphi %s381, %s381
                  %s584 = sphi %s383, %s383
                $region86: #{_lambda_.3} parent=68 // loop_header_branch
                  %581 = sbr.rel (%p579) target = $region90
                $region87: #{_lambda_.3} parent=68 // loop_body
                  %v585 = vld [vmem:[%s583] sm:%s576]
                  %586 = vst [vmem:[%s584] sm:%s576] %v585
                  %v587 = vld [vmem:[%s583 + $0x8c] sm:%s576]
                  %588 = vst [vmem:[%s584 + $0x48] sm:%s576] %v587
                  %v589 = vld [vmem:[%s583 + $0x118] sm:%s576]
                  %590 = vst [vmem:[%s584 + $0x90] sm:%s576] %v589
                  %v591 = vld [vmem:[%s583 + $0x1a4] sm:%s576]
                  %592 = vst [vmem:[%s584 + $0xd8] sm:%s576] %v591
                  %v593 = vld [vmem:[%s583 + $0x230] sm:%s576]
                  %594 = vst [vmem:[%s584 + $0x120] sm:%s576] %v593
                  %v595 = vld [vmem:[%s583 + $0x2bc] sm:%s576]
                  %596 = vst [vmem:[%s584 + $0x168] sm:%s576] %v595
                  %v597 = vld [vmem:[%s583 + $0x348] sm:%s576]
                  %598 = vst [vmem:[%s584 + $0x1b0] sm:%s576] %v597
                  %v599 = vld [vmem:[%s583 + $0x3d4] sm:%s576]
                  %600 = vst [vmem:[%s584 + $0x1f8] sm:%s576] %v599
                $region88: #{_lambda_.3} parent=68 // loop_footer
                  %s582 = sadd.s32 1, %s578
                $region89: #{_lambda_.3} parent=68 // loop_footer_branch
                  %577 = sbr.rel target = $region85
                $region90: #{_lambda_.3} parent=68 // loop_exit
                  _
              $region69: #{_lambda_.3} parent=35 // pred_fallthru
                _
            $region36: #{_lambda_.3} parent=31 // pred_fallthru
              _
            // Predicated region
            $region37: #{_lambda_.3} parent=31 // pred_check
              %p151 = pneg %p147
            $region38: #{_lambda_.3} parent=31 // pred_check_branch
              %153 = sbr.rel (%p151) target = $region40
            $region39: #{_lambda_.3} parent=31 // pred_region
              %s154 = sshll.u32 1, %s143
              %s155 = ssub.s32 %s154, 1
              loop: start=0, step=1, limit=1
              $region41: #{_lambda_.3} parent=39 // loop_pre_header
                _
              $region42: #{_lambda_.3} parent=39 // loop_header
                %s157 = sphi 0, %s161
                %p158 = scmp.ge.s32.totalorder %s157, 1
                %s162 = sphi %s142, %s142
                %s163 = sphi %s134, %s134
              $region43: #{_lambda_.3} parent=39 // loop_header_branch
                %160 = sbr.rel (%p158) target = $region47
              $region44: #{_lambda_.3} parent=39 // loop_body
                %v164 = vld [vmem:[%s162] sm:%s155]
                %165 = vst [vmem:[%s163] sm:%s155] %v164
                %v166 = vld [vmem:[%s162 + $0x8c] sm:%s155]
                %167 = vst [vmem:[%s163 + $0x48] sm:%s155] %v166
                %v168 = vld [vmem:[%s162 + $0x118] sm:%s155]
                %169 = vst [vmem:[%s163 + $0x90] sm:%s155] %v168
                %v170 = vld [vmem:[%s162 + $0x1a4] sm:%s155]
                %171 = vst [vmem:[%s163 + $0xd8] sm:%s155] %v170
                %v172 = vld [vmem:[%s162 + $0x230] sm:%s155]
                %173 = vst [vmem:[%s163 + $0x120] sm:%s155] %v172
                %v174 = vld [vmem:[%s162 + $0x2bc] sm:%s155]
                %175 = vst [vmem:[%s163 + $0x168] sm:%s155] %v174
                %v176 = vld [vmem:[%s162 + $0x348] sm:%s155]
                %177 = vst [vmem:[%s163 + $0x1b0] sm:%s155] %v176
                %v178 = vld [vmem:[%s162 + $0x3d4] sm:%s155]
                %179 = vst [vmem:[%s163 + $0x1f8] sm:%s155] %v178
              $region45: #{_lambda_.3} parent=39 // loop_footer
                %s161 = sadd.s32 1, %s157
              $region46: #{_lambda_.3} parent=39 // loop_footer_branch
                %156 = sbr.rel target = $region42
              $region47: #{_lambda_.3} parent=39 // loop_exit
                _
            $region40: #{_lambda_.3} parent=31 // pred_fallthru
              _
          $region32: #{_lambda_.3} parent=27 // pred_fallthru
            _
          %601 = vnop
        $region28: #{_lambda_.3} parent=23 // pred_fallthru
          _
      $region24: #{_lambda_.3} parent=5 // pred_fallthru
        _
      %p602 = scmp.le.s32.totalorder 1, %s9
      %p603 = scmp.lt.s32.totalorder %s9, 3
      %p604 = pnand %p602, %p603
      %p605 = pneg %p604
      // Predicated region
      $region91: #{_lambda_.3} parent=5 // pred_check
        _
      $region92: #{_lambda_.3} parent=5 // pred_check_branch
        %607 = sbr.rel (%p604) target = $region94
      $region93: #{_lambda_.3} parent=5 // pred_region
        %s608 = ssub.s32 %s9, 1
        %s609 = sand.u32 %s22, 1
        %s610 = sand.u32 %s22, 1
        %s611 = smul.addr %s610, 576
        %s612 = scalar_lea.vmem [#allocation2], %s611
        // Predicated region
        $region95: #{_lambda_.3} parent=93 // pred_check
          %p613 = pneg %p35
        $region96: #{_lambda_.3} parent=93 // pred_check_branch
          %615 = sbr.rel (%p613) target = $region98
        $region97: #{_lambda_.3} parent=93 // pred_region
          _
        $region98: #{_lambda_.3} parent=93 // pred_fallthru
          _
        %s616 = sand.u32 %s22, 1
        %s617 = sand.u32 %s22, 1
        %s618 = smul.addr %s617, 576
        %s619 = scalar_lea.vmem [#allocation2], %s618
        %p620 = pneg %p35
        %p621 = pneg %p32
        %p622 = pneg %p56
        %p623 = pneg %p53
        %p624 = pneg %p77
        %p625 = pneg %p74
        %p626 = pneg %p103
        %p627 = pneg %p100
        %s628 = sand.u32 %s90, 1
        %s629 = sand.u32 %s90, 1
        %s630 = smul.addr %s629, 72
        %s631 = scalar_lea.vmem [#allocation3], %s630
        %s632 = smul.u32 18, %s14
        %s633 = ssub.s32 35, %s632
        %p634 = scmp.lt.s32.totalorder %s633, 18
        %s635 = scalar_select %p634, %s633, 18
        %s636 = smul.u32 512, %s635
        %s637 = smul.u32 18, %s14
        %s638 = ssub.s32 35, %s637
        %p639 = scmp.lt.s32.totalorder %s638, 18
        %s640 = scalar_select %p639, %s638, 18
        %s641 = smul.u32 64, %s640
        %v643 = vld [vmem:[%s1] sm:$0xf]
        %v644 = vld [vmem:[%s612] sm:$0xff]
        %v645 = vld [vmem:[%s612 + $0x8] sm:$0xff]
        %v646 = vld [vmem:[%s612 + $0x10] sm:$0xff]
        %v647 = vld [vmem:[%s612 + $0x18] sm:$0xff]
        %v648 = vld [vmem:[%s612 + $0x20] sm:$0xff]
        %v649 = vld [vmem:[%s612 + $0x28] sm:$0xff]
        %v650 = vld [vmem:[%s612 + $0x30] sm:$0xff]
        %v651 = vld [vmem:[%s612 + $0x38] sm:$0xff]
        %v652 = vld [vmem:[%s612 + $0x40] sm:$0xff]
        %v653 = vld [vmem:[%s612 + $0x48] sm:$0xff]
        %v654 = vld [vmem:[%s612 + $0x50] sm:$0xff]
        %v655 = vld [vmem:[%s612 + $0x58] sm:$0xff]
        %v656 = vld [vmem:[%s612 + $0x60] sm:$0xff]
        %v657 = vld [vmem:[%s612 + $0x68] sm:$0xff]
        %v658 = vld [vmem:[%s612 + $0x70] sm:$0xff]
        %v659 = vld [vmem:[%s612 + $0x78] sm:$0xff]
        %v660 = vld [vmem:[%s612 + $0x80] sm:$0xff]
        %v661 = vld [vmem:[%s612 + $0x88] sm:$0xff]
        %v662 = vld [vmem:[%s612 + $0x90] sm:$0xff]
        %v663 = vld [vmem:[%s612 + $0x98] sm:$0xff]
        %v664 = vld [vmem:[%s612 + $0xa0] sm:$0xff]
        %v665 = vld [vmem:[%s612 + $0xa8] sm:$0xff]
        %v666 = vld [vmem:[%s612 + $0xb0] sm:$0xff]
        %v667 = vld [vmem:[%s612 + $0xb8] sm:$0xff]
        %v668 = vld [vmem:[%s612 + $0xc0] sm:$0xff]
        %v669 = vld [vmem:[%s612 + $0xc8] sm:$0xff]
        %v670 = vld [vmem:[%s612 + $0xd0] sm:$0xff]
        %v671 = vld [vmem:[%s612 + $0xd8] sm:$0xff]
        %v672 = vld [vmem:[%s612 + $0xe0] sm:$0xff]
        %v673 = vld [vmem:[%s612 + $0xe8] sm:$0xff]
        %v674 = vld [vmem:[%s612 + $0xf0] sm:$0xff]
        %v675 = vld [vmem:[%s612 + $0xf8] sm:$0xff]
        %v676 = vld [vmem:[%s612 + $0x100] sm:$0xff]
        %v677 = vld [vmem:[%s612 + $0x108] sm:$0xff]
        %v678 = vld [vmem:[%s612 + $0x110] sm:$0xff]
        %v679 = vld [vmem:[%s612 + $0x118] sm:$0xff]
        %v680 = vld [vmem:[%s612 + $0x120] sm:$0xff]
        %v681 = vld [vmem:[%s612 + $0x128] sm:$0xff]
        %v682 = vld [vmem:[%s612 + $0x130] sm:$0xff]
        %v683 = vld [vmem:[%s612 + $0x138] sm:$0xff]
        %v684 = vld [vmem:[%s612 + $0x140] sm:$0xff]
        %v685 = vld [vmem:[%s612 + $0x148] sm:$0xff]
        %v686 = vld [vmem:[%s612 + $0x150] sm:$0xff]
        %v687 = vld [vmem:[%s612 + $0x158] sm:$0xff]
        %v688 = vld [vmem:[%s612 + $0x160] sm:$0xff]
        %v689 = vld [vmem:[%s612 + $0x168] sm:$0xff]
        %v690 = vld [vmem:[%s612 + $0x170] sm:$0xff]
        %v691 = vld [vmem:[%s612 + $0x178] sm:$0xff]
        %v692 = vld [vmem:[%s612 + $0x180] sm:$0xff]
        %v693 = vld [vmem:[%s612 + $0x188] sm:$0xff]
        %v694 = vld [vmem:[%s612 + $0x190] sm:$0xff]
        %v695 = vld [vmem:[%s612 + $0x198] sm:$0xff]
        %v696 = vld [vmem:[%s612 + $0x1a0] sm:$0xff]
        %v697 = vld [vmem:[%s612 + $0x1a8] sm:$0xff]
        %v698 = vld [vmem:[%s612 + $0x1b0] sm:$0xff]
        %v699 = vld [vmem:[%s612 + $0x1b8] sm:$0xff]
        %v700 = vld [vmem:[%s612 + $0x1c0] sm:$0xff]
        %v701 = vld [vmem:[%s612 + $0x1c8] sm:$0xff]
        %v702 = vld [vmem:[%s612 + $0x1d0] sm:$0xff]
        %v703 = vld [vmem:[%s612 + $0x1d8] sm:$0xff]
        %v704 = vld [vmem:[%s612 + $0x1e0] sm:$0xff]
        %v705 = vld [vmem:[%s612 + $0x1e8] sm:$0xff]
        %v706 = vld [vmem:[%s612 + $0x1f0] sm:$0xff]
        %v707 = vld [vmem:[%s612 + $0x1f8] sm:$0xff]
        %v708 = vld [vmem:[%s612 + $0x200] sm:$0xff]
        %v709 = vld [vmem:[%s612 + $0x208] sm:$0xff]
        %v710 = vld [vmem:[%s612 + $0x210] sm:$0xff]
        %v711 = vld [vmem:[%s612 + $0x218] sm:$0xff]
        %v712 = vld [vmem:[%s612 + $0x220] sm:$0xff]
        %v713 = vld [vmem:[%s612 + $0x228] sm:$0xff]
        %v714 = vld [vmem:[%s612 + $0x230] sm:$0xff]
        %v715 = vld [vmem:[%s612 + $0x238] sm:$0xff]
        %v716 = vld [vmem:[%s2] sm:$0xff]
        %718 = vset.pattern.permute.xlu0 0
        %719 = vperm.xlu0 %718, %v716
        %v720 = vpop.permute.xlu0 %719
        %v794 = vunpack.c.l.b16 %v644
        %v795 = vunpack.c.h.b16 %v644
        %v796 = vunpack.c.l.b16 %v645
        %v797 = vunpack.c.h.b16 %v645
        %v798 = vunpack.c.l.b16 %v646
        %v799 = vunpack.c.h.b16 %v646
        %v800 = vunpack.c.l.b16 %v647
        %v801 = vunpack.c.h.b16 %v647
        %v802 = vunpack.c.l.b16 %v648
        %v803 = vunpack.c.h.b16 %v648
        %v804 = vunpack.c.l.b16 %v649
        %v805 = vunpack.c.h.b16 %v649
        %v806 = vunpack.c.l.b16 %v650
        %v807 = vunpack.c.h.b16 %v650
        %v808 = vunpack.c.l.b16 %v651
        %v809 = vunpack.c.h.b16 %v651
        %v810 = vunpack.c.l.b16 %v652
        %v811 = vunpack.c.h.b16 %v652
        %v812 = vunpack.c.l.b16 %v653
        %v813 = vunpack.c.h.b16 %v653
        %v814 = vunpack.c.l.b16 %v654
        %v815 = vunpack.c.h.b16 %v654
        %v816 = vunpack.c.l.b16 %v655
        %v817 = vunpack.c.h.b16 %v655
        %v818 = vunpack.c.l.b16 %v656
        %v819 = vunpack.c.h.b16 %v656
        %v820 = vunpack.c.l.b16 %v657
        %v821 = vunpack.c.h.b16 %v657
        %v822 = vunpack.c.l.b16 %v658
        %v823 = vunpack.c.h.b16 %v658
        %v824 = vunpack.c.l.b16 %v659
        %v825 = vunpack.c.h.b16 %v659
        %v826 = vunpack.c.l.b16 %v660
        %v827 = vunpack.c.h.b16 %v660
        %v828 = vunpack.c.l.b16 %v661
        %v829 = vunpack.c.h.b16 %v661
        %v830 = vunpack.c.l.b16 %v662
        %v831 = vunpack.c.h.b16 %v662
        %v832 = vunpack.c.l.b16 %v663
        %v833 = vunpack.c.h.b16 %v663
        %v834 = vunpack.c.l.b16 %v664
        %v835 = vunpack.c.h.b16 %v664
        %v836 = vunpack.c.l.b16 %v665
        %v837 = vunpack.c.h.b16 %v665
        %v838 = vunpack.c.l.b16 %v666
        %v839 = vunpack.c.h.b16 %v666
        %v840 = vunpack.c.l.b16 %v667
        %v841 = vunpack.c.h.b16 %v667
        %v842 = vunpack.c.l.b16 %v668
        %v843 = vunpack.c.h.b16 %v668
        %v844 = vunpack.c.l.b16 %v669
        %v845 = vunpack.c.h.b16 %v669
        %v846 = vunpack.c.l.b16 %v670
        %v847 = vunpack.c.h.b16 %v670
        %v848 = vunpack.c.l.b16 %v671
        %v849 = vunpack.c.h.b16 %v671
        %v850 = vunpack.c.l.b16 %v672
        %v851 = vunpack.c.h.b16 %v672
        %v852 = vunpack.c.l.b16 %v673
        %v853 = vunpack.c.h.b16 %v673
        %v854 = vunpack.c.l.b16 %v674
        %v855 = vunpack.c.h.b16 %v674
        %v856 = vunpack.c.l.b16 %v675
        %v857 = vunpack.c.h.b16 %v675
        %v858 = vunpack.c.l.b16 %v676
        %v859 = vunpack.c.h.b16 %v676
        %v860 = vunpack.c.l.b16 %v677
        %v861 = vunpack.c.h.b16 %v677
        %v862 = vunpack.c.l.b16 %v678
        %v863 = vunpack.c.h.b16 %v678
        %v864 = vunpack.c.l.b16 %v679
        %v865 = vunpack.c.h.b16 %v679
        %v866 = vunpack.c.l.b16 %v680
        %v867 = vunpack.c.h.b16 %v680
        %v868 = vunpack.c.l.b16 %v681
        %v869 = vunpack.c.h.b16 %v681
        %v870 = vunpack.c.l.b16 %v682
        %v871 = vunpack.c.h.b16 %v682
        %v872 = vunpack.c.l.b16 %v683
        %v873 = vunpack.c.h.b16 %v683
        %v874 = vunpack.c.l.b16 %v684
        %v875 = vunpack.c.h.b16 %v684
        %v876 = vunpack.c.l.b16 %v685
        %v877 = vunpack.c.h.b16 %v685
        %v878 = vunpack.c.l.b16 %v686
        %v879 = vunpack.c.h.b16 %v686
        %v880 = vunpack.c.l.b16 %v687
        %v881 = vunpack.c.h.b16 %v687
        %v882 = vunpack.c.l.b16 %v688
        %v883 = vunpack.c.h.b16 %v688
        %v884 = vunpack.c.l.b16 %v689
        %v885 = vunpack.c.h.b16 %v689
        %v886 = vunpack.c.l.b16 %v690
        %v887 = vunpack.c.h.b16 %v690
        %v888 = vunpack.c.l.b16 %v691
        %v889 = vunpack.c.h.b16 %v691
        %v890 = vunpack.c.l.b16 %v692
        %v891 = vunpack.c.h.b16 %v692
        %v892 = vunpack.c.l.b16 %v693
        %v893 = vunpack.c.h.b16 %v693
        %v894 = vunpack.c.l.b16 %v694
        %v895 = vunpack.c.h.b16 %v694
        %v896 = vunpack.c.l.b16 %v695
        %v897 = vunpack.c.h.b16 %v695
        %v898 = vunpack.c.l.b16 %v696
        %v899 = vunpack.c.h.b16 %v696
        %v900 = vunpack.c.l.b16 %v697
        %v901 = vunpack.c.h.b16 %v697
        %v902 = vunpack.c.l.b16 %v698
        %v903 = vunpack.c.h.b16 %v698
        %v904 = vunpack.c.l.b16 %v699
        %v905 = vunpack.c.h.b16 %v699
        %v906 = vunpack.c.l.b16 %v700
        %v907 = vunpack.c.h.b16 %v700
        %v908 = vunpack.c.l.b16 %v701
        %v909 = vunpack.c.h.b16 %v701
        %v910 = vunpack.c.l.b16 %v702
        %v911 = vunpack.c.h.b16 %v702
        %v912 = vunpack.c.l.b16 %v703
        %v913 = vunpack.c.h.b16 %v703
        %v914 = vunpack.c.l.b16 %v704
        %v915 = vunpack.c.h.b16 %v704
        %v916 = vunpack.c.l.b16 %v705
        %v917 = vunpack.c.h.b16 %v705
        %v918 = vunpack.c.l.b16 %v706
        %v919 = vunpack.c.h.b16 %v706
        %v920 = vunpack.c.l.b16 %v707
        %v921 = vunpack.c.h.b16 %v707
        %v922 = vunpack.c.l.b16 %v708
        %v923 = vunpack.c.h.b16 %v708
        %v924 = vunpack.c.l.b16 %v709
        %v925 = vunpack.c.h.b16 %v709
        %v926 = vunpack.c.l.b16 %v710
        %v927 = vunpack.c.h.b16 %v710
        %v928 = vunpack.c.l.b16 %v711
        %v929 = vunpack.c.h.b16 %v711
        %v930 = vunpack.c.l.b16 %v712
        %v931 = vunpack.c.h.b16 %v712
        %v932 = vunpack.c.l.b16 %v713
        %v933 = vunpack.c.h.b16 %v713
        %v934 = vunpack.c.l.b16 %v714
        %v935 = vunpack.c.h.b16 %v714
        %v936 = vunpack.c.l.b16 %v715
        %v937 = vunpack.c.h.b16 %v715
        %v938 = vpack.c.b16 %v812, %v794
        %v939 = vpack.c.b16 %v813, %v795
        %v940 = vpack.c.b16 %v814, %v796
        %v941 = vpack.c.b16 %v815, %v797
        %v942 = vpack.c.b16 %v816, %v798
        %v943 = vpack.c.b16 %v817, %v799
        %v944 = vpack.c.b16 %v818, %v800
        %v945 = vpack.c.b16 %v819, %v801
        %v946 = vpack.c.b16 %v820, %v802
        %v947 = vpack.c.b16 %v821, %v803
        %v948 = vpack.c.b16 %v822, %v804
        %v949 = vpack.c.b16 %v823, %v805
        %v950 = vpack.c.b16 %v824, %v806
        %v951 = vpack.c.b16 %v825, %v807
        %v952 = vpack.c.b16 %v826, %v808
        %v953 = vpack.c.b16 %v827, %v809
        %v954 = vpack.c.b16 %v828, %v810
        %v955 = vpack.c.b16 %v829, %v811
        %v956 = vpack.c.b16 %v848, %v830
        %v957 = vpack.c.b16 %v849, %v831
        %v958 = vpack.c.b16 %v850, %v832
        %v959 = vpack.c.b16 %v851, %v833
        %v960 = vpack.c.b16 %v852, %v834
        %v961 = vpack.c.b16 %v853, %v835
        %v962 = vpack.c.b16 %v854, %v836
        %v963 = vpack.c.b16 %v855, %v837
        %v964 = vpack.c.b16 %v856, %v838
        %v965 = vpack.c.b16 %v857, %v839
        %v966 = vpack.c.b16 %v858, %v840
        %v967 = vpack.c.b16 %v859, %v841
        %v968 = vpack.c.b16 %v860, %v842
        %v969 = vpack.c.b16 %v861, %v843
        %v970 = vpack.c.b16 %v862, %v844
        %v971 = vpack.c.b16 %v863, %v845
        %v972 = vpack.c.b16 %v864, %v846
        %v973 = vpack.c.b16 %v865, %v847
        %v974 = vpack.c.b16 %v884, %v866
        %v975 = vpack.c.b16 %v885, %v867
        %v976 = vpack.c.b16 %v886, %v868
        %v977 = vpack.c.b16 %v887, %v869
        %v978 = vpack.c.b16 %v888, %v870
        %v979 = vpack.c.b16 %v889, %v871
        %v980 = vpack.c.b16 %v890, %v872
        %v981 = vpack.c.b16 %v891, %v873
        %v982 = vpack.c.b16 %v892, %v874
        %v983 = vpack.c.b16 %v893, %v875
        %v984 = vpack.c.b16 %v894, %v876
        %v985 = vpack.c.b16 %v895, %v877
        %v986 = vpack.c.b16 %v896, %v878
        %v987 = vpack.c.b16 %v897, %v879
        %v988 = vpack.c.b16 %v898, %v880
        %v989 = vpack.c.b16 %v899, %v881
        %v990 = vpack.c.b16 %v900, %v882
        %v991 = vpack.c.b16 %v901, %v883
        %v992 = vpack.c.b16 %v920, %v902
        %v993 = vpack.c.b16 %v921, %v903
        %v994 = vpack.c.b16 %v922, %v904
        %v995 = vpack.c.b16 %v923, %v905
        %v996 = vpack.c.b16 %v924, %v906
        %v997 = vpack.c.b16 %v925, %v907
        %v998 = vpack.c.b16 %v926, %v908
        %v999 = vpack.c.b16 %v927, %v909
        %v1000 = vpack.c.b16 %v928, %v910
        %v1001 = vpack.c.b16 %v929, %v911
        %v1002 = vpack.c.b16 %v930, %v912
        %v1003 = vpack.c.b16 %v931, %v913
        %v1004 = vpack.c.b16 %v932, %v914
        %v1005 = vpack.c.b16 %v933, %v915
        %v1006 = vpack.c.b16 %v934, %v916
        %v1007 = vpack.c.b16 %v935, %v917
        %v1008 = vpack.c.b16 %v936, %v918
        %v1009 = vpack.c.b16 %v937, %v919
        %vm1082 = vcmask 523264
        %v1084 = vsel %vm1082, %v643, 0
        %1086 = vmatprep.subr.bf16.mxu0 0
        %1087 = vmatpush1.bf16.msra.mxu0 0
        %1088 = vmatprep.subr.bf16.mxu0 0
        %1089 = vmatpush1.bf16.msra.mxu0 0
        %1090 = vmatprep.subr.bf16.mxu0 0
        %1091 = vmatpush1.bf16.msra.mxu0 0
        %1092 = vmatprep.subr.bf16.mxu0 0
        %1093 = vmatpush1.bf16.msra.mxu0 0
        %1094 = vmatprep.subr.bf16.mxu0 %v993
        %1095 = vmatpush1.bf16.msra.mxu0 %v992
        %1096 = vmatprep.subr.bf16.mxu0 %v975
        %1097 = vmatpush1.bf16.msra.mxu0 %v974
        %1098 = vmatprep.subr.bf16.mxu0 %v957
        %1099 = vmatpush1.bf16.msra.mxu0 %v956
        %1100 = vmatprep.subr.bf16.mxu0 %v939
        %1101 = vmatpush1.bf16.msra.mxu0 %v938
        %1102 = vmatprep.subr.bf16.mxu0 0
        %1103 = vmatpush2.bf16.msra.mxu0 0
        %1104 = vmatprep.subr.bf16.mxu0 0
        %1105 = vmatpush2.bf16.msra.mxu0 0
        %1106 = vmatprep.subr.bf16.mxu0 0
        %1107 = vmatpush2.bf16.msra.mxu0 0
        %1108 = vmatprep.subr.bf16.mxu0 0
        %1109 = vmatpush2.bf16.msra.mxu0 0
        %1110 = vmatprep.subr.bf16.mxu0 0
        %1111 = vmatpush2.bf16.msra.mxu0 0
        %1112 = vmatprep.subr.bf16.mxu0 0
        %1113 = vmatpush2.bf16.msra.mxu0 0
        %1114 = vmatprep.subr.bf16.mxu0 0
        %1115 = vmatpush2.bf16.msra.mxu0 0
        %1116 = vmatprep.subr.bf16.mxu0 0
        %1117 = vmatpush2.bf16.msra.mxu0 0
        %1118 = vmatprep.mubr.bf16.mxu0 0
        %1119 = vmatmul.mubr.bf16.gmra.mxu0 %v1084
        %v1120 = vpop.f32.mrf.mxu0
        %v1121 = vadd.f32 %v720, %v1120
        %v1122 = vpop.f32.mrf.mxu0
        %v1123 = vadd.f32 %v720, %v1122
        %v1124 = vpop.f32.mrf.mxu0
        %v1125 = vpop.f32.mrf.mxu0
        %1126 = vdwg.mxu0
        %1127 = vmatprep.subr.bf16.mxu0 0
        %1128 = vmatpush1.bf16.msra.mxu0 0
        %1129 = vmatprep.subr.bf16.mxu0 0
        %1130 = vmatpush1.bf16.msra.mxu0 0
        %1131 = vmatprep.subr.bf16.mxu0 0
        %1132 = vmatpush1.bf16.msra.mxu0 0
        %1133 = vmatprep.subr.bf16.mxu0 0
        %1134 = vmatpush1.bf16.msra.mxu0 0
        %1135 = vmatprep.subr.bf16.mxu0 %v995
        %1136 = vmatpush1.bf16.msra.mxu0 %v994
        %1137 = vmatprep.subr.bf16.mxu0 %v977
        %1138 = vmatpush1.bf16.msra.mxu0 %v976
        %1139 = vmatprep.subr.bf16.mxu0 %v959
        %1140 = vmatpush1.bf16.msra.mxu0 %v958
        %1141 = vmatprep.subr.bf16.mxu0 %v941
        %1142 = vmatpush1.bf16.msra.mxu0 %v940
        %1143 = vmatprep.subr.bf16.mxu0 0
        %1144 = vmatpush2.bf16.msra.mxu0 0
        %1145 = vmatprep.subr.bf16.mxu0 0
        %1146 = vmatpush2.bf16.msra.mxu0 0
        %1147 = vmatprep.subr.bf16.mxu0 0
        %1148 = vmatpush2.bf16.msra.mxu0 0
        %1149 = vmatprep.subr.bf16.mxu0 0
        %1150 = vmatpush2.bf16.msra.mxu0 0
        %1151 = vmatprep.subr.bf16.mxu0 0
        %1152 = vmatpush2.bf16.msra.mxu0 0
        %1153 = vmatprep.subr.bf16.mxu0 0
        %1154 = vmatpush2.bf16.msra.mxu0 0
        %1155 = vmatprep.subr.bf16.mxu0 0
        %1156 = vmatpush2.bf16.msra.mxu0 0
        %1157 = vmatprep.subr.bf16.mxu0 0
        %1158 = vmatpush2.bf16.msra.mxu0 0
        %1159 = vmatprep.mubr.bf16.mxu0 0
        %1160 = vmatmul.mubr.bf16.gmra.mxu0 %v1084
        %v1161 = vpop.f32.mrf.mxu0
        %v1162 = vadd.f32 %v720, %v1161
        %v1163 = vpop.f32.mrf.mxu0
        %v1164 = vadd.f32 %v720, %v1163
        %v1165 = vpop.f32.mrf.mxu0
        %v1166 = vpop.f32.mrf.mxu0
        %1167 = vdwg.mxu0
        %1168 = vmatprep.subr.bf16.mxu0 0
        %1169 = vmatpush1.bf16.msra.mxu0 0
        %1170 = vmatprep.subr.bf16.mxu0 0
        %1171 = vmatpush1.bf16.msra.mxu0 0
        %1172 = vmatprep.subr.bf16.mxu0 0
        %1173 = vmatpush1.bf16.msra.mxu0 0
        %1174 = vmatprep.subr.bf16.mxu0 0
        %1175 = vmatpush1.bf16.msra.mxu0 0
        %1176 = vmatprep.subr.bf16.mxu0 %v997
        %1177 = vmatpush1.bf16.msra.mxu0 %v996
        %1178 = vmatprep.subr.bf16.mxu0 %v979
        %1179 = vmatpush1.bf16.msra.mxu0 %v978
        %1180 = vmatprep.subr.bf16.mxu0 %v961
        %1181 = vmatpush1.bf16.msra.mxu0 %v960
        %1182 = vmatprep.subr.bf16.mxu0 %v943
        %1183 = vmatpush1.bf16.msra.mxu0 %v942
        %1184 = vmatprep.subr.bf16.mxu0 0
        %1185 = vmatpush2.bf16.msra.mxu0 0
        %1186 = vmatprep.subr.bf16.mxu0 0
        %1187 = vmatpush2.bf16.msra.mxu0 0
        %1188 = vmatprep.subr.bf16.mxu0 0
        %1189 = vmatpush2.bf16.msra.mxu0 0
        %1190 = vmatprep.subr.bf16.mxu0 0
        %1191 = vmatpush2.bf16.msra.mxu0 0
        %1192 = vmatprep.subr.bf16.mxu0 0
        %1193 = vmatpush2.bf16.msra.mxu0 0
        %1194 = vmatprep.subr.bf16.mxu0 0
        %1195 = vmatpush2.bf16.msra.mxu0 0
        %1196 = vmatprep.subr.bf16.mxu0 0
        %1197 = vmatpush2.bf16.msra.mxu0 0
        %1198 = vmatprep.subr.bf16.mxu0 0
        %1199 = vmatpush2.bf16.msra.mxu0 0
        %1200 = vmatprep.mubr.bf16.mxu0 0
        %1201 = vmatmul.mubr.bf16.gmra.mxu0 %v1084
        %v1202 = vpop.f32.mrf.mxu0
        %v1203 = vadd.f32 %v720, %v1202
        %v1204 = vpop.f32.mrf.mxu0
        %v1205 = vadd.f32 %v720, %v1204
        %v1206 = vpop.f32.mrf.mxu0
        %v1207 = vpop.f32.mrf.mxu0
        %1208 = vdwg.mxu0
        %1209 = vmatprep.subr.bf16.mxu0 0
        %1210 = vmatpush1.bf16.msra.mxu0 0
        %1211 = vmatprep.subr.bf16.mxu0 0
        %1212 = vmatpush1.bf16.msra.mxu0 0
        %1213 = vmatprep.subr.bf16.mxu0 0
        %1214 = vmatpush1.bf16.msra.mxu0 0
        %1215 = vmatprep.subr.bf16.mxu0 0
        %1216 = vmatpush1.bf16.msra.mxu0 0
        %1217 = vmatprep.subr.bf16.mxu0 %v999
        %1218 = vmatpush1.bf16.msra.mxu0 %v998
        %1219 = vmatprep.subr.bf16.mxu0 %v981
        %1220 = vmatpush1.bf16.msra.mxu0 %v980
        %1221 = vmatprep.subr.bf16.mxu0 %v963
        %1222 = vmatpush1.bf16.msra.mxu0 %v962
        %1223 = vmatprep.subr.bf16.mxu0 %v945
        %1224 = vmatpush1.bf16.msra.mxu0 %v944
        %1225 = vmatprep.subr.bf16.mxu0 0
        %1226 = vmatpush2.bf16.msra.mxu0 0
        %1227 = vmatprep.subr.bf16.mxu0 0
        %1228 = vmatpush2.bf16.msra.mxu0 0
        %1229 = vmatprep.subr.bf16.mxu0 0
        %1230 = vmatpush2.bf16.msra.mxu0 0
        %1231 = vmatprep.subr.bf16.mxu0 0
        %1232 = vmatpush2.bf16.msra.mxu0 0
        %1233 = vmatprep.subr.bf16.mxu0 0
        %1234 = vmatpush2.bf16.msra.mxu0 0
        %1235 = vmatprep.subr.bf16.mxu0 0
        %1236 = vmatpush2.bf16.msra.mxu0 0
        %1237 = vmatprep.subr.bf16.mxu0 0
        %1238 = vmatpush2.bf16.msra.mxu0 0
        %1239 = vmatprep.subr.bf16.mxu0 0
        %1240 = vmatpush2.bf16.msra.mxu0 0
        %1241 = vmatprep.mubr.bf16.mxu0 0
        %1242 = vmatmul.mubr.bf16.gmra.mxu0 %v1084
        %v1243 = vpop.f32.mrf.mxu0
        %v1244 = vadd.f32 %v720, %v1243
        %v1245 = vpop.f32.mrf.mxu0
        %v1246 = vadd.f32 %v720, %v1245
        %v1247 = vpop.f32.mrf.mxu0
        %v1248 = vpop.f32.mrf.mxu0
        %1249 = vdwg.mxu0
        %1250 = vmatprep.subr.bf16.mxu0 0
        %1251 = vmatpush1.bf16.msra.mxu0 0
        %1252 = vmatprep.subr.bf16.mxu0 0
        %1253 = vmatpush1.bf16.msra.mxu0 0
        %1254 = vmatprep.subr.bf16.mxu0 0
        %1255 = vmatpush1.bf16.msra.mxu0 0
        %1256 = vmatprep.subr.bf16.mxu0 0
        %1257 = vmatpush1.bf16.msra.mxu0 0
        %1258 = vmatprep.subr.bf16.mxu0 %v1001
        %1259 = vmatpush1.bf16.msra.mxu0 %v1000
        %1260 = vmatprep.subr.bf16.mxu0 %v983
        %1261 = vmatpush1.bf16.msra.mxu0 %v982
        %1262 = vmatprep.subr.bf16.mxu0 %v965
        %1263 = vmatpush1.bf16.msra.mxu0 %v964
        %1264 = vmatprep.subr.bf16.mxu0 %v947
        %1265 = vmatpush1.bf16.msra.mxu0 %v946
        %1266 = vmatprep.subr.bf16.mxu0 0
        %1267 = vmatpush2.bf16.msra.mxu0 0
        %1268 = vmatprep.subr.bf16.mxu0 0
        %1269 = vmatpush2.bf16.msra.mxu0 0
        %1270 = vmatprep.subr.bf16.mxu0 0
        %1271 = vmatpush2.bf16.msra.mxu0 0
        %1272 = vmatprep.subr.bf16.mxu0 0
        %1273 = vmatpush2.bf16.msra.mxu0 0
        %1274 = vmatprep.subr.bf16.mxu0 0
        %1275 = vmatpush2.bf16.msra.mxu0 0
        %1276 = vmatprep.subr.bf16.mxu0 0
        %1277 = vmatpush2.bf16.msra.mxu0 0
        %1278 = vmatprep.subr.bf16.mxu0 0
        %1279 = vmatpush2.bf16.msra.mxu0 0
        %1280 = vmatprep.subr.bf16.mxu0 0
        %1281 = vmatpush2.bf16.msra.mxu0 0
        %1282 = vmatprep.mubr.bf16.mxu0 0
        %1283 = vmatmul.mubr.bf16.gmra.mxu0 %v1084
        %v1284 = vpop.f32.mrf.mxu0
        %v1285 = vadd.f32 %v720, %v1284
        %v1286 = vpop.f32.mrf.mxu0
        %v1287 = vadd.f32 %v720, %v1286
        %v1288 = vpop.f32.mrf.mxu0
        %v1289 = vpop.f32.mrf.mxu0
        %1290 = vdwg.mxu0
        %1291 = vmatprep.subr.bf16.mxu0 0
        %1292 = vmatpush1.bf16.msra.mxu0 0
        %1293 = vmatprep.subr.bf16.mxu0 0
        %1294 = vmatpush1.bf16.msra.mxu0 0
        %1295 = vmatprep.subr.bf16.mxu0 0
        %1296 = vmatpush1.bf16.msra.mxu0 0
        %1297 = vmatprep.subr.bf16.mxu0 0
        %1298 = vmatpush1.bf16.msra.mxu0 0
        %1299 = vmatprep.subr.bf16.mxu0 %v1003
        %1300 = vmatpush1.bf16.msra.mxu0 %v1002
        %1301 = vmatprep.subr.bf16.mxu0 %v985
        %1302 = vmatpush1.bf16.msra.mxu0 %v984
        %1303 = vmatprep.subr.bf16.mxu0 %v967
        %1304 = vmatpush1.bf16.msra.mxu0 %v966
        %1305 = vmatprep.subr.bf16.mxu0 %v949
        %1306 = vmatpush1.bf16.msra.mxu0 %v948
        %1307 = vmatprep.subr.bf16.mxu0 0
        %1308 = vmatpush2.bf16.msra.mxu0 0
        %1309 = vmatprep.subr.bf16.mxu0 0
        %1310 = vmatpush2.bf16.msra.mxu0 0
        %1311 = vmatprep.subr.bf16.mxu0 0
        %1312 = vmatpush2.bf16.msra.mxu0 0
        %1313 = vmatprep.subr.bf16.mxu0 0
        %1314 = vmatpush2.bf16.msra.mxu0 0
        %1315 = vmatprep.subr.bf16.mxu0 0
        %1316 = vmatpush2.bf16.msra.mxu0 0
        %1317 = vmatprep.subr.bf16.mxu0 0
        %1318 = vmatpush2.bf16.msra.mxu0 0
        %1319 = vmatprep.subr.bf16.mxu0 0
        %1320 = vmatpush2.bf16.msra.mxu0 0
        %1321 = vmatprep.subr.bf16.mxu0 0
        %1322 = vmatpush2.bf16.msra.mxu0 0
        %1323 = vmatprep.mubr.bf16.mxu0 0
        %1324 = vmatmul.mubr.bf16.gmra.mxu0 %v1084
        %v1325 = vpop.f32.mrf.mxu0
        %v1326 = vadd.f32 %v720, %v1325
        %v1327 = vpop.f32.mrf.mxu0
        %v1328 = vadd.f32 %v720, %v1327
        %v1329 = vpop.f32.mrf.mxu0
        %v1330 = vpop.f32.mrf.mxu0
        %1331 = vdwg.mxu0
        %1332 = vmatprep.subr.bf16.mxu0 0
        %1333 = vmatpush1.bf16.msra.mxu0 0
        %1334 = vmatprep.subr.bf16.mxu0 0
        %1335 = vmatpush1.bf16.msra.mxu0 0
        %1336 = vmatprep.subr.bf16.mxu0 0
        %1337 = vmatpush1.bf16.msra.mxu0 0
        %1338 = vmatprep.subr.bf16.mxu0 0
        %1339 = vmatpush1.bf16.msra.mxu0 0
        %1340 = vmatprep.subr.bf16.mxu0 %v1005
        %1341 = vmatpush1.bf16.msra.mxu0 %v1004
        %1342 = vmatprep.subr.bf16.mxu0 %v987
        %1343 = vmatpush1.bf16.msra.mxu0 %v986
        %1344 = vmatprep.subr.bf16.mxu0 %v969
        %1345 = vmatpush1.bf16.msra.mxu0 %v968
        %1346 = vmatprep.subr.bf16.mxu0 %v951
        %1347 = vmatpush1.bf16.msra.mxu0 %v950
        %1348 = vmatprep.subr.bf16.mxu0 0
        %1349 = vmatpush2.bf16.msra.mxu0 0
        %1350 = vmatprep.subr.bf16.mxu0 0
        %1351 = vmatpush2.bf16.msra.mxu0 0
        %1352 = vmatprep.subr.bf16.mxu0 0
        %1353 = vmatpush2.bf16.msra.mxu0 0
        %1354 = vmatprep.subr.bf16.mxu0 0
        %1355 = vmatpush2.bf16.msra.mxu0 0
        %1356 = vmatprep.subr.bf16.mxu0 0
        %1357 = vmatpush2.bf16.msra.mxu0 0
        %1358 = vmatprep.subr.bf16.mxu0 0
        %1359 = vmatpush2.bf16.msra.mxu0 0
        %1360 = vmatprep.subr.bf16.mxu0 0
        %1361 = vmatpush2.bf16.msra.mxu0 0
        %1362 = vmatprep.subr.bf16.mxu0 0
        %1363 = vmatpush2.bf16.msra.mxu0 0
        %1364 = vmatprep.mubr.bf16.mxu0 0
        %1365 = vmatmul.mubr.bf16.gmra.mxu0 %v1084
        %v1366 = vpop.f32.mrf.mxu0
        %v1367 = vadd.f32 %v720, %v1366
        %v1368 = vpop.f32.mrf.mxu0
        %v1369 = vadd.f32 %v720, %v1368
        %v1370 = vpop.f32.mrf.mxu0
        %v1371 = vpop.f32.mrf.mxu0
        %1372 = vdwg.mxu0
        %1373 = vmatprep.subr.bf16.mxu0 0
        %1374 = vmatpush1.bf16.msra.mxu0 0
        %1375 = vmatprep.subr.bf16.mxu0 0
        %1376 = vmatpush1.bf16.msra.mxu0 0
        %1377 = vmatprep.subr.bf16.mxu0 0
        %1378 = vmatpush1.bf16.msra.mxu0 0
        %1379 = vmatprep.subr.bf16.mxu0 0
        %1380 = vmatpush1.bf16.msra.mxu0 0
        %1381 = vmatprep.subr.bf16.mxu0 %v1007
        %1382 = vmatpush1.bf16.msra.mxu0 %v1006
        %1383 = vmatprep.subr.bf16.mxu0 %v989
        %1384 = vmatpush1.bf16.msra.mxu0 %v988
        %1385 = vmatprep.subr.bf16.mxu0 %v971
        %1386 = vmatpush1.bf16.msra.mxu0 %v970
        %1387 = vmatprep.subr.bf16.mxu0 %v953
        %1388 = vmatpush1.bf16.msra.mxu0 %v952
        %1389 = vmatprep.subr.bf16.mxu0 0
        %1390 = vmatpush2.bf16.msra.mxu0 0
        %1391 = vmatprep.subr.bf16.mxu0 0
        %1392 = vmatpush2.bf16.msra.mxu0 0
        %1393 = vmatprep.subr.bf16.mxu0 0
        %1394 = vmatpush2.bf16.msra.mxu0 0
        %1395 = vmatprep.subr.bf16.mxu0 0
        %1396 = vmatpush2.bf16.msra.mxu0 0
        %1397 = vmatprep.subr.bf16.mxu0 0
        %1398 = vmatpush2.bf16.msra.mxu0 0
        %1399 = vmatprep.subr.bf16.mxu0 0
        %1400 = vmatpush2.bf16.msra.mxu0 0
        %1401 = vmatprep.subr.bf16.mxu0 0
        %1402 = vmatpush2.bf16.msra.mxu0 0
        %1403 = vmatprep.subr.bf16.mxu0 0
        %1404 = vmatpush2.bf16.msra.mxu0 0
        %1405 = vmatprep.mubr.bf16.mxu0 0
        %1406 = vmatmul.mubr.bf16.gmra.mxu0 %v1084
        %v1407 = vpop.f32.mrf.mxu0
        %v1408 = vadd.f32 %v720, %v1407
        %v1409 = vpop.f32.mrf.mxu0
        %v1410 = vadd.f32 %v720, %v1409
        %v1411 = vpop.f32.mrf.mxu0
        %v1412 = vpop.f32.mrf.mxu0
        %1413 = vdwg.mxu0
        %1414 = vmatprep.subr.bf16.mxu0 0
        %1415 = vmatpush1.bf16.msra.mxu0 0
        %1416 = vmatprep.subr.bf16.mxu0 0
        %1417 = vmatpush1.bf16.msra.mxu0 0
        %1418 = vmatprep.subr.bf16.mxu0 0
        %1419 = vmatpush1.bf16.msra.mxu0 0
        %1420 = vmatprep.subr.bf16.mxu0 0
        %1421 = vmatpush1.bf16.msra.mxu0 0
        %1422 = vmatprep.subr.bf16.mxu0 %v1009
        %1423 = vmatpush1.bf16.msra.mxu0 %v1008
        %1424 = vmatprep.subr.bf16.mxu0 %v991
        %1425 = vmatpush1.bf16.msra.mxu0 %v990
        %1426 = vmatprep.subr.bf16.mxu0 %v973
        %1427 = vmatpush1.bf16.msra.mxu0 %v972
        %1428 = vmatprep.subr.bf16.mxu0 %v955
        %1429 = vmatpush1.bf16.msra.mxu0 %v954
        %1430 = vmatprep.subr.bf16.mxu0 0
        %1431 = vmatpush2.bf16.msra.mxu0 0
        %1432 = vmatprep.subr.bf16.mxu0 0
        %1433 = vmatpush2.bf16.msra.mxu0 0
        %1434 = vmatprep.subr.bf16.mxu0 0
        %1435 = vmatpush2.bf16.msra.mxu0 0
        %1436 = vmatprep.subr.bf16.mxu0 0
        %1437 = vmatpush2.bf16.msra.mxu0 0
        %1438 = vmatprep.subr.bf16.mxu0 0
        %1439 = vmatpush2.bf16.msra.mxu0 0
        %1440 = vmatprep.subr.bf16.mxu0 0
        %1441 = vmatpush2.bf16.msra.mxu0 0
        %1442 = vmatprep.subr.bf16.mxu0 0
        %1443 = vmatpush2.bf16.msra.mxu0 0
        %1444 = vmatprep.subr.bf16.mxu0 0
        %1445 = vmatpush2.bf16.msra.mxu0 0
        %1446 = vmatprep.mubr.bf16.mxu0 0
        %1447 = vmatmul.mubr.bf16.gmra.mxu0 %v1084
        %v1448 = vpop.f32.mrf.mxu0
        %v1449 = vadd.f32 %v720, %v1448
        %v1450 = vpop.f32.mrf.mxu0
        %v1451 = vadd.f32 %v720, %v1450
        %v1452 = vpop.f32.mrf.mxu0
        %v1453 = vpop.f32.mrf.mxu0
        %1454 = vdwg.mxu0
        %v1455 = vmax.f32 %v1121, 0.0
        %v1456 = vmax.f32 %v1123, 0.0
        %v1457 = vmax.f32 %v1162, 0.0
        %v1458 = vmax.f32 %v1164, 0.0
        %v1459 = vmax.f32 %v1203, 0.0
        %v1460 = vmax.f32 %v1205, 0.0
        %v1461 = vmax.f32 %v1244, 0.0
        %v1462 = vmax.f32 %v1246, 0.0
        %v1463 = vmax.f32 %v1285, 0.0
        %v1464 = vmax.f32 %v1287, 0.0
        %v1465 = vmax.f32 %v1326, 0.0
        %v1466 = vmax.f32 %v1328, 0.0
        %v1467 = vmax.f32 %v1367, 0.0
        %v1468 = vmax.f32 %v1369, 0.0
        %v1469 = vmax.f32 %v1408, 0.0
        %v1470 = vmax.f32 %v1410, 0.0
        %v1471 = vmax.f32 %v1449, 0.0
        %v1472 = vmax.f32 %v1451, 0.0
        %v1473 = vpack.c.bf16 %v1455, %v1455
        %v1474 = vpack.c.bf16 %v1456, %v1456
        %v1475 = vpack.c.bf16 %v1457, %v1457
        %v1476 = vpack.c.bf16 %v1458, %v1458
        %v1477 = vpack.c.bf16 %v1459, %v1459
        %v1478 = vpack.c.bf16 %v1460, %v1460
        %v1479 = vpack.c.bf16 %v1461, %v1461
        %v1480 = vpack.c.bf16 %v1462, %v1462
        %v1481 = vpack.c.bf16 %v1463, %v1463
        %v1482 = vpack.c.bf16 %v1464, %v1464
        %v1483 = vpack.c.bf16 %v1465, %v1465
        %v1484 = vpack.c.bf16 %v1466, %v1466
        %v1485 = vpack.c.bf16 %v1467, %v1467
        %v1486 = vpack.c.bf16 %v1468, %v1468
        %v1487 = vpack.c.bf16 %v1469, %v1469
        %v1488 = vpack.c.bf16 %v1470, %v1470
        %v1489 = vpack.c.bf16 %v1471, %v1471
        %v1490 = vpack.c.bf16 %v1472, %v1472
        %v1509 = vunpack.c.l.b16 %v1473
        %v1510 = vunpack.c.l.b16 %v1474
        %v1511 = vunpack.c.l.b16 %v1475
        %v1512 = vunpack.c.l.b16 %v1476
        %v1513 = vunpack.c.l.b16 %v1477
        %v1514 = vunpack.c.l.b16 %v1478
        %v1515 = vunpack.c.l.b16 %v1479
        %v1516 = vunpack.c.l.b16 %v1480
        %v1517 = vunpack.c.l.b16 %v1481
        %v1518 = vunpack.c.l.b16 %v1482
        %v1519 = vunpack.c.l.b16 %v1483
        %v1520 = vunpack.c.l.b16 %v1484
        %v1521 = vunpack.c.l.b16 %v1485
        %v1522 = vunpack.c.l.b16 %v1486
        %v1523 = vunpack.c.l.b16 %v1487
        %v1524 = vunpack.c.l.b16 %v1488
        %v1525 = vunpack.c.l.b16 %v1489
        %v1526 = vunpack.c.l.b16 %v1490
        %v1527 = vpack.c.b16 %v1510, %v1509
        %v1528 = vpack.c.b16 %v1512, %v1511
        %v1529 = vpack.c.b16 %v1514, %v1513
        %v1530 = vpack.c.b16 %v1516, %v1515
        %v1531 = vpack.c.b16 %v1518, %v1517
        %v1532 = vpack.c.b16 %v1520, %v1519
        %v1533 = vpack.c.b16 %v1522, %v1521
        %v1534 = vpack.c.b16 %v1524, %v1523
        %v1535 = vpack.c.b16 %v1526, %v1525
        %1545 = vst [vmem:[%s631] sm:$0xff] %v1527
        %1546 = vst [vmem:[%s631 + $0x8] sm:$0xff] %v1528
        %1547 = vst [vmem:[%s631 + $0x10] sm:$0xff] %v1529
        %1548 = vst [vmem:[%s631 + $0x18] sm:$0xff] %v1530
        %1549 = vst [vmem:[%s631 + $0x20] sm:$0xff] %v1531
        %1550 = vst [vmem:[%s631 + $0x28] sm:$0xff] %v1532
        %1551 = vst [vmem:[%s631 + $0x30] sm:$0xff] %v1533
        %1552 = vst [vmem:[%s631 + $0x38] sm:$0xff] %v1534
        %1553 = vst [vmem:[%s631 + $0x40] sm:$0xff] %v1535
        %s1554 = sand.u32 %s90, 1
        %s1555 = sand.u32 %s90, 1
        %s1556 = smul.addr %s1555, 72
        %s1557 = scalar_lea.vmem [#allocation3], %s1556
        // Predicated region
        $region99: #{_lambda_.3} parent=93 // pred_check
          %p1558 = pneg %p100
        $region100: #{_lambda_.3} parent=93 // pred_check_branch
          %1560 = sbr.rel (%p1558) target = $region102
        $region101: #{_lambda_.3} parent=93 // pred_region
          %s1561 = smul.u32 18, %s14
          %s1562 = ssub.s32 35, %s1561
          %p1563 = scmp.lt.s32.totalorder %s1562, 18
          %s1564 = scalar_select %p1563, %s1562, 18
          %s1565 = smul.u32 64, %s1564
          %p1566 = scmp.ne.s32.totalorder 0, %s1565
          %s1567 = smul.addr %s1561, 4
          %s1568 = scalar_lea.vmem %s3, %s1567
          %s1569 = smul.u32 %s1564, 4
          // Predicated region
          $region103: #{_lambda_.3} parent=101 // pred_check
            %p1570 = pneg %p1566
          $region104: #{_lambda_.3} parent=101 // pred_check_branch
            %1572 = sbr.rel (%p1570) target = $region106
          $region105: #{_lambda_.3} parent=101 // pred_region
            %p1573 = scmp.lt.u32.totalorder %s1569, 8
            %p1574 = pneg %p1573
            // Predicated region
            $region107: #{_lambda_.3} parent=105 // pred_check
              _
            $region108: #{_lambda_.3} parent=105 // pred_check_branch
              %1576 = sbr.rel (%p1573) target = $region110
            $region109: #{_lambda_.3} parent=105 // pred_region
              %s1592 = sand.u32 %s1569, 7
              %p1593 = scmp.eq.s32.totalorder %s1592, 0
              // Predicated region
              $region122: #{_lambda_.3} parent=109 // pred_check
                %p1594 = pneg %p1593
              $region123: #{_lambda_.3} parent=109 // pred_check_branch
                %1596 = sbr.rel (%p1594) target = $region125
              $region124: #{_lambda_.3} parent=109 // pred_region
                %s1597 = sshrl.u32 %s1569, 3
                %s1598 = sshrl.u32 %s1597, 6
                // While loop
                $region126: #{_lambda_.3} parent=124 // loop_pre_header
                  _
                $region127: #{_lambda_.3} parent=124 // loop_header
                  %s1602 = sphi 0, %s1604
                  %p1603 = scmp.ge.s32.totalorder %s1602, %s1598
                  %s1607 = sphi 0, %s1740
                  %s1608 = sphi %s1557, %s1743
                  %s1609 = sphi %s1568, %s1744
                $region128: #{_lambda_.3} parent=124 // loop_header_branch
                  %1606 = sbr.rel (%p1603) target = $region132
                $region129: #{_lambda_.3} parent=124 // loop_body
                  %v1610 = vld [vmem:[%s1608] sm:$0xff]
                  %1611 = vst [vmem:[%s1609] sm:$0xff] %v1610
                  %v1612 = vld [vmem:[%s1608 + $0x8] sm:$0xff]
                  %1613 = vst [vmem:[%s1609 + $0x8] sm:$0xff] %v1612
                  %v1614 = vld [vmem:[%s1608 + $0x10] sm:$0xff]
                  %1615 = vst [vmem:[%s1609 + $0x10] sm:$0xff] %v1614
                  %v1616 = vld [vmem:[%s1608 + $0x18] sm:$0xff]
                  %1617 = vst [vmem:[%s1609 + $0x18] sm:$0xff] %v1616
                  %v1618 = vld [vmem:[%s1608 + $0x20] sm:$0xff]
                  %1619 = vst [vmem:[%s1609 + $0x20] sm:$0xff] %v1618
                  %v1620 = vld [vmem:[%s1608 + $0x28] sm:$0xff]
                  %1621 = vst [vmem:[%s1609 + $0x28] sm:$0xff] %v1620
                  %v1622 = vld [vmem:[%s1608 + $0x30] sm:$0xff]
                  %1623 = vst [vmem:[%s1609 + $0x30] sm:$0xff] %v1622
                  %v1624 = vld [vmem:[%s1608 + $0x38] sm:$0xff]
                  %1625 = vst [vmem:[%s1609 + $0x38] sm:$0xff] %v1624
                  %v1626 = vld [vmem:[%s1608 + $0x40] sm:$0xff]
                  %1627 = vst [vmem:[%s1609 + $0x40] sm:$0xff] %v1626
                  %v1628 = vld [vmem:[%s1608 + $0x48] sm:$0xff]
                  %1629 = vst [vmem:[%s1609 + $0x48] sm:$0xff] %v1628
                  %v1630 = vld [vmem:[%s1608 + $0x50] sm:$0xff]
                  %1631 = vst [vmem:[%s1609 + $0x50] sm:$0xff] %v1630
                  %v1632 = vld [vmem:[%s1608 + $0x58] sm:$0xff]
                  %1633 = vst [vmem:[%s1609 + $0x58] sm:$0xff] %v1632
                  %v1634 = vld [vmem:[%s1608 + $0x60] sm:$0xff]
                  %1635 = vst [vmem:[%s1609 + $0x60] sm:$0xff] %v1634
                  %v1636 = vld [vmem:[%s1608 + $0x68] sm:$0xff]
                  %1637 = vst [vmem:[%s1609 + $0x68] sm:$0xff] %v1636
                  %v1638 = vld [vmem:[%s1608 + $0x70] sm:$0xff]
                  %1639 = vst [vmem:[%s1609 + $0x70] sm:$0xff] %v1638
                  %v1640 = vld [vmem:[%s1608 + $0x78] sm:$0xff]
                  %1641 = vst [vmem:[%s1609 + $0x78] sm:$0xff] %v1640
                  %v1642 = vld [vmem:[%s1608 + $0x80] sm:$0xff]
                  %1643 = vst [vmem:[%s1609 + $0x80] sm:$0xff] %v1642
                  %v1644 = vld [vmem:[%s1608 + $0x88] sm:$0xff]
                  %1645 = vst [vmem:[%s1609 + $0x88] sm:$0xff] %v1644
                  %v1646 = vld [vmem:[%s1608 + $0x90] sm:$0xff]
                  %1647 = vst [vmem:[%s1609 + $0x90] sm:$0xff] %v1646
                  %v1648 = vld [vmem:[%s1608 + $0x98] sm:$0xff]
                  %1649 = vst [vmem:[%s1609 + $0x98] sm:$0xff] %v1648
                  %v1650 = vld [vmem:[%s1608 + $0xa0] sm:$0xff]
                  %1651 = vst [vmem:[%s1609 + $0xa0] sm:$0xff] %v1650
                  %v1652 = vld [vmem:[%s1608 + $0xa8] sm:$0xff]
                  %1653 = vst [vmem:[%s1609 + $0xa8] sm:$0xff] %v1652
                  %v1654 = vld [vmem:[%s1608 + $0xb0] sm:$0xff]
                  %1655 = vst [vmem:[%s1609 + $0xb0] sm:$0xff] %v1654
                  %v1656 = vld [vmem:[%s1608 + $0xb8] sm:$0xff]
                  %1657 = vst [vmem:[%s1609 + $0xb8] sm:$0xff] %v1656
                  %v1658 = vld [vmem:[%s1608 + $0xc0] sm:$0xff]
                  %1659 = vst [vmem:[%s1609 + $0xc0] sm:$0xff] %v1658
                  %v1660 = vld [vmem:[%s1608 + $0xc8] sm:$0xff]
                  %1661 = vst [vmem:[%s1609 + $0xc8] sm:$0xff] %v1660
                  %v1662 = vld [vmem:[%s1608 + $0xd0] sm:$0xff]
                  %1663 = vst [vmem:[%s1609 + $0xd0] sm:$0xff] %v1662
                  %v1664 = vld [vmem:[%s1608 + $0xd8] sm:$0xff]
                  %1665 = vst [vmem:[%s1609 + $0xd8] sm:$0xff] %v1664
                  %v1666 = vld [vmem:[%s1608 + $0xe0] sm:$0xff]
                  %1667 = vst [vmem:[%s1609 + $0xe0] sm:$0xff] %v1666
                  %v1668 = vld [vmem:[%s1608 + $0xe8] sm:$0xff]
                  %1669 = vst [vmem:[%s1609 + $0xe8] sm:$0xff] %v1668
                  %v1670 = vld [vmem:[%s1608 + $0xf0] sm:$0xff]
                  %1671 = vst [vmem:[%s1609 + $0xf0] sm:$0xff] %v1670
                  %v1672 = vld [vmem:[%s1608 + $0xf8] sm:$0xff]
                  %1673 = vst [vmem:[%s1609 + $0xf8] sm:$0xff] %v1672
                  %v1674 = vld [vmem:[%s1608 + $0x100] sm:$0xff]
                  %1675 = vst [vmem:[%s1609 + $0x100] sm:$0xff] %v1674
                  %v1676 = vld [vmem:[%s1608 + $0x108] sm:$0xff]
                  %1677 = vst [vmem:[%s1609 + $0x108] sm:$0xff] %v1676
                  %v1678 = vld [vmem:[%s1608 + $0x110] sm:$0xff]
                  %1679 = vst [vmem:[%s1609 + $0x110] sm:$0xff] %v1678
                  %v1680 = vld [vmem:[%s1608 + $0x118] sm:$0xff]
                  %1681 = vst [vmem:[%s1609 + $0x118] sm:$0xff] %v1680
                  %v1682 = vld [vmem:[%s1608 + $0x120] sm:$0xff]
                  %1683 = vst [vmem:[%s1609 + $0x120] sm:$0xff] %v1682
                  %v1684 = vld [vmem:[%s1608 + $0x128] sm:$0xff]
                  %1685 = vst [vmem:[%s1609 + $0x128] sm:$0xff] %v1684
                  %v1686 = vld [vmem:[%s1608 + $0x130] sm:$0xff]
                  %1687 = vst [vmem:[%s1609 + $0x130] sm:$0xff] %v1686
                  %v1688 = vld [vmem:[%s1608 + $0x138] sm:$0xff]
                  %1689 = vst [vmem:[%s1609 + $0x138] sm:$0xff] %v1688
                  %v1690 = vld [vmem:[%s1608 + $0x140] sm:$0xff]
                  %1691 = vst [vmem:[%s1609 + $0x140] sm:$0xff] %v1690
                  %v1692 = vld [vmem:[%s1608 + $0x148] sm:$0xff]
                  %1693 = vst [vmem:[%s1609 + $0x148] sm:$0xff] %v1692
                  %v1694 = vld [vmem:[%s1608 + $0x150] sm:$0xff]
                  %1695 = vst [vmem:[%s1609 + $0x150] sm:$0xff] %v1694
                  %v1696 = vld [vmem:[%s1608 + $0x158] sm:$0xff]
                  %1697 = vst [vmem:[%s1609 + $0x158] sm:$0xff] %v1696
                  %v1698 = vld [vmem:[%s1608 + $0x160] sm:$0xff]
                  %1699 = vst [vmem:[%s1609 + $0x160] sm:$0xff] %v1698
                  %v1700 = vld [vmem:[%s1608 + $0x168] sm:$0xff]
                  %1701 = vst [vmem:[%s1609 + $0x168] sm:$0xff] %v1700
                  %v1702 = vld [vmem:[%s1608 + $0x170] sm:$0xff]
                  %1703 = vst [vmem:[%s1609 + $0x170] sm:$0xff] %v1702
                  %v1704 = vld [vmem:[%s1608 + $0x178] sm:$0xff]
                  %1705 = vst [vmem:[%s1609 + $0x178] sm:$0xff] %v1704
                  %v1706 = vld [vmem:[%s1608 + $0x180] sm:$0xff]
                  %1707 = vst [vmem:[%s1609 + $0x180] sm:$0xff] %v1706
                  %v1708 = vld [vmem:[%s1608 + $0x188] sm:$0xff]
                  %1709 = vst [vmem:[%s1609 + $0x188] sm:$0xff] %v1708
                  %v1710 = vld [vmem:[%s1608 + $0x190] sm:$0xff]
                  %1711 = vst [vmem:[%s1609 + $0x190] sm:$0xff] %v1710
                  %v1712 = vld [vmem:[%s1608 + $0x198] sm:$0xff]
                  %1713 = vst [vmem:[%s1609 + $0x198] sm:$0xff] %v1712
                  %v1714 = vld [vmem:[%s1608 + $0x1a0] sm:$0xff]
                  %1715 = vst [vmem:[%s1609 + $0x1a0] sm:$0xff] %v1714
                  %v1716 = vld [vmem:[%s1608 + $0x1a8] sm:$0xff]
                  %1717 = vst [vmem:[%s1609 + $0x1a8] sm:$0xff] %v1716
                  %v1718 = vld [vmem:[%s1608 + $0x1b0] sm:$0xff]
                  %1719 = vst [vmem:[%s1609 + $0x1b0] sm:$0xff] %v1718
                  %v1720 = vld [vmem:[%s1608 + $0x1b8] sm:$0xff]
                  %1721 = vst [vmem:[%s1609 + $0x1b8] sm:$0xff] %v1720
                  %v1722 = vld [vmem:[%s1608 + $0x1c0] sm:$0xff]
                  %1723 = vst [vmem:[%s1609 + $0x1c0] sm:$0xff] %v1722
                  %v1724 = vld [vmem:[%s1608 + $0x1c8] sm:$0xff]
                  %1725 = vst [vmem:[%s1609 + $0x1c8] sm:$0xff] %v1724
                  %v1726 = vld [vmem:[%s1608 + $0x1d0] sm:$0xff]
                  %1727 = vst [vmem:[%s1609 + $0x1d0] sm:$0xff] %v1726
                  %v1728 = vld [vmem:[%s1608 + $0x1d8] sm:$0xff]
                  %1729 = vst [vmem:[%s1609 + $0x1d8] sm:$0xff] %v1728
                  %v1730 = vld [vmem:[%s1608 + $0x1e0] sm:$0xff]
                  %1731 = vst [vmem:[%s1609 + $0x1e0] sm:$0xff] %v1730
                  %v1732 = vld [vmem:[%s1608 + $0x1e8] sm:$0xff]
                  %1733 = vst [vmem:[%s1609 + $0x1e8] sm:$0xff] %v1732
                  %v1734 = vld [vmem:[%s1608 + $0x1f0] sm:$0xff]
                  %1735 = vst [vmem:[%s1609 + $0x1f0] sm:$0xff] %v1734
                  %v1736 = vld [vmem:[%s1608 + $0x1f8] sm:$0xff]
                  %1737 = vst [vmem:[%s1609 + $0x1f8] sm:$0xff] %v1736
                  %s1738 = sadd.s32 1, %s1607
                  %p1739 = scmp.ge.s32.totalorder %s1738, %s1598
                  %s1740 = scalar_select %p1739, 0, %s1738
                  %s1741 = smul.u32 %s1740, 512
                  %s1742 = smul.u32 %s1740, 512
                  %s1743 = scalar_lea.vmem %s1557, %s1741 [#allocation3]
                  %s1744 = scalar_lea.vmem %s1568, %s1742
                $region130: #{_lambda_.3} parent=124 // loop_footer
                  %s1604 = sadd.s32 %s1602, 1
                $region131: #{_lambda_.3} parent=124 // loop_footer_branch
                  %1601 = sbr.rel target = $region127
                $region132: #{_lambda_.3} parent=124 // loop_exit
                  _
                %s1745 = sshrl.u32 %s1597, 6
                %s1746 = sand.u32 %s1597, 63
                %s1747 = smul.u32 %s1745, 64
                %s1748 = smul.u32 128, %s1747
                %s1749 = sshra.s32 %s1748, 4
                %s1750 = scalar_lea.vmem %s1557, %s1749 [#allocation3]
                %s1751 = smul.u32 128, %s1747
                %s1752 = sshra.s32 %s1751, 4
                %s1753 = scalar_lea.vmem %s1568, %s1752
                // While loop
                $region133: #{_lambda_.3} parent=124 // loop_pre_header
                  _
                $region134: #{_lambda_.3} parent=124 // loop_header
                  %s1757 = sphi 0, %s1759
                  %p1758 = scmp.ge.s32.totalorder %s1757, %s1746
                  %s1762 = sphi 0, %s1769
                  %s1763 = sphi %s1750, %s1772
                  %s1764 = sphi %s1753, %s1773
                $region135: #{_lambda_.3} parent=124 // loop_header_branch
                  %1761 = sbr.rel (%p1758) target = $region139
                $region136: #{_lambda_.3} parent=124 // loop_body
                  %v1765 = vld [vmem:[%s1763] sm:$0xff]
                  %1766 = vst [vmem:[%s1764] sm:$0xff] %v1765
                  %s1767 = sadd.s32 1, %s1762
                  %p1768 = scmp.ge.s32.totalorder %s1767, %s1746
                  %s1769 = scalar_select %p1768, 0, %s1767
                  %s1770 = smul.u32 %s1769, 8
                  %s1771 = smul.u32 %s1769, 8
                  %s1772 = scalar_lea.vmem %s1750, %s1770 [#allocation3]
                  %s1773 = scalar_lea.vmem %s1753, %s1771
                $region137: #{_lambda_.3} parent=124 // loop_footer
                  %s1759 = sadd.s32 %s1757, 1
                $region138: #{_lambda_.3} parent=124 // loop_footer_branch
                  %1756 = sbr.rel target = $region134
                $region139: #{_lambda_.3} parent=124 // loop_exit
                  _
              $region125: #{_lambda_.3} parent=109 // pred_fallthru
                _
              %p1774 = pneg %p1593
              // Predicated region
              $region140: #{_lambda_.3} parent=109 // pred_check
                _
              $region141: #{_lambda_.3} parent=109 // pred_check_branch
                %1776 = sbr.rel (%p1593) target = $region143
              $region142: #{_lambda_.3} parent=109 // pred_region
                %s1777 = sand.u32 %s1569, 7
                %s1778 = ssub.s32 %s1569, %s1777
                %s1779 = scalar_lea.vmem %s1557, %s1778 [#allocation3]
                %s1780 = ssub.s32 %s1569, %s1777
                %s1781 = scalar_lea.vmem %s1568, %s1780
                %s1782 = sshrl.u32 %s1569, 3
                %s1783 = sshrl.u32 %s1782, 6
                // While loop
                $region144: #{_lambda_.3} parent=142 // loop_pre_header
                  _
                $region145: #{_lambda_.3} parent=142 // loop_header
                  %s1787 = sphi 0, %s1789
                  %p1788 = scmp.ge.s32.totalorder %s1787, %s1783
                  %s1792 = sphi 0, %s1925
                  %s1793 = sphi %s1557, %s1928
                  %s1794 = sphi %s1568, %s1929
                $region146: #{_lambda_.3} parent=142 // loop_header_branch
                  %1791 = sbr.rel (%p1788) target = $region150
                $region147: #{_lambda_.3} parent=142 // loop_body
                  %v1795 = vld [vmem:[%s1793] sm:$0xff]
                  %1796 = vst [vmem:[%s1794] sm:$0xff] %v1795
                  %v1797 = vld [vmem:[%s1793 + $0x8] sm:$0xff]
                  %1798 = vst [vmem:[%s1794 + $0x8] sm:$0xff] %v1797
                  %v1799 = vld [vmem:[%s1793 + $0x10] sm:$0xff]
                  %1800 = vst [vmem:[%s1794 + $0x10] sm:$0xff] %v1799
                  %v1801 = vld [vmem:[%s1793 + $0x18] sm:$0xff]
                  %1802 = vst [vmem:[%s1794 + $0x18] sm:$0xff] %v1801
                  %v1803 = vld [vmem:[%s1793 + $0x20] sm:$0xff]
                  %1804 = vst [vmem:[%s1794 + $0x20] sm:$0xff] %v1803
                  %v1805 = vld [vmem:[%s1793 + $0x28] sm:$0xff]
                  %1806 = vst [vmem:[%s1794 + $0x28] sm:$0xff] %v1805
                  %v1807 = vld [vmem:[%s1793 + $0x30] sm:$0xff]
                  %1808 = vst [vmem:[%s1794 + $0x30] sm:$0xff] %v1807
                  %v1809 = vld [vmem:[%s1793 + $0x38] sm:$0xff]
                  %1810 = vst [vmem:[%s1794 + $0x38] sm:$0xff] %v1809
                  %v1811 = vld [vmem:[%s1793 + $0x40] sm:$0xff]
                  %1812 = vst [vmem:[%s1794 + $0x40] sm:$0xff] %v1811
                  %v1813 = vld [vmem:[%s1793 + $0x48] sm:$0xff]
                  %1814 = vst [vmem:[%s1794 + $0x48] sm:$0xff] %v1813
                  %v1815 = vld [vmem:[%s1793 + $0x50] sm:$0xff]
                  %1816 = vst [vmem:[%s1794 + $0x50] sm:$0xff] %v1815
                  %v1817 = vld [vmem:[%s1793 + $0x58] sm:$0xff]
                  %1818 = vst [vmem:[%s1794 + $0x58] sm:$0xff] %v1817
                  %v1819 = vld [vmem:[%s1793 + $0x60] sm:$0xff]
                  %1820 = vst [vmem:[%s1794 + $0x60] sm:$0xff] %v1819
                  %v1821 = vld [vmem:[%s1793 + $0x68] sm:$0xff]
                  %1822 = vst [vmem:[%s1794 + $0x68] sm:$0xff] %v1821
                  %v1823 = vld [vmem:[%s1793 + $0x70] sm:$0xff]
                  %1824 = vst [vmem:[%s1794 + $0x70] sm:$0xff] %v1823
                  %v1825 = vld [vmem:[%s1793 + $0x78] sm:$0xff]
                  %1826 = vst [vmem:[%s1794 + $0x78] sm:$0xff] %v1825
                  %v1827 = vld [vmem:[%s1793 + $0x80] sm:$0xff]
                  %1828 = vst [vmem:[%s1794 + $0x80] sm:$0xff] %v1827
                  %v1829 = vld [vmem:[%s1793 + $0x88] sm:$0xff]
                  %1830 = vst [vmem:[%s1794 + $0x88] sm:$0xff] %v1829
                  %v1831 = vld [vmem:[%s1793 + $0x90] sm:$0xff]
                  %1832 = vst [vmem:[%s1794 + $0x90] sm:$0xff] %v1831
                  %v1833 = vld [vmem:[%s1793 + $0x98] sm:$0xff]
                  %1834 = vst [vmem:[%s1794 + $0x98] sm:$0xff] %v1833
                  %v1835 = vld [vmem:[%s1793 + $0xa0] sm:$0xff]
                  %1836 = vst [vmem:[%s1794 + $0xa0] sm:$0xff] %v1835
                  %v1837 = vld [vmem:[%s1793 + $0xa8] sm:$0xff]
                  %1838 = vst [vmem:[%s1794 + $0xa8] sm:$0xff] %v1837
                  %v1839 = vld [vmem:[%s1793 + $0xb0] sm:$0xff]
                  %1840 = vst [vmem:[%s1794 + $0xb0] sm:$0xff] %v1839
                  %v1841 = vld [vmem:[%s1793 + $0xb8] sm:$0xff]
                  %1842 = vst [vmem:[%s1794 + $0xb8] sm:$0xff] %v1841
                  %v1843 = vld [vmem:[%s1793 + $0xc0] sm:$0xff]
                  %1844 = vst [vmem:[%s1794 + $0xc0] sm:$0xff] %v1843
                  %v1845 = vld [vmem:[%s1793 + $0xc8] sm:$0xff]
                  %1846 = vst [vmem:[%s1794 + $0xc8] sm:$0xff] %v1845
                  %v1847 = vld [vmem:[%s1793 + $0xd0] sm:$0xff]
                  %1848 = vst [vmem:[%s1794 + $0xd0] sm:$0xff] %v1847
                  %v1849 = vld [vmem:[%s1793 + $0xd8] sm:$0xff]
                  %1850 = vst [vmem:[%s1794 + $0xd8] sm:$0xff] %v1849
                  %v1851 = vld [vmem:[%s1793 + $0xe0] sm:$0xff]
                  %1852 = vst [vmem:[%s1794 + $0xe0] sm:$0xff] %v1851
                  %v1853 = vld [vmem:[%s1793 + $0xe8] sm:$0xff]
                  %1854 = vst [vmem:[%s1794 + $0xe8] sm:$0xff] %v1853
                  %v1855 = vld [vmem:[%s1793 + $0xf0] sm:$0xff]
                  %1856 = vst [vmem:[%s1794 + $0xf0] sm:$0xff] %v1855
                  %v1857 = vld [vmem:[%s1793 + $0xf8] sm:$0xff]
                  %1858 = vst [vmem:[%s1794 + $0xf8] sm:$0xff] %v1857
                  %v1859 = vld [vmem:[%s1793 + $0x100] sm:$0xff]
                  %1860 = vst [vmem:[%s1794 + $0x100] sm:$0xff] %v1859
                  %v1861 = vld [vmem:[%s1793 + $0x108] sm:$0xff]
                  %1862 = vst [vmem:[%s1794 + $0x108] sm:$0xff] %v1861
                  %v1863 = vld [vmem:[%s1793 + $0x110] sm:$0xff]
                  %1864 = vst [vmem:[%s1794 + $0x110] sm:$0xff] %v1863
                  %v1865 = vld [vmem:[%s1793 + $0x118] sm:$0xff]
                  %1866 = vst [vmem:[%s1794 + $0x118] sm:$0xff] %v1865
                  %v1867 = vld [vmem:[%s1793 + $0x120] sm:$0xff]
                  %1868 = vst [vmem:[%s1794 + $0x120] sm:$0xff] %v1867
                  %v1869 = vld [vmem:[%s1793 + $0x128] sm:$0xff]
                  %1870 = vst [vmem:[%s1794 + $0x128] sm:$0xff] %v1869
                  %v1871 = vld [vmem:[%s1793 + $0x130] sm:$0xff]
                  %1872 = vst [vmem:[%s1794 + $0x130] sm:$0xff] %v1871
                  %v1873 = vld [vmem:[%s1793 + $0x138] sm:$0xff]
                  %1874 = vst [vmem:[%s1794 + $0x138] sm:$0xff] %v1873
                  %v1875 = vld [vmem:[%s1793 + $0x140] sm:$0xff]
                  %1876 = vst [vmem:[%s1794 + $0x140] sm:$0xff] %v1875
                  %v1877 = vld [vmem:[%s1793 + $0x148] sm:$0xff]
                  %1878 = vst [vmem:[%s1794 + $0x148] sm:$0xff] %v1877
                  %v1879 = vld [vmem:[%s1793 + $0x150] sm:$0xff]
                  %1880 = vst [vmem:[%s1794 + $0x150] sm:$0xff] %v1879
                  %v1881 = vld [vmem:[%s1793 + $0x158] sm:$0xff]
                  %1882 = vst [vmem:[%s1794 + $0x158] sm:$0xff] %v1881
                  %v1883 = vld [vmem:[%s1793 + $0x160] sm:$0xff]
                  %1884 = vst [vmem:[%s1794 + $0x160] sm:$0xff] %v1883
                  %v1885 = vld [vmem:[%s1793 + $0x168] sm:$0xff]
                  %1886 = vst [vmem:[%s1794 + $0x168] sm:$0xff] %v1885
                  %v1887 = vld [vmem:[%s1793 + $0x170] sm:$0xff]
                  %1888 = vst [vmem:[%s1794 + $0x170] sm:$0xff] %v1887
                  %v1889 = vld [vmem:[%s1793 + $0x178] sm:$0xff]
                  %1890 = vst [vmem:[%s1794 + $0x178] sm:$0xff] %v1889
                  %v1891 = vld [vmem:[%s1793 + $0x180] sm:$0xff]
                  %1892 = vst [vmem:[%s1794 + $0x180] sm:$0xff] %v1891
                  %v1893 = vld [vmem:[%s1793 + $0x188] sm:$0xff]
                  %1894 = vst [vmem:[%s1794 + $0x188] sm:$0xff] %v1893
                  %v1895 = vld [vmem:[%s1793 + $0x190] sm:$0xff]
                  %1896 = vst [vmem:[%s1794 + $0x190] sm:$0xff] %v1895
                  %v1897 = vld [vmem:[%s1793 + $0x198] sm:$0xff]
                  %1898 = vst [vmem:[%s1794 + $0x198] sm:$0xff] %v1897
                  %v1899 = vld [vmem:[%s1793 + $0x1a0] sm:$0xff]
                  %1900 = vst [vmem:[%s1794 + $0x1a0] sm:$0xff] %v1899
                  %v1901 = vld [vmem:[%s1793 + $0x1a8] sm:$0xff]
                  %1902 = vst [vmem:[%s1794 + $0x1a8] sm:$0xff] %v1901
                  %v1903 = vld [vmem:[%s1793 + $0x1b0] sm:$0xff]
                  %1904 = vst [vmem:[%s1794 + $0x1b0] sm:$0xff] %v1903
                  %v1905 = vld [vmem:[%s1793 + $0x1b8] sm:$0xff]
                  %1906 = vst [vmem:[%s1794 + $0x1b8] sm:$0xff] %v1905
                  %v1907 = vld [vmem:[%s1793 + $0x1c0] sm:$0xff]
                  %1908 = vst [vmem:[%s1794 + $0x1c0] sm:$0xff] %v1907
                  %v1909 = vld [vmem:[%s1793 + $0x1c8] sm:$0xff]
                  %1910 = vst [vmem:[%s1794 + $0x1c8] sm:$0xff] %v1909
                  %v1911 = vld [vmem:[%s1793 + $0x1d0] sm:$0xff]
                  %1912 = vst [vmem:[%s1794 + $0x1d0] sm:$0xff] %v1911
                  %v1913 = vld [vmem:[%s1793 + $0x1d8] sm:$0xff]
                  %1914 = vst [vmem:[%s1794 + $0x1d8] sm:$0xff] %v1913
                  %v1915 = vld [vmem:[%s1793 + $0x1e0] sm:$0xff]
                  %1916 = vst [vmem:[%s1794 + $0x1e0] sm:$0xff] %v1915
                  %v1917 = vld [vmem:[%s1793 + $0x1e8] sm:$0xff]
                  %1918 = vst [vmem:[%s1794 + $0x1e8] sm:$0xff] %v1917
                  %v1919 = vld [vmem:[%s1793 + $0x1f0] sm:$0xff]
                  %1920 = vst [vmem:[%s1794 + $0x1f0] sm:$0xff] %v1919
                  %v1921 = vld [vmem:[%s1793 + $0x1f8] sm:$0xff]
                  %1922 = vst [vmem:[%s1794 + $0x1f8] sm:$0xff] %v1921
                  %s1923 = sadd.s32 1, %s1792
                  %p1924 = scmp.ge.s32.totalorder %s1923, %s1783
                  %s1925 = scalar_select %p1924, 0, %s1923
                  %s1926 = smul.u32 %s1925, 512
                  %s1927 = smul.u32 %s1925, 512
                  %s1928 = scalar_lea.vmem %s1557, %s1926 [#allocation3]
                  %s1929 = scalar_lea.vmem %s1568, %s1927
                $region148: #{_lambda_.3} parent=142 // loop_footer
                  %s1789 = sadd.s32 %s1787, 1
                $region149: #{_lambda_.3} parent=142 // loop_footer_branch
                  %1786 = sbr.rel target = $region145
                $region150: #{_lambda_.3} parent=142 // loop_exit
                  _
                %s1930 = sshrl.u32 %s1782, 6
                %s1931 = sand.u32 %s1782, 63
                %s1932 = smul.u32 %s1930, 64
                %s1933 = smul.u32 128, %s1932
                %s1934 = sshra.s32 %s1933, 4
                %s1935 = scalar_lea.vmem %s1557, %s1934 [#allocation3]
                %s1936 = smul.u32 128, %s1932
                %s1937 = sshra.s32 %s1936, 4
                %s1938 = scalar_lea.vmem %s1568, %s1937
                // While loop
                $region151: #{_lambda_.3} parent=142 // loop_pre_header
                  _
                $region152: #{_lambda_.3} parent=142 // loop_header
                  %s1942 = sphi 0, %s1944
                  %p1943 = scmp.ge.s32.totalorder %s1942, %s1931
                  %s1947 = sphi 0, %s1954
                  %s1948 = sphi %s1935, %s1957
                  %s1949 = sphi %s1938, %s1958
                $region153: #{_lambda_.3} parent=142 // loop_header_branch
                  %1946 = sbr.rel (%p1943) target = $region157
                $region154: #{_lambda_.3} parent=142 // loop_body
                  %v1950 = vld [vmem:[%s1948] sm:$0xff]
                  %1951 = vst [vmem:[%s1949] sm:$0xff] %v1950
                  %s1952 = sadd.s32 1, %s1947
                  %p1953 = scmp.ge.s32.totalorder %s1952, %s1931
                  %s1954 = scalar_select %p1953, 0, %s1952
                  %s1955 = smul.u32 %s1954, 8
                  %s1956 = smul.u32 %s1954, 8
                  %s1957 = scalar_lea.vmem %s1935, %s1955 [#allocation3]
                  %s1958 = scalar_lea.vmem %s1938, %s1956
                $region155: #{_lambda_.3} parent=142 // loop_footer
                  %s1944 = sadd.s32 %s1942, 1
                $region156: #{_lambda_.3} parent=142 // loop_footer_branch
                  %1941 = sbr.rel target = $region152
                $region157: #{_lambda_.3} parent=142 // loop_exit
                  _
                %s1959 = sshll.u32 1, %s1777
                %s1960 = ssub.s32 %s1959, 1
                loop: start=0, step=1, limit=1
                $region158: #{_lambda_.3} parent=142 // loop_pre_header
                  _
                $region159: #{_lambda_.3} parent=142 // loop_header
                  %s1962 = sphi 0, %s1966
                  %p1963 = scmp.ge.s32.totalorder %s1962, 1
                  %s1967 = sphi %s1779, %s1779
                  %s1968 = sphi %s1781, %s1781
                $region160: #{_lambda_.3} parent=142 // loop_header_branch
                  %1965 = sbr.rel (%p1963) target = $region164
                $region161: #{_lambda_.3} parent=142 // loop_body
                  %v1969 = vld [vmem:[%s1967] sm:%s1960]
                  %1970 = vst [vmem:[%s1968] sm:%s1960] %v1969
                $region162: #{_lambda_.3} parent=142 // loop_footer
                  %s1966 = sadd.s32 1, %s1962
                $region163: #{_lambda_.3} parent=142 // loop_footer_branch
                  %1961 = sbr.rel target = $region159
                $region164: #{_lambda_.3} parent=142 // loop_exit
                  _
              $region143: #{_lambda_.3} parent=109 // pred_fallthru
                _
            $region110: #{_lambda_.3} parent=105 // pred_fallthru
              _
            // Predicated region
            $region111: #{_lambda_.3} parent=105 // pred_check
              %p1577 = pneg %p1573
            $region112: #{_lambda_.3} parent=105 // pred_check_branch
              %1579 = sbr.rel (%p1577) target = $region114
            $region113: #{_lambda_.3} parent=105 // pred_region
              %s1580 = sshll.u32 1, %s1569
              %s1581 = ssub.s32 %s1580, 1
              loop: start=0, step=1, limit=1
              $region115: #{_lambda_.3} parent=113 // loop_pre_header
                _
              $region116: #{_lambda_.3} parent=113 // loop_header
                %s1583 = sphi 0, %s1587
                %p1584 = scmp.ge.s32.totalorder %s1583, 1
                %s1588 = sphi %s1557, %s1557
                %s1589 = sphi %s1568, %s1568
              $region117: #{_lambda_.3} parent=113 // loop_header_branch
                %1586 = sbr.rel (%p1584) target = $region121
              $region118: #{_lambda_.3} parent=113 // loop_body
                %v1590 = vld [vmem:[%s1588] sm:%s1581]
                %1591 = vst [vmem:[%s1589] sm:%s1581] %v1590
              $region119: #{_lambda_.3} parent=113 // loop_footer
                %s1587 = sadd.s32 1, %s1583
              $region120: #{_lambda_.3} parent=113 // loop_footer_branch
                %1582 = sbr.rel target = $region116
              $region121: #{_lambda_.3} parent=113 // loop_exit
                _
            $region114: #{_lambda_.3} parent=105 // pred_fallthru
              _
          $region106: #{_lambda_.3} parent=101 // pred_fallthru
            _
          %1971 = vnop
        $region102: #{_lambda_.3} parent=93 // pred_fallthru
          _
      $region94: #{_lambda_.3} parent=5 // pred_fallthru
        _
      %p1972 = scmp.le.s32.totalorder 2, %s9
      // Predicated region
      $region165: #{_lambda_.3} parent=5 // pred_check
        %p1973 = pneg %p1972
      $region166: #{_lambda_.3} parent=5 // pred_check_branch
        %1975 = sbr.rel (%p1973) target = $region168
      $region167: #{_lambda_.3} parent=5 // pred_region
        %s1976 = ssub.s32 %s9, 2
        // Predicated region
        $region169: #{_lambda_.3} parent=167 // pred_check
          %p1977 = pneg %p106
        $region170: #{_lambda_.3} parent=167 // pred_check_branch
          %1979 = sbr.rel (%p1977) target = $region172
        $region171: #{_lambda_.3} parent=167 // pred_region
          %s1980 = sand.u32 %s91, 1
          %s1981 = sand.u32 %s91, 1
          %s1982 = smul.addr %s1981, 72
          %s1983 = scalar_lea.vmem [#allocation3], %s1982
        $region172: #{_lambda_.3} parent=167 // pred_fallthru
          _
      $region168: #{_lambda_.3} parent=5 // pred_fallthru
        _
    $region6: #{_lambda_.3} parent=1 // loop_footer
      %s13 = sadd.s32 1, %s9
    $region7: #{_lambda_.3} parent=1 // loop_footer_branch
      %8 = sbr.rel target = $region3
    $region8: #{_lambda_.3} parent=1 // loop_exit
      _

// kernel: _lambda_.4
$region0: #{_lambda_.4}
  #allocation0 [shape = 'u32[]', space=smem, size = 0x4, offset = 0x4, fixed_abs, tag = 'smem constant byte address 0x4 - core index']
  #allocation1 [shape = 'u32[144,128]{1,0:T(1,128)}', space=vmem, size = 0x12000, scoped, tag = 'internal scratch']
  %s0 = inlined_call_operand.vmem [shape: bf16[72,1058], index: 0, kind: input, shape index: {}]
  %s1 = inlined_call_operand.vmem [shape: bf16[16,72], index: 1, kind: input, shape index: {}]
  %s2 = inlined_call_operand.vmem [shape: f32[16,1], index: 2, kind: input, shape index: {}]
  %s3 = inlined_call_operand.vmem [shape: bf16[16,1058], index: 3, kind: output, shape index: {}]
  %s4 = sld [smem:[#allocation0]]
  $region22: #{_lambda_.4} parent=0
    _
  %s6 = ssub.s32 1, %s4
  %s7 = scalar_select 0, %s6, %s4
  // Predicated region
  $region2: #{_lambda_.4} parent=0 // pred_check
    _
  $region3: #{_lambda_.4} parent=0 // pred_check_branch
    %9 = sbr.rel (0) target = $region5
  $region4: #{_lambda_.4} parent=0 // pred_region
    _
  $region5: #{_lambda_.4} parent=0 // pred_fallthru
    _
  // Predicated region
  $region6: #{_lambda_.4} parent=0 // pred_check
    _
  $region7: #{_lambda_.4} parent=0 // pred_check_branch
    %11 = sbr.rel (0) target = $region9
  $region8: #{_lambda_.4} parent=0 // pred_region
    _
  $region9: #{_lambda_.4} parent=0 // pred_fallthru
    _
  // Predicated region
  $region10: #{_lambda_.4} parent=0 // pred_check
    _
  $region11: #{_lambda_.4} parent=0 // pred_check_branch
    %13 = sbr.rel (0) target = $region13
  $region12: #{_lambda_.4} parent=0 // pred_region
    _
  $region13: #{_lambda_.4} parent=0 // pred_fallthru
    _
  %v15 = vld [vmem:[%s1] sm:$0xf]
  %v16 = vld [vmem:[%s1 + $0x4] sm:$0xf]
  %v17 = vld [vmem:[%s0] sm:$0xff]
  %v18 = vld [vmem:[%s0 + $0x8] sm:$0xff]
  %v19 = vld [vmem:[%s0 + $0x10] sm:$0xff]
  %v20 = vld [vmem:[%s0 + $0x18] sm:$0xff]
  %v21 = vld [vmem:[%s0 + $0x20] sm:$0xf]
  %v22 = vld [vmem:[%s0 + $0x24] sm:$0xff]
  %v23 = vld [vmem:[%s0 + $0x2c] sm:$0xff]
  %v24 = vld [vmem:[%s0 + $0x34] sm:$0xff]
  %v25 = vld [vmem:[%s0 + $0x3c] sm:$0xff]
  %v26 = vld [vmem:[%s0 + $0x44] sm:$0xf]
  %v27 = vld [vmem:[%s0 + $0x48] sm:$0xff]
  %v28 = vld [vmem:[%s0 + $0x50] sm:$0xff]
  %v29 = vld [vmem:[%s0 + $0x58] sm:$0xff]
  %v30 = vld [vmem:[%s0 + $0x60] sm:$0xff]
  %v31 = vld [vmem:[%s0 + $0x68] sm:$0xf]
  %v32 = vld [vmem:[%s0 + $0x6c] sm:$0xff]
  %v33 = vld [vmem:[%s0 + $0x74] sm:$0xff]
  %v34 = vld [vmem:[%s0 + $0x7c] sm:$0xff]
  %v35 = vld [vmem:[%s0 + $0x84] sm:$0xff]
  %v36 = vld [vmem:[%s0 + $0x8c] sm:$0xf]
  %v37 = vld [vmem:[%s0 + $0x90] sm:$0xff]
  %v38 = vld [vmem:[%s0 + $0x98] sm:$0xff]
  %v39 = vld [vmem:[%s0 + $0xa0] sm:$0xff]
  %v40 = vld [vmem:[%s0 + $0xa8] sm:$0xff]
  %v41 = vld [vmem:[%s0 + $0xb0] sm:$0xf]
  %v42 = vld [vmem:[%s0 + $0xb4] sm:$0xff]
  %v43 = vld [vmem:[%s0 + $0xbc] sm:$0xff]
  %v44 = vld [vmem:[%s0 + $0xc4] sm:$0xff]
  %v45 = vld [vmem:[%s0 + $0xcc] sm:$0xff]
  %v46 = vld [vmem:[%s0 + $0xd4] sm:$0xf]
  %v47 = vld [vmem:[%s0 + $0xd8] sm:$0xff]
  %v48 = vld [vmem:[%s0 + $0xe0] sm:$0xff]
  %v49 = vld [vmem:[%s0 + $0xe8] sm:$0xff]
  %v50 = vld [vmem:[%s0 + $0xf0] sm:$0xff]
  %v51 = vld [vmem:[%s0 + $0xf8] sm:$0xf]
  %v52 = vld [vmem:[%s0 + $0xfc] sm:$0xff]
  %v53 = vld [vmem:[%s0 + $0x104] sm:$0xff]
  %v54 = vld [vmem:[%s0 + $0x10c] sm:$0xff]
  %v55 = vld [vmem:[%s0 + $0x114] sm:$0xff]
  %v56 = vld [vmem:[%s0 + $0x11c] sm:$0xf]
  %v57 = vld [vmem:[%s0 + $0x120] sm:$0xff]
  %v58 = vld [vmem:[%s0 + $0x128] sm:$0xff]
  %v59 = vld [vmem:[%s0 + $0x130] sm:$0xff]
  %v60 = vld [vmem:[%s0 + $0x138] sm:$0xff]
  %v61 = vld [vmem:[%s0 + $0x140] sm:$0xf]
  %v62 = vld [vmem:[%s2] sm:$0xff]
  %v63 = vld [vmem:[%s2 + $0x8] sm:$0xff]
  %65 = vset.pattern.permute.xlu0 0
  %66 = vperm.xlu0 %65, %v62
  %v67 = vpop.permute.xlu0 %66
  %70 = vset.pattern.permute.xlu0 0
  %71 = vperm.xlu0 %70, %v63
  %v72 = vpop.permute.xlu0 %71
  %v76 = vunpack.c.l.b16 %v15
  %v77 = vunpack.c.l.b16 %v16
  %v78 = vpack.c.b16 %v77, %v76
  %v124 = vunpack.c.l.b16 %v17
  %v125 = vunpack.c.h.b16 %v17
  %v126 = vunpack.c.l.b16 %v18
  %v127 = vunpack.c.h.b16 %v18
  %v128 = vunpack.c.l.b16 %v19
  %v129 = vunpack.c.h.b16 %v19
  %v130 = vunpack.c.l.b16 %v20
  %v131 = vunpack.c.h.b16 %v20
  %v132 = vunpack.c.l.b16 %v21
  %v133 = vunpack.c.l.b16 %v22
  %v134 = vunpack.c.h.b16 %v22
  %v135 = vunpack.c.l.b16 %v23
  %v136 = vunpack.c.h.b16 %v23
  %v137 = vunpack.c.l.b16 %v24
  %v138 = vunpack.c.h.b16 %v24
  %v139 = vunpack.c.l.b16 %v25
  %v140 = vunpack.c.h.b16 %v25
  %v141 = vunpack.c.l.b16 %v26
  %v142 = vunpack.c.l.b16 %v27
  %v143 = vunpack.c.h.b16 %v27
  %v144 = vunpack.c.l.b16 %v28
  %v145 = vunpack.c.h.b16 %v28
  %v146 = vunpack.c.l.b16 %v29
  %v147 = vunpack.c.h.b16 %v29
  %v148 = vunpack.c.l.b16 %v30
  %v149 = vunpack.c.h.b16 %v30
  %v150 = vunpack.c.l.b16 %v31
  %v151 = vunpack.c.l.b16 %v32
  %v152 = vunpack.c.h.b16 %v32
  %v153 = vunpack.c.l.b16 %v33
  %v154 = vunpack.c.h.b16 %v33
  %v155 = vunpack.c.l.b16 %v34
  %v156 = vunpack.c.h.b16 %v34
  %v157 = vunpack.c.l.b16 %v35
  %v158 = vunpack.c.h.b16 %v35
  %v159 = vunpack.c.l.b16 %v36
  %v160 = vunpack.c.l.b16 %v37
  %v161 = vunpack.c.h.b16 %v37
  %v162 = vunpack.c.l.b16 %v38
  %v163 = vunpack.c.h.b16 %v38
  %v164 = vunpack.c.l.b16 %v39
  %v165 = vunpack.c.h.b16 %v39
  %v166 = vunpack.c.l.b16 %v40
  %v167 = vunpack.c.h.b16 %v40
  %v168 = vunpack.c.l.b16 %v41
  %v169 = vunpack.c.l.b16 %v42
  %v170 = vunpack.c.h.b16 %v42
  %v171 = vunpack.c.l.b16 %v43
  %v172 = vunpack.c.h.b16 %v43
  %v173 = vunpack.c.l.b16 %v44
  %v174 = vunpack.c.h.b16 %v44
  %v175 = vunpack.c.l.b16 %v45
  %v176 = vunpack.c.h.b16 %v45
  %v177 = vunpack.c.l.b16 %v46
  %v178 = vunpack.c.l.b16 %v47
  %v179 = vunpack.c.h.b16 %v47
  %v180 = vunpack.c.l.b16 %v48
  %v181 = vunpack.c.h.b16 %v48
  %v182 = vunpack.c.l.b16 %v49
  %v183 = vunpack.c.h.b16 %v49
  %v184 = vunpack.c.l.b16 %v50
  %v185 = vunpack.c.h.b16 %v50
  %v186 = vunpack.c.l.b16 %v51
  %v187 = vunpack.c.l.b16 %v52
  %v188 = vunpack.c.h.b16 %v52
  %v189 = vunpack.c.l.b16 %v53
  %v190 = vunpack.c.h.b16 %v53
  %v191 = vunpack.c.l.b16 %v54
  %v192 = vunpack.c.h.b16 %v54
  %v193 = vunpack.c.l.b16 %v55
  %v194 = vunpack.c.h.b16 %v55
  %v195 = vunpack.c.l.b16 %v56
  %v196 = vunpack.c.l.b16 %v57
  %v197 = vunpack.c.h.b16 %v57
  %v198 = vunpack.c.l.b16 %v58
  %v199 = vunpack.c.h.b16 %v58
  %v200 = vunpack.c.l.b16 %v59
  %v201 = vunpack.c.h.b16 %v59
  %v202 = vunpack.c.l.b16 %v60
  %v203 = vunpack.c.h.b16 %v60
  %v204 = vunpack.c.l.b16 %v61
  %v205 = vpack.c.b16 %v133, %v124
  %v206 = vpack.c.b16 %v134, %v125
  %v207 = vpack.c.b16 %v135, %v126
  %v208 = vpack.c.b16 %v136, %v127
  %v209 = vpack.c.b16 %v137, %v128
  %v210 = vpack.c.b16 %v138, %v129
  %v211 = vpack.c.b16 %v139, %v130
  %v212 = vpack.c.b16 %v140, %v131
  %v213 = vpack.c.b16 %v141, %v132
  %v214 = vpack.c.b16 %v151, %v142
  %v215 = vpack.c.b16 %v152, %v143
  %v216 = vpack.c.b16 %v153, %v144
  %v217 = vpack.c.b16 %v154, %v145
  %v218 = vpack.c.b16 %v155, %v146
  %v219 = vpack.c.b16 %v156, %v147
  %v220 = vpack.c.b16 %v157, %v148
  %v221 = vpack.c.b16 %v158, %v149
  %v222 = vpack.c.b16 %v159, %v150
  %v223 = vpack.c.b16 %v169, %v160
  %v224 = vpack.c.b16 %v170, %v161
  %v225 = vpack.c.b16 %v171, %v162
  %v226 = vpack.c.b16 %v172, %v163
  %v227 = vpack.c.b16 %v173, %v164
  %v228 = vpack.c.b16 %v174, %v165
  %v229 = vpack.c.b16 %v175, %v166
  %v230 = vpack.c.b16 %v176, %v167
  %v231 = vpack.c.b16 %v177, %v168
  %v232 = vpack.c.b16 %v187, %v178
  %v233 = vpack.c.b16 %v188, %v179
  %v234 = vpack.c.b16 %v189, %v180
  %v235 = vpack.c.b16 %v190, %v181
  %v236 = vpack.c.b16 %v191, %v182
  %v237 = vpack.c.b16 %v192, %v183
  %v238 = vpack.c.b16 %v193, %v184
  %v239 = vpack.c.b16 %v194, %v185
  %v240 = vpack.c.b16 %v195, %v186
  %v241 = vpack.c.b16 %v196, %v196
  %v242 = vpack.c.b16 %v197, %v197
  %v243 = vpack.c.b16 %v198, %v198
  %v244 = vpack.c.b16 %v199, %v199
  %v245 = vpack.c.b16 %v200, %v200
  %v246 = vpack.c.b16 %v201, %v201
  %v247 = vpack.c.b16 %v202, %v202
  %v248 = vpack.c.b16 %v203, %v203
  %v249 = vpack.c.b16 %v204, %v204
  %vm286 = vcmask 588800
  %v288 = vsel %vm286, %v78, 0
  %vm290 = vcmask 1043456
  %v292 = vsel %vm290, %v241, 0
  %v295 = vsel %vm290, %v242, 0
  %v298 = vsel %vm290, %v243, 0
  %v301 = vsel %vm290, %v244, 0
  %v304 = vsel %vm290, %v245, 0
  %v307 = vsel %vm290, %v246, 0
  %v310 = vsel %vm290, %v247, 0
  %v313 = vsel %vm290, %v248, 0
  %v316 = vsel %vm290, %v249, 0
  %318 = vmatprep.subr.bf16.mxu0 0
  %319 = vmatpush1.bf16.msra.mxu0 0
  %320 = vmatprep.subr.bf16.mxu0 0
  %321 = vmatpush1.bf16.msra.mxu0 0
  %322 = vmatprep.subr.bf16.mxu0 0
  %323 = vmatpush1.bf16.msra.mxu0 0
  %324 = vmatprep.subr.bf16.mxu0 %v295
  %325 = vmatpush1.bf16.msra.mxu0 %v292
  %326 = vmatprep.subr.bf16.mxu0 %v233
  %327 = vmatpush1.bf16.msra.mxu0 %v232
  %328 = vmatprep.subr.bf16.mxu0 %v224
  %329 = vmatpush1.bf16.msra.mxu0 %v223
  %330 = vmatprep.subr.bf16.mxu0 %v215
  %331 = vmatpush1.bf16.msra.mxu0 %v214
  %332 = vmatprep.subr.bf16.mxu0 %v206
  %333 = vmatpush1.bf16.msra.mxu0 %v205
  %334 = vmatprep.subr.bf16.mxu0 0
  %335 = vmatpush2.bf16.msra.mxu0 0
  %336 = vmatprep.subr.bf16.mxu0 0
  %337 = vmatpush2.bf16.msra.mxu0 0
  %338 = vmatprep.subr.bf16.mxu0 0
  %339 = vmatpush2.bf16.msra.mxu0 0
  %340 = vmatprep.subr.bf16.mxu0 0
  %341 = vmatpush2.bf16.msra.mxu0 0
  %342 = vmatprep.subr.bf16.mxu0 0
  %343 = vmatpush2.bf16.msra.mxu0 0
  %344 = vmatprep.subr.bf16.mxu0 0
  %345 = vmatpush2.bf16.msra.mxu0 0
  %346 = vmatprep.subr.bf16.mxu0 0
  %347 = vmatpush2.bf16.msra.mxu0 0
  %348 = vmatprep.subr.bf16.mxu0 0
  %349 = vmatpush2.bf16.msra.mxu0 0
  %350 = vmatprep.mubr.bf16.mxu0 0
  %351 = vmatmul.mubr.bf16.gmra.mxu0 %v288
  %v352 = vpop.f32.mrf.mxu0
  %v353 = vadd.f32 %v67, %v352
  %v354 = vpop.f32.mrf.mxu0
  %v355 = vadd.f32 %v67, %v354
  %v356 = vpop.f32.mrf.mxu0
  %v357 = vadd.f32 %v72, %v356
  %v358 = vpop.f32.mrf.mxu0
  %v359 = vadd.f32 %v72, %v358
  %360 = vdwg.mxu0
  %361 = vmatprep.subr.bf16.mxu0 0
  %362 = vmatpush1.bf16.msra.mxu0 0
  %363 = vmatprep.subr.bf16.mxu0 0
  %364 = vmatpush1.bf16.msra.mxu0 0
  %365 = vmatprep.subr.bf16.mxu0 0
  %366 = vmatpush1.bf16.msra.mxu0 0
  %367 = vmatprep.subr.bf16.mxu0 %v301
  %368 = vmatpush1.bf16.msra.mxu0 %v298
  %369 = vmatprep.subr.bf16.mxu0 %v235
  %370 = vmatpush1.bf16.msra.mxu0 %v234
  %371 = vmatprep.subr.bf16.mxu0 %v226
  %372 = vmatpush1.bf16.msra.mxu0 %v225
  %373 = vmatprep.subr.bf16.mxu0 %v217
  %374 = vmatpush1.bf16.msra.mxu0 %v216
  %375 = vmatprep.subr.bf16.mxu0 %v208
  %376 = vmatpush1.bf16.msra.mxu0 %v207
  %377 = vmatprep.subr.bf16.mxu0 0
  %378 = vmatpush2.bf16.msra.mxu0 0
  %379 = vmatprep.subr.bf16.mxu0 0
  %380 = vmatpush2.bf16.msra.mxu0 0
  %381 = vmatprep.subr.bf16.mxu0 0
  %382 = vmatpush2.bf16.msra.mxu0 0
  %383 = vmatprep.subr.bf16.mxu0 0
  %384 = vmatpush2.bf16.msra.mxu0 0
  %385 = vmatprep.subr.bf16.mxu0 0
  %386 = vmatpush2.bf16.msra.mxu0 0
  %387 = vmatprep.subr.bf16.mxu0 0
  %388 = vmatpush2.bf16.msra.mxu0 0
  %389 = vmatprep.subr.bf16.mxu0 0
  %390 = vmatpush2.bf16.msra.mxu0 0
  %391 = vmatprep.subr.bf16.mxu0 0
  %392 = vmatpush2.bf16.msra.mxu0 0
  %393 = vmatprep.mubr.bf16.mxu0 0
  %394 = vmatmul.mubr.bf16.gmra.mxu0 %v288
  %v395 = vpop.f32.mrf.mxu0
  %v396 = vadd.f32 %v67, %v395
  %v397 = vpop.f32.mrf.mxu0
  %v398 = vadd.f32 %v67, %v397
  %v399 = vpop.f32.mrf.mxu0
  %v400 = vadd.f32 %v72, %v399
  %v401 = vpop.f32.mrf.mxu0
  %v402 = vadd.f32 %v72, %v401
  %403 = vdwg.mxu0
  %404 = vmatprep.subr.bf16.mxu0 0
  %405 = vmatpush1.bf16.msra.mxu0 0
  %406 = vmatprep.subr.bf16.mxu0 0
  %407 = vmatpush1.bf16.msra.mxu0 0
  %408 = vmatprep.subr.bf16.mxu0 0
  %409 = vmatpush1.bf16.msra.mxu0 0
  %410 = vmatprep.subr.bf16.mxu0 %v307
  %411 = vmatpush1.bf16.msra.mxu0 %v304
  %412 = vmatprep.subr.bf16.mxu0 %v237
  %413 = vmatpush1.bf16.msra.mxu0 %v236
  %414 = vmatprep.subr.bf16.mxu0 %v228
  %415 = vmatpush1.bf16.msra.mxu0 %v227
  %416 = vmatprep.subr.bf16.mxu0 %v219
  %417 = vmatpush1.bf16.msra.mxu0 %v218
  %418 = vmatprep.subr.bf16.mxu0 %v210
  %419 = vmatpush1.bf16.msra.mxu0 %v209
  %420 = vmatprep.subr.bf16.mxu0 0
  %421 = vmatpush2.bf16.msra.mxu0 0
  %422 = vmatprep.subr.bf16.mxu0 0
  %423 = vmatpush2.bf16.msra.mxu0 0
  %424 = vmatprep.subr.bf16.mxu0 0
  %425 = vmatpush2.bf16.msra.mxu0 0
  %426 = vmatprep.subr.bf16.mxu0 0
  %427 = vmatpush2.bf16.msra.mxu0 0
  %428 = vmatprep.subr.bf16.mxu0 0
  %429 = vmatpush2.bf16.msra.mxu0 0
  %430 = vmatprep.subr.bf16.mxu0 0
  %431 = vmatpush2.bf16.msra.mxu0 0
  %432 = vmatprep.subr.bf16.mxu0 0
  %433 = vmatpush2.bf16.msra.mxu0 0
  %434 = vmatprep.subr.bf16.mxu0 0
  %435 = vmatpush2.bf16.msra.mxu0 0
  %436 = vmatprep.mubr.bf16.mxu0 0
  %437 = vmatmul.mubr.bf16.gmra.mxu0 %v288
  %v438 = vpop.f32.mrf.mxu0
  %v439 = vadd.f32 %v67, %v438
  %v440 = vpop.f32.mrf.mxu0
  %v441 = vadd.f32 %v67, %v440
  %v442 = vpop.f32.mrf.mxu0
  %v443 = vadd.f32 %v72, %v442
  %v444 = vpop.f32.mrf.mxu0
  %v445 = vadd.f32 %v72, %v444
  %446 = vdwg.mxu0
  %447 = vmatprep.subr.bf16.mxu0 0
  %448 = vmatpush1.bf16.msra.mxu0 0
  %449 = vmatprep.subr.bf16.mxu0 0
  %450 = vmatpush1.bf16.msra.mxu0 0
  %451 = vmatprep.subr.bf16.mxu0 0
  %452 = vmatpush1.bf16.msra.mxu0 0
  %453 = vmatprep.subr.bf16.mxu0 %v313
  %454 = vmatpush1.bf16.msra.mxu0 %v310
  %455 = vmatprep.subr.bf16.mxu0 %v239
  %456 = vmatpush1.bf16.msra.mxu0 %v238
  %457 = vmatprep.subr.bf16.mxu0 %v230
  %458 = vmatpush1.bf16.msra.mxu0 %v229
  %459 = vmatprep.subr.bf16.mxu0 %v221
  %460 = vmatpush1.bf16.msra.mxu0 %v220
  %461 = vmatprep.subr.bf16.mxu0 %v212
  %462 = vmatpush1.bf16.msra.mxu0 %v211
  %463 = vmatprep.subr.bf16.mxu0 0
  %464 = vmatpush2.bf16.msra.mxu0 0
  %465 = vmatprep.subr.bf16.mxu0 0
  %466 = vmatpush2.bf16.msra.mxu0 0
  %467 = vmatprep.subr.bf16.mxu0 0
  %468 = vmatpush2.bf16.msra.mxu0 0
  %469 = vmatprep.subr.bf16.mxu0 0
  %470 = vmatpush2.bf16.msra.mxu0 0
  %471 = vmatprep.subr.bf16.mxu0 0
  %472 = vmatpush2.bf16.msra.mxu0 0
  %473 = vmatprep.subr.bf16.mxu0 0
  %474 = vmatpush2.bf16.msra.mxu0 0
  %475 = vmatprep.subr.bf16.mxu0 0
  %476 = vmatpush2.bf16.msra.mxu0 0
  %477 = vmatprep.subr.bf16.mxu0 0
  %478 = vmatpush2.bf16.msra.mxu0 0
  %479 = vmatprep.mubr.bf16.mxu0 0
  %480 = vmatmul.mubr.bf16.gmra.mxu0 %v288
  %v481 = vpop.f32.mrf.mxu0
  %v482 = vadd.f32 %v67, %v481
  %v483 = vpop.f32.mrf.mxu0
  %v484 = vadd.f32 %v67, %v483
  %v485 = vpop.f32.mrf.mxu0
  %v486 = vadd.f32 %v72, %v485
  %v487 = vpop.f32.mrf.mxu0
  %v488 = vadd.f32 %v72, %v487
  %489 = vdwg.mxu0
  %490 = vmatprep.subr.bf16.mxu0 0
  %491 = vmatpush1.bf16.msra.mxu0 0
  %492 = vmatprep.subr.bf16.mxu0 0
  %493 = vmatpush1.bf16.msra.mxu0 0
  %494 = vmatprep.subr.bf16.mxu0 0
  %495 = vmatpush1.bf16.msra.mxu0 0
  %496 = vmatprep.subr.bf16.mxu0 0
  %497 = vmatpush1.bf16.msra.mxu0 %v316
  %498 = vmatprep.subr.bf16.mxu0 0
  %499 = vmatpush1.bf16.msra.mxu0 %v240
  %500 = vmatprep.subr.bf16.mxu0 0
  %501 = vmatpush1.bf16.msra.mxu0 %v231
  %502 = vmatprep.subr.bf16.mxu0 0
  %503 = vmatpush1.bf16.msra.mxu0 %v222
  %504 = vmatprep.subr.bf16.mxu0 0
  %505 = vmatpush1.bf16.msra.mxu0 %v213
  %506 = vmatprep.subr.bf16.mxu0 0
  %507 = vmatpush2.bf16.msra.mxu0 0
  %508 = vmatprep.subr.bf16.mxu0 0
  %509 = vmatpush2.bf16.msra.mxu0 0
  %510 = vmatprep.subr.bf16.mxu0 0
  %511 = vmatpush2.bf16.msra.mxu0 0
  %512 = vmatprep.subr.bf16.mxu0 0
  %513 = vmatpush2.bf16.msra.mxu0 0
  %514 = vmatprep.subr.bf16.mxu0 0
  %515 = vmatpush2.bf16.msra.mxu0 0
  %516 = vmatprep.subr.bf16.mxu0 0
  %517 = vmatpush2.bf16.msra.mxu0 0
  %518 = vmatprep.subr.bf16.mxu0 0
  %519 = vmatpush2.bf16.msra.mxu0 0
  %520 = vmatprep.subr.bf16.mxu0 0
  %521 = vmatpush2.bf16.msra.mxu0 0
  %522 = vmatprep.mubr.bf16.mxu0 0
  %523 = vmatmul.mubr.bf16.gmra.mxu0 %v288
  %v524 = vpop.f32.mrf.mxu0
  %v525 = vadd.f32 %v67, %v524
  %v526 = vpop.f32.mrf.mxu0
  %v527 = vpop.f32.mrf.mxu0
  %v528 = vadd.f32 %v72, %v527
  %v529 = vpop.f32.mrf.mxu0
  %530 = vdwg.mxu0
  %v531 = vmax.f32 %v353, 0.0
  %v532 = vmax.f32 %v355, 0.0
  %v533 = vmax.f32 %v396, 0.0
  %v534 = vmax.f32 %v398, 0.0
  %v535 = vmax.f32 %v439, 0.0
  %v536 = vmax.f32 %v441, 0.0
  %v537 = vmax.f32 %v482, 0.0
  %v538 = vmax.f32 %v484, 0.0
  %v539 = vmax.f32 %v525, 0.0
  %v540 = vmax.f32 %v357, 0.0
  %v541 = vmax.f32 %v359, 0.0
  %v542 = vmax.f32 %v400, 0.0
  %v543 = vmax.f32 %v402, 0.0
  %v544 = vmax.f32 %v443, 0.0
  %v545 = vmax.f32 %v445, 0.0
  %v546 = vmax.f32 %v486, 0.0
  %v547 = vmax.f32 %v488, 0.0
  %v548 = vmax.f32 %v528, 0.0
  %v549 = vpack.c.bf16 %v540, %v531
  %v550 = vpack.c.bf16 %v541, %v532
  %v551 = vpack.c.bf16 %v542, %v533
  %v552 = vpack.c.bf16 %v543, %v534
  %v553 = vpack.c.bf16 %v544, %v535
  %v554 = vpack.c.bf16 %v545, %v536
  %v555 = vpack.c.bf16 %v546, %v537
  %v556 = vpack.c.bf16 %v547, %v538
  %v557 = vpack.c.bf16 %v548, %v539
  %v567 = vunpack.c.l.b16 %v549
  %v568 = vunpack.c.l.b16 %v550
  %v569 = vunpack.c.l.b16 %v551
  %v570 = vunpack.c.l.b16 %v552
  %v571 = vunpack.c.l.b16 %v553
  %v572 = vunpack.c.l.b16 %v554
  %v573 = vunpack.c.l.b16 %v555
  %v574 = vunpack.c.l.b16 %v556
  %v575 = vunpack.c.l.b16 %v557
  %v576 = vunpack.c.h.b16 %v549
  %v577 = vunpack.c.h.b16 %v550
  %v578 = vunpack.c.h.b16 %v551
  %v579 = vunpack.c.h.b16 %v552
  %v580 = vunpack.c.h.b16 %v553
  %v581 = vunpack.c.h.b16 %v554
  %v582 = vunpack.c.h.b16 %v555
  %v583 = vunpack.c.h.b16 %v556
  %v584 = vunpack.c.h.b16 %v557
  %v585 = vpack.c.b16 %v568, %v567
  %v586 = vpack.c.b16 %v570, %v569
  %v587 = vpack.c.b16 %v572, %v571
  %v588 = vpack.c.b16 %v574, %v573
  %v589 = vpack.c.b16 %v575, %v575
  %v590 = vpack.c.b16 %v577, %v576
  %v591 = vpack.c.b16 %v579, %v578
  %v592 = vpack.c.b16 %v581, %v580
  %v593 = vpack.c.b16 %v583, %v582
  %v594 = vpack.c.b16 %v584, %v584
  %605 = vst [vmem:[%s3] sm:$0xff] %v585
  %606 = vst [vmem:[%s3 + $0x8] sm:$0xff] %v586
  %607 = vst [vmem:[%s3 + $0x10] sm:$0xff] %v587
  %608 = vst [vmem:[%s3 + $0x18] sm:$0xff] %v588
  %vm609 = vcmask 273408
  %610 = vst.msk [vmem:[%s3 + $0x20] sm:$0xf] %vm609, %v589
  %611 = vst [vmem:[%s3 + $0x24] sm:$0xff] %v590
  %612 = vst [vmem:[%s3 + $0x2c] sm:$0xff] %v591
  %613 = vst [vmem:[%s3 + $0x34] sm:$0xff] %v592
  %614 = vst [vmem:[%s3 + $0x3c] sm:$0xff] %v593
  %615 = vst.msk [vmem:[%s3 + $0x44] sm:$0xf] %vm609, %v594
  // Predicated region
  $region14: #{_lambda_.4} parent=0 // pred_check
    _
  $region15: #{_lambda_.4} parent=0 // pred_check_branch
    %617 = sbr.rel (0) target = $region17
  $region16: #{_lambda_.4} parent=0 // pred_region
    _
  $region17: #{_lambda_.4} parent=0 // pred_fallthru
    _
  // Predicated region
  $region18: #{_lambda_.4} parent=0 // pred_check
    _
  $region19: #{_lambda_.4} parent=0 // pred_check_branch
    %619 = sbr.rel (0) target = $region21
  $region20: #{_lambda_.4} parent=0 // pred_region
    _
  $region21: #{_lambda_.4} parent=0 // pred_fallthru
    _

// kernel: _lambda_.5
$region0: #{_lambda_.5}
  #allocation0 [shape = 'u32[]', space=smem, size = 0x4, offset = 0x4, fixed_abs, tag = 'smem constant byte address 0x4 - core index']
  #allocation1 [shape = 'u32[144,128]{1,0:T(1,128)}', space=vmem, size = 0x12000, scoped, tag = 'internal scratch']
  #allocation2 [shape = 'f32[1,1]{1,0:T(1,128)S(1)}', space=vmem, size = 0x200, scoped, tag = 'scoped memory for _lambda_.5']
  %s0 = inlined_call_operand.vmem [shape: bf16[242,144], index: 0, kind: input, shape index: {}]
  %s1 = inlined_call_operand.vmem [shape: bf16[144,32], index: 1, kind: input, shape index: {}]
  %s2 = inlined_call_operand.vmem [shape: f32[1,32], index: 2, kind: input, shape index: {}]
  %s3 = inlined_call_operand.vmem [shape: bf16[9,50,242], index: 3, kind: input, shape index: {}]
  %s4 = inlined_call_operand.vmem [shape: bf16[288,64], index: 4, kind: input, shape index: {}]
  %s5 = inlined_call_operand.vmem [shape: f32[1,64], index: 5, kind: input, shape index: {}]
  %s6 = inlined_call_operand.vmem [shape: bf16[9,18,50], index: 6, kind: input, shape index: {}]
  %s7 = inlined_call_operand.vmem [shape: bf16[576,128], index: 7, kind: input, shape index: {}]
  %s8 = inlined_call_operand.vmem [shape: f32[1,128], index: 8, kind: input, shape index: {}]
  %s9 = inlined_call_operand.vmem [shape: bf16[9,2,18], index: 9, kind: input, shape index: {}]
  %s10 = inlined_call_operand.vmem [shape: bf16[1152,256], index: 10, kind: input, shape index: {}]
  %s11 = inlined_call_operand.vmem [shape: f32[1,256], index: 11, kind: input, shape index: {}]
  %s12 = inlined_call_operand.vmem [shape: bf16[256,100], index: 12, kind: input, shape index: {}]
  %s13 = inlined_call_operand.vmem [shape: f32[1,100], index: 13, kind: input, shape index: {}]
  %s14 = inlined_call_operand.vmem [shape: f32[1,100], index: 14, kind: input, shape index: {}]
  %s15 = inlined_call_operand.<no memory space> [shape: f32[1,1], index: 15, kind: input, shape index: {}]
  %s16 = inlined_call_operand.vmem [shape: f32[2,1], index: 16, kind: output, shape index: {}]
  %s17 = sld [smem:[#allocation0]]
  $region74: #{_lambda_.5} parent=0
    _
  %s19 = ssub.s32 1, %s17
  %s20 = scalar_select 0, %s19, %s17
  %v21 = vstv %s15
  %22 = vst [vmem:[#allocation2] sm:$0x1] %v21
  // Predicated region
  $region2: #{_lambda_.5} parent=0 // pred_check
    _
  $region3: #{_lambda_.5} parent=0 // pred_check_branch
    %24 = sbr.rel (0) target = $region5
  $region4: #{_lambda_.5} parent=0 // pred_region
    _
  $region5: #{_lambda_.5} parent=0 // pred_fallthru
    _
  // Predicated region
  $region6: #{_lambda_.5} parent=0 // pred_check
    _
  $region7: #{_lambda_.5} parent=0 // pred_check_branch
    %26 = sbr.rel (0) target = $region9
  $region8: #{_lambda_.5} parent=0 // pred_region
    _
  $region9: #{_lambda_.5} parent=0 // pred_fallthru
    _
  // Predicated region
  $region10: #{_lambda_.5} parent=0 // pred_check
    _
  $region11: #{_lambda_.5} parent=0 // pred_check_branch
    %28 = sbr.rel (0) target = $region13
  $region12: #{_lambda_.5} parent=0 // pred_region
    _
  $region13: #{_lambda_.5} parent=0 // pred_fallthru
    _
  // Predicated region
  $region14: #{_lambda_.5} parent=0 // pred_check
    _
  $region15: #{_lambda_.5} parent=0 // pred_check_branch
    %30 = sbr.rel (0) target = $region17
  $region16: #{_lambda_.5} parent=0 // pred_region
    _
  $region17: #{_lambda_.5} parent=0 // pred_fallthru
    _
  // Predicated region
  $region18: #{_lambda_.5} parent=0 // pred_check
    _
  $region19: #{_lambda_.5} parent=0 // pred_check_branch
    %32 = sbr.rel (0) target = $region21
  $region20: #{_lambda_.5} parent=0 // pred_region
    _
  $region21: #{_lambda_.5} parent=0 // pred_fallthru
    _
  // Predicated region
  $region22: #{_lambda_.5} parent=0 // pred_check
    _
  $region23: #{_lambda_.5} parent=0 // pred_check_branch
    %34 = sbr.rel (0) target = $region25
  $region24: #{_lambda_.5} parent=0 // pred_region
    _
  $region25: #{_lambda_.5} parent=0 // pred_fallthru
    _
  // Predicated region
  $region26: #{_lambda_.5} parent=0 // pred_check
    _
  $region27: #{_lambda_.5} parent=0 // pred_check_branch
    %36 = sbr.rel (0) target = $region29
  $region28: #{_lambda_.5} parent=0 // pred_region
    _
  $region29: #{_lambda_.5} parent=0 // pred_fallthru
    _
  // Predicated region
  $region30: #{_lambda_.5} parent=0 // pred_check
    _
  $region31: #{_lambda_.5} parent=0 // pred_check_branch
    %38 = sbr.rel (0) target = $region33
  $region32: #{_lambda_.5} parent=0 // pred_region
    _
  $region33: #{_lambda_.5} parent=0 // pred_fallthru
    _
  // Predicated region
  $region34: #{_lambda_.5} parent=0 // pred_check
    _
  $region35: #{_lambda_.5} parent=0 // pred_check_branch
    %40 = sbr.rel (0) target = $region37
  $region36: #{_lambda_.5} parent=0 // pred_region
    _
  $region37: #{_lambda_.5} parent=0 // pred_fallthru
    _
  // Predicated region
  $region38: #{_lambda_.5} parent=0 // pred_check
    _
  $region39: #{_lambda_.5} parent=0 // pred_check_branch
    %42 = sbr.rel (0) target = $region41
  $region40: #{_lambda_.5} parent=0 // pred_region
    _
  $region41: #{_lambda_.5} parent=0 // pred_fallthru
    _
  // Predicated region
  $region42: #{_lambda_.5} parent=0 // pred_check
    _
  $region43: #{_lambda_.5} parent=0 // pred_check_branch
    %44 = sbr.rel (0) target = $region45
  $region44: #{_lambda_.5} parent=0 // pred_region
    _
  $region45: #{_lambda_.5} parent=0 // pred_fallthru
    _
  // Predicated region
  $region46: #{_lambda_.5} parent=0 // pred_check
    _
  $region47: #{_lambda_.5} parent=0 // pred_check_branch
    %46 = sbr.rel (0) target = $region49
  $region48: #{_lambda_.5} parent=0 // pred_region
    _
  $region49: #{_lambda_.5} parent=0 // pred_fallthru
    _
  // Predicated region
  $region50: #{_lambda_.5} parent=0 // pred_check
    _
  $region51: #{_lambda_.5} parent=0 // pred_check_branch
    %48 = sbr.rel (0) target = $region53
  $region52: #{_lambda_.5} parent=0 // pred_region
    _
  $region53: #{_lambda_.5} parent=0 // pred_fallthru
    _
  // Predicated region
  $region54: #{_lambda_.5} parent=0 // pred_check
    _
  $region55: #{_lambda_.5} parent=0 // pred_check_branch
    %50 = sbr.rel (0) target = $region57
  $region56: #{_lambda_.5} parent=0 // pred_region
    _
  $region57: #{_lambda_.5} parent=0 // pred_fallthru
    _
  // Predicated region
  $region58: #{_lambda_.5} parent=0 // pred_check
    _
  $region59: #{_lambda_.5} parent=0 // pred_check_branch
    %52 = sbr.rel (0) target = $region61
  $region60: #{_lambda_.5} parent=0 // pred_region
    _
  $region61: #{_lambda_.5} parent=0 // pred_fallthru
    _
  // Predicated region
  $region62: #{_lambda_.5} parent=0 // pred_check
    _
  $region63: #{_lambda_.5} parent=0 // pred_check_branch
    %54 = sbr.rel (0) target = $region65
  $region64: #{_lambda_.5} parent=0 // pred_region
    _
  $region65: #{_lambda_.5} parent=0 // pred_fallthru
    _
  %v56 = vld [vmem:[%s0] sm:$0xff]
  %v57 = vld [vmem:[%s0 + $0x8] sm:$0xff]
  %v58 = vld [vmem:[%s0 + $0x10] sm:$0xff]
  %v59 = vld [vmem:[%s0 + $0x18] sm:$0xff]
  %v60 = vld [vmem:[%s0 + $0x20] sm:$0xff]
  %v61 = vld [vmem:[%s0 + $0x28] sm:$0xff]
  %v62 = vld [vmem:[%s0 + $0x30] sm:$0xff]
  %v63 = vld [vmem:[%s0 + $0x38] sm:$0xff]
  %v64 = vld [vmem:[%s0 + $0x40] sm:$0xff]
  %v65 = vld [vmem:[%s0 + $0x48] sm:$0xff]
  %v66 = vld [vmem:[%s0 + $0x50] sm:$0xff]
  %v67 = vld [vmem:[%s0 + $0x58] sm:$0xff]
  %v68 = vld [vmem:[%s0 + $0x60] sm:$0xff]
  %v69 = vld [vmem:[%s0 + $0x68] sm:$0xff]
  %v70 = vld [vmem:[%s0 + $0x70] sm:$0xff]
  %v71 = vld [vmem:[%s0 + $0x78] sm:$0xff]
  %v72 = vld [vmem:[%s0 + $0x80] sm:$0xff]
  %v73 = vld [vmem:[%s0 + $0x88] sm:$0xff]
  %v74 = vld [vmem:[%s0 + $0x90] sm:$0xff]
  %v75 = vld [vmem:[%s0 + $0x98] sm:$0xff]
  %v76 = vld [vmem:[%s0 + $0xa0] sm:$0xff]
  %v77 = vld [vmem:[%s0 + $0xa8] sm:$0xff]
  %v78 = vld [vmem:[%s0 + $0xb0] sm:$0xff]
  %v79 = vld [vmem:[%s0 + $0xb8] sm:$0xff]
  %v80 = vld [vmem:[%s0 + $0xc0] sm:$0xff]
  %v81 = vld [vmem:[%s0 + $0xc8] sm:$0xff]
  %v82 = vld [vmem:[%s0 + $0xd0] sm:$0xff]
  %v83 = vld [vmem:[%s0 + $0xd8] sm:$0xff]
  %v84 = vld [vmem:[%s0 + $0xe0] sm:$0xff]
  %v85 = vld [vmem:[%s0 + $0xe8] sm:$0xff]
  %v86 = vld [vmem:[%s0 + $0xf0] sm:$0x11]
  %v87 = vld [vmem:[%s1] sm:$0xf]
  %v88 = vld [vmem:[%s1 + $0x4] sm:$0xf]
  %v89 = vld [vmem:[%s1 + $0x8] sm:$0xf]
  %v90 = vld [vmem:[%s1 + $0xc] sm:$0xf]
  %v91 = vld [vmem:[%s1 + $0x10] sm:$0xf]
  %v92 = vld [vmem:[%s1 + $0x14] sm:$0xf]
  %v93 = vld [vmem:[%s1 + $0x18] sm:$0xf]
  %v94 = vld [vmem:[%s1 + $0x1c] sm:$0xf]
  %v95 = vld [vmem:[%s1 + $0x20] sm:$0xf]
  %v96 = vld [vmem:[%s1 + $0x24] sm:$0xf]
  %v97 = vld [vmem:[%s1 + $0x28] sm:$0xf]
  %v98 = vld [vmem:[%s1 + $0x2c] sm:$0xf]
  %v99 = vld [vmem:[%s1 + $0x30] sm:$0xf]
  %v100 = vld [vmem:[%s1 + $0x34] sm:$0xf]
  %v101 = vld [vmem:[%s1 + $0x38] sm:$0xf]
  %v102 = vld [vmem:[%s1 + $0x3c] sm:$0xf]
  %v103 = vld [vmem:[%s1 + $0x40] sm:$0xf]
  %v104 = vld [vmem:[%s1 + $0x44] sm:$0xf]
  %v105 = vld [vmem:[%s2] sm:$0x1]
  %v107 = vlaneseq
  %v108 = vshrl.u32 %v107, 7
  %v109 = vsub.s32 0, %v108
  %v110 = vrot.slane %v105, %v109
  %v143 = vunpack.c.l.b16 %v56
  %v144 = vunpack.c.h.b16 %v56
  %v145 = vunpack.c.l.b16 %v57
  %v146 = vunpack.c.h.b16 %v57
  %v147 = vunpack.c.l.b16 %v58
  %v148 = vunpack.c.h.b16 %v58
  %v149 = vunpack.c.l.b16 %v59
  %v150 = vunpack.c.h.b16 %v59
  %v151 = vunpack.c.l.b16 %v60
  %v152 = vunpack.c.h.b16 %v60
  %v153 = vunpack.c.l.b16 %v61
  %v154 = vunpack.c.h.b16 %v61
  %v155 = vunpack.c.l.b16 %v62
  %v156 = vunpack.c.h.b16 %v62
  %v157 = vunpack.c.l.b16 %v63
  %v158 = vunpack.c.h.b16 %v63
  %v159 = vunpack.c.l.b16 %v64
  %v160 = vunpack.c.h.b16 %v64
  %v161 = vunpack.c.l.b16 %v65
  %v162 = vunpack.c.h.b16 %v65
  %v163 = vunpack.c.l.b16 %v66
  %v164 = vunpack.c.h.b16 %v66
  %v165 = vunpack.c.l.b16 %v67
  %v166 = vunpack.c.h.b16 %v67
  %v167 = vunpack.c.l.b16 %v68
  %v168 = vunpack.c.h.b16 %v68
  %v169 = vunpack.c.l.b16 %v69
  %v170 = vunpack.c.h.b16 %v69
  %v171 = vunpack.c.l.b16 %v70
  %v172 = vunpack.c.h.b16 %v70
  %v173 = vunpack.c.l.b16 %v71
  %v174 = vunpack.c.h.b16 %v71
  %v175 = vunpack.c.l.b16 %v72
  %v176 = vunpack.c.h.b16 %v72
  %v177 = vunpack.c.l.b16 %v73
  %v178 = vunpack.c.h.b16 %v73
  %v179 = vunpack.c.l.b16 %v74
  %v180 = vunpack.c.h.b16 %v74
  %v181 = vunpack.c.l.b16 %v75
  %v182 = vunpack.c.h.b16 %v75
  %v183 = vunpack.c.l.b16 %v76
  %v184 = vunpack.c.h.b16 %v76
  %v185 = vunpack.c.l.b16 %v77
  %v186 = vunpack.c.h.b16 %v77
  %v187 = vunpack.c.l.b16 %v78
  %v188 = vunpack.c.h.b16 %v78
  %v189 = vunpack.c.l.b16 %v79
  %v190 = vunpack.c.h.b16 %v79
  %v191 = vunpack.c.l.b16 %v80
  %v192 = vunpack.c.h.b16 %v80
  %v193 = vunpack.c.l.b16 %v81
  %v194 = vunpack.c.h.b16 %v81
  %v195 = vunpack.c.l.b16 %v82
  %v196 = vunpack.c.h.b16 %v82
  %v197 = vunpack.c.l.b16 %v83
  %v198 = vunpack.c.h.b16 %v83
  %v199 = vunpack.c.l.b16 %v84
  %v200 = vunpack.c.h.b16 %v84
  %v201 = vunpack.c.l.b16 %v85
  %v202 = vunpack.c.h.b16 %v85
  %v203 = vunpack.c.l.b16 %v86
  %v204 = vunpack.c.h.b16 %v86
  %v205 = vpack.c.b16 %v145, %v143
  %v206 = vpack.c.b16 %v146, %v144
  %v207 = vpack.c.b16 %v149, %v147
  %v208 = vpack.c.b16 %v150, %v148
  %v209 = vpack.c.b16 %v153, %v151
  %v210 = vpack.c.b16 %v154, %v152
  %v211 = vpack.c.b16 %v157, %v155
  %v212 = vpack.c.b16 %v158, %v156
  %v213 = vpack.c.b16 %v161, %v159
  %v214 = vpack.c.b16 %v162, %v160
  %v215 = vpack.c.b16 %v165, %v163
  %v216 = vpack.c.b16 %v166, %v164
  %v217 = vpack.c.b16 %v169, %v167
  %v218 = vpack.c.b16 %v170, %v168
  %v219 = vpack.c.b16 %v173, %v171
  %v220 = vpack.c.b16 %v174, %v172
  %v221 = vpack.c.b16 %v177, %v175
  %v222 = vpack.c.b16 %v178, %v176
  %v223 = vpack.c.b16 %v181, %v179
  %v224 = vpack.c.b16 %v182, %v180
  %v225 = vpack.c.b16 %v185, %v183
  %v226 = vpack.c.b16 %v186, %v184
  %v227 = vpack.c.b16 %v189, %v187
  %v228 = vpack.c.b16 %v190, %v188
  %v229 = vpack.c.b16 %v193, %v191
  %v230 = vpack.c.b16 %v194, %v192
  %v231 = vpack.c.b16 %v197, %v195
  %v232 = vpack.c.b16 %v198, %v196
  %v233 = vpack.c.b16 %v201, %v199
  %v234 = vpack.c.b16 %v202, %v200
  %v235 = vpack.c.b16 %v203, %v203
  %v236 = vpack.c.b16 %v204, %v204
  %v271 = vunpack.c.l.b16 %v87
  %v272 = vunpack.c.l.b16 %v88
  %v273 = vunpack.c.l.b16 %v89
  %v274 = vunpack.c.l.b16 %v90
  %v275 = vunpack.c.l.b16 %v91
  %v276 = vunpack.c.l.b16 %v92
  %v277 = vunpack.c.l.b16 %v93
  %v278 = vunpack.c.l.b16 %v94
  %v279 = vunpack.c.l.b16 %v95
  %v280 = vunpack.c.l.b16 %v96
  %v281 = vunpack.c.l.b16 %v97
  %v282 = vunpack.c.l.b16 %v98
  %v283 = vunpack.c.l.b16 %v99
  %v284 = vunpack.c.l.b16 %v100
  %v285 = vunpack.c.l.b16 %v101
  %v286 = vunpack.c.l.b16 %v102
  %v287 = vunpack.c.l.b16 %v103
  %v288 = vunpack.c.l.b16 %v104
  %v289 = vpack.c.b16 %v272, %v271
  %v290 = vpack.c.b16 %v274, %v273
  %v291 = vpack.c.b16 %v276, %v275
  %v292 = vpack.c.b16 %v278, %v277
  %v293 = vpack.c.b16 %v280, %v279
  %v294 = vpack.c.b16 %v282, %v281
  %v295 = vpack.c.b16 %v284, %v283
  %v296 = vpack.c.b16 %v286, %v285
  %v297 = vpack.c.b16 %v288, %v287
  %vm307 = vcmask 130048
  %v309 = vsel %vm307, %v206, 0
  %v312 = vsel %vm307, %v208, 0
  %v315 = vsel %vm307, %v210, 0
  %v318 = vsel %vm307, %v212, 0
  %v321 = vsel %vm307, %v214, 0
  %v324 = vsel %vm307, %v216, 0
  %v327 = vsel %vm307, %v218, 0
  %v330 = vsel %vm307, %v220, 0
  %v333 = vsel %vm307, %v222, 0
  %v336 = vsel %vm307, %v224, 0
  %v339 = vsel %vm307, %v226, 0
  %v342 = vsel %vm307, %v228, 0
  %v345 = vsel %vm307, %v230, 0
  %v348 = vsel %vm307, %v232, 0
  %v351 = vsel %vm307, %v234, 0
  %v354 = vsel %vm307, %v236, 0
  %356 = vmatprep.subr.bf16.mxu0 0
  %357 = vmatpush1.bf16.msra.mxu0 %v296
  %358 = vmatprep.subr.bf16.mxu0 0
  %359 = vmatpush1.bf16.msra.mxu0 %v295
  %360 = vmatprep.subr.bf16.mxu0 0
  %361 = vmatpush1.bf16.msra.mxu0 %v294
  %362 = vmatprep.subr.bf16.mxu0 0
  %363 = vmatpush1.bf16.msra.mxu0 %v293
  %364 = vmatprep.subr.bf16.mxu0 0
  %365 = vmatpush1.bf16.msra.mxu0 %v292
  %366 = vmatprep.subr.bf16.mxu0 0
  %367 = vmatpush1.bf16.msra.mxu0 %v291
  %368 = vmatprep.subr.bf16.mxu0 0
  %369 = vmatpush1.bf16.msra.mxu0 %v290
  %370 = vmatprep.subr.bf16.mxu0 0
  %371 = vmatpush1.bf16.msra.mxu0 %v289
  %372 = vmatprep.subr.bf16.mxu0 0
  %373 = vmatpush2.bf16.msra.mxu0 0
  %374 = vmatprep.subr.bf16.mxu0 0
  %375 = vmatpush2.bf16.msra.mxu0 0
  %376 = vmatprep.subr.bf16.mxu0 0
  %377 = vmatpush2.bf16.msra.mxu0 0
  %378 = vmatprep.subr.bf16.mxu0 0
  %379 = vmatpush2.bf16.msra.mxu0 0
  %380 = vmatprep.subr.bf16.mxu0 0
  %381 = vmatpush2.bf16.msra.mxu0 0
  %382 = vmatprep.subr.bf16.mxu0 0
  %383 = vmatpush2.bf16.msra.mxu0 0
  %384 = vmatprep.subr.bf16.mxu0 0
  %385 = vmatpush2.bf16.msra.mxu0 0
  %386 = vmatprep.subr.bf16.mxu0 0
  %387 = vmatpush2.bf16.msra.mxu0 %v297
  %388 = vmatprep.mubr.bf16.mxu0 %v309
  %389 = vmatmul.mubr.bf16.gmra.mxu0 %v205
  %v390 = vpop.f32.mrf.mxu0
  %v391 = vadd.f32 %v110, %v390
  %v392 = vpop.f32.mrf.mxu0
  %v393 = vpop.f32.mrf.mxu0
  %v394 = vadd.f32 %v110, %v393
  %v395 = vpop.f32.mrf.mxu0
  %396 = vmatprep.mubr.bf16.mxu0 %v312
  %397 = vmatmul.mubr.bf16.gmra.mxu0 %v207
  %v398 = vpop.f32.mrf.mxu0
  %v399 = vadd.f32 %v110, %v398
  %v400 = vpop.f32.mrf.mxu0
  %v401 = vpop.f32.mrf.mxu0
  %v402 = vadd.f32 %v110, %v401
  %v403 = vpop.f32.mrf.mxu0
  %404 = vmatprep.mubr.bf16.mxu0 %v315
  %405 = vmatmul.mubr.bf16.gmra.mxu0 %v209
  %v406 = vpop.f32.mrf.mxu0
  %v407 = vadd.f32 %v110, %v406
  %v408 = vpop.f32.mrf.mxu0
  %v409 = vpop.f32.mrf.mxu0
  %v410 = vadd.f32 %v110, %v409
  %v411 = vpop.f32.mrf.mxu0
  %412 = vmatprep.mubr.bf16.mxu0 %v318
  %413 = vmatmul.mubr.bf16.gmra.mxu0 %v211
  %v414 = vpop.f32.mrf.mxu0
  %v415 = vadd.f32 %v110, %v414
  %v416 = vpop.f32.mrf.mxu0
  %v417 = vpop.f32.mrf.mxu0
  %v418 = vadd.f32 %v110, %v417
  %v419 = vpop.f32.mrf.mxu0
  %420 = vmatprep.mubr.bf16.mxu0 %v321
  %421 = vmatmul.mubr.bf16.gmra.mxu0 %v213
  %v422 = vpop.f32.mrf.mxu0
  %v423 = vadd.f32 %v110, %v422
  %v424 = vpop.f32.mrf.mxu0
  %v425 = vpop.f32.mrf.mxu0
  %v426 = vadd.f32 %v110, %v425
  %v427 = vpop.f32.mrf.mxu0
  %428 = vmatprep.mubr.bf16.mxu0 %v324
  %429 = vmatmul.mubr.bf16.gmra.mxu0 %v215
  %v430 = vpop.f32.mrf.mxu0
  %v431 = vadd.f32 %v110, %v430
  %v432 = vpop.f32.mrf.mxu0
  %v433 = vpop.f32.mrf.mxu0
  %v434 = vadd.f32 %v110, %v433
  %v435 = vpop.f32.mrf.mxu0
  %436 = vmatprep.mubr.bf16.mxu0 %v327
  %437 = vmatmul.mubr.bf16.gmra.mxu0 %v217
  %v438 = vpop.f32.mrf.mxu0
  %v439 = vadd.f32 %v110, %v438
  %v440 = vpop.f32.mrf.mxu0
  %v441 = vpop.f32.mrf.mxu0
  %v442 = vadd.f32 %v110, %v441
  %v443 = vpop.f32.mrf.mxu0
  %444 = vmatprep.mubr.bf16.mxu0 %v330
  %445 = vmatmul.mubr.bf16.gmra.mxu0 %v219
  %v446 = vpop.f32.mrf.mxu0
  %v447 = vadd.f32 %v110, %v446
  %v448 = vpop.f32.mrf.mxu0
  %v449 = vpop.f32.mrf.mxu0
  %v450 = vadd.f32 %v110, %v449
  %v451 = vpop.f32.mrf.mxu0
  %452 = vmatprep.mubr.bf16.mxu0 %v333
  %453 = vmatmul.mubr.bf16.gmra.mxu0 %v221
  %v454 = vpop.f32.mrf.mxu0
  %v455 = vadd.f32 %v110, %v454
  %v456 = vpop.f32.mrf.mxu0
  %v457 = vpop.f32.mrf.mxu0
  %v458 = vadd.f32 %v110, %v457
  %v459 = vpop.f32.mrf.mxu0
  %460 = vmatprep.mubr.bf16.mxu0 %v336
  %461 = vmatmul.mubr.bf16.gmra.mxu0 %v223
  %v462 = vpop.f32.mrf.mxu0
  %v463 = vadd.f32 %v110, %v462
  %v464 = vpop.f32.mrf.mxu0
  %v465 = vpop.f32.mrf.mxu0
  %v466 = vadd.f32 %v110, %v465
  %v467 = vpop.f32.mrf.mxu0
  %468 = vmatprep.mubr.bf16.mxu0 %v339
  %469 = vmatmul.mubr.bf16.gmra.mxu0 %v225
  %v470 = vpop.f32.mrf.mxu0
  %v471 = vadd.f32 %v110, %v470
  %v472 = vpop.f32.mrf.mxu0
  %v473 = vpop.f32.mrf.mxu0
  %v474 = vadd.f32 %v110, %v473
  %v475 = vpop.f32.mrf.mxu0
  %476 = vmatprep.mubr.bf16.mxu0 %v342
  %477 = vmatmul.mubr.bf16.gmra.mxu0 %v227
  %v478 = vpop.f32.mrf.mxu0
  %v479 = vadd.f32 %v110, %v478
  %v480 = vpop.f32.mrf.mxu0
  %v481 = vpop.f32.mrf.mxu0
  %v482 = vadd.f32 %v110, %v481
  %v483 = vpop.f32.mrf.mxu0
  %484 = vmatprep.mubr.bf16.mxu0 %v345
  %485 = vmatmul.mubr.bf16.gmra.mxu0 %v229
  %v486 = vpop.f32.mrf.mxu0
  %v487 = vadd.f32 %v110, %v486
  %v488 = vpop.f32.mrf.mxu0
  %v489 = vpop.f32.mrf.mxu0
  %v490 = vadd.f32 %v110, %v489
  %v491 = vpop.f32.mrf.mxu0
  %492 = vmatprep.mubr.bf16.mxu0 %v348
  %493 = vmatmul.mubr.bf16.gmra.mxu0 %v231
  %v494 = vpop.f32.mrf.mxu0
  %v495 = vadd.f32 %v110, %v494
  %v496 = vpop.f32.mrf.mxu0
  %v497 = vpop.f32.mrf.mxu0
  %v498 = vadd.f32 %v110, %v497
  %v499 = vpop.f32.mrf.mxu0
  %500 = vmatprep.mubr.bf16.mxu0 %v351
  %501 = vmatmul.mubr.bf16.gmra.mxu0 %v233
  %v502 = vpop.f32.mrf.mxu0
  %v503 = vadd.f32 %v110, %v502
  %v504 = vpop.f32.mrf.mxu0
  %v505 = vpop.f32.mrf.mxu0
  %v506 = vadd.f32 %v110, %v505
  %v507 = vpop.f32.mrf.mxu0
  %508 = vmatprep.mubr.bf16.mxu0 %v354
  %509 = vmatmul.mubr.bf16.gmra.mxu0 %v235
  %v510 = vpop.f32.mrf.mxu0
  %v511 = vadd.f32 %v110, %v510
  %v512 = vpop.f32.mrf.mxu0
  %v513 = vpop.f32.mrf.mxu0
  %v514 = vpop.f32.mrf.mxu0
  %515 = vdwg.mxu0
  %v516 = vmax.f32 %v391, 0.0
  %v517 = vmax.f32 %v394, 0.0
  %v518 = vmax.f32 %v399, 0.0
  %v519 = vmax.f32 %v402, 0.0
  %v520 = vmax.f32 %v407, 0.0
  %v521 = vmax.f32 %v410, 0.0
  %v522 = vmax.f32 %v415, 0.0
  %v523 = vmax.f32 %v418, 0.0
  %v524 = vmax.f32 %v423, 0.0
  %v525 = vmax.f32 %v426, 0.0
  %v526 = vmax.f32 %v431, 0.0
  %v527 = vmax.f32 %v434, 0.0
  %v528 = vmax.f32 %v439, 0.0
  %v529 = vmax.f32 %v442, 0.0
  %v530 = vmax.f32 %v447, 0.0
  %v531 = vmax.f32 %v450, 0.0
  %v532 = vmax.f32 %v455, 0.0
  %v533 = vmax.f32 %v458, 0.0
  %v534 = vmax.f32 %v463, 0.0
  %v535 = vmax.f32 %v466, 0.0
  %v536 = vmax.f32 %v471, 0.0
  %v537 = vmax.f32 %v474, 0.0
  %v538 = vmax.f32 %v479, 0.0
  %v539 = vmax.f32 %v482, 0.0
  %v540 = vmax.f32 %v487, 0.0
  %v541 = vmax.f32 %v490, 0.0
  %v542 = vmax.f32 %v495, 0.0
  %v543 = vmax.f32 %v498, 0.0
  %v544 = vmax.f32 %v503, 0.0
  %v545 = vmax.f32 %v506, 0.0
  %v546 = vmax.f32 %v511, 0.0
  %v547 = vpack.c.bf16 %v517, %v516
  %v548 = vpack.c.bf16 %v519, %v518
  %v549 = vpack.c.bf16 %v521, %v520
  %v550 = vpack.c.bf16 %v523, %v522
  %v551 = vpack.c.bf16 %v525, %v524
  %v552 = vpack.c.bf16 %v527, %v526
  %v553 = vpack.c.bf16 %v529, %v528
  %v554 = vpack.c.bf16 %v531, %v530
  %v555 = vpack.c.bf16 %v533, %v532
  %v556 = vpack.c.bf16 %v535, %v534
  %v557 = vpack.c.bf16 %v537, %v536
  %v558 = vpack.c.bf16 %v539, %v538
  %v559 = vpack.c.bf16 %v541, %v540
  %v560 = vpack.c.bf16 %v543, %v542
  %v561 = vpack.c.bf16 %v545, %v544
  %v562 = vpack.c.bf16 %v546, %v546
  %v563 = vld [vmem:[%s3] sm:$0xff]
  %v564 = vld [vmem:[%s3 + $0x8] sm:$0xff]
  %v565 = vld [vmem:[%s3 + $0x10] sm:$0xff]
  %v566 = vld [vmem:[%s3 + $0x18] sm:$0xff]
  %v567 = vld [vmem:[%s3 + $0x20] sm:$0xff]
  %v568 = vld [vmem:[%s3 + $0x28] sm:$0xff]
  %v569 = vld [vmem:[%s3 + $0x30] sm:$0x11]
  %v577 = vunpack.c.l.b16 %v563
  %v578 = vunpack.c.h.b16 %v563
  %v579 = vunpack.c.l.b16 %v564
  %v580 = vunpack.c.h.b16 %v564
  %v581 = vunpack.c.l.b16 %v565
  %v582 = vunpack.c.h.b16 %v565
  %v583 = vunpack.c.l.b16 %v566
  %v584 = vunpack.c.h.b16 %v566
  %v585 = vunpack.c.l.b16 %v567
  %v586 = vunpack.c.h.b16 %v567
  %v587 = vunpack.c.l.b16 %v568
  %v588 = vunpack.c.h.b16 %v568
  %v589 = vunpack.c.l.b16 %v569
  %v590 = vunpack.c.h.b16 %v569
  %v591 = vpack.c.b16 %v579, %v577
  %v592 = vpack.c.b16 %v580, %v578
  %v593 = vpack.c.b16 %v583, %v581
  %v594 = vpack.c.b16 %v584, %v582
  %v595 = vpack.c.b16 %v587, %v585
  %v596 = vpack.c.b16 %v588, %v586
  %v597 = vpack.c.b16 %v589, %v589
  %v598 = vpack.c.b16 %v590, %v590
  %vm603 = vcmask 932864
  %v605 = vsel %vm603, %v592, 0
  %v608 = vsel %vm603, %v594, 0
  %v611 = vsel %vm603, %v596, 0
  %v614 = vsel %vm603, %v598, 0
  %vm616 = vcmask 1040384
  %v618 = vsel %vm616, %v562, 0
  %620 = vmatprep.subr.bf16.mxu0 0
  %621 = vmatpush1.bf16.msra.mxu0 %v554
  %622 = vmatprep.subr.bf16.mxu0 0
  %623 = vmatpush1.bf16.msra.mxu0 %v553
  %624 = vmatprep.subr.bf16.mxu0 0
  %625 = vmatpush1.bf16.msra.mxu0 %v552
  %626 = vmatprep.subr.bf16.mxu0 0
  %627 = vmatpush1.bf16.msra.mxu0 %v551
  %628 = vmatprep.subr.bf16.mxu0 0
  %629 = vmatpush1.bf16.msra.mxu0 %v550
  %630 = vmatprep.subr.bf16.mxu0 0
  %631 = vmatpush1.bf16.msra.mxu0 %v549
  %632 = vmatprep.subr.bf16.mxu0 0
  %633 = vmatpush1.bf16.msra.mxu0 %v548
  %634 = vmatprep.subr.bf16.mxu0 0
  %635 = vmatpush1.bf16.msra.mxu0 %v547
  %636 = vmatprep.subr.bf16.mxu0 0
  %637 = vmatpush2.bf16.msra.mxu0 %v618
  %638 = vmatprep.subr.bf16.mxu0 0
  %639 = vmatpush2.bf16.msra.mxu0 %v561
  %640 = vmatprep.subr.bf16.mxu0 0
  %641 = vmatpush2.bf16.msra.mxu0 %v560
  %642 = vmatprep.subr.bf16.mxu0 0
  %643 = vmatpush2.bf16.msra.mxu0 %v559
  %644 = vmatprep.subr.bf16.mxu0 0
  %645 = vmatpush2.bf16.msra.mxu0 %v558
  %646 = vmatprep.subr.bf16.mxu0 0
  %647 = vmatpush2.bf16.msra.mxu0 %v557
  %648 = vmatprep.subr.bf16.mxu0 0
  %649 = vmatpush2.bf16.msra.mxu0 %v556
  %650 = vmatprep.subr.bf16.mxu0 0
  %651 = vmatpush2.bf16.msra.mxu0 %v555
  %652 = vmatprep.mubr.bf16.mxu0 %v605
  %653 = vmatmul.mubr.bf16.gmra.mxu0 %v591
  %v654 = vpop.f32.mrf.mxu0
  %v655 = vadd.f32 0.0, %v654
  %v656 = vpop.f32.mrf.mxu0
  %v657 = vpop.f32.mrf.mxu0
  %v658 = vadd.f32 0.0, %v657
  %v659 = vpop.f32.mrf.mxu0
  %660 = vmatprep.mubr.bf16.mxu0 %v608
  %661 = vmatmul.mubr.bf16.gmra.mxu0 %v593
  %v662 = vpop.f32.mrf.mxu0
  %v663 = vadd.f32 0.0, %v662
  %v664 = vpop.f32.mrf.mxu0
  %v665 = vpop.f32.mrf.mxu0
  %v666 = vadd.f32 0.0, %v665
  %v667 = vpop.f32.mrf.mxu0
  %668 = vmatprep.mubr.bf16.mxu0 %v611
  %669 = vmatmul.mubr.bf16.gmra.mxu0 %v595
  %v670 = vpop.f32.mrf.mxu0
  %v671 = vadd.f32 0.0, %v670
  %v672 = vpop.f32.mrf.mxu0
  %v673 = vpop.f32.mrf.mxu0
  %v674 = vadd.f32 0.0, %v673
  %v675 = vpop.f32.mrf.mxu0
  %676 = vmatprep.mubr.bf16.mxu0 %v614
  %677 = vmatmul.mubr.bf16.gmra.mxu0 %v597
  %v678 = vpop.f32.mrf.mxu0
  %v679 = vadd.f32 0.0, %v678
  %v680 = vpop.f32.mrf.mxu0
  %v681 = vpop.f32.mrf.mxu0
  %v682 = vpop.f32.mrf.mxu0
  %683 = vdwg.mxu0
  %s684 = scalar_lea.vmem %s3, 56
  %v685 = vld [vmem:[%s684] sm:$0xff]
  %v686 = vld [vmem:[%s684 + $0x8] sm:$0xff]
  %v687 = vld [vmem:[%s684 + $0x10] sm:$0xff]
  %v688 = vld [vmem:[%s684 + $0x18] sm:$0xff]
  %v689 = vld [vmem:[%s684 + $0x20] sm:$0xff]
  %v690 = vld [vmem:[%s684 + $0x28] sm:$0xff]
  %v691 = vld [vmem:[%s684 + $0x30] sm:$0x11]
  %v699 = vunpack.c.l.b16 %v685
  %v700 = vunpack.c.h.b16 %v685
  %v701 = vunpack.c.l.b16 %v686
  %v702 = vunpack.c.h.b16 %v686
  %v703 = vunpack.c.l.b16 %v687
  %v704 = vunpack.c.h.b16 %v687
  %v705 = vunpack.c.l.b16 %v688
  %v706 = vunpack.c.h.b16 %v688
  %v707 = vunpack.c.l.b16 %v689
  %v708 = vunpack.c.h.b16 %v689
  %v709 = vunpack.c.l.b16 %v690
  %v710 = vunpack.c.h.b16 %v690
  %v711 = vunpack.c.l.b16 %v691
  %v712 = vunpack.c.h.b16 %v691
  %v713 = vpack.c.b16 %v701, %v699
  %v714 = vpack.c.b16 %v702, %v700
  %v715 = vpack.c.b16 %v705, %v703
  %v716 = vpack.c.b16 %v706, %v704
  %v717 = vpack.c.b16 %v709, %v707
  %v718 = vpack.c.b16 %v710, %v708
  %v719 = vpack.c.b16 %v711, %v711
  %v720 = vpack.c.b16 %v712, %v712
  %v726 = vsel %vm603, %v714, 0
  %v729 = vsel %vm603, %v716, 0
  %v732 = vsel %vm603, %v718, 0
  %v735 = vsel %vm603, %v720, 0
  %737 = vmatprep.subr.bf16.mxu0 0
  %738 = vmatpush1.bf16.msra.mxu0 %v554
  %739 = vmatprep.subr.bf16.mxu0 0
  %740 = vmatpush1.bf16.msra.mxu0 %v553
  %741 = vmatprep.subr.bf16.mxu0 0
  %742 = vmatpush1.bf16.msra.mxu0 %v552
  %743 = vmatprep.subr.bf16.mxu0 0
  %744 = vmatpush1.bf16.msra.mxu0 %v551
  %745 = vmatprep.subr.bf16.mxu0 0
  %746 = vmatpush1.bf16.msra.mxu0 %v550
  %747 = vmatprep.subr.bf16.mxu0 0
  %748 = vmatpush1.bf16.msra.mxu0 %v549
  %749 = vmatprep.subr.bf16.mxu0 0
  %750 = vmatpush1.bf16.msra.mxu0 %v548
  %751 = vmatprep.subr.bf16.mxu0 0
  %752 = vmatpush1.bf16.msra.mxu0 %v547
  %753 = vmatprep.subr.bf16.mxu0 0
  %754 = vmatpush2.bf16.msra.mxu0 %v618
  %755 = vmatprep.subr.bf16.mxu0 0
  %756 = vmatpush2.bf16.msra.mxu0 %v561
  %757 = vmatprep.subr.bf16.mxu0 0
  %758 = vmatpush2.bf16.msra.mxu0 %v560
  %759 = vmatprep.subr.bf16.mxu0 0
  %760 = vmatpush2.bf16.msra.mxu0 %v559
  %761 = vmatprep.subr.bf16.mxu0 0
  %762 = vmatpush2.bf16.msra.mxu0 %v558
  %763 = vmatprep.subr.bf16.mxu0 0
  %764 = vmatpush2.bf16.msra.mxu0 %v557
  %765 = vmatprep.subr.bf16.mxu0 0
  %766 = vmatpush2.bf16.msra.mxu0 %v556
  %767 = vmatprep.subr.bf16.mxu0 0
  %768 = vmatpush2.bf16.msra.mxu0 %v555
  %769 = vmatprep.mubr.bf16.mxu0 %v726
  %770 = vmatmul.mubr.bf16.gmra.mxu0 %v713
  %v771 = vpop.f32.mrf.mxu0
  %v772 = vadd.f32 0.0, %v771
  %v773 = vpop.f32.mrf.mxu0
  %v774 = vpop.f32.mrf.mxu0
  %v775 = vadd.f32 0.0, %v774
  %v776 = vpop.f32.mrf.mxu0
  %777 = vmatprep.mubr.bf16.mxu0 %v729
  %778 = vmatmul.mubr.bf16.gmra.mxu0 %v715
  %v779 = vpop.f32.mrf.mxu0
  %v780 = vadd.f32 0.0, %v779
  %v781 = vpop.f32.mrf.mxu0
  %v782 = vpop.f32.mrf.mxu0
  %v783 = vadd.f32 0.0, %v782
  %v784 = vpop.f32.mrf.mxu0
  %785 = vmatprep.mubr.bf16.mxu0 %v732
  %786 = vmatmul.mubr.bf16.gmra.mxu0 %v717
  %v787 = vpop.f32.mrf.mxu0
  %v788 = vadd.f32 0.0, %v787
  %v789 = vpop.f32.mrf.mxu0
  %v790 = vpop.f32.mrf.mxu0
  %v791 = vadd.f32 0.0, %v790
  %v792 = vpop.f32.mrf.mxu0
  %793 = vmatprep.mubr.bf16.mxu0 %v735
  %794 = vmatmul.mubr.bf16.gmra.mxu0 %v719
  %v795 = vpop.f32.mrf.mxu0
  %v796 = vadd.f32 0.0, %v795
  %v797 = vpop.f32.mrf.mxu0
  %v798 = vpop.f32.mrf.mxu0
  %v799 = vpop.f32.mrf.mxu0
  %800 = vdwg.mxu0
  %s801 = scalar_lea.vmem %s3, 112
  %v802 = vld [vmem:[%s801] sm:$0xff]
  %v803 = vld [vmem:[%s801 + $0x8] sm:$0xff]
  %v804 = vld [vmem:[%s801 + $0x10] sm:$0xff]
  %v805 = vld [vmem:[%s801 + $0x18] sm:$0xff]
  %v806 = vld [vmem:[%s801 + $0x20] sm:$0xff]
  %v807 = vld [vmem:[%s801 + $0x28] sm:$0xff]
  %v808 = vld [vmem:[%s801 + $0x30] sm:$0x11]
  %v816 = vunpack.c.l.b16 %v802
  %v817 = vunpack.c.h.b16 %v802
  %v818 = vunpack.c.l.b16 %v803
  %v819 = vunpack.c.h.b16 %v803
  %v820 = vunpack.c.l.b16 %v804
  %v821 = vunpack.c.h.b16 %v804
  %v822 = vunpack.c.l.b16 %v805
  %v823 = vunpack.c.h.b16 %v805
  %v824 = vunpack.c.l.b16 %v806
  %v825 = vunpack.c.h.b16 %v806
  %v826 = vunpack.c.l.b16 %v807
  %v827 = vunpack.c.h.b16 %v807
  %v828 = vunpack.c.l.b16 %v808
  %v829 = vunpack.c.h.b16 %v808
  %v830 = vpack.c.b16 %v818, %v816
  %v831 = vpack.c.b16 %v819, %v817
  %v832 = vpack.c.b16 %v822, %v820
  %v833 = vpack.c.b16 %v823, %v821
  %v834 = vpack.c.b16 %v826, %v824
  %v835 = vpack.c.b16 %v827, %v825
  %v836 = vpack.c.b16 %v828, %v828
  %v837 = vpack.c.b16 %v829, %v829
  %v843 = vsel %vm603, %v831, 0
  %v846 = vsel %vm603, %v833, 0
  %v849 = vsel %vm603, %v835, 0
  %v852 = vsel %vm603, %v837, 0
  %854 = vmatprep.subr.bf16.mxu0 0
  %855 = vmatpush1.bf16.msra.mxu0 %v554
  %856 = vmatprep.subr.bf16.mxu0 0
  %857 = vmatpush1.bf16.msra.mxu0 %v553
  %858 = vmatprep.subr.bf16.mxu0 0
  %859 = vmatpush1.bf16.msra.mxu0 %v552
  %860 = vmatprep.subr.bf16.mxu0 0
  %861 = vmatpush1.bf16.msra.mxu0 %v551
  %862 = vmatprep.subr.bf16.mxu0 0
  %863 = vmatpush1.bf16.msra.mxu0 %v550
  %864 = vmatprep.subr.bf16.mxu0 0
  %865 = vmatpush1.bf16.msra.mxu0 %v549
  %866 = vmatprep.subr.bf16.mxu0 0
  %867 = vmatpush1.bf16.msra.mxu0 %v548
  %868 = vmatprep.subr.bf16.mxu0 0
  %869 = vmatpush1.bf16.msra.mxu0 %v547
  %870 = vmatprep.subr.bf16.mxu0 0
  %871 = vmatpush2.bf16.msra.mxu0 %v618
  %872 = vmatprep.subr.bf16.mxu0 0
  %873 = vmatpush2.bf16.msra.mxu0 %v561
  %874 = vmatprep.subr.bf16.mxu0 0
  %875 = vmatpush2.bf16.msra.mxu0 %v560
  %876 = vmatprep.subr.bf16.mxu0 0
  %877 = vmatpush2.bf16.msra.mxu0 %v559
  %878 = vmatprep.subr.bf16.mxu0 0
  %879 = vmatpush2.bf16.msra.mxu0 %v558
  %880 = vmatprep.subr.bf16.mxu0 0
  %881 = vmatpush2.bf16.msra.mxu0 %v557
  %882 = vmatprep.subr.bf16.mxu0 0
  %883 = vmatpush2.bf16.msra.mxu0 %v556
  %884 = vmatprep.subr.bf16.mxu0 0
  %885 = vmatpush2.bf16.msra.mxu0 %v555
  %886 = vmatprep.mubr.bf16.mxu0 %v843
  %887 = vmatmul.mubr.bf16.gmra.mxu0 %v830
  %v888 = vpop.f32.mrf.mxu0
  %v889 = vadd.f32 0.0, %v888
  %v890 = vpop.f32.mrf.mxu0
  %v891 = vpop.f32.mrf.mxu0
  %v892 = vadd.f32 0.0, %v891
  %v893 = vpop.f32.mrf.mxu0
  %894 = vmatprep.mubr.bf16.mxu0 %v846
  %895 = vmatmul.mubr.bf16.gmra.mxu0 %v832
  %v896 = vpop.f32.mrf.mxu0
  %v897 = vadd.f32 0.0, %v896
  %v898 = vpop.f32.mrf.mxu0
  %v899 = vpop.f32.mrf.mxu0
  %v900 = vadd.f32 0.0, %v899
  %v901 = vpop.f32.mrf.mxu0
  %902 = vmatprep.mubr.bf16.mxu0 %v849
  %903 = vmatmul.mubr.bf16.gmra.mxu0 %v834
  %v904 = vpop.f32.mrf.mxu0
  %v905 = vadd.f32 0.0, %v904
  %v906 = vpop.f32.mrf.mxu0
  %v907 = vpop.f32.mrf.mxu0
  %v908 = vadd.f32 0.0, %v907
  %v909 = vpop.f32.mrf.mxu0
  %910 = vmatprep.mubr.bf16.mxu0 %v852
  %911 = vmatmul.mubr.bf16.gmra.mxu0 %v836
  %v912 = vpop.f32.mrf.mxu0
  %v913 = vadd.f32 0.0, %v912
  %v914 = vpop.f32.mrf.mxu0
  %v915 = vpop.f32.mrf.mxu0
  %v916 = vpop.f32.mrf.mxu0
  %917 = vdwg.mxu0
  %s918 = scalar_lea.vmem %s3, 168
  %v919 = vld [vmem:[%s918] sm:$0xff]
  %v920 = vld [vmem:[%s918 + $0x8] sm:$0xff]
  %v921 = vld [vmem:[%s918 + $0x10] sm:$0xff]
  %v922 = vld [vmem:[%s918 + $0x18] sm:$0xff]
  %v923 = vld [vmem:[%s918 + $0x20] sm:$0xff]
  %v924 = vld [vmem:[%s918 + $0x28] sm:$0xff]
  %v925 = vld [vmem:[%s918 + $0x30] sm:$0x11]
  %v933 = vunpack.c.l.b16 %v919
  %v934 = vunpack.c.h.b16 %v919
  %v935 = vunpack.c.l.b16 %v920
  %v936 = vunpack.c.h.b16 %v920
  %v937 = vunpack.c.l.b16 %v921
  %v938 = vunpack.c.h.b16 %v921
  %v939 = vunpack.c.l.b16 %v922
  %v940 = vunpack.c.h.b16 %v922
  %v941 = vunpack.c.l.b16 %v923
  %v942 = vunpack.c.h.b16 %v923
  %v943 = vunpack.c.l.b16 %v924
  %v944 = vunpack.c.h.b16 %v924
  %v945 = vunpack.c.l.b16 %v925
  %v946 = vunpack.c.h.b16 %v925
  %v947 = vpack.c.b16 %v935, %v933
  %v948 = vpack.c.b16 %v936, %v934
  %v949 = vpack.c.b16 %v939, %v937
  %v950 = vpack.c.b16 %v940, %v938
  %v951 = vpack.c.b16 %v943, %v941
  %v952 = vpack.c.b16 %v944, %v942
  %v953 = vpack.c.b16 %v945, %v945
  %v954 = vpack.c.b16 %v946, %v946
  %v960 = vsel %vm603, %v948, 0
  %v963 = vsel %vm603, %v950, 0
  %v966 = vsel %vm603, %v952, 0
  %v969 = vsel %vm603, %v954, 0
  %971 = vmatprep.subr.bf16.mxu0 0
  %972 = vmatpush1.bf16.msra.mxu0 %v554
  %973 = vmatprep.subr.bf16.mxu0 0
  %974 = vmatpush1.bf16.msra.mxu0 %v553
  %975 = vmatprep.subr.bf16.mxu0 0
  %976 = vmatpush1.bf16.msra.mxu0 %v552
  %977 = vmatprep.subr.bf16.mxu0 0
  %978 = vmatpush1.bf16.msra.mxu0 %v551
  %979 = vmatprep.subr.bf16.mxu0 0
  %980 = vmatpush1.bf16.msra.mxu0 %v550
  %981 = vmatprep.subr.bf16.mxu0 0
  %982 = vmatpush1.bf16.msra.mxu0 %v549
  %983 = vmatprep.subr.bf16.mxu0 0
  %984 = vmatpush1.bf16.msra.mxu0 %v548
  %985 = vmatprep.subr.bf16.mxu0 0
  %986 = vmatpush1.bf16.msra.mxu0 %v547
  %987 = vmatprep.subr.bf16.mxu0 0
  %988 = vmatpush2.bf16.msra.mxu0 %v618
  %989 = vmatprep.subr.bf16.mxu0 0
  %990 = vmatpush2.bf16.msra.mxu0 %v561
  %991 = vmatprep.subr.bf16.mxu0 0
  %992 = vmatpush2.bf16.msra.mxu0 %v560
  %993 = vmatprep.subr.bf16.mxu0 0
  %994 = vmatpush2.bf16.msra.mxu0 %v559
  %995 = vmatprep.subr.bf16.mxu0 0
  %996 = vmatpush2.bf16.msra.mxu0 %v558
  %997 = vmatprep.subr.bf16.mxu0 0
  %998 = vmatpush2.bf16.msra.mxu0 %v557
  %999 = vmatprep.subr.bf16.mxu0 0
  %1000 = vmatpush2.bf16.msra.mxu0 %v556
  %1001 = vmatprep.subr.bf16.mxu0 0
  %1002 = vmatpush2.bf16.msra.mxu0 %v555
  %1003 = vmatprep.mubr.bf16.mxu0 %v960
  %1004 = vmatmul.mubr.bf16.gmra.mxu0 %v947
  %v1005 = vpop.f32.mrf.mxu0
  %v1006 = vadd.f32 0.0, %v1005
  %v1007 = vpop.f32.mrf.mxu0
  %v1008 = vpop.f32.mrf.mxu0
  %v1009 = vadd.f32 0.0, %v1008
  %v1010 = vpop.f32.mrf.mxu0
  %1011 = vmatprep.mubr.bf16.mxu0 %v963
  %1012 = vmatmul.mubr.bf16.gmra.mxu0 %v949
  %v1013 = vpop.f32.mrf.mxu0
  %v1014 = vadd.f32 0.0, %v1013
  %v1015 = vpop.f32.mrf.mxu0
  %v1016 = vpop.f32.mrf.mxu0
  %v1017 = vadd.f32 0.0, %v1016
  %v1018 = vpop.f32.mrf.mxu0
  %1019 = vmatprep.mubr.bf16.mxu0 %v966
  %1020 = vmatmul.mubr.bf16.gmra.mxu0 %v951
  %v1021 = vpop.f32.mrf.mxu0
  %v1022 = vadd.f32 0.0, %v1021
  %v1023 = vpop.f32.mrf.mxu0
  %v1024 = vpop.f32.mrf.mxu0
  %v1025 = vadd.f32 0.0, %v1024
  %v1026 = vpop.f32.mrf.mxu0
  %1027 = vmatprep.mubr.bf16.mxu0 %v969
  %1028 = vmatmul.mubr.bf16.gmra.mxu0 %v953
  %v1029 = vpop.f32.mrf.mxu0
  %v1030 = vadd.f32 0.0, %v1029
  %v1031 = vpop.f32.mrf.mxu0
  %v1032 = vpop.f32.mrf.mxu0
  %v1033 = vpop.f32.mrf.mxu0
  %1034 = vdwg.mxu0
  %s1035 = scalar_lea.vmem %s3, 224
  %v1036 = vld [vmem:[%s1035] sm:$0xff]
  %v1037 = vld [vmem:[%s1035 + $0x8] sm:$0xff]
  %v1038 = vld [vmem:[%s1035 + $0x10] sm:$0xff]
  %v1039 = vld [vmem:[%s1035 + $0x18] sm:$0xff]
  %v1040 = vld [vmem:[%s1035 + $0x20] sm:$0xff]
  %v1041 = vld [vmem:[%s1035 + $0x28] sm:$0xff]
  %v1042 = vld [vmem:[%s1035 + $0x30] sm:$0x11]
  %v1050 = vunpack.c.l.b16 %v1036
  %v1051 = vunpack.c.h.b16 %v1036
  %v1052 = vunpack.c.l.b16 %v1037
  %v1053 = vunpack.c.h.b16 %v1037
  %v1054 = vunpack.c.l.b16 %v1038
  %v1055 = vunpack.c.h.b16 %v1038
  %v1056 = vunpack.c.l.b16 %v1039
  %v1057 = vunpack.c.h.b16 %v1039
  %v1058 = vunpack.c.l.b16 %v1040
  %v1059 = vunpack.c.h.b16 %v1040
  %v1060 = vunpack.c.l.b16 %v1041
  %v1061 = vunpack.c.h.b16 %v1041
  %v1062 = vunpack.c.l.b16 %v1042
  %v1063 = vunpack.c.h.b16 %v1042
  %v1064 = vpack.c.b16 %v1052, %v1050
  %v1065 = vpack.c.b16 %v1053, %v1051
  %v1066 = vpack.c.b16 %v1056, %v1054
  %v1067 = vpack.c.b16 %v1057, %v1055
  %v1068 = vpack.c.b16 %v1060, %v1058
  %v1069 = vpack.c.b16 %v1061, %v1059
  %v1070 = vpack.c.b16 %v1062, %v1062
  %v1071 = vpack.c.b16 %v1063, %v1063
  %v1077 = vsel %vm603, %v1065, 0
  %v1080 = vsel %vm603, %v1067, 0
  %v1083 = vsel %vm603, %v1069, 0
  %v1086 = vsel %vm603, %v1071, 0
  %1088 = vmatprep.subr.bf16.mxu0 0
  %1089 = vmatpush1.bf16.msra.mxu0 %v554
  %1090 = vmatprep.subr.bf16.mxu0 0
  %1091 = vmatpush1.bf16.msra.mxu0 %v553
  %1092 = vmatprep.subr.bf16.mxu0 0
  %1093 = vmatpush1.bf16.msra.mxu0 %v552
  %1094 = vmatprep.subr.bf16.mxu0 0
  %1095 = vmatpush1.bf16.msra.mxu0 %v551
  %1096 = vmatprep.subr.bf16.mxu0 0
  %1097 = vmatpush1.bf16.msra.mxu0 %v550
  %1098 = vmatprep.subr.bf16.mxu0 0
  %1099 = vmatpush1.bf16.msra.mxu0 %v549
  %1100 = vmatprep.subr.bf16.mxu0 0
  %1101 = vmatpush1.bf16.msra.mxu0 %v548
  %1102 = vmatprep.subr.bf16.mxu0 0
  %1103 = vmatpush1.bf16.msra.mxu0 %v547
  %1104 = vmatprep.subr.bf16.mxu0 0
  %1105 = vmatpush2.bf16.msra.mxu0 %v618
  %1106 = vmatprep.subr.bf16.mxu0 0
  %1107 = vmatpush2.bf16.msra.mxu0 %v561
  %1108 = vmatprep.subr.bf16.mxu0 0
  %1109 = vmatpush2.bf16.msra.mxu0 %v560
  %1110 = vmatprep.subr.bf16.mxu0 0
  %1111 = vmatpush2.bf16.msra.mxu0 %v559
  %1112 = vmatprep.subr.bf16.mxu0 0
  %1113 = vmatpush2.bf16.msra.mxu0 %v558
  %1114 = vmatprep.subr.bf16.mxu0 0
  %1115 = vmatpush2.bf16.msra.mxu0 %v557
  %1116 = vmatprep.subr.bf16.mxu0 0
  %1117 = vmatpush2.bf16.msra.mxu0 %v556
  %1118 = vmatprep.subr.bf16.mxu0 0
  %1119 = vmatpush2.bf16.msra.mxu0 %v555
  %1120 = vmatprep.mubr.bf16.mxu0 %v1077
  %1121 = vmatmul.mubr.bf16.gmra.mxu0 %v1064
  %v1122 = vpop.f32.mrf.mxu0
  %v1123 = vadd.f32 0.0, %v1122
  %v1124 = vpop.f32.mrf.mxu0
  %v1125 = vpop.f32.mrf.mxu0
  %v1126 = vadd.f32 0.0, %v1125
  %v1127 = vpop.f32.mrf.mxu0
  %1128 = vmatprep.mubr.bf16.mxu0 %v1080
  %1129 = vmatmul.mubr.bf16.gmra.mxu0 %v1066
  %v1130 = vpop.f32.mrf.mxu0
  %v1131 = vadd.f32 0.0, %v1130
  %v1132 = vpop.f32.mrf.mxu0
  %v1133 = vpop.f32.mrf.mxu0
  %v1134 = vadd.f32 0.0, %v1133
  %v1135 = vpop.f32.mrf.mxu0
  %1136 = vmatprep.mubr.bf16.mxu0 %v1083
  %1137 = vmatmul.mubr.bf16.gmra.mxu0 %v1068
  %v1138 = vpop.f32.mrf.mxu0
  %v1139 = vadd.f32 0.0, %v1138
  %v1140 = vpop.f32.mrf.mxu0
  %v1141 = vpop.f32.mrf.mxu0
  %v1142 = vadd.f32 0.0, %v1141
  %v1143 = vpop.f32.mrf.mxu0
  %1144 = vmatprep.mubr.bf16.mxu0 %v1086
  %1145 = vmatmul.mubr.bf16.gmra.mxu0 %v1070
  %v1146 = vpop.f32.mrf.mxu0
  %v1147 = vadd.f32 0.0, %v1146
  %v1148 = vpop.f32.mrf.mxu0
  %v1149 = vpop.f32.mrf.mxu0
  %v1150 = vpop.f32.mrf.mxu0
  %1151 = vdwg.mxu0
  %s1152 = scalar_lea.vmem %s3, 280
  %v1153 = vld [vmem:[%s1152] sm:$0xff]
  %v1154 = vld [vmem:[%s1152 + $0x8] sm:$0xff]
  %v1155 = vld [vmem:[%s1152 + $0x10] sm:$0xff]
  %v1156 = vld [vmem:[%s1152 + $0x18] sm:$0xff]
  %v1157 = vld [vmem:[%s1152 + $0x20] sm:$0xff]
  %v1158 = vld [vmem:[%s1152 + $0x28] sm:$0xff]
  %v1159 = vld [vmem:[%s1152 + $0x30] sm:$0x11]
  %v1167 = vunpack.c.l.b16 %v1153
  %v1168 = vunpack.c.h.b16 %v1153
  %v1169 = vunpack.c.l.b16 %v1154
  %v1170 = vunpack.c.h.b16 %v1154
  %v1171 = vunpack.c.l.b16 %v1155
  %v1172 = vunpack.c.h.b16 %v1155
  %v1173 = vunpack.c.l.b16 %v1156
  %v1174 = vunpack.c.h.b16 %v1156
  %v1175 = vunpack.c.l.b16 %v1157
  %v1176 = vunpack.c.h.b16 %v1157
  %v1177 = vunpack.c.l.b16 %v1158
  %v1178 = vunpack.c.h.b16 %v1158
  %v1179 = vunpack.c.l.b16 %v1159
  %v1180 = vunpack.c.h.b16 %v1159
  %v1181 = vpack.c.b16 %v1169, %v1167
  %v1182 = vpack.c.b16 %v1170, %v1168
  %v1183 = vpack.c.b16 %v1173, %v1171
  %v1184 = vpack.c.b16 %v1174, %v1172
  %v1185 = vpack.c.b16 %v1177, %v1175
  %v1186 = vpack.c.b16 %v1178, %v1176
  %v1187 = vpack.c.b16 %v1179, %v1179
  %v1188 = vpack.c.b16 %v1180, %v1180
  %v1194 = vsel %vm603, %v1182, 0
  %v1197 = vsel %vm603, %v1184, 0
  %v1200 = vsel %vm603, %v1186, 0
  %v1203 = vsel %vm603, %v1188, 0
  %1205 = vmatprep.subr.bf16.mxu0 0
  %1206 = vmatpush1.bf16.msra.mxu0 %v554
  %1207 = vmatprep.subr.bf16.mxu0 0
  %1208 = vmatpush1.bf16.msra.mxu0 %v553
  %1209 = vmatprep.subr.bf16.mxu0 0
  %1210 = vmatpush1.bf16.msra.mxu0 %v552
  %1211 = vmatprep.subr.bf16.mxu0 0
  %1212 = vmatpush1.bf16.msra.mxu0 %v551
  %1213 = vmatprep.subr.bf16.mxu0 0
  %1214 = vmatpush1.bf16.msra.mxu0 %v550
  %1215 = vmatprep.subr.bf16.mxu0 0
  %1216 = vmatpush1.bf16.msra.mxu0 %v549
  %1217 = vmatprep.subr.bf16.mxu0 0
  %1218 = vmatpush1.bf16.msra.mxu0 %v548
  %1219 = vmatprep.subr.bf16.mxu0 0
  %1220 = vmatpush1.bf16.msra.mxu0 %v547
  %1221 = vmatprep.subr.bf16.mxu0 0
  %1222 = vmatpush2.bf16.msra.mxu0 %v618
  %1223 = vmatprep.subr.bf16.mxu0 0
  %1224 = vmatpush2.bf16.msra.mxu0 %v561
  %1225 = vmatprep.subr.bf16.mxu0 0
  %1226 = vmatpush2.bf16.msra.mxu0 %v560
  %1227 = vmatprep.subr.bf16.mxu0 0
  %1228 = vmatpush2.bf16.msra.mxu0 %v559
  %1229 = vmatprep.subr.bf16.mxu0 0
  %1230 = vmatpush2.bf16.msra.mxu0 %v558
  %1231 = vmatprep.subr.bf16.mxu0 0
  %1232 = vmatpush2.bf16.msra.mxu0 %v557
  %1233 = vmatprep.subr.bf16.mxu0 0
  %1234 = vmatpush2.bf16.msra.mxu0 %v556
  %1235 = vmatprep.subr.bf16.mxu0 0
  %1236 = vmatpush2.bf16.msra.mxu0 %v555
  %1237 = vmatprep.mubr.bf16.mxu0 %v1194
  %1238 = vmatmul.mubr.bf16.gmra.mxu0 %v1181
  %v1239 = vpop.f32.mrf.mxu0
  %v1240 = vadd.f32 0.0, %v1239
  %v1241 = vpop.f32.mrf.mxu0
  %v1242 = vpop.f32.mrf.mxu0
  %v1243 = vadd.f32 0.0, %v1242
  %v1244 = vpop.f32.mrf.mxu0
  %1245 = vmatprep.mubr.bf16.mxu0 %v1197
  %1246 = vmatmul.mubr.bf16.gmra.mxu0 %v1183
  %v1247 = vpop.f32.mrf.mxu0
  %v1248 = vadd.f32 0.0, %v1247
  %v1249 = vpop.f32.mrf.mxu0
  %v1250 = vpop.f32.mrf.mxu0
  %v1251 = vadd.f32 0.0, %v1250
  %v1252 = vpop.f32.mrf.mxu0
  %1253 = vmatprep.mubr.bf16.mxu0 %v1200
  %1254 = vmatmul.mubr.bf16.gmra.mxu0 %v1185
  %v1255 = vpop.f32.mrf.mxu0
  %v1256 = vadd.f32 0.0, %v1255
  %v1257 = vpop.f32.mrf.mxu0
  %v1258 = vpop.f32.mrf.mxu0
  %v1259 = vadd.f32 0.0, %v1258
  %v1260 = vpop.f32.mrf.mxu0
  %1261 = vmatprep.mubr.bf16.mxu0 %v1203
  %1262 = vmatmul.mubr.bf16.gmra.mxu0 %v1187
  %v1263 = vpop.f32.mrf.mxu0
  %v1264 = vadd.f32 0.0, %v1263
  %v1265 = vpop.f32.mrf.mxu0
  %v1266 = vpop.f32.mrf.mxu0
  %v1267 = vpop.f32.mrf.mxu0
  %1268 = vdwg.mxu0
  %s1269 = scalar_lea.vmem %s3, 336
  %v1270 = vld [vmem:[%s1269] sm:$0xff]
  %v1271 = vld [vmem:[%s1269 + $0x8] sm:$0xff]
  %v1272 = vld [vmem:[%s1269 + $0x10] sm:$0xff]
  %v1273 = vld [vmem:[%s1269 + $0x18] sm:$0xff]
  %v1274 = vld [vmem:[%s1269 + $0x20] sm:$0xff]
  %v1275 = vld [vmem:[%s1269 + $0x28] sm:$0xff]
  %v1276 = vld [vmem:[%s1269 + $0x30] sm:$0x11]
  %v1284 = vunpack.c.l.b16 %v1270
  %v1285 = vunpack.c.h.b16 %v1270
  %v1286 = vunpack.c.l.b16 %v1271
  %v1287 = vunpack.c.h.b16 %v1271
  %v1288 = vunpack.c.l.b16 %v1272
  %v1289 = vunpack.c.h.b16 %v1272
  %v1290 = vunpack.c.l.b16 %v1273
  %v1291 = vunpack.c.h.b16 %v1273
  %v1292 = vunpack.c.l.b16 %v1274
  %v1293 = vunpack.c.h.b16 %v1274
  %v1294 = vunpack.c.l.b16 %v1275
  %v1295 = vunpack.c.h.b16 %v1275
  %v1296 = vunpack.c.l.b16 %v1276
  %v1297 = vunpack.c.h.b16 %v1276
  %v1298 = vpack.c.b16 %v1286, %v1284
  %v1299 = vpack.c.b16 %v1287, %v1285
  %v1300 = vpack.c.b16 %v1290, %v1288
  %v1301 = vpack.c.b16 %v1291, %v1289
  %v1302 = vpack.c.b16 %v1294, %v1292
  %v1303 = vpack.c.b16 %v1295, %v1293
  %v1304 = vpack.c.b16 %v1296, %v1296
  %v1305 = vpack.c.b16 %v1297, %v1297
  %v1311 = vsel %vm603, %v1299, 0
  %v1314 = vsel %vm603, %v1301, 0
  %v1317 = vsel %vm603, %v1303, 0
  %v1320 = vsel %vm603, %v1305, 0
  %1322 = vmatprep.subr.bf16.mxu0 0
  %1323 = vmatpush1.bf16.msra.mxu0 %v554
  %1324 = vmatprep.subr.bf16.mxu0 0
  %1325 = vmatpush1.bf16.msra.mxu0 %v553
  %1326 = vmatprep.subr.bf16.mxu0 0
  %1327 = vmatpush1.bf16.msra.mxu0 %v552
  %1328 = vmatprep.subr.bf16.mxu0 0
  %1329 = vmatpush1.bf16.msra.mxu0 %v551
  %1330 = vmatprep.subr.bf16.mxu0 0
  %1331 = vmatpush1.bf16.msra.mxu0 %v550
  %1332 = vmatprep.subr.bf16.mxu0 0
  %1333 = vmatpush1.bf16.msra.mxu0 %v549
  %1334 = vmatprep.subr.bf16.mxu0 0
  %1335 = vmatpush1.bf16.msra.mxu0 %v548
  %1336 = vmatprep.subr.bf16.mxu0 0
  %1337 = vmatpush1.bf16.msra.mxu0 %v547
  %1338 = vmatprep.subr.bf16.mxu0 0
  %1339 = vmatpush2.bf16.msra.mxu0 %v618
  %1340 = vmatprep.subr.bf16.mxu0 0
  %1341 = vmatpush2.bf16.msra.mxu0 %v561
  %1342 = vmatprep.subr.bf16.mxu0 0
  %1343 = vmatpush2.bf16.msra.mxu0 %v560
  %1344 = vmatprep.subr.bf16.mxu0 0
  %1345 = vmatpush2.bf16.msra.mxu0 %v559
  %1346 = vmatprep.subr.bf16.mxu0 0
  %1347 = vmatpush2.bf16.msra.mxu0 %v558
  %1348 = vmatprep.subr.bf16.mxu0 0
  %1349 = vmatpush2.bf16.msra.mxu0 %v557
  %1350 = vmatprep.subr.bf16.mxu0 0
  %1351 = vmatpush2.bf16.msra.mxu0 %v556
  %1352 = vmatprep.subr.bf16.mxu0 0
  %1353 = vmatpush2.bf16.msra.mxu0 %v555
  %1354 = vmatprep.mubr.bf16.mxu0 %v1311
  %1355 = vmatmul.mubr.bf16.gmra.mxu0 %v1298
  %v1356 = vpop.f32.mrf.mxu0
  %v1357 = vadd.f32 0.0, %v1356
  %v1358 = vpop.f32.mrf.mxu0
  %v1359 = vpop.f32.mrf.mxu0
  %v1360 = vadd.f32 0.0, %v1359
  %v1361 = vpop.f32.mrf.mxu0
  %1362 = vmatprep.mubr.bf16.mxu0 %v1314
  %1363 = vmatmul.mubr.bf16.gmra.mxu0 %v1300
  %v1364 = vpop.f32.mrf.mxu0
  %v1365 = vadd.f32 0.0, %v1364
  %v1366 = vpop.f32.mrf.mxu0
  %v1367 = vpop.f32.mrf.mxu0
  %v1368 = vadd.f32 0.0, %v1367
  %v1369 = vpop.f32.mrf.mxu0
  %1370 = vmatprep.mubr.bf16.mxu0 %v1317
  %1371 = vmatmul.mubr.bf16.gmra.mxu0 %v1302
  %v1372 = vpop.f32.mrf.mxu0
  %v1373 = vadd.f32 0.0, %v1372
  %v1374 = vpop.f32.mrf.mxu0
  %v1375 = vpop.f32.mrf.mxu0
  %v1376 = vadd.f32 0.0, %v1375
  %v1377 = vpop.f32.mrf.mxu0
  %1378 = vmatprep.mubr.bf16.mxu0 %v1320
  %1379 = vmatmul.mubr.bf16.gmra.mxu0 %v1304
  %v1380 = vpop.f32.mrf.mxu0
  %v1381 = vadd.f32 0.0, %v1380
  %v1382 = vpop.f32.mrf.mxu0
  %v1383 = vpop.f32.mrf.mxu0
  %v1384 = vpop.f32.mrf.mxu0
  %1385 = vdwg.mxu0
  %s1386 = scalar_lea.vmem %s3, 392
  %v1387 = vld [vmem:[%s1386] sm:$0xff]
  %v1388 = vld [vmem:[%s1386 + $0x8] sm:$0xff]
  %v1389 = vld [vmem:[%s1386 + $0x10] sm:$0xff]
  %v1390 = vld [vmem:[%s1386 + $0x18] sm:$0xff]
  %v1391 = vld [vmem:[%s1386 + $0x20] sm:$0xff]
  %v1392 = vld [vmem:[%s1386 + $0x28] sm:$0xff]
  %v1393 = vld [vmem:[%s1386 + $0x30] sm:$0x11]
  %v1401 = vunpack.c.l.b16 %v1387
  %v1402 = vunpack.c.h.b16 %v1387
  %v1403 = vunpack.c.l.b16 %v1388
  %v1404 = vunpack.c.h.b16 %v1388
  %v1405 = vunpack.c.l.b16 %v1389
  %v1406 = vunpack.c.h.b16 %v1389
  %v1407 = vunpack.c.l.b16 %v1390
  %v1408 = vunpack.c.h.b16 %v1390
  %v1409 = vunpack.c.l.b16 %v1391
  %v1410 = vunpack.c.h.b16 %v1391
  %v1411 = vunpack.c.l.b16 %v1392
  %v1412 = vunpack.c.h.b16 %v1392
  %v1413 = vunpack.c.l.b16 %v1393
  %v1414 = vunpack.c.h.b16 %v1393
  %v1415 = vpack.c.b16 %v1403, %v1401
  %v1416 = vpack.c.b16 %v1404, %v1402
  %v1417 = vpack.c.b16 %v1407, %v1405
  %v1418 = vpack.c.b16 %v1408, %v1406
  %v1419 = vpack.c.b16 %v1411, %v1409
  %v1420 = vpack.c.b16 %v1412, %v1410
  %v1421 = vpack.c.b16 %v1413, %v1413
  %v1422 = vpack.c.b16 %v1414, %v1414
  %v1428 = vsel %vm603, %v1416, 0
  %v1431 = vsel %vm603, %v1418, 0
  %v1434 = vsel %vm603, %v1420, 0
  %v1437 = vsel %vm603, %v1422, 0
  %1439 = vmatprep.subr.bf16.mxu0 0
  %1440 = vmatpush1.bf16.msra.mxu0 %v554
  %1441 = vmatprep.subr.bf16.mxu0 0
  %1442 = vmatpush1.bf16.msra.mxu0 %v553
  %1443 = vmatprep.subr.bf16.mxu0 0
  %1444 = vmatpush1.bf16.msra.mxu0 %v552
  %1445 = vmatprep.subr.bf16.mxu0 0
  %1446 = vmatpush1.bf16.msra.mxu0 %v551
  %1447 = vmatprep.subr.bf16.mxu0 0
  %1448 = vmatpush1.bf16.msra.mxu0 %v550
  %1449 = vmatprep.subr.bf16.mxu0 0
  %1450 = vmatpush1.bf16.msra.mxu0 %v549
  %1451 = vmatprep.subr.bf16.mxu0 0
  %1452 = vmatpush1.bf16.msra.mxu0 %v548
  %1453 = vmatprep.subr.bf16.mxu0 0
  %1454 = vmatpush1.bf16.msra.mxu0 %v547
  %1455 = vmatprep.subr.bf16.mxu0 0
  %1456 = vmatpush2.bf16.msra.mxu0 %v618
  %1457 = vmatprep.subr.bf16.mxu0 0
  %1458 = vmatpush2.bf16.msra.mxu0 %v561
  %1459 = vmatprep.subr.bf16.mxu0 0
  %1460 = vmatpush2.bf16.msra.mxu0 %v560
  %1461 = vmatprep.subr.bf16.mxu0 0
  %1462 = vmatpush2.bf16.msra.mxu0 %v559
  %1463 = vmatprep.subr.bf16.mxu0 0
  %1464 = vmatpush2.bf16.msra.mxu0 %v558
  %1465 = vmatprep.subr.bf16.mxu0 0
  %1466 = vmatpush2.bf16.msra.mxu0 %v557
  %1467 = vmatprep.subr.bf16.mxu0 0
  %1468 = vmatpush2.bf16.msra.mxu0 %v556
  %1469 = vmatprep.subr.bf16.mxu0 0
  %1470 = vmatpush2.bf16.msra.mxu0 %v555
  %1471 = vmatprep.mubr.bf16.mxu0 %v1428
  %1472 = vmatmul.mubr.bf16.gmra.mxu0 %v1415
  %v1473 = vpop.f32.mrf.mxu0
  %v1474 = vadd.f32 0.0, %v1473
  %v1475 = vpop.f32.mrf.mxu0
  %v1476 = vpop.f32.mrf.mxu0
  %v1477 = vadd.f32 0.0, %v1476
  %v1478 = vpop.f32.mrf.mxu0
  %1479 = vmatprep.mubr.bf16.mxu0 %v1431
  %1480 = vmatmul.mubr.bf16.gmra.mxu0 %v1417
  %v1481 = vpop.f32.mrf.mxu0
  %v1482 = vadd.f32 0.0, %v1481
  %v1483 = vpop.f32.mrf.mxu0
  %v1484 = vpop.f32.mrf.mxu0
  %v1485 = vadd.f32 0.0, %v1484
  %v1486 = vpop.f32.mrf.mxu0
  %1487 = vmatprep.mubr.bf16.mxu0 %v1434
  %1488 = vmatmul.mubr.bf16.gmra.mxu0 %v1419
  %v1489 = vpop.f32.mrf.mxu0
  %v1490 = vadd.f32 0.0, %v1489
  %v1491 = vpop.f32.mrf.mxu0
  %v1492 = vpop.f32.mrf.mxu0
  %v1493 = vadd.f32 0.0, %v1492
  %v1494 = vpop.f32.mrf.mxu0
  %1495 = vmatprep.mubr.bf16.mxu0 %v1437
  %1496 = vmatmul.mubr.bf16.gmra.mxu0 %v1421
  %v1497 = vpop.f32.mrf.mxu0
  %v1498 = vadd.f32 0.0, %v1497
  %v1499 = vpop.f32.mrf.mxu0
  %v1500 = vpop.f32.mrf.mxu0
  %v1501 = vpop.f32.mrf.mxu0
  %1502 = vdwg.mxu0
  %s1503 = scalar_lea.vmem %s3, 448
  %v1504 = vld [vmem:[%s1503] sm:$0xff]
  %v1505 = vld [vmem:[%s1503 + $0x8] sm:$0xff]
  %v1506 = vld [vmem:[%s1503 + $0x10] sm:$0xff]
  %v1507 = vld [vmem:[%s1503 + $0x18] sm:$0xff]
  %v1508 = vld [vmem:[%s1503 + $0x20] sm:$0xff]
  %v1509 = vld [vmem:[%s1503 + $0x28] sm:$0xff]
  %v1510 = vld [vmem:[%s1503 + $0x30] sm:$0x11]
  %v1518 = vunpack.c.l.b16 %v1504
  %v1519 = vunpack.c.h.b16 %v1504
  %v1520 = vunpack.c.l.b16 %v1505
  %v1521 = vunpack.c.h.b16 %v1505
  %v1522 = vunpack.c.l.b16 %v1506
  %v1523 = vunpack.c.h.b16 %v1506
  %v1524 = vunpack.c.l.b16 %v1507
  %v1525 = vunpack.c.h.b16 %v1507
  %v1526 = vunpack.c.l.b16 %v1508
  %v1527 = vunpack.c.h.b16 %v1508
  %v1528 = vunpack.c.l.b16 %v1509
  %v1529 = vunpack.c.h.b16 %v1509
  %v1530 = vunpack.c.l.b16 %v1510
  %v1531 = vunpack.c.h.b16 %v1510
  %v1532 = vpack.c.b16 %v1520, %v1518
  %v1533 = vpack.c.b16 %v1521, %v1519
  %v1534 = vpack.c.b16 %v1524, %v1522
  %v1535 = vpack.c.b16 %v1525, %v1523
  %v1536 = vpack.c.b16 %v1528, %v1526
  %v1537 = vpack.c.b16 %v1529, %v1527
  %v1538 = vpack.c.b16 %v1530, %v1530
  %v1539 = vpack.c.b16 %v1531, %v1531
  %v1545 = vsel %vm603, %v1533, 0
  %v1548 = vsel %vm603, %v1535, 0
  %v1551 = vsel %vm603, %v1537, 0
  %v1554 = vsel %vm603, %v1539, 0
  %1556 = vmatprep.subr.bf16.mxu0 0
  %1557 = vmatpush1.bf16.msra.mxu0 %v554
  %1558 = vmatprep.subr.bf16.mxu0 0
  %1559 = vmatpush1.bf16.msra.mxu0 %v553
  %1560 = vmatprep.subr.bf16.mxu0 0
  %1561 = vmatpush1.bf16.msra.mxu0 %v552
  %1562 = vmatprep.subr.bf16.mxu0 0
  %1563 = vmatpush1.bf16.msra.mxu0 %v551
  %1564 = vmatprep.subr.bf16.mxu0 0
  %1565 = vmatpush1.bf16.msra.mxu0 %v550
  %1566 = vmatprep.subr.bf16.mxu0 0
  %1567 = vmatpush1.bf16.msra.mxu0 %v549
  %1568 = vmatprep.subr.bf16.mxu0 0
  %1569 = vmatpush1.bf16.msra.mxu0 %v548
  %1570 = vmatprep.subr.bf16.mxu0 0
  %1571 = vmatpush1.bf16.msra.mxu0 %v547
  %1572 = vmatprep.subr.bf16.mxu0 0
  %1573 = vmatpush2.bf16.msra.mxu0 %v618
  %1574 = vmatprep.subr.bf16.mxu0 0
  %1575 = vmatpush2.bf16.msra.mxu0 %v561
  %1576 = vmatprep.subr.bf16.mxu0 0
  %1577 = vmatpush2.bf16.msra.mxu0 %v560
  %1578 = vmatprep.subr.bf16.mxu0 0
  %1579 = vmatpush2.bf16.msra.mxu0 %v559
  %1580 = vmatprep.subr.bf16.mxu0 0
  %1581 = vmatpush2.bf16.msra.mxu0 %v558
  %1582 = vmatprep.subr.bf16.mxu0 0
  %1583 = vmatpush2.bf16.msra.mxu0 %v557
  %1584 = vmatprep.subr.bf16.mxu0 0
  %1585 = vmatpush2.bf16.msra.mxu0 %v556
  %1586 = vmatprep.subr.bf16.mxu0 0
  %1587 = vmatpush2.bf16.msra.mxu0 %v555
  %1588 = vmatprep.mubr.bf16.mxu0 %v1545
  %1589 = vmatmul.mubr.bf16.gmra.mxu0 %v1532
  %v1590 = vpop.f32.mrf.mxu0
  %v1591 = vadd.f32 0.0, %v1590
  %v1592 = vpop.f32.mrf.mxu0
  %v1593 = vpop.f32.mrf.mxu0
  %v1594 = vadd.f32 0.0, %v1593
  %v1595 = vpop.f32.mrf.mxu0
  %1596 = vmatprep.mubr.bf16.mxu0 %v1548
  %1597 = vmatmul.mubr.bf16.gmra.mxu0 %v1534
  %v1598 = vpop.f32.mrf.mxu0
  %v1599 = vadd.f32 0.0, %v1598
  %v1600 = vpop.f32.mrf.mxu0
  %v1601 = vpop.f32.mrf.mxu0
  %v1602 = vadd.f32 0.0, %v1601
  %v1603 = vpop.f32.mrf.mxu0
  %1604 = vmatprep.mubr.bf16.mxu0 %v1551
  %1605 = vmatmul.mubr.bf16.gmra.mxu0 %v1536
  %v1606 = vpop.f32.mrf.mxu0
  %v1607 = vadd.f32 0.0, %v1606
  %v1608 = vpop.f32.mrf.mxu0
  %v1609 = vpop.f32.mrf.mxu0
  %v1610 = vadd.f32 0.0, %v1609
  %v1611 = vpop.f32.mrf.mxu0
  %1612 = vmatprep.mubr.bf16.mxu0 %v1554
  %1613 = vmatmul.mubr.bf16.gmra.mxu0 %v1538
  %v1614 = vpop.f32.mrf.mxu0
  %v1615 = vadd.f32 0.0, %v1614
  %v1616 = vpop.f32.mrf.mxu0
  %v1617 = vpop.f32.mrf.mxu0
  %v1618 = vpop.f32.mrf.mxu0
  %1619 = vdwg.mxu0
  %1627 = vrot.lane.b32.xlu0 %v772, 32
  %v1628 = vpop.permute.xlu0 %1627
  %1629 = vrot.lane.b32.xlu0 %v775, 32
  %v1630 = vpop.permute.xlu0 %1629
  %1631 = vrot.lane.b32.xlu0 %v780, 32
  %v1632 = vpop.permute.xlu0 %1631
  %1633 = vrot.lane.b32.xlu0 %v783, 32
  %v1634 = vpop.permute.xlu0 %1633
  %1635 = vrot.lane.b32.xlu0 %v788, 32
  %v1636 = vpop.permute.xlu0 %1635
  %1637 = vrot.lane.b32.xlu0 %v791, 32
  %v1638 = vpop.permute.xlu0 %1637
  %1639 = vrot.lane.b32.xlu0 %v796, 32
  %v1640 = vpop.permute.xlu0 %1639
  %1655 = vrot.lane.b32.xlu0 %v889, 64
  %v1656 = vpop.permute.xlu0 %1655
  %1657 = vrot.lane.b32.xlu0 %v892, 64
  %v1658 = vpop.permute.xlu0 %1657
  %1659 = vrot.lane.b32.xlu0 %v897, 64
  %v1660 = vpop.permute.xlu0 %1659
  %1661 = vrot.lane.b32.xlu0 %v900, 64
  %v1662 = vpop.permute.xlu0 %1661
  %1663 = vrot.lane.b32.xlu0 %v905, 64
  %v1664 = vpop.permute.xlu0 %1663
  %1665 = vrot.lane.b32.xlu0 %v908, 64
  %v1666 = vpop.permute.xlu0 %1665
  %1667 = vrot.lane.b32.xlu0 %v913, 64
  %v1668 = vpop.permute.xlu0 %1667
  %1683 = vrot.lane.b32.xlu0 %v1006, 96
  %v1684 = vpop.permute.xlu0 %1683
  %1685 = vrot.lane.b32.xlu0 %v1009, 96
  %v1686 = vpop.permute.xlu0 %1685
  %1687 = vrot.lane.b32.xlu0 %v1014, 96
  %v1688 = vpop.permute.xlu0 %1687
  %1689 = vrot.lane.b32.xlu0 %v1017, 96
  %v1690 = vpop.permute.xlu0 %1689
  %1691 = vrot.lane.b32.xlu0 %v1022, 96
  %v1692 = vpop.permute.xlu0 %1691
  %1693 = vrot.lane.b32.xlu0 %v1025, 96
  %v1694 = vpop.permute.xlu0 %1693
  %1695 = vrot.lane.b32.xlu0 %v1030, 96
  %v1696 = vpop.permute.xlu0 %1695
  %1711 = vrot.lane.b32.xlu0 %v1240, 32
  %v1712 = vpop.permute.xlu0 %1711
  %1713 = vrot.lane.b32.xlu0 %v1243, 32
  %v1714 = vpop.permute.xlu0 %1713
  %1715 = vrot.lane.b32.xlu0 %v1248, 32
  %v1716 = vpop.permute.xlu0 %1715
  %1717 = vrot.lane.b32.xlu0 %v1251, 32
  %v1718 = vpop.permute.xlu0 %1717
  %1719 = vrot.lane.b32.xlu0 %v1256, 32
  %v1720 = vpop.permute.xlu0 %1719
  %1721 = vrot.lane.b32.xlu0 %v1259, 32
  %v1722 = vpop.permute.xlu0 %1721
  %1723 = vrot.lane.b32.xlu0 %v1264, 32
  %v1724 = vpop.permute.xlu0 %1723
  %1739 = vrot.lane.b32.xlu0 %v1357, 64
  %v1740 = vpop.permute.xlu0 %1739
  %1741 = vrot.lane.b32.xlu0 %v1360, 64
  %v1742 = vpop.permute.xlu0 %1741
  %1743 = vrot.lane.b32.xlu0 %v1365, 64
  %v1744 = vpop.permute.xlu0 %1743
  %1745 = vrot.lane.b32.xlu0 %v1368, 64
  %v1746 = vpop.permute.xlu0 %1745
  %1747 = vrot.lane.b32.xlu0 %v1373, 64
  %v1748 = vpop.permute.xlu0 %1747
  %1749 = vrot.lane.b32.xlu0 %v1376, 64
  %v1750 = vpop.permute.xlu0 %1749
  %1751 = vrot.lane.b32.xlu0 %v1381, 64
  %v1752 = vpop.permute.xlu0 %1751
  %1767 = vrot.lane.b32.xlu0 %v1474, 96
  %v1768 = vpop.permute.xlu0 %1767
  %1769 = vrot.lane.b32.xlu0 %v1477, 96
  %v1770 = vpop.permute.xlu0 %1769
  %1771 = vrot.lane.b32.xlu0 %v1482, 96
  %v1772 = vpop.permute.xlu0 %1771
  %1773 = vrot.lane.b32.xlu0 %v1485, 96
  %v1774 = vpop.permute.xlu0 %1773
  %1775 = vrot.lane.b32.xlu0 %v1490, 96
  %v1776 = vpop.permute.xlu0 %1775
  %1777 = vrot.lane.b32.xlu0 %v1493, 96
  %v1778 = vpop.permute.xlu0 %1777
  %1779 = vrot.lane.b32.xlu0 %v1498, 96
  %v1780 = vpop.permute.xlu0 %1779
  %vm1788 = vcmask 261120
  %v1789 = vsel %vm1788, %v655, %v1628
  %v1790 = vsel %vm1788, %v658, %v1630
  %v1791 = vsel %vm1788, %v663, %v1632
  %v1792 = vsel %vm1788, %v666, %v1634
  %v1793 = vsel %vm1788, %v671, %v1636
  %v1794 = vsel %vm1788, %v674, %v1638
  %v1795 = vsel %vm1788, %v679, %v1640
  %vm1796 = vcmask 523264
  %v1797 = vsel %vm1796, %v1789, %v1656
  %v1798 = vsel %vm1796, %v1790, %v1658
  %v1799 = vsel %vm1796, %v1791, %v1660
  %v1800 = vsel %vm1796, %v1792, %v1662
  %v1801 = vsel %vm1796, %v1793, %v1664
  %v1802 = vsel %vm1796, %v1794, %v1666
  %v1803 = vsel %vm1796, %v1795, %v1668
  %vm1804 = vcmask 785408
  %v1805 = vsel %vm1804, %v1797, %v1684
  %v1806 = vsel %vm1804, %v1798, %v1686
  %v1807 = vsel %vm1804, %v1799, %v1688
  %v1808 = vsel %vm1804, %v1800, %v1690
  %v1809 = vsel %vm1804, %v1801, %v1692
  %v1810 = vsel %vm1804, %v1802, %v1694
  %v1811 = vsel %vm1804, %v1803, %v1696
  %v1812 = vsel %vm1788, %v1123, %v1712
  %v1813 = vsel %vm1788, %v1126, %v1714
  %v1814 = vsel %vm1788, %v1131, %v1716
  %v1815 = vsel %vm1788, %v1134, %v1718
  %v1816 = vsel %vm1788, %v1139, %v1720
  %v1817 = vsel %vm1788, %v1142, %v1722
  %v1818 = vsel %vm1788, %v1147, %v1724
  %v1819 = vsel %vm1796, %v1812, %v1740
  %v1820 = vsel %vm1796, %v1813, %v1742
  %v1821 = vsel %vm1796, %v1814, %v1744
  %v1822 = vsel %vm1796, %v1815, %v1746
  %v1823 = vsel %vm1796, %v1816, %v1748
  %v1824 = vsel %vm1796, %v1817, %v1750
  %v1825 = vsel %vm1796, %v1818, %v1752
  %v1826 = vsel %vm1804, %v1819, %v1768
  %v1827 = vsel %vm1804, %v1820, %v1770
  %v1828 = vsel %vm1804, %v1821, %v1772
  %v1829 = vsel %vm1804, %v1822, %v1774
  %v1830 = vsel %vm1804, %v1823, %v1776
  %v1831 = vsel %vm1804, %v1824, %v1778
  %v1832 = vsel %vm1804, %v1825, %v1780
  %v1833 = vpack.c.bf16 %v1806, %v1805
  %v1834 = vpack.c.bf16 %v1827, %v1826
  %v1835 = vpack.c.bf16 %v1594, %v1591
  %v1836 = vpack.c.bf16 %v1808, %v1807
  %v1837 = vpack.c.bf16 %v1829, %v1828
  %v1838 = vpack.c.bf16 %v1602, %v1599
  %v1839 = vpack.c.bf16 %v1810, %v1809
  %v1840 = vpack.c.bf16 %v1831, %v1830
  %v1841 = vpack.c.bf16 %v1610, %v1607
  %v1842 = vpack.c.bf16 %v1811, %v1811
  %v1843 = vpack.c.bf16 %v1832, %v1832
  %v1844 = vpack.c.bf16 %v1615, %v1615
  %v1845 = vld [vmem:[%s4] sm:$0xf]
  %v1846 = vld [vmem:[%s4 + $0x4] sm:$0xf]
  %v1847 = vld [vmem:[%s4 + $0x8] sm:$0xf]
  %v1848 = vld [vmem:[%s4 + $0xc] sm:$0xf]
  %v1849 = vld [vmem:[%s4 + $0x10] sm:$0xf]
  %v1850 = vld [vmem:[%s4 + $0x14] sm:$0xf]
  %v1851 = vld [vmem:[%s4 + $0x18] sm:$0xf]
  %v1852 = vld [vmem:[%s4 + $0x1c] sm:$0xf]
  %v1853 = vld [vmem:[%s4 + $0x20] sm:$0xf]
  %v1854 = vld [vmem:[%s4 + $0x24] sm:$0xf]
  %v1855 = vld [vmem:[%s4 + $0x28] sm:$0xf]
  %v1856 = vld [vmem:[%s4 + $0x2c] sm:$0xf]
  %v1857 = vld [vmem:[%s4 + $0x30] sm:$0xf]
  %v1858 = vld [vmem:[%s4 + $0x34] sm:$0xf]
  %v1859 = vld [vmem:[%s4 + $0x38] sm:$0xf]
  %v1860 = vld [vmem:[%s4 + $0x3c] sm:$0xf]
  %v1861 = vld [vmem:[%s4 + $0x40] sm:$0xf]
  %v1862 = vld [vmem:[%s4 + $0x44] sm:$0xf]
  %v1863 = vld [vmem:[%s4 + $0x48] sm:$0xf]
  %v1864 = vld [vmem:[%s4 + $0x4c] sm:$0xf]
  %v1865 = vld [vmem:[%s4 + $0x50] sm:$0xf]
  %v1866 = vld [vmem:[%s4 + $0x54] sm:$0xf]
  %v1867 = vld [vmem:[%s4 + $0x58] sm:$0xf]
  %v1868 = vld [vmem:[%s4 + $0x5c] sm:$0xf]
  %v1869 = vld [vmem:[%s4 + $0x60] sm:$0xf]
  %v1870 = vld [vmem:[%s4 + $0x64] sm:$0xf]
  %v1871 = vld [vmem:[%s4 + $0x68] sm:$0xf]
  %v1872 = vld [vmem:[%s4 + $0x6c] sm:$0xf]
  %v1873 = vld [vmem:[%s4 + $0x70] sm:$0xf]
  %v1874 = vld [vmem:[%s4 + $0x74] sm:$0xf]
  %v1875 = vld [vmem:[%s4 + $0x78] sm:$0xf]
  %v1876 = vld [vmem:[%s4 + $0x7c] sm:$0xf]
  %v1877 = vld [vmem:[%s4 + $0x80] sm:$0xf]
  %v1878 = vld [vmem:[%s4 + $0x84] sm:$0xf]
  %v1879 = vld [vmem:[%s4 + $0x88] sm:$0xf]
  %v1880 = vld [vmem:[%s4 + $0x8c] sm:$0xf]
  %v1881 = vld [vmem:[%s5] sm:$0x1]
  %v1883 = vlaneseq
  %v1884 = vshrl.u32 %v1883, 7
  %v1885 = vsub.s32 0, %v1884
  %v1886 = vrot.slane %v1881, %v1885
  %v1924 = vunpack.c.l.b16 %v1845
  %v1925 = vunpack.c.l.b16 %v1846
  %v1926 = vunpack.c.l.b16 %v1847
  %v1927 = vunpack.c.l.b16 %v1848
  %v1928 = vunpack.c.l.b16 %v1849
  %v1929 = vunpack.c.l.b16 %v1850
  %v1930 = vunpack.c.l.b16 %v1851
  %v1931 = vunpack.c.l.b16 %v1852
  %v1932 = vunpack.c.l.b16 %v1853
  %v1933 = vunpack.c.l.b16 %v1854
  %v1934 = vunpack.c.l.b16 %v1855
  %v1935 = vunpack.c.l.b16 %v1856
  %v1936 = vunpack.c.l.b16 %v1857
  %v1937 = vunpack.c.l.b16 %v1858
  %v1938 = vunpack.c.l.b16 %v1859
  %v1939 = vunpack.c.l.b16 %v1860
  %v1940 = vunpack.c.l.b16 %v1861
  %v1941 = vunpack.c.l.b16 %v1862
  %v1942 = vunpack.c.l.b16 %v1863
  %v1943 = vunpack.c.l.b16 %v1864
  %v1944 = vunpack.c.l.b16 %v1865
  %v1945 = vunpack.c.l.b16 %v1866
  %v1946 = vunpack.c.l.b16 %v1867
  %v1947 = vunpack.c.l.b16 %v1868
  %v1948 = vunpack.c.l.b16 %v1869
  %v1949 = vunpack.c.l.b16 %v1870
  %v1950 = vunpack.c.l.b16 %v1871
  %v1951 = vunpack.c.l.b16 %v1872
  %v1952 = vunpack.c.l.b16 %v1873
  %v1953 = vunpack.c.l.b16 %v1874
  %v1954 = vunpack.c.l.b16 %v1875
  %v1955 = vunpack.c.l.b16 %v1876
  %v1956 = vunpack.c.l.b16 %v1877
  %v1957 = vunpack.c.l.b16 %v1878
  %v1958 = vunpack.c.l.b16 %v1879
  %v1959 = vunpack.c.l.b16 %v1880
  %v1960 = vpack.c.b16 %v1925, %v1924
  %v1961 = vpack.c.b16 %v1927, %v1926
  %v1962 = vpack.c.b16 %v1929, %v1928
  %v1963 = vpack.c.b16 %v1931, %v1930
  %v1964 = vpack.c.b16 %v1933, %v1932
  %v1965 = vpack.c.b16 %v1935, %v1934
  %v1966 = vpack.c.b16 %v1937, %v1936
  %v1967 = vpack.c.b16 %v1939, %v1938
  %v1968 = vpack.c.b16 %v1941, %v1940
  %v1969 = vpack.c.b16 %v1943, %v1942
  %v1970 = vpack.c.b16 %v1945, %v1944
  %v1971 = vpack.c.b16 %v1947, %v1946
  %v1972 = vpack.c.b16 %v1949, %v1948
  %v1973 = vpack.c.b16 %v1951, %v1950
  %v1974 = vpack.c.b16 %v1953, %v1952
  %v1975 = vpack.c.b16 %v1955, %v1954
  %v1976 = vpack.c.b16 %v1957, %v1956
  %v1977 = vpack.c.b16 %v1959, %v1958
  %v1997 = vsel %vm1788, %v1835, 0
  %v2000 = vsel %vm1788, %v1838, 0
  %v2003 = vsel %vm1788, %v1841, 0
  %v2006 = vsel %vm1788, %v1844, 0
  %2008 = vmatprep.subr.bf16.mxu0 0
  %2009 = vmatpush1.bf16.msra.mxu0 %v1967
  %2010 = vmatprep.subr.bf16.mxu0 0
  %2011 = vmatpush1.bf16.msra.mxu0 %v1966
  %2012 = vmatprep.subr.bf16.mxu0 0
  %2013 = vmatpush1.bf16.msra.mxu0 %v1965
  %2014 = vmatprep.subr.bf16.mxu0 0
  %2015 = vmatpush1.bf16.msra.mxu0 %v1964
  %2016 = vmatprep.subr.bf16.mxu0 0
  %2017 = vmatpush1.bf16.msra.mxu0 %v1963
  %2018 = vmatprep.subr.bf16.mxu0 0
  %2019 = vmatpush1.bf16.msra.mxu0 %v1962
  %2020 = vmatprep.subr.bf16.mxu0 0
  %2021 = vmatpush1.bf16.msra.mxu0 %v1961
  %2022 = vmatprep.subr.bf16.mxu0 0
  %2023 = vmatpush1.bf16.msra.mxu0 %v1960
  %2024 = vmatprep.subr.bf16.mxu0 0
  %2025 = vmatpush2.bf16.msra.mxu0 %v1975
  %2026 = vmatprep.subr.bf16.mxu0 0
  %2027 = vmatpush2.bf16.msra.mxu0 %v1974
  %2028 = vmatprep.subr.bf16.mxu0 0
  %2029 = vmatpush2.bf16.msra.mxu0 %v1973
  %2030 = vmatprep.subr.bf16.mxu0 0
  %2031 = vmatpush2.bf16.msra.mxu0 %v1972
  %2032 = vmatprep.subr.bf16.mxu0 0
  %2033 = vmatpush2.bf16.msra.mxu0 %v1971
  %2034 = vmatprep.subr.bf16.mxu0 0
  %2035 = vmatpush2.bf16.msra.mxu0 %v1970
  %2036 = vmatprep.subr.bf16.mxu0 0
  %2037 = vmatpush2.bf16.msra.mxu0 %v1969
  %2038 = vmatprep.subr.bf16.mxu0 0
  %2039 = vmatpush2.bf16.msra.mxu0 %v1968
  %2040 = vmatprep.mubr.bf16.mxu0 %v1834
  %2041 = vmatmul.mubr.bf16.gmra.mxu0 %v1833
  %v2042 = vpop.f32.mrf.mxu0
  %v2043 = vadd.f32 %v1886, %v2042
  %v2044 = vpop.f32.mrf.mxu0
  %v2045 = vpop.f32.mrf.mxu0
  %v2046 = vadd.f32 %v1886, %v2045
  %v2047 = vpop.f32.mrf.mxu0
  %2048 = vmatprep.mubr.bf16.mxu0 %v1837
  %2049 = vmatmul.mubr.bf16.gmra.mxu0 %v1836
  %v2050 = vpop.f32.mrf.mxu0
  %v2051 = vadd.f32 %v1886, %v2050
  %v2052 = vpop.f32.mrf.mxu0
  %v2053 = vpop.f32.mrf.mxu0
  %v2054 = vadd.f32 %v1886, %v2053
  %v2055 = vpop.f32.mrf.mxu0
  %2056 = vmatprep.mubr.bf16.mxu0 %v1840
  %2057 = vmatmul.mubr.bf16.gmra.mxu0 %v1839
  %v2058 = vpop.f32.mrf.mxu0
  %v2059 = vadd.f32 %v1886, %v2058
  %v2060 = vpop.f32.mrf.mxu0
  %v2061 = vpop.f32.mrf.mxu0
  %v2062 = vadd.f32 %v1886, %v2061
  %v2063 = vpop.f32.mrf.mxu0
  %2064 = vmatprep.mubr.bf16.mxu0 %v1843
  %2065 = vmatmul.mubr.bf16.gmra.mxu0 %v1842
  %v2066 = vpop.f32.mrf.mxu0
  %v2067 = vadd.f32 %v1886, %v2066
  %v2068 = vpop.f32.mrf.mxu0
  %v2069 = vpop.f32.mrf.mxu0
  %v2070 = vpop.f32.mrf.mxu0
  %2071 = vdwg.mxu0
  %2072 = vmatprep.subr.bf16.mxu0 0
  %2073 = vmatpush1.bf16.msra.mxu0 0
  %2074 = vmatprep.subr.bf16.mxu0 0
  %2075 = vmatpush1.bf16.msra.mxu0 0
  %2076 = vmatprep.subr.bf16.mxu0 0
  %2077 = vmatpush1.bf16.msra.mxu0 0
  %2078 = vmatprep.subr.bf16.mxu0 0
  %2079 = vmatpush1.bf16.msra.mxu0 0
  %2080 = vmatprep.subr.bf16.mxu0 0
  %2081 = vmatpush1.bf16.msra.mxu0 0
  %2082 = vmatprep.subr.bf16.mxu0 0
  %2083 = vmatpush1.bf16.msra.mxu0 0
  %2084 = vmatprep.subr.bf16.mxu0 0
  %2085 = vmatpush1.bf16.msra.mxu0 %v1977
  %2086 = vmatprep.subr.bf16.mxu0 0
  %2087 = vmatpush1.bf16.msra.mxu0 %v1976
  %2088 = vmatprep.subr.bf16.mxu0 0
  %2089 = vmatpush2.bf16.msra.mxu0 0
  %2090 = vmatprep.subr.bf16.mxu0 0
  %2091 = vmatpush2.bf16.msra.mxu0 0
  %2092 = vmatprep.subr.bf16.mxu0 0
  %2093 = vmatpush2.bf16.msra.mxu0 0
  %2094 = vmatprep.subr.bf16.mxu0 0
  %2095 = vmatpush2.bf16.msra.mxu0 0
  %2096 = vmatprep.subr.bf16.mxu0 0
  %2097 = vmatpush2.bf16.msra.mxu0 0
  %2098 = vmatprep.subr.bf16.mxu0 0
  %2099 = vmatpush2.bf16.msra.mxu0 0
  %2100 = vmatprep.subr.bf16.mxu0 0
  %2101 = vmatpush2.bf16.msra.mxu0 0
  %2102 = vmatprep.subr.bf16.mxu0 0
  %2103 = vmatpush2.bf16.msra.mxu0 0
  %2104 = vmatprep.mubr.bf16.mxu0 0
  %2105 = vmatmul.mubr.bf16.gmra.mxu0 %v1997
  %v2106 = vpop.f32.mrf.mxu0
  %v2107 = vadd.f32 %v2043, %v2106
  %v2108 = vpop.f32.mrf.mxu0
  %v2109 = vpop.f32.mrf.mxu0
  %v2110 = vadd.f32 %v2046, %v2109
  %v2111 = vpop.f32.mrf.mxu0
  %2112 = vmatprep.mubr.bf16.mxu0 0
  %2113 = vmatmul.mubr.bf16.gmra.mxu0 %v2000
  %v2114 = vpop.f32.mrf.mxu0
  %v2115 = vadd.f32 %v2051, %v2114
  %v2116 = vpop.f32.mrf.mxu0
  %v2117 = vpop.f32.mrf.mxu0
  %v2118 = vadd.f32 %v2054, %v2117
  %v2119 = vpop.f32.mrf.mxu0
  %2120 = vmatprep.mubr.bf16.mxu0 0
  %2121 = vmatmul.mubr.bf16.gmra.mxu0 %v2003
  %v2122 = vpop.f32.mrf.mxu0
  %v2123 = vadd.f32 %v2059, %v2122
  %v2124 = vpop.f32.mrf.mxu0
  %v2125 = vpop.f32.mrf.mxu0
  %v2126 = vadd.f32 %v2062, %v2125
  %v2127 = vpop.f32.mrf.mxu0
  %2128 = vmatprep.mubr.bf16.mxu0 0
  %2129 = vmatmul.mubr.bf16.gmra.mxu0 %v2006
  %v2130 = vpop.f32.mrf.mxu0
  %v2131 = vadd.f32 %v2067, %v2130
  %v2132 = vpop.f32.mrf.mxu0
  %v2133 = vpop.f32.mrf.mxu0
  %v2134 = vpop.f32.mrf.mxu0
  %2135 = vdwg.mxu0
  %v2136 = vmax.f32 %v2107, 0.0
  %v2137 = vmax.f32 %v2110, 0.0
  %v2138 = vmax.f32 %v2115, 0.0
  %v2139 = vmax.f32 %v2118, 0.0
  %v2140 = vmax.f32 %v2123, 0.0
  %v2141 = vmax.f32 %v2126, 0.0
  %v2142 = vmax.f32 %v2131, 0.0
  %v2143 = vpack.c.bf16 %v2137, %v2136
  %v2144 = vpack.c.bf16 %v2139, %v2138
  %v2145 = vpack.c.bf16 %v2141, %v2140
  %v2146 = vpack.c.bf16 %v2142, %v2142
  %v2147 = vld [vmem:[%s6] sm:$0xf]
  %v2148 = vld [vmem:[%s6 + $0x4] sm:$0xf]
  %v2149 = vld [vmem:[%s6 + $0x8] sm:$0x1]
  %v2153 = vunpack.c.l.b16 %v2147
  %v2154 = vunpack.c.l.b16 %v2148
  %v2155 = vunpack.c.l.b16 %v2149
  %v2156 = vpack.c.b16 %v2154, %v2153
  %v2157 = vpack.c.b16 %v2155, %v2155
  %vm2158 = vcmask 408576
  %v2160 = vsel %vm2158, %v2156, 0
  %v2163 = vsel %vm2158, %v2157, 0
  %v2166 = vsel %vm616, %v2146, 0
  %2168 = vmatprep.subr.bf16.mxu0 0
  %2169 = vmatpush1.bf16.msra.mxu0 0
  %2170 = vmatprep.subr.bf16.mxu0 0
  %2171 = vmatpush1.bf16.msra.mxu0 0
  %2172 = vmatprep.subr.bf16.mxu0 0
  %2173 = vmatpush1.bf16.msra.mxu0 0
  %2174 = vmatprep.subr.bf16.mxu0 0
  %2175 = vmatpush1.bf16.msra.mxu0 0
  %2176 = vmatprep.subr.bf16.mxu0 0
  %2177 = vmatpush1.bf16.msra.mxu0 %v2166
  %2178 = vmatprep.subr.bf16.mxu0 0
  %2179 = vmatpush1.bf16.msra.mxu0 %v2145
  %2180 = vmatprep.subr.bf16.mxu0 0
  %2181 = vmatpush1.bf16.msra.mxu0 %v2144
  %2182 = vmatprep.subr.bf16.mxu0 0
  %2183 = vmatpush1.bf16.msra.mxu0 %v2143
  %2184 = vmatprep.subr.bf16.mxu0 0
  %2185 = vmatpush2.bf16.msra.mxu0 0
  %2186 = vmatprep.subr.bf16.mxu0 0
  %2187 = vmatpush2.bf16.msra.mxu0 0
  %2188 = vmatprep.subr.bf16.mxu0 0
  %2189 = vmatpush2.bf16.msra.mxu0 0
  %2190 = vmatprep.subr.bf16.mxu0 0
  %2191 = vmatpush2.bf16.msra.mxu0 0
  %2192 = vmatprep.subr.bf16.mxu0 0
  %2193 = vmatpush2.bf16.msra.mxu0 0
  %2194 = vmatprep.subr.bf16.mxu0 0
  %2195 = vmatpush2.bf16.msra.mxu0 0
  %2196 = vmatprep.subr.bf16.mxu0 0
  %2197 = vmatpush2.bf16.msra.mxu0 0
  %2198 = vmatprep.subr.bf16.mxu0 0
  %2199 = vmatpush2.bf16.msra.mxu0 0
  %2200 = vmatprep.mubr.bf16.mxu0 0
  %2201 = vmatmul.mubr.bf16.gmra.mxu0 %v2160
  %v2202 = vpop.f32.mrf.mxu0
  %v2203 = vadd.f32 0.0, %v2202
  %v2204 = vpop.f32.mrf.mxu0
  %v2205 = vpop.f32.mrf.mxu0
  %v2206 = vadd.f32 0.0, %v2205
  %v2207 = vpop.f32.mrf.mxu0
  %2208 = vmatprep.mubr.bf16.mxu0 0
  %2209 = vmatmul.mubr.bf16.gmra.mxu0 %v2163
  %v2210 = vpop.f32.mrf.mxu0
  %v2211 = vadd.f32 0.0, %v2210
  %v2212 = vpop.f32.mrf.mxu0
  %v2213 = vpop.f32.mrf.mxu0
  %v2214 = vpop.f32.mrf.mxu0
  %2215 = vdwg.mxu0
  %s2216 = scalar_lea.vmem %s6, 12
  %v2217 = vld [vmem:[%s2216] sm:$0xf]
  %v2218 = vld [vmem:[%s2216 + $0x4] sm:$0xf]
  %v2219 = vld [vmem:[%s2216 + $0x8] sm:$0x1]
  %v2223 = vunpack.c.l.b16 %v2217
  %v2224 = vunpack.c.l.b16 %v2218
  %v2225 = vunpack.c.l.b16 %v2219
  %v2226 = vpack.c.b16 %v2224, %v2223
  %v2227 = vpack.c.b16 %v2225, %v2225
  %v2229 = vsel %vm2158, %v2226, 0
  %v2232 = vsel %vm2158, %v2227, 0
  %2234 = vmatprep.subr.bf16.mxu0 0
  %2235 = vmatpush1.bf16.msra.mxu0 0
  %2236 = vmatprep.subr.bf16.mxu0 0
  %2237 = vmatpush1.bf16.msra.mxu0 0
  %2238 = vmatprep.subr.bf16.mxu0 0
  %2239 = vmatpush1.bf16.msra.mxu0 0
  %2240 = vmatprep.subr.bf16.mxu0 0
  %2241 = vmatpush1.bf16.msra.mxu0 0
  %2242 = vmatprep.subr.bf16.mxu0 0
  %2243 = vmatpush1.bf16.msra.mxu0 %v2166
  %2244 = vmatprep.subr.bf16.mxu0 0
  %2245 = vmatpush1.bf16.msra.mxu0 %v2145
  %2246 = vmatprep.subr.bf16.mxu0 0
  %2247 = vmatpush1.bf16.msra.mxu0 %v2144
  %2248 = vmatprep.subr.bf16.mxu0 0
  %2249 = vmatpush1.bf16.msra.mxu0 %v2143
  %2250 = vmatprep.subr.bf16.mxu0 0
  %2251 = vmatpush2.bf16.msra.mxu0 0
  %2252 = vmatprep.subr.bf16.mxu0 0
  %2253 = vmatpush2.bf16.msra.mxu0 0
  %2254 = vmatprep.subr.bf16.mxu0 0
  %2255 = vmatpush2.bf16.msra.mxu0 0
  %2256 = vmatprep.subr.bf16.mxu0 0
  %2257 = vmatpush2.bf16.msra.mxu0 0
  %2258 = vmatprep.subr.bf16.mxu0 0
  %2259 = vmatpush2.bf16.msra.mxu0 0
  %2260 = vmatprep.subr.bf16.mxu0 0
  %2261 = vmatpush2.bf16.msra.mxu0 0
  %2262 = vmatprep.subr.bf16.mxu0 0
  %2263 = vmatpush2.bf16.msra.mxu0 0
  %2264 = vmatprep.subr.bf16.mxu0 0
  %2265 = vmatpush2.bf16.msra.mxu0 0
  %2266 = vmatprep.mubr.bf16.mxu0 0
  %2267 = vmatmul.mubr.bf16.gmra.mxu0 %v2229
  %v2268 = vpop.f32.mrf.mxu0
  %v2269 = vadd.f32 0.0, %v2268
  %v2270 = vpop.f32.mrf.mxu0
  %v2271 = vpop.f32.mrf.mxu0
  %v2272 = vadd.f32 0.0, %v2271
  %v2273 = vpop.f32.mrf.mxu0
  %2274 = vmatprep.mubr.bf16.mxu0 0
  %2275 = vmatmul.mubr.bf16.gmra.mxu0 %v2232
  %v2276 = vpop.f32.mrf.mxu0
  %v2277 = vadd.f32 0.0, %v2276
  %v2278 = vpop.f32.mrf.mxu0
  %v2279 = vpop.f32.mrf.mxu0
  %v2280 = vpop.f32.mrf.mxu0
  %2281 = vdwg.mxu0
  %s2282 = scalar_lea.vmem %s6, 24
  %v2283 = vld [vmem:[%s2282] sm:$0xf]
  %v2284 = vld [vmem:[%s2282 + $0x4] sm:$0xf]
  %v2285 = vld [vmem:[%s2282 + $0x8] sm:$0x1]
  %v2289 = vunpack.c.l.b16 %v2283
  %v2290 = vunpack.c.l.b16 %v2284
  %v2291 = vunpack.c.l.b16 %v2285
  %v2292 = vpack.c.b16 %v2290, %v2289
  %v2293 = vpack.c.b16 %v2291, %v2291
  %v2295 = vsel %vm2158, %v2292, 0
  %v2298 = vsel %vm2158, %v2293, 0
  %2300 = vmatprep.subr.bf16.mxu0 0
  %2301 = vmatpush1.bf16.msra.mxu0 0
  %2302 = vmatprep.subr.bf16.mxu0 0
  %2303 = vmatpush1.bf16.msra.mxu0 0
  %2304 = vmatprep.subr.bf16.mxu0 0
  %2305 = vmatpush1.bf16.msra.mxu0 0
  %2306 = vmatprep.subr.bf16.mxu0 0
  %2307 = vmatpush1.bf16.msra.mxu0 0
  %2308 = vmatprep.subr.bf16.mxu0 0
  %2309 = vmatpush1.bf16.msra.mxu0 %v2166
  %2310 = vmatprep.subr.bf16.mxu0 0
  %2311 = vmatpush1.bf16.msra.mxu0 %v2145
  %2312 = vmatprep.subr.bf16.mxu0 0
  %2313 = vmatpush1.bf16.msra.mxu0 %v2144
  %2314 = vmatprep.subr.bf16.mxu0 0
  %2315 = vmatpush1.bf16.msra.mxu0 %v2143
  %2316 = vmatprep.subr.bf16.mxu0 0
  %2317 = vmatpush2.bf16.msra.mxu0 0
  %2318 = vmatprep.subr.bf16.mxu0 0
  %2319 = vmatpush2.bf16.msra.mxu0 0
  %2320 = vmatprep.subr.bf16.mxu0 0
  %2321 = vmatpush2.bf16.msra.mxu0 0
  %2322 = vmatprep.subr.bf16.mxu0 0
  %2323 = vmatpush2.bf16.msra.mxu0 0
  %2324 = vmatprep.subr.bf16.mxu0 0
  %2325 = vmatpush2.bf16.msra.mxu0 0
  %2326 = vmatprep.subr.bf16.mxu0 0
  %2327 = vmatpush2.bf16.msra.mxu0 0
  %2328 = vmatprep.subr.bf16.mxu0 0
  %2329 = vmatpush2.bf16.msra.mxu0 0
  %2330 = vmatprep.subr.bf16.mxu0 0
  %2331 = vmatpush2.bf16.msra.mxu0 0
  %2332 = vmatprep.mubr.bf16.mxu0 0
  %2333 = vmatmul.mubr.bf16.gmra.mxu0 %v2295
  %v2334 = vpop.f32.mrf.mxu0
  %v2335 = vadd.f32 0.0, %v2334
  %v2336 = vpop.f32.mrf.mxu0
  %v2337 = vpop.f32.mrf.mxu0
  %v2338 = vadd.f32 0.0, %v2337
  %v2339 = vpop.f32.mrf.mxu0
  %2340 = vmatprep.mubr.bf16.mxu0 0
  %2341 = vmatmul.mubr.bf16.gmra.mxu0 %v2298
  %v2342 = vpop.f32.mrf.mxu0
  %v2343 = vadd.f32 0.0, %v2342
  %v2344 = vpop.f32.mrf.mxu0
  %v2345 = vpop.f32.mrf.mxu0
  %v2346 = vpop.f32.mrf.mxu0
  %2347 = vdwg.mxu0
  %s2348 = scalar_lea.vmem %s6, 36
  %v2349 = vld [vmem:[%s2348] sm:$0xf]
  %v2350 = vld [vmem:[%s2348 + $0x4] sm:$0xf]
  %v2351 = vld [vmem:[%s2348 + $0x8] sm:$0x1]
  %v2355 = vunpack.c.l.b16 %v2349
  %v2356 = vunpack.c.l.b16 %v2350
  %v2357 = vunpack.c.l.b16 %v2351
  %v2358 = vpack.c.b16 %v2356, %v2355
  %v2359 = vpack.c.b16 %v2357, %v2357
  %v2361 = vsel %vm2158, %v2358, 0
  %v2364 = vsel %vm2158, %v2359, 0
  %2366 = vmatprep.subr.bf16.mxu0 0
  %2367 = vmatpush1.bf16.msra.mxu0 0
  %2368 = vmatprep.subr.bf16.mxu0 0
  %2369 = vmatpush1.bf16.msra.mxu0 0
  %2370 = vmatprep.subr.bf16.mxu0 0
  %2371 = vmatpush1.bf16.msra.mxu0 0
  %2372 = vmatprep.subr.bf16.mxu0 0
  %2373 = vmatpush1.bf16.msra.mxu0 0
  %2374 = vmatprep.subr.bf16.mxu0 0
  %2375 = vmatpush1.bf16.msra.mxu0 %v2166
  %2376 = vmatprep.subr.bf16.mxu0 0
  %2377 = vmatpush1.bf16.msra.mxu0 %v2145
  %2378 = vmatprep.subr.bf16.mxu0 0
  %2379 = vmatpush1.bf16.msra.mxu0 %v2144
  %2380 = vmatprep.subr.bf16.mxu0 0
  %2381 = vmatpush1.bf16.msra.mxu0 %v2143
  %2382 = vmatprep.subr.bf16.mxu0 0
  %2383 = vmatpush2.bf16.msra.mxu0 0
  %2384 = vmatprep.subr.bf16.mxu0 0
  %2385 = vmatpush2.bf16.msra.mxu0 0
  %2386 = vmatprep.subr.bf16.mxu0 0
  %2387 = vmatpush2.bf16.msra.mxu0 0
  %2388 = vmatprep.subr.bf16.mxu0 0
  %2389 = vmatpush2.bf16.msra.mxu0 0
  %2390 = vmatprep.subr.bf16.mxu0 0
  %2391 = vmatpush2.bf16.msra.mxu0 0
  %2392 = vmatprep.subr.bf16.mxu0 0
  %2393 = vmatpush2.bf16.msra.mxu0 0
  %2394 = vmatprep.subr.bf16.mxu0 0
  %2395 = vmatpush2.bf16.msra.mxu0 0
  %2396 = vmatprep.subr.bf16.mxu0 0
  %2397 = vmatpush2.bf16.msra.mxu0 0
  %2398 = vmatprep.mubr.bf16.mxu0 0
  %2399 = vmatmul.mubr.bf16.gmra.mxu0 %v2361
  %v2400 = vpop.f32.mrf.mxu0
  %v2401 = vadd.f32 0.0, %v2400
  %v2402 = vpop.f32.mrf.mxu0
  %v2403 = vpop.f32.mrf.mxu0
  %v2404 = vadd.f32 0.0, %v2403
  %v2405 = vpop.f32.mrf.mxu0
  %2406 = vmatprep.mubr.bf16.mxu0 0
  %2407 = vmatmul.mubr.bf16.gmra.mxu0 %v2364
  %v2408 = vpop.f32.mrf.mxu0
  %v2409 = vadd.f32 0.0, %v2408
  %v2410 = vpop.f32.mrf.mxu0
  %v2411 = vpop.f32.mrf.mxu0
  %v2412 = vpop.f32.mrf.mxu0
  %2413 = vdwg.mxu0
  %s2414 = scalar_lea.vmem %s6, 48
  %v2415 = vld [vmem:[%s2414] sm:$0xf]
  %v2416 = vld [vmem:[%s2414 + $0x4] sm:$0xf]
  %v2417 = vld [vmem:[%s2414 + $0x8] sm:$0x1]
  %v2421 = vunpack.c.l.b16 %v2415
  %v2422 = vunpack.c.l.b16 %v2416
  %v2423 = vunpack.c.l.b16 %v2417
  %v2424 = vpack.c.b16 %v2422, %v2421
  %v2425 = vpack.c.b16 %v2423, %v2423
  %v2427 = vsel %vm2158, %v2424, 0
  %v2430 = vsel %vm2158, %v2425, 0
  %2432 = vmatprep.subr.bf16.mxu0 0
  %2433 = vmatpush1.bf16.msra.mxu0 0
  %2434 = vmatprep.subr.bf16.mxu0 0
  %2435 = vmatpush1.bf16.msra.mxu0 0
  %2436 = vmatprep.subr.bf16.mxu0 0
  %2437 = vmatpush1.bf16.msra.mxu0 0
  %2438 = vmatprep.subr.bf16.mxu0 0
  %2439 = vmatpush1.bf16.msra.mxu0 0
  %2440 = vmatprep.subr.bf16.mxu0 0
  %2441 = vmatpush1.bf16.msra.mxu0 %v2166
  %2442 = vmatprep.subr.bf16.mxu0 0
  %2443 = vmatpush1.bf16.msra.mxu0 %v2145
  %2444 = vmatprep.subr.bf16.mxu0 0
  %2445 = vmatpush1.bf16.msra.mxu0 %v2144
  %2446 = vmatprep.subr.bf16.mxu0 0
  %2447 = vmatpush1.bf16.msra.mxu0 %v2143
  %2448 = vmatprep.subr.bf16.mxu0 0
  %2449 = vmatpush2.bf16.msra.mxu0 0
  %2450 = vmatprep.subr.bf16.mxu0 0
  %2451 = vmatpush2.bf16.msra.mxu0 0
  %2452 = vmatprep.subr.bf16.mxu0 0
  %2453 = vmatpush2.bf16.msra.mxu0 0
  %2454 = vmatprep.subr.bf16.mxu0 0
  %2455 = vmatpush2.bf16.msra.mxu0 0
  %2456 = vmatprep.subr.bf16.mxu0 0
  %2457 = vmatpush2.bf16.msra.mxu0 0
  %2458 = vmatprep.subr.bf16.mxu0 0
  %2459 = vmatpush2.bf16.msra.mxu0 0
  %2460 = vmatprep.subr.bf16.mxu0 0
  %2461 = vmatpush2.bf16.msra.mxu0 0
  %2462 = vmatprep.subr.bf16.mxu0 0
  %2463 = vmatpush2.bf16.msra.mxu0 0
  %2464 = vmatprep.mubr.bf16.mxu0 0
  %2465 = vmatmul.mubr.bf16.gmra.mxu0 %v2427
  %v2466 = vpop.f32.mrf.mxu0
  %v2467 = vadd.f32 0.0, %v2466
  %v2468 = vpop.f32.mrf.mxu0
  %v2469 = vpop.f32.mrf.mxu0
  %v2470 = vadd.f32 0.0, %v2469
  %v2471 = vpop.f32.mrf.mxu0
  %2472 = vmatprep.mubr.bf16.mxu0 0
  %2473 = vmatmul.mubr.bf16.gmra.mxu0 %v2430
  %v2474 = vpop.f32.mrf.mxu0
  %v2475 = vadd.f32 0.0, %v2474
  %v2476 = vpop.f32.mrf.mxu0
  %v2477 = vpop.f32.mrf.mxu0
  %v2478 = vpop.f32.mrf.mxu0
  %2479 = vdwg.mxu0
  %s2480 = scalar_lea.vmem %s6, 60
  %v2481 = vld [vmem:[%s2480] sm:$0xf]
  %v2482 = vld [vmem:[%s2480 + $0x4] sm:$0xf]
  %v2483 = vld [vmem:[%s2480 + $0x8] sm:$0x1]
  %v2487 = vunpack.c.l.b16 %v2481
  %v2488 = vunpack.c.l.b16 %v2482
  %v2489 = vunpack.c.l.b16 %v2483
  %v2490 = vpack.c.b16 %v2488, %v2487
  %v2491 = vpack.c.b16 %v2489, %v2489
  %v2493 = vsel %vm2158, %v2490, 0
  %v2496 = vsel %vm2158, %v2491, 0
  %2498 = vmatprep.subr.bf16.mxu0 0
  %2499 = vmatpush1.bf16.msra.mxu0 0
  %2500 = vmatprep.subr.bf16.mxu0 0
  %2501 = vmatpush1.bf16.msra.mxu0 0
  %2502 = vmatprep.subr.bf16.mxu0 0
  %2503 = vmatpush1.bf16.msra.mxu0 0
  %2504 = vmatprep.subr.bf16.mxu0 0
  %2505 = vmatpush1.bf16.msra.mxu0 0
  %2506 = vmatprep.subr.bf16.mxu0 0
  %2507 = vmatpush1.bf16.msra.mxu0 %v2166
  %2508 = vmatprep.subr.bf16.mxu0 0
  %2509 = vmatpush1.bf16.msra.mxu0 %v2145
  %2510 = vmatprep.subr.bf16.mxu0 0
  %2511 = vmatpush1.bf16.msra.mxu0 %v2144
  %2512 = vmatprep.subr.bf16.mxu0 0
  %2513 = vmatpush1.bf16.msra.mxu0 %v2143
  %2514 = vmatprep.subr.bf16.mxu0 0
  %2515 = vmatpush2.bf16.msra.mxu0 0
  %2516 = vmatprep.subr.bf16.mxu0 0
  %2517 = vmatpush2.bf16.msra.mxu0 0
  %2518 = vmatprep.subr.bf16.mxu0 0
  %2519 = vmatpush2.bf16.msra.mxu0 0
  %2520 = vmatprep.subr.bf16.mxu0 0
  %2521 = vmatpush2.bf16.msra.mxu0 0
  %2522 = vmatprep.subr.bf16.mxu0 0
  %2523 = vmatpush2.bf16.msra.mxu0 0
  %2524 = vmatprep.subr.bf16.mxu0 0
  %2525 = vmatpush2.bf16.msra.mxu0 0
  %2526 = vmatprep.subr.bf16.mxu0 0
  %2527 = vmatpush2.bf16.msra.mxu0 0
  %2528 = vmatprep.subr.bf16.mxu0 0
  %2529 = vmatpush2.bf16.msra.mxu0 0
  %2530 = vmatprep.mubr.bf16.mxu0 0
  %2531 = vmatmul.mubr.bf16.gmra.mxu0 %v2493
  %v2532 = vpop.f32.mrf.mxu0
  %v2533 = vadd.f32 0.0, %v2532
  %v2534 = vpop.f32.mrf.mxu0
  %v2535 = vpop.f32.mrf.mxu0
  %v2536 = vadd.f32 0.0, %v2535
  %v2537 = vpop.f32.mrf.mxu0
  %2538 = vmatprep.mubr.bf16.mxu0 0
  %2539 = vmatmul.mubr.bf16.gmra.mxu0 %v2496
  %v2540 = vpop.f32.mrf.mxu0
  %v2541 = vadd.f32 0.0, %v2540
  %v2542 = vpop.f32.mrf.mxu0
  %v2543 = vpop.f32.mrf.mxu0
  %v2544 = vpop.f32.mrf.mxu0
  %2545 = vdwg.mxu0
  %s2546 = scalar_lea.vmem %s6, 72
  %v2547 = vld [vmem:[%s2546] sm:$0xf]
  %v2548 = vld [vmem:[%s2546 + $0x4] sm:$0xf]
  %v2549 = vld [vmem:[%s2546 + $0x8] sm:$0x1]
  %v2553 = vunpack.c.l.b16 %v2547
  %v2554 = vunpack.c.l.b16 %v2548
  %v2555 = vunpack.c.l.b16 %v2549
  %v2556 = vpack.c.b16 %v2554, %v2553
  %v2557 = vpack.c.b16 %v2555, %v2555
  %v2559 = vsel %vm2158, %v2556, 0
  %v2562 = vsel %vm2158, %v2557, 0
  %2564 = vmatprep.subr.bf16.mxu0 0
  %2565 = vmatpush1.bf16.msra.mxu0 0
  %2566 = vmatprep.subr.bf16.mxu0 0
  %2567 = vmatpush1.bf16.msra.mxu0 0
  %2568 = vmatprep.subr.bf16.mxu0 0
  %2569 = vmatpush1.bf16.msra.mxu0 0
  %2570 = vmatprep.subr.bf16.mxu0 0
  %2571 = vmatpush1.bf16.msra.mxu0 0
  %2572 = vmatprep.subr.bf16.mxu0 0
  %2573 = vmatpush1.bf16.msra.mxu0 %v2166
  %2574 = vmatprep.subr.bf16.mxu0 0
  %2575 = vmatpush1.bf16.msra.mxu0 %v2145
  %2576 = vmatprep.subr.bf16.mxu0 0
  %2577 = vmatpush1.bf16.msra.mxu0 %v2144
  %2578 = vmatprep.subr.bf16.mxu0 0
  %2579 = vmatpush1.bf16.msra.mxu0 %v2143
  %2580 = vmatprep.subr.bf16.mxu0 0
  %2581 = vmatpush2.bf16.msra.mxu0 0
  %2582 = vmatprep.subr.bf16.mxu0 0
  %2583 = vmatpush2.bf16.msra.mxu0 0
  %2584 = vmatprep.subr.bf16.mxu0 0
  %2585 = vmatpush2.bf16.msra.mxu0 0
  %2586 = vmatprep.subr.bf16.mxu0 0
  %2587 = vmatpush2.bf16.msra.mxu0 0
  %2588 = vmatprep.subr.bf16.mxu0 0
  %2589 = vmatpush2.bf16.msra.mxu0 0
  %2590 = vmatprep.subr.bf16.mxu0 0
  %2591 = vmatpush2.bf16.msra.mxu0 0
  %2592 = vmatprep.subr.bf16.mxu0 0
  %2593 = vmatpush2.bf16.msra.mxu0 0
  %2594 = vmatprep.subr.bf16.mxu0 0
  %2595 = vmatpush2.bf16.msra.mxu0 0
  %2596 = vmatprep.mubr.bf16.mxu0 0
  %2597 = vmatmul.mubr.bf16.gmra.mxu0 %v2559
  %v2598 = vpop.f32.mrf.mxu0
  %v2599 = vadd.f32 0.0, %v2598
  %v2600 = vpop.f32.mrf.mxu0
  %v2601 = vpop.f32.mrf.mxu0
  %v2602 = vadd.f32 0.0, %v2601
  %v2603 = vpop.f32.mrf.mxu0
  %2604 = vmatprep.mubr.bf16.mxu0 0
  %2605 = vmatmul.mubr.bf16.gmra.mxu0 %v2562
  %v2606 = vpop.f32.mrf.mxu0
  %v2607 = vadd.f32 0.0, %v2606
  %v2608 = vpop.f32.mrf.mxu0
  %v2609 = vpop.f32.mrf.mxu0
  %v2610 = vpop.f32.mrf.mxu0
  %2611 = vdwg.mxu0
  %s2612 = scalar_lea.vmem %s6, 84
  %v2613 = vld [vmem:[%s2612] sm:$0xf]
  %v2614 = vld [vmem:[%s2612 + $0x4] sm:$0xf]
  %v2615 = vld [vmem:[%s2612 + $0x8] sm:$0x1]
  %v2619 = vunpack.c.l.b16 %v2613
  %v2620 = vunpack.c.l.b16 %v2614
  %v2621 = vunpack.c.l.b16 %v2615
  %v2622 = vpack.c.b16 %v2620, %v2619
  %v2623 = vpack.c.b16 %v2621, %v2621
  %v2625 = vsel %vm2158, %v2622, 0
  %v2628 = vsel %vm2158, %v2623, 0
  %2630 = vmatprep.subr.bf16.mxu0 0
  %2631 = vmatpush1.bf16.msra.mxu0 0
  %2632 = vmatprep.subr.bf16.mxu0 0
  %2633 = vmatpush1.bf16.msra.mxu0 0
  %2634 = vmatprep.subr.bf16.mxu0 0
  %2635 = vmatpush1.bf16.msra.mxu0 0
  %2636 = vmatprep.subr.bf16.mxu0 0
  %2637 = vmatpush1.bf16.msra.mxu0 0
  %2638 = vmatprep.subr.bf16.mxu0 0
  %2639 = vmatpush1.bf16.msra.mxu0 %v2166
  %2640 = vmatprep.subr.bf16.mxu0 0
  %2641 = vmatpush1.bf16.msra.mxu0 %v2145
  %2642 = vmatprep.subr.bf16.mxu0 0
  %2643 = vmatpush1.bf16.msra.mxu0 %v2144
  %2644 = vmatprep.subr.bf16.mxu0 0
  %2645 = vmatpush1.bf16.msra.mxu0 %v2143
  %2646 = vmatprep.subr.bf16.mxu0 0
  %2647 = vmatpush2.bf16.msra.mxu0 0
  %2648 = vmatprep.subr.bf16.mxu0 0
  %2649 = vmatpush2.bf16.msra.mxu0 0
  %2650 = vmatprep.subr.bf16.mxu0 0
  %2651 = vmatpush2.bf16.msra.mxu0 0
  %2652 = vmatprep.subr.bf16.mxu0 0
  %2653 = vmatpush2.bf16.msra.mxu0 0
  %2654 = vmatprep.subr.bf16.mxu0 0
  %2655 = vmatpush2.bf16.msra.mxu0 0
  %2656 = vmatprep.subr.bf16.mxu0 0
  %2657 = vmatpush2.bf16.msra.mxu0 0
  %2658 = vmatprep.subr.bf16.mxu0 0
  %2659 = vmatpush2.bf16.msra.mxu0 0
  %2660 = vmatprep.subr.bf16.mxu0 0
  %2661 = vmatpush2.bf16.msra.mxu0 0
  %2662 = vmatprep.mubr.bf16.mxu0 0
  %2663 = vmatmul.mubr.bf16.gmra.mxu0 %v2625
  %v2664 = vpop.f32.mrf.mxu0
  %v2665 = vadd.f32 0.0, %v2664
  %v2666 = vpop.f32.mrf.mxu0
  %v2667 = vpop.f32.mrf.mxu0
  %v2668 = vadd.f32 0.0, %v2667
  %v2669 = vpop.f32.mrf.mxu0
  %2670 = vmatprep.mubr.bf16.mxu0 0
  %2671 = vmatmul.mubr.bf16.gmra.mxu0 %v2628
  %v2672 = vpop.f32.mrf.mxu0
  %v2673 = vadd.f32 0.0, %v2672
  %v2674 = vpop.f32.mrf.mxu0
  %v2675 = vpop.f32.mrf.mxu0
  %v2676 = vpop.f32.mrf.mxu0
  %2677 = vdwg.mxu0
  %s2678 = scalar_lea.vmem %s6, 96
  %v2679 = vld [vmem:[%s2678] sm:$0xf]
  %v2680 = vld [vmem:[%s2678 + $0x4] sm:$0xf]
  %v2681 = vld [vmem:[%s2678 + $0x8] sm:$0x1]
  %v2685 = vunpack.c.l.b16 %v2679
  %v2686 = vunpack.c.l.b16 %v2680
  %v2687 = vunpack.c.l.b16 %v2681
  %v2688 = vpack.c.b16 %v2686, %v2685
  %v2689 = vpack.c.b16 %v2687, %v2687
  %v2691 = vsel %vm2158, %v2688, 0
  %v2694 = vsel %vm2158, %v2689, 0
  %2696 = vmatprep.subr.bf16.mxu0 0
  %2697 = vmatpush1.bf16.msra.mxu0 0
  %2698 = vmatprep.subr.bf16.mxu0 0
  %2699 = vmatpush1.bf16.msra.mxu0 0
  %2700 = vmatprep.subr.bf16.mxu0 0
  %2701 = vmatpush1.bf16.msra.mxu0 0
  %2702 = vmatprep.subr.bf16.mxu0 0
  %2703 = vmatpush1.bf16.msra.mxu0 0
  %2704 = vmatprep.subr.bf16.mxu0 0
  %2705 = vmatpush1.bf16.msra.mxu0 %v2166
  %2706 = vmatprep.subr.bf16.mxu0 0
  %2707 = vmatpush1.bf16.msra.mxu0 %v2145
  %2708 = vmatprep.subr.bf16.mxu0 0
  %2709 = vmatpush1.bf16.msra.mxu0 %v2144
  %2710 = vmatprep.subr.bf16.mxu0 0
  %2711 = vmatpush1.bf16.msra.mxu0 %v2143
  %2712 = vmatprep.subr.bf16.mxu0 0
  %2713 = vmatpush2.bf16.msra.mxu0 0
  %2714 = vmatprep.subr.bf16.mxu0 0
  %2715 = vmatpush2.bf16.msra.mxu0 0
  %2716 = vmatprep.subr.bf16.mxu0 0
  %2717 = vmatpush2.bf16.msra.mxu0 0
  %2718 = vmatprep.subr.bf16.mxu0 0
  %2719 = vmatpush2.bf16.msra.mxu0 0
  %2720 = vmatprep.subr.bf16.mxu0 0
  %2721 = vmatpush2.bf16.msra.mxu0 0
  %2722 = vmatprep.subr.bf16.mxu0 0
  %2723 = vmatpush2.bf16.msra.mxu0 0
  %2724 = vmatprep.subr.bf16.mxu0 0
  %2725 = vmatpush2.bf16.msra.mxu0 0
  %2726 = vmatprep.subr.bf16.mxu0 0
  %2727 = vmatpush2.bf16.msra.mxu0 0
  %2728 = vmatprep.mubr.bf16.mxu0 0
  %2729 = vmatmul.mubr.bf16.gmra.mxu0 %v2691
  %v2730 = vpop.f32.mrf.mxu0
  %v2731 = vadd.f32 0.0, %v2730
  %v2732 = vpop.f32.mrf.mxu0
  %v2733 = vpop.f32.mrf.mxu0
  %v2734 = vadd.f32 0.0, %v2733
  %v2735 = vpop.f32.mrf.mxu0
  %2736 = vmatprep.mubr.bf16.mxu0 0
  %2737 = vmatmul.mubr.bf16.gmra.mxu0 %v2694
  %v2738 = vpop.f32.mrf.mxu0
  %v2739 = vadd.f32 0.0, %v2738
  %v2740 = vpop.f32.mrf.mxu0
  %v2741 = vpop.f32.mrf.mxu0
  %v2742 = vpop.f32.mrf.mxu0
  %2743 = vdwg.mxu0
  %2747 = vrot.lane.b32.xlu0 %v2269, 64
  %v2748 = vpop.permute.xlu0 %2747
  %2749 = vrot.lane.b32.xlu0 %v2272, 64
  %v2750 = vpop.permute.xlu0 %2749
  %2751 = vrot.lane.b32.xlu0 %v2277, 64
  %v2752 = vpop.permute.xlu0 %2751
  %2759 = vrot.lane.b32.xlu0 %v2401, 64
  %v2760 = vpop.permute.xlu0 %2759
  %2761 = vrot.lane.b32.xlu0 %v2404, 64
  %v2762 = vpop.permute.xlu0 %2761
  %2763 = vrot.lane.b32.xlu0 %v2409, 64
  %v2764 = vpop.permute.xlu0 %2763
  %2771 = vrot.lane.b32.xlu0 %v2533, 64
  %v2772 = vpop.permute.xlu0 %2771
  %2773 = vrot.lane.b32.xlu0 %v2536, 64
  %v2774 = vpop.permute.xlu0 %2773
  %2775 = vrot.lane.b32.xlu0 %v2541, 64
  %v2776 = vpop.permute.xlu0 %2775
  %2783 = vrot.lane.b32.xlu0 %v2665, 64
  %v2784 = vpop.permute.xlu0 %2783
  %2785 = vrot.lane.b32.xlu0 %v2668, 64
  %v2786 = vpop.permute.xlu0 %2785
  %2787 = vrot.lane.b32.xlu0 %v2673, 64
  %v2788 = vpop.permute.xlu0 %2787
  %v2792 = vsel %vm1796, %v2203, %v2748
  %v2793 = vsel %vm1796, %v2206, %v2750
  %v2794 = vsel %vm1796, %v2211, %v2752
  %v2795 = vsel %vm1796, %v2335, %v2760
  %v2796 = vsel %vm1796, %v2338, %v2762
  %v2797 = vsel %vm1796, %v2343, %v2764
  %v2798 = vsel %vm1796, %v2467, %v2772
  %v2799 = vsel %vm1796, %v2470, %v2774
  %v2800 = vsel %vm1796, %v2475, %v2776
  %v2801 = vsel %vm1796, %v2599, %v2784
  %v2802 = vsel %vm1796, %v2602, %v2786
  %v2803 = vsel %vm1796, %v2607, %v2788
  %v2804 = vpack.c.bf16 %v2793, %v2792
  %v2805 = vpack.c.bf16 %v2796, %v2795
  %v2806 = vpack.c.bf16 %v2799, %v2798
  %v2807 = vpack.c.bf16 %v2802, %v2801
  %v2808 = vpack.c.bf16 %v2734, %v2731
  %v2809 = vpack.c.bf16 %v2794, %v2794
  %v2810 = vpack.c.bf16 %v2797, %v2797
  %v2811 = vpack.c.bf16 %v2800, %v2800
  %v2812 = vpack.c.bf16 %v2803, %v2803
  %v2813 = vpack.c.bf16 %v2739, %v2739
  %v2814 = vld [vmem:[%s7] sm:$0xf]
  %v2815 = vld [vmem:[%s7 + $0x4] sm:$0xf]
  %v2816 = vld [vmem:[%s7 + $0x8] sm:$0xf]
  %v2817 = vld [vmem:[%s7 + $0xc] sm:$0xf]
  %v2818 = vld [vmem:[%s7 + $0x10] sm:$0xf]
  %v2819 = vld [vmem:[%s7 + $0x14] sm:$0xf]
  %v2820 = vld [vmem:[%s7 + $0x18] sm:$0xf]
  %v2821 = vld [vmem:[%s7 + $0x1c] sm:$0xf]
  %v2822 = vld [vmem:[%s7 + $0x20] sm:$0xf]
  %v2823 = vld [vmem:[%s7 + $0x24] sm:$0xf]
  %v2824 = vld [vmem:[%s7 + $0x28] sm:$0xf]
  %v2825 = vld [vmem:[%s7 + $0x2c] sm:$0xf]
  %v2826 = vld [vmem:[%s7 + $0x30] sm:$0xf]
  %v2827 = vld [vmem:[%s7 + $0x34] sm:$0xf]
  %v2828 = vld [vmem:[%s7 + $0x38] sm:$0xf]
  %v2829 = vld [vmem:[%s7 + $0x3c] sm:$0xf]
  %v2830 = vld [vmem:[%s7 + $0x40] sm:$0xf]
  %v2831 = vld [vmem:[%s7 + $0x44] sm:$0xf]
  %v2832 = vld [vmem:[%s7 + $0x48] sm:$0xf]
  %v2833 = vld [vmem:[%s7 + $0x4c] sm:$0xf]
  %v2834 = vld [vmem:[%s7 + $0x50] sm:$0xf]
  %v2835 = vld [vmem:[%s7 + $0x54] sm:$0xf]
  %v2836 = vld [vmem:[%s7 + $0x58] sm:$0xf]
  %v2837 = vld [vmem:[%s7 + $0x5c] sm:$0xf]
  %v2838 = vld [vmem:[%s7 + $0x60] sm:$0xf]
  %v2839 = vld [vmem:[%s7 + $0x64] sm:$0xf]
  %v2840 = vld [vmem:[%s7 + $0x68] sm:$0xf]
  %v2841 = vld [vmem:[%s7 + $0x6c] sm:$0xf]
  %v2842 = vld [vmem:[%s7 + $0x70] sm:$0xf]
  %v2843 = vld [vmem:[%s7 + $0x74] sm:$0xf]
  %v2844 = vld [vmem:[%s7 + $0x78] sm:$0xf]
  %v2845 = vld [vmem:[%s7 + $0x7c] sm:$0xf]
  %v2846 = vld [vmem:[%s7 + $0x80] sm:$0xf]
  %v2847 = vld [vmem:[%s7 + $0x84] sm:$0xf]
  %v2848 = vld [vmem:[%s7 + $0x88] sm:$0xf]
  %v2849 = vld [vmem:[%s7 + $0x8c] sm:$0xf]
  %v2850 = vld [vmem:[%s7 + $0x90] sm:$0xf]
  %v2851 = vld [vmem:[%s7 + $0x94] sm:$0xf]
  %v2852 = vld [vmem:[%s7 + $0x98] sm:$0xf]
  %v2853 = vld [vmem:[%s7 + $0x9c] sm:$0xf]
  %v2854 = vld [vmem:[%s7 + $0xa0] sm:$0xf]
  %v2855 = vld [vmem:[%s7 + $0xa4] sm:$0xf]
  %v2856 = vld [vmem:[%s7 + $0xa8] sm:$0xf]
  %v2857 = vld [vmem:[%s7 + $0xac] sm:$0xf]
  %v2858 = vld [vmem:[%s7 + $0xb0] sm:$0xf]
  %v2859 = vld [vmem:[%s7 + $0xb4] sm:$0xf]
  %v2860 = vld [vmem:[%s7 + $0xb8] sm:$0xf]
  %v2861 = vld [vmem:[%s7 + $0xbc] sm:$0xf]
  %v2862 = vld [vmem:[%s7 + $0xc0] sm:$0xf]
  %v2863 = vld [vmem:[%s7 + $0xc4] sm:$0xf]
  %v2864 = vld [vmem:[%s7 + $0xc8] sm:$0xf]
  %v2865 = vld [vmem:[%s7 + $0xcc] sm:$0xf]
  %v2866 = vld [vmem:[%s7 + $0xd0] sm:$0xf]
  %v2867 = vld [vmem:[%s7 + $0xd4] sm:$0xf]
  %v2868 = vld [vmem:[%s7 + $0xd8] sm:$0xf]
  %v2869 = vld [vmem:[%s7 + $0xdc] sm:$0xf]
  %v2870 = vld [vmem:[%s7 + $0xe0] sm:$0xf]
  %v2871 = vld [vmem:[%s7 + $0xe4] sm:$0xf]
  %v2872 = vld [vmem:[%s7 + $0xe8] sm:$0xf]
  %v2873 = vld [vmem:[%s7 + $0xec] sm:$0xf]
  %v2874 = vld [vmem:[%s7 + $0xf0] sm:$0xf]
  %v2875 = vld [vmem:[%s7 + $0xf4] sm:$0xf]
  %v2876 = vld [vmem:[%s7 + $0xf8] sm:$0xf]
  %v2877 = vld [vmem:[%s7 + $0xfc] sm:$0xf]
  %v2878 = vld [vmem:[%s7 + $0x100] sm:$0xf]
  %v2879 = vld [vmem:[%s7 + $0x104] sm:$0xf]
  %v2880 = vld [vmem:[%s7 + $0x108] sm:$0xf]
  %v2881 = vld [vmem:[%s7 + $0x10c] sm:$0xf]
  %v2882 = vld [vmem:[%s7 + $0x110] sm:$0xf]
  %v2883 = vld [vmem:[%s7 + $0x114] sm:$0xf]
  %v2884 = vld [vmem:[%s7 + $0x118] sm:$0xf]
  %v2885 = vld [vmem:[%s7 + $0x11c] sm:$0xf]
  %v2886 = vld [vmem:[%s8] sm:$0x1]
  %v2888 = vlaneseq
  %v2889 = vshrl.u32 %v2888, 7
  %v2890 = vsub.s32 0, %v2889
  %v2891 = vrot.slane %v2886, %v2890
  %v2965 = vunpack.c.l.b16 %v2814
  %v2966 = vunpack.c.l.b16 %v2815
  %v2967 = vunpack.c.l.b16 %v2816
  %v2968 = vunpack.c.l.b16 %v2817
  %v2969 = vunpack.c.l.b16 %v2818
  %v2970 = vunpack.c.l.b16 %v2819
  %v2971 = vunpack.c.l.b16 %v2820
  %v2972 = vunpack.c.l.b16 %v2821
  %v2973 = vunpack.c.l.b16 %v2822
  %v2974 = vunpack.c.l.b16 %v2823
  %v2975 = vunpack.c.l.b16 %v2824
  %v2976 = vunpack.c.l.b16 %v2825
  %v2977 = vunpack.c.l.b16 %v2826
  %v2978 = vunpack.c.l.b16 %v2827
  %v2979 = vunpack.c.l.b16 %v2828
  %v2980 = vunpack.c.l.b16 %v2829
  %v2981 = vunpack.c.l.b16 %v2830
  %v2982 = vunpack.c.l.b16 %v2831
  %v2983 = vunpack.c.l.b16 %v2832
  %v2984 = vunpack.c.l.b16 %v2833
  %v2985 = vunpack.c.l.b16 %v2834
  %v2986 = vunpack.c.l.b16 %v2835
  %v2987 = vunpack.c.l.b16 %v2836
  %v2988 = vunpack.c.l.b16 %v2837
  %v2989 = vunpack.c.l.b16 %v2838
  %v2990 = vunpack.c.l.b16 %v2839
  %v2991 = vunpack.c.l.b16 %v2840
  %v2992 = vunpack.c.l.b16 %v2841
  %v2993 = vunpack.c.l.b16 %v2842
  %v2994 = vunpack.c.l.b16 %v2843
  %v2995 = vunpack.c.l.b16 %v2844
  %v2996 = vunpack.c.l.b16 %v2845
  %v2997 = vunpack.c.l.b16 %v2846
  %v2998 = vunpack.c.l.b16 %v2847
  %v2999 = vunpack.c.l.b16 %v2848
  %v3000 = vunpack.c.l.b16 %v2849
  %v3001 = vunpack.c.l.b16 %v2850
  %v3002 = vunpack.c.l.b16 %v2851
  %v3003 = vunpack.c.l.b16 %v2852
  %v3004 = vunpack.c.l.b16 %v2853
  %v3005 = vunpack.c.l.b16 %v2854
  %v3006 = vunpack.c.l.b16 %v2855
  %v3007 = vunpack.c.l.b16 %v2856
  %v3008 = vunpack.c.l.b16 %v2857
  %v3009 = vunpack.c.l.b16 %v2858
  %v3010 = vunpack.c.l.b16 %v2859
  %v3011 = vunpack.c.l.b16 %v2860
  %v3012 = vunpack.c.l.b16 %v2861
  %v3013 = vunpack.c.l.b16 %v2862
  %v3014 = vunpack.c.l.b16 %v2863
  %v3015 = vunpack.c.l.b16 %v2864
  %v3016 = vunpack.c.l.b16 %v2865
  %v3017 = vunpack.c.l.b16 %v2866
  %v3018 = vunpack.c.l.b16 %v2867
  %v3019 = vunpack.c.l.b16 %v2868
  %v3020 = vunpack.c.l.b16 %v2869
  %v3021 = vunpack.c.l.b16 %v2870
  %v3022 = vunpack.c.l.b16 %v2871
  %v3023 = vunpack.c.l.b16 %v2872
  %v3024 = vunpack.c.l.b16 %v2873
  %v3025 = vunpack.c.l.b16 %v2874
  %v3026 = vunpack.c.l.b16 %v2875
  %v3027 = vunpack.c.l.b16 %v2876
  %v3028 = vunpack.c.l.b16 %v2877
  %v3029 = vunpack.c.l.b16 %v2878
  %v3030 = vunpack.c.l.b16 %v2879
  %v3031 = vunpack.c.l.b16 %v2880
  %v3032 = vunpack.c.l.b16 %v2881
  %v3033 = vunpack.c.l.b16 %v2882
  %v3034 = vunpack.c.l.b16 %v2883
  %v3035 = vunpack.c.l.b16 %v2884
  %v3036 = vunpack.c.l.b16 %v2885
  %v3037 = vpack.c.b16 %v2966, %v2965
  %v3038 = vpack.c.b16 %v2968, %v2967
  %v3039 = vpack.c.b16 %v2970, %v2969
  %v3040 = vpack.c.b16 %v2972, %v2971
  %v3041 = vpack.c.b16 %v2974, %v2973
  %v3042 = vpack.c.b16 %v2976, %v2975
  %v3043 = vpack.c.b16 %v2978, %v2977
  %v3044 = vpack.c.b16 %v2980, %v2979
  %v3045 = vpack.c.b16 %v2982, %v2981
  %v3046 = vpack.c.b16 %v2984, %v2983
  %v3047 = vpack.c.b16 %v2986, %v2985
  %v3048 = vpack.c.b16 %v2988, %v2987
  %v3049 = vpack.c.b16 %v2990, %v2989
  %v3050 = vpack.c.b16 %v2992, %v2991
  %v3051 = vpack.c.b16 %v2994, %v2993
  %v3052 = vpack.c.b16 %v2996, %v2995
  %v3053 = vpack.c.b16 %v2998, %v2997
  %v3054 = vpack.c.b16 %v3000, %v2999
  %v3055 = vpack.c.b16 %v3002, %v3001
  %v3056 = vpack.c.b16 %v3004, %v3003
  %v3057 = vpack.c.b16 %v3006, %v3005
  %v3058 = vpack.c.b16 %v3008, %v3007
  %v3059 = vpack.c.b16 %v3010, %v3009
  %v3060 = vpack.c.b16 %v3012, %v3011
  %v3061 = vpack.c.b16 %v3014, %v3013
  %v3062 = vpack.c.b16 %v3016, %v3015
  %v3063 = vpack.c.b16 %v3018, %v3017
  %v3064 = vpack.c.b16 %v3020, %v3019
  %v3065 = vpack.c.b16 %v3022, %v3021
  %v3066 = vpack.c.b16 %v3024, %v3023
  %v3067 = vpack.c.b16 %v3026, %v3025
  %v3068 = vpack.c.b16 %v3028, %v3027
  %v3069 = vpack.c.b16 %v3030, %v3029
  %v3070 = vpack.c.b16 %v3032, %v3031
  %v3071 = vpack.c.b16 %v3034, %v3033
  %v3072 = vpack.c.b16 %v3036, %v3035
  %v3110 = vsel %vm1796, %v2808, 0
  %v3113 = vsel %vm1796, %v2813, 0
  %3115 = vmatprep.subr.bf16.mxu0 0
  %3116 = vmatpush1.bf16.msra.mxu0 %v3044
  %3117 = vmatprep.subr.bf16.mxu0 0
  %3118 = vmatpush1.bf16.msra.mxu0 %v3043
  %3119 = vmatprep.subr.bf16.mxu0 0
  %3120 = vmatpush1.bf16.msra.mxu0 %v3042
  %3121 = vmatprep.subr.bf16.mxu0 0
  %3122 = vmatpush1.bf16.msra.mxu0 %v3041
  %3123 = vmatprep.subr.bf16.mxu0 0
  %3124 = vmatpush1.bf16.msra.mxu0 %v3040
  %3125 = vmatprep.subr.bf16.mxu0 0
  %3126 = vmatpush1.bf16.msra.mxu0 %v3039
  %3127 = vmatprep.subr.bf16.mxu0 0
  %3128 = vmatpush1.bf16.msra.mxu0 %v3038
  %3129 = vmatprep.subr.bf16.mxu0 0
  %3130 = vmatpush1.bf16.msra.mxu0 %v3037
  %3131 = vmatprep.subr.bf16.mxu0 0
  %3132 = vmatpush2.bf16.msra.mxu0 %v3052
  %3133 = vmatprep.subr.bf16.mxu0 0
  %3134 = vmatpush2.bf16.msra.mxu0 %v3051
  %3135 = vmatprep.subr.bf16.mxu0 0
  %3136 = vmatpush2.bf16.msra.mxu0 %v3050
  %3137 = vmatprep.subr.bf16.mxu0 0
  %3138 = vmatpush2.bf16.msra.mxu0 %v3049
  %3139 = vmatprep.subr.bf16.mxu0 0
  %3140 = vmatpush2.bf16.msra.mxu0 %v3048
  %3141 = vmatprep.subr.bf16.mxu0 0
  %3142 = vmatpush2.bf16.msra.mxu0 %v3047
  %3143 = vmatprep.subr.bf16.mxu0 0
  %3144 = vmatpush2.bf16.msra.mxu0 %v3046
  %3145 = vmatprep.subr.bf16.mxu0 0
  %3146 = vmatpush2.bf16.msra.mxu0 %v3045
  %3147 = vmatprep.mubr.bf16.mxu0 %v2805
  %3148 = vmatmul.mubr.bf16.gmra.mxu0 %v2804
  %v3149 = vpop.f32.mrf.mxu0
  %v3150 = vadd.f32 %v2891, %v3149
  %v3151 = vpop.f32.mrf.mxu0
  %v3152 = vpop.f32.mrf.mxu0
  %v3153 = vadd.f32 %v2891, %v3152
  %v3154 = vpop.f32.mrf.mxu0
  %3155 = vmatprep.mubr.bf16.mxu0 %v2810
  %3156 = vmatmul.mubr.bf16.gmra.mxu0 %v2809
  %v3157 = vpop.f32.mrf.mxu0
  %v3158 = vadd.f32 %v2891, %v3157
  %v3159 = vpop.f32.mrf.mxu0
  %v3160 = vpop.f32.mrf.mxu0
  %v3161 = vpop.f32.mrf.mxu0
  %3162 = vdwg.mxu0
  %3163 = vmatprep.subr.bf16.mxu0 0
  %3164 = vmatpush1.bf16.msra.mxu0 %v3060
  %3165 = vmatprep.subr.bf16.mxu0 0
  %3166 = vmatpush1.bf16.msra.mxu0 %v3059
  %3167 = vmatprep.subr.bf16.mxu0 0
  %3168 = vmatpush1.bf16.msra.mxu0 %v3058
  %3169 = vmatprep.subr.bf16.mxu0 0
  %3170 = vmatpush1.bf16.msra.mxu0 %v3057
  %3171 = vmatprep.subr.bf16.mxu0 0
  %3172 = vmatpush1.bf16.msra.mxu0 %v3056
  %3173 = vmatprep.subr.bf16.mxu0 0
  %3174 = vmatpush1.bf16.msra.mxu0 %v3055
  %3175 = vmatprep.subr.bf16.mxu0 0
  %3176 = vmatpush1.bf16.msra.mxu0 %v3054
  %3177 = vmatprep.subr.bf16.mxu0 0
  %3178 = vmatpush1.bf16.msra.mxu0 %v3053
  %3179 = vmatprep.subr.bf16.mxu0 0
  %3180 = vmatpush2.bf16.msra.mxu0 %v3068
  %3181 = vmatprep.subr.bf16.mxu0 0
  %3182 = vmatpush2.bf16.msra.mxu0 %v3067
  %3183 = vmatprep.subr.bf16.mxu0 0
  %3184 = vmatpush2.bf16.msra.mxu0 %v3066
  %3185 = vmatprep.subr.bf16.mxu0 0
  %3186 = vmatpush2.bf16.msra.mxu0 %v3065
  %3187 = vmatprep.subr.bf16.mxu0 0
  %3188 = vmatpush2.bf16.msra.mxu0 %v3064
  %3189 = vmatprep.subr.bf16.mxu0 0
  %3190 = vmatpush2.bf16.msra.mxu0 %v3063
  %3191 = vmatprep.subr.bf16.mxu0 0
  %3192 = vmatpush2.bf16.msra.mxu0 %v3062
  %3193 = vmatprep.subr.bf16.mxu0 0
  %3194 = vmatpush2.bf16.msra.mxu0 %v3061
  %3195 = vmatprep.mubr.bf16.mxu0 %v2807
  %3196 = vmatmul.mubr.bf16.gmra.mxu0 %v2806
  %v3197 = vpop.f32.mrf.mxu0
  %v3198 = vadd.f32 %v3150, %v3197
  %v3199 = vpop.f32.mrf.mxu0
  %v3200 = vpop.f32.mrf.mxu0
  %v3201 = vadd.f32 %v3153, %v3200
  %v3202 = vpop.f32.mrf.mxu0
  %3203 = vmatprep.mubr.bf16.mxu0 %v2812
  %3204 = vmatmul.mubr.bf16.gmra.mxu0 %v2811
  %v3205 = vpop.f32.mrf.mxu0
  %v3206 = vadd.f32 %v3158, %v3205
  %v3207 = vpop.f32.mrf.mxu0
  %v3208 = vpop.f32.mrf.mxu0
  %v3209 = vpop.f32.mrf.mxu0
  %3210 = vdwg.mxu0
  %3211 = vmatprep.subr.bf16.mxu0 0
  %3212 = vmatpush1.bf16.msra.mxu0 0
  %3213 = vmatprep.subr.bf16.mxu0 0
  %3214 = vmatpush1.bf16.msra.mxu0 0
  %3215 = vmatprep.subr.bf16.mxu0 0
  %3216 = vmatpush1.bf16.msra.mxu0 0
  %3217 = vmatprep.subr.bf16.mxu0 0
  %3218 = vmatpush1.bf16.msra.mxu0 0
  %3219 = vmatprep.subr.bf16.mxu0 0
  %3220 = vmatpush1.bf16.msra.mxu0 %v3072
  %3221 = vmatprep.subr.bf16.mxu0 0
  %3222 = vmatpush1.bf16.msra.mxu0 %v3071
  %3223 = vmatprep.subr.bf16.mxu0 0
  %3224 = vmatpush1.bf16.msra.mxu0 %v3070
  %3225 = vmatprep.subr.bf16.mxu0 0
  %3226 = vmatpush1.bf16.msra.mxu0 %v3069
  %3227 = vmatprep.subr.bf16.mxu0 0
  %3228 = vmatpush2.bf16.msra.mxu0 0
  %3229 = vmatprep.subr.bf16.mxu0 0
  %3230 = vmatpush2.bf16.msra.mxu0 0
  %3231 = vmatprep.subr.bf16.mxu0 0
  %3232 = vmatpush2.bf16.msra.mxu0 0
  %3233 = vmatprep.subr.bf16.mxu0 0
  %3234 = vmatpush2.bf16.msra.mxu0 0
  %3235 = vmatprep.subr.bf16.mxu0 0
  %3236 = vmatpush2.bf16.msra.mxu0 0
  %3237 = vmatprep.subr.bf16.mxu0 0
  %3238 = vmatpush2.bf16.msra.mxu0 0
  %3239 = vmatprep.subr.bf16.mxu0 0
  %3240 = vmatpush2.bf16.msra.mxu0 0
  %3241 = vmatprep.subr.bf16.mxu0 0
  %3242 = vmatpush2.bf16.msra.mxu0 0
  %3243 = vmatprep.mubr.bf16.mxu0 0
  %3244 = vmatmul.mubr.bf16.gmra.mxu0 %v3110
  %v3245 = vpop.f32.mrf.mxu0
  %v3246 = vadd.f32 %v3198, %v3245
  %v3247 = vpop.f32.mrf.mxu0
  %v3248 = vpop.f32.mrf.mxu0
  %v3249 = vadd.f32 %v3201, %v3248
  %v3250 = vpop.f32.mrf.mxu0
  %3251 = vmatprep.mubr.bf16.mxu0 0
  %3252 = vmatmul.mubr.bf16.gmra.mxu0 %v3113
  %v3253 = vpop.f32.mrf.mxu0
  %v3254 = vadd.f32 %v3206, %v3253
  %v3255 = vpop.f32.mrf.mxu0
  %v3256 = vpop.f32.mrf.mxu0
  %v3257 = vpop.f32.mrf.mxu0
  %3258 = vdwg.mxu0
  %v3259 = vmax.f32 %v3246, 0.0
  %v3260 = vmax.f32 %v3249, 0.0
  %v3261 = vmax.f32 %v3254, 0.0
  %v3262 = vpack.c.bf16 %v3260, %v3259
  %v3263 = vpack.c.bf16 %v3261, %v3261
  %v3264 = vld [vmem:[%s9] sm:$0x1]
  %vm3265 = vcmask 146432
  %v3267 = vsel %vm3265, %v3264, 0
  %v3270 = vsel %vm616, %v3263, 0
  %3272 = vmatprep.subr.bf16.mxu0 0
  %3273 = vmatpush1.bf16.msra.mxu0 0
  %3274 = vmatprep.subr.bf16.mxu0 0
  %3275 = vmatpush1.bf16.msra.mxu0 0
  %3276 = vmatprep.subr.bf16.mxu0 0
  %3277 = vmatpush1.bf16.msra.mxu0 0
  %3278 = vmatprep.subr.bf16.mxu0 0
  %3279 = vmatpush1.bf16.msra.mxu0 0
  %3280 = vmatprep.subr.bf16.mxu0 0
  %3281 = vmatpush1.bf16.msra.mxu0 0
  %3282 = vmatprep.subr.bf16.mxu0 0
  %3283 = vmatpush1.bf16.msra.mxu0 0
  %3284 = vmatprep.subr.bf16.mxu0 0
  %3285 = vmatpush1.bf16.msra.mxu0 %v3270
  %3286 = vmatprep.subr.bf16.mxu0 0
  %3287 = vmatpush1.bf16.msra.mxu0 %v3262
  %3288 = vmatprep.subr.bf16.mxu0 0
  %3289 = vmatpush2.bf16.msra.mxu0 0
  %3290 = vmatprep.subr.bf16.mxu0 0
  %3291 = vmatpush2.bf16.msra.mxu0 0
  %3292 = vmatprep.subr.bf16.mxu0 0
  %3293 = vmatpush2.bf16.msra.mxu0 0
  %3294 = vmatprep.subr.bf16.mxu0 0
  %3295 = vmatpush2.bf16.msra.mxu0 0
  %3296 = vmatprep.subr.bf16.mxu0 0
  %3297 = vmatpush2.bf16.msra.mxu0 0
  %3298 = vmatprep.subr.bf16.mxu0 0
  %3299 = vmatpush2.bf16.msra.mxu0 0
  %3300 = vmatprep.subr.bf16.mxu0 0
  %3301 = vmatpush2.bf16.msra.mxu0 0
  %3302 = vmatprep.subr.bf16.mxu0 0
  %3303 = vmatpush2.bf16.msra.mxu0 0
  %3304 = vmatprep.mubr.bf16.mxu0 0
  %3305 = vmatmul.mubr.bf16.gmra.mxu0 %v3267
  %v3306 = vpop.f32.mrf.mxu0
  %v3307 = vadd.f32 0.0, %v3306
  %v3308 = vpop.f32.mrf.mxu0
  %v3309 = vpop.f32.mrf.mxu0
  %v3310 = vpop.f32.mrf.mxu0
  %3311 = vdwg.mxu0
  %s3312 = scalar_lea.vmem %s9, 1
  %v3313 = vld [vmem:[%s3312] sm:$0x1]
  %v3315 = vsel %vm3265, %v3313, 0
  %3317 = vmatprep.subr.bf16.mxu0 0
  %3318 = vmatpush1.bf16.msra.mxu0 0
  %3319 = vmatprep.subr.bf16.mxu0 0
  %3320 = vmatpush1.bf16.msra.mxu0 0
  %3321 = vmatprep.subr.bf16.mxu0 0
  %3322 = vmatpush1.bf16.msra.mxu0 0
  %3323 = vmatprep.subr.bf16.mxu0 0
  %3324 = vmatpush1.bf16.msra.mxu0 0
  %3325 = vmatprep.subr.bf16.mxu0 0
  %3326 = vmatpush1.bf16.msra.mxu0 0
  %3327 = vmatprep.subr.bf16.mxu0 0
  %3328 = vmatpush1.bf16.msra.mxu0 0
  %3329 = vmatprep.subr.bf16.mxu0 0
  %3330 = vmatpush1.bf16.msra.mxu0 %v3270
  %3331 = vmatprep.subr.bf16.mxu0 0
  %3332 = vmatpush1.bf16.msra.mxu0 %v3262
  %3333 = vmatprep.subr.bf16.mxu0 0
  %3334 = vmatpush2.bf16.msra.mxu0 0
  %3335 = vmatprep.subr.bf16.mxu0 0
  %3336 = vmatpush2.bf16.msra.mxu0 0
  %3337 = vmatprep.subr.bf16.mxu0 0
  %3338 = vmatpush2.bf16.msra.mxu0 0
  %3339 = vmatprep.subr.bf16.mxu0 0
  %3340 = vmatpush2.bf16.msra.mxu0 0
  %3341 = vmatprep.subr.bf16.mxu0 0
  %3342 = vmatpush2.bf16.msra.mxu0 0
  %3343 = vmatprep.subr.bf16.mxu0 0
  %3344 = vmatpush2.bf16.msra.mxu0 0
  %3345 = vmatprep.subr.bf16.mxu0 0
  %3346 = vmatpush2.bf16.msra.mxu0 0
  %3347 = vmatprep.subr.bf16.mxu0 0
  %3348 = vmatpush2.bf16.msra.mxu0 0
  %3349 = vmatprep.mubr.bf16.mxu0 0
  %3350 = vmatmul.mubr.bf16.gmra.mxu0 %v3315
  %v3351 = vpop.f32.mrf.mxu0
  %v3352 = vadd.f32 0.0, %v3351
  %v3353 = vpop.f32.mrf.mxu0
  %v3354 = vpop.f32.mrf.mxu0
  %v3355 = vpop.f32.mrf.mxu0
  %3356 = vdwg.mxu0
  %s3357 = scalar_lea.vmem %s9, 2
  %v3358 = vld [vmem:[%s3357] sm:$0x1]
  %v3360 = vsel %vm3265, %v3358, 0
  %3362 = vmatprep.subr.bf16.mxu0 0
  %3363 = vmatpush1.bf16.msra.mxu0 0
  %3364 = vmatprep.subr.bf16.mxu0 0
  %3365 = vmatpush1.bf16.msra.mxu0 0
  %3366 = vmatprep.subr.bf16.mxu0 0
  %3367 = vmatpush1.bf16.msra.mxu0 0
  %3368 = vmatprep.subr.bf16.mxu0 0
  %3369 = vmatpush1.bf16.msra.mxu0 0
  %3370 = vmatprep.subr.bf16.mxu0 0
  %3371 = vmatpush1.bf16.msra.mxu0 0
  %3372 = vmatprep.subr.bf16.mxu0 0
  %3373 = vmatpush1.bf16.msra.mxu0 0
  %3374 = vmatprep.subr.bf16.mxu0 0
  %3375 = vmatpush1.bf16.msra.mxu0 %v3270
  %3376 = vmatprep.subr.bf16.mxu0 0
  %3377 = vmatpush1.bf16.msra.mxu0 %v3262
  %3378 = vmatprep.subr.bf16.mxu0 0
  %3379 = vmatpush2.bf16.msra.mxu0 0
  %3380 = vmatprep.subr.bf16.mxu0 0
  %3381 = vmatpush2.bf16.msra.mxu0 0
  %3382 = vmatprep.subr.bf16.mxu0 0
  %3383 = vmatpush2.bf16.msra.mxu0 0
  %3384 = vmatprep.subr.bf16.mxu0 0
  %3385 = vmatpush2.bf16.msra.mxu0 0
  %3386 = vmatprep.subr.bf16.mxu0 0
  %3387 = vmatpush2.bf16.msra.mxu0 0
  %3388 = vmatprep.subr.bf16.mxu0 0
  %3389 = vmatpush2.bf16.msra.mxu0 0
  %3390 = vmatprep.subr.bf16.mxu0 0
  %3391 = vmatpush2.bf16.msra.mxu0 0
  %3392 = vmatprep.subr.bf16.mxu0 0
  %3393 = vmatpush2.bf16.msra.mxu0 0
  %3394 = vmatprep.mubr.bf16.mxu0 0
  %3395 = vmatmul.mubr.bf16.gmra.mxu0 %v3360
  %v3396 = vpop.f32.mrf.mxu0
  %v3397 = vadd.f32 0.0, %v3396
  %v3398 = vpop.f32.mrf.mxu0
  %v3399 = vpop.f32.mrf.mxu0
  %v3400 = vpop.f32.mrf.mxu0
  %3401 = vdwg.mxu0
  %s3402 = scalar_lea.vmem %s9, 3
  %v3403 = vld [vmem:[%s3402] sm:$0x1]
  %v3405 = vsel %vm3265, %v3403, 0
  %3407 = vmatprep.subr.bf16.mxu0 0
  %3408 = vmatpush1.bf16.msra.mxu0 0
  %3409 = vmatprep.subr.bf16.mxu0 0
  %3410 = vmatpush1.bf16.msra.mxu0 0
  %3411 = vmatprep.subr.bf16.mxu0 0
  %3412 = vmatpush1.bf16.msra.mxu0 0
  %3413 = vmatprep.subr.bf16.mxu0 0
  %3414 = vmatpush1.bf16.msra.mxu0 0
  %3415 = vmatprep.subr.bf16.mxu0 0
  %3416 = vmatpush1.bf16.msra.mxu0 0
  %3417 = vmatprep.subr.bf16.mxu0 0
  %3418 = vmatpush1.bf16.msra.mxu0 0
  %3419 = vmatprep.subr.bf16.mxu0 0
  %3420 = vmatpush1.bf16.msra.mxu0 %v3270
  %3421 = vmatprep.subr.bf16.mxu0 0
  %3422 = vmatpush1.bf16.msra.mxu0 %v3262
  %3423 = vmatprep.subr.bf16.mxu0 0
  %3424 = vmatpush2.bf16.msra.mxu0 0
  %3425 = vmatprep.subr.bf16.mxu0 0
  %3426 = vmatpush2.bf16.msra.mxu0 0
  %3427 = vmatprep.subr.bf16.mxu0 0
  %3428 = vmatpush2.bf16.msra.mxu0 0
  %3429 = vmatprep.subr.bf16.mxu0 0
  %3430 = vmatpush2.bf16.msra.mxu0 0
  %3431 = vmatprep.subr.bf16.mxu0 0
  %3432 = vmatpush2.bf16.msra.mxu0 0
  %3433 = vmatprep.subr.bf16.mxu0 0
  %3434 = vmatpush2.bf16.msra.mxu0 0
  %3435 = vmatprep.subr.bf16.mxu0 0
  %3436 = vmatpush2.bf16.msra.mxu0 0
  %3437 = vmatprep.subr.bf16.mxu0 0
  %3438 = vmatpush2.bf16.msra.mxu0 0
  %3439 = vmatprep.mubr.bf16.mxu0 0
  %3440 = vmatmul.mubr.bf16.gmra.mxu0 %v3405
  %v3441 = vpop.f32.mrf.mxu0
  %v3442 = vadd.f32 0.0, %v3441
  %v3443 = vpop.f32.mrf.mxu0
  %v3444 = vpop.f32.mrf.mxu0
  %v3445 = vpop.f32.mrf.mxu0
  %3446 = vdwg.mxu0
  %s3447 = scalar_lea.vmem %s9, 4
  %v3448 = vld [vmem:[%s3447] sm:$0x1]
  %v3450 = vsel %vm3265, %v3448, 0
  %3452 = vmatprep.subr.bf16.mxu0 0
  %3453 = vmatpush1.bf16.msra.mxu0 0
  %3454 = vmatprep.subr.bf16.mxu0 0
  %3455 = vmatpush1.bf16.msra.mxu0 0
  %3456 = vmatprep.subr.bf16.mxu0 0
  %3457 = vmatpush1.bf16.msra.mxu0 0
  %3458 = vmatprep.subr.bf16.mxu0 0
  %3459 = vmatpush1.bf16.msra.mxu0 0
  %3460 = vmatprep.subr.bf16.mxu0 0
  %3461 = vmatpush1.bf16.msra.mxu0 0
  %3462 = vmatprep.subr.bf16.mxu0 0
  %3463 = vmatpush1.bf16.msra.mxu0 0
  %3464 = vmatprep.subr.bf16.mxu0 0
  %3465 = vmatpush1.bf16.msra.mxu0 %v3270
  %3466 = vmatprep.subr.bf16.mxu0 0
  %3467 = vmatpush1.bf16.msra.mxu0 %v3262
  %3468 = vmatprep.subr.bf16.mxu0 0
  %3469 = vmatpush2.bf16.msra.mxu0 0
  %3470 = vmatprep.subr.bf16.mxu0 0
  %3471 = vmatpush2.bf16.msra.mxu0 0
  %3472 = vmatprep.subr.bf16.mxu0 0
  %3473 = vmatpush2.bf16.msra.mxu0 0
  %3474 = vmatprep.subr.bf16.mxu0 0
  %3475 = vmatpush2.bf16.msra.mxu0 0
  %3476 = vmatprep.subr.bf16.mxu0 0
  %3477 = vmatpush2.bf16.msra.mxu0 0
  %3478 = vmatprep.subr.bf16.mxu0 0
  %3479 = vmatpush2.bf16.msra.mxu0 0
  %3480 = vmatprep.subr.bf16.mxu0 0
  %3481 = vmatpush2.bf16.msra.mxu0 0
  %3482 = vmatprep.subr.bf16.mxu0 0
  %3483 = vmatpush2.bf16.msra.mxu0 0
  %3484 = vmatprep.mubr.bf16.mxu0 0
  %3485 = vmatmul.mubr.bf16.gmra.mxu0 %v3450
  %v3486 = vpop.f32.mrf.mxu0
  %v3487 = vadd.f32 0.0, %v3486
  %v3488 = vpop.f32.mrf.mxu0
  %v3489 = vpop.f32.mrf.mxu0
  %v3490 = vpop.f32.mrf.mxu0
  %3491 = vdwg.mxu0
  %s3492 = scalar_lea.vmem %s9, 5
  %v3493 = vld [vmem:[%s3492] sm:$0x1]
  %v3495 = vsel %vm3265, %v3493, 0
  %3497 = vmatprep.subr.bf16.mxu0 0
  %3498 = vmatpush1.bf16.msra.mxu0 0
  %3499 = vmatprep.subr.bf16.mxu0 0
  %3500 = vmatpush1.bf16.msra.mxu0 0
  %3501 = vmatprep.subr.bf16.mxu0 0
  %3502 = vmatpush1.bf16.msra.mxu0 0
  %3503 = vmatprep.subr.bf16.mxu0 0
  %3504 = vmatpush1.bf16.msra.mxu0 0
  %3505 = vmatprep.subr.bf16.mxu0 0
  %3506 = vmatpush1.bf16.msra.mxu0 0
  %3507 = vmatprep.subr.bf16.mxu0 0
  %3508 = vmatpush1.bf16.msra.mxu0 0
  %3509 = vmatprep.subr.bf16.mxu0 0
  %3510 = vmatpush1.bf16.msra.mxu0 %v3270
  %3511 = vmatprep.subr.bf16.mxu0 0
  %3512 = vmatpush1.bf16.msra.mxu0 %v3262
  %3513 = vmatprep.subr.bf16.mxu0 0
  %3514 = vmatpush2.bf16.msra.mxu0 0
  %3515 = vmatprep.subr.bf16.mxu0 0
  %3516 = vmatpush2.bf16.msra.mxu0 0
  %3517 = vmatprep.subr.bf16.mxu0 0
  %3518 = vmatpush2.bf16.msra.mxu0 0
  %3519 = vmatprep.subr.bf16.mxu0 0
  %3520 = vmatpush2.bf16.msra.mxu0 0
  %3521 = vmatprep.subr.bf16.mxu0 0
  %3522 = vmatpush2.bf16.msra.mxu0 0
  %3523 = vmatprep.subr.bf16.mxu0 0
  %3524 = vmatpush2.bf16.msra.mxu0 0
  %3525 = vmatprep.subr.bf16.mxu0 0
  %3526 = vmatpush2.bf16.msra.mxu0 0
  %3527 = vmatprep.subr.bf16.mxu0 0
  %3528 = vmatpush2.bf16.msra.mxu0 0
  %3529 = vmatprep.mubr.bf16.mxu0 0
  %3530 = vmatmul.mubr.bf16.gmra.mxu0 %v3495
  %v3531 = vpop.f32.mrf.mxu0
  %v3532 = vadd.f32 0.0, %v3531
  %v3533 = vpop.f32.mrf.mxu0
  %v3534 = vpop.f32.mrf.mxu0
  %v3535 = vpop.f32.mrf.mxu0
  %3536 = vdwg.mxu0
  %s3537 = scalar_lea.vmem %s9, 6
  %v3538 = vld [vmem:[%s3537] sm:$0x1]
  %v3540 = vsel %vm3265, %v3538, 0
  %3542 = vmatprep.subr.bf16.mxu0 0
  %3543 = vmatpush1.bf16.msra.mxu0 0
  %3544 = vmatprep.subr.bf16.mxu0 0
  %3545 = vmatpush1.bf16.msra.mxu0 0
  %3546 = vmatprep.subr.bf16.mxu0 0
  %3547 = vmatpush1.bf16.msra.mxu0 0
  %3548 = vmatprep.subr.bf16.mxu0 0
  %3549 = vmatpush1.bf16.msra.mxu0 0
  %3550 = vmatprep.subr.bf16.mxu0 0
  %3551 = vmatpush1.bf16.msra.mxu0 0
  %3552 = vmatprep.subr.bf16.mxu0 0
  %3553 = vmatpush1.bf16.msra.mxu0 0
  %3554 = vmatprep.subr.bf16.mxu0 0
  %3555 = vmatpush1.bf16.msra.mxu0 %v3270
  %3556 = vmatprep.subr.bf16.mxu0 0
  %3557 = vmatpush1.bf16.msra.mxu0 %v3262
  %3558 = vmatprep.subr.bf16.mxu0 0
  %3559 = vmatpush2.bf16.msra.mxu0 0
  %3560 = vmatprep.subr.bf16.mxu0 0
  %3561 = vmatpush2.bf16.msra.mxu0 0
  %3562 = vmatprep.subr.bf16.mxu0 0
  %3563 = vmatpush2.bf16.msra.mxu0 0
  %3564 = vmatprep.subr.bf16.mxu0 0
  %3565 = vmatpush2.bf16.msra.mxu0 0
  %3566 = vmatprep.subr.bf16.mxu0 0
  %3567 = vmatpush2.bf16.msra.mxu0 0
  %3568 = vmatprep.subr.bf16.mxu0 0
  %3569 = vmatpush2.bf16.msra.mxu0 0
  %3570 = vmatprep.subr.bf16.mxu0 0
  %3571 = vmatpush2.bf16.msra.mxu0 0
  %3572 = vmatprep.subr.bf16.mxu0 0
  %3573 = vmatpush2.bf16.msra.mxu0 0
  %3574 = vmatprep.mubr.bf16.mxu0 0
  %3575 = vmatmul.mubr.bf16.gmra.mxu0 %v3540
  %v3576 = vpop.f32.mrf.mxu0
  %v3577 = vadd.f32 0.0, %v3576
  %v3578 = vpop.f32.mrf.mxu0
  %v3579 = vpop.f32.mrf.mxu0
  %v3580 = vpop.f32.mrf.mxu0
  %3581 = vdwg.mxu0
  %s3582 = scalar_lea.vmem %s9, 7
  %v3583 = vld [vmem:[%s3582] sm:$0x1]
  %v3585 = vsel %vm3265, %v3583, 0
  %3587 = vmatprep.subr.bf16.mxu0 0
  %3588 = vmatpush1.bf16.msra.mxu0 0
  %3589 = vmatprep.subr.bf16.mxu0 0
  %3590 = vmatpush1.bf16.msra.mxu0 0
  %3591 = vmatprep.subr.bf16.mxu0 0
  %3592 = vmatpush1.bf16.msra.mxu0 0
  %3593 = vmatprep.subr.bf16.mxu0 0
  %3594 = vmatpush1.bf16.msra.mxu0 0
  %3595 = vmatprep.subr.bf16.mxu0 0
  %3596 = vmatpush1.bf16.msra.mxu0 0
  %3597 = vmatprep.subr.bf16.mxu0 0
  %3598 = vmatpush1.bf16.msra.mxu0 0
  %3599 = vmatprep.subr.bf16.mxu0 0
  %3600 = vmatpush1.bf16.msra.mxu0 %v3270
  %3601 = vmatprep.subr.bf16.mxu0 0
  %3602 = vmatpush1.bf16.msra.mxu0 %v3262
  %3603 = vmatprep.subr.bf16.mxu0 0
  %3604 = vmatpush2.bf16.msra.mxu0 0
  %3605 = vmatprep.subr.bf16.mxu0 0
  %3606 = vmatpush2.bf16.msra.mxu0 0
  %3607 = vmatprep.subr.bf16.mxu0 0
  %3608 = vmatpush2.bf16.msra.mxu0 0
  %3609 = vmatprep.subr.bf16.mxu0 0
  %3610 = vmatpush2.bf16.msra.mxu0 0
  %3611 = vmatprep.subr.bf16.mxu0 0
  %3612 = vmatpush2.bf16.msra.mxu0 0
  %3613 = vmatprep.subr.bf16.mxu0 0
  %3614 = vmatpush2.bf16.msra.mxu0 0
  %3615 = vmatprep.subr.bf16.mxu0 0
  %3616 = vmatpush2.bf16.msra.mxu0 0
  %3617 = vmatprep.subr.bf16.mxu0 0
  %3618 = vmatpush2.bf16.msra.mxu0 0
  %3619 = vmatprep.mubr.bf16.mxu0 0
  %3620 = vmatmul.mubr.bf16.gmra.mxu0 %v3585
  %v3621 = vpop.f32.mrf.mxu0
  %v3622 = vadd.f32 0.0, %v3621
  %v3623 = vpop.f32.mrf.mxu0
  %v3624 = vpop.f32.mrf.mxu0
  %v3625 = vpop.f32.mrf.mxu0
  %3626 = vdwg.mxu0
  %s3627 = scalar_lea.vmem %s9, 8
  %v3628 = vld [vmem:[%s3627] sm:$0x1]
  %v3630 = vsel %vm3265, %v3628, 0
  %3632 = vmatprep.subr.bf16.mxu0 0
  %3633 = vmatpush1.bf16.msra.mxu0 0
  %3634 = vmatprep.subr.bf16.mxu0 0
  %3635 = vmatpush1.bf16.msra.mxu0 0
  %3636 = vmatprep.subr.bf16.mxu0 0
  %3637 = vmatpush1.bf16.msra.mxu0 0
  %3638 = vmatprep.subr.bf16.mxu0 0
  %3639 = vmatpush1.bf16.msra.mxu0 0
  %3640 = vmatprep.subr.bf16.mxu0 0
  %3641 = vmatpush1.bf16.msra.mxu0 0
  %3642 = vmatprep.subr.bf16.mxu0 0
  %3643 = vmatpush1.bf16.msra.mxu0 0
  %3644 = vmatprep.subr.bf16.mxu0 0
  %3645 = vmatpush1.bf16.msra.mxu0 %v3270
  %3646 = vmatprep.subr.bf16.mxu0 0
  %3647 = vmatpush1.bf16.msra.mxu0 %v3262
  %3648 = vmatprep.subr.bf16.mxu0 0
  %3649 = vmatpush2.bf16.msra.mxu0 0
  %3650 = vmatprep.subr.bf16.mxu0 0
  %3651 = vmatpush2.bf16.msra.mxu0 0
  %3652 = vmatprep.subr.bf16.mxu0 0
  %3653 = vmatpush2.bf16.msra.mxu0 0
  %3654 = vmatprep.subr.bf16.mxu0 0
  %3655 = vmatpush2.bf16.msra.mxu0 0
  %3656 = vmatprep.subr.bf16.mxu0 0
  %3657 = vmatpush2.bf16.msra.mxu0 0
  %3658 = vmatprep.subr.bf16.mxu0 0
  %3659 = vmatpush2.bf16.msra.mxu0 0
  %3660 = vmatprep.subr.bf16.mxu0 0
  %3661 = vmatpush2.bf16.msra.mxu0 0
  %3662 = vmatprep.subr.bf16.mxu0 0
  %3663 = vmatpush2.bf16.msra.mxu0 0
  %3664 = vmatprep.mubr.bf16.mxu0 0
  %3665 = vmatmul.mubr.bf16.gmra.mxu0 %v3630
  %v3666 = vpop.f32.mrf.mxu0
  %v3667 = vadd.f32 0.0, %v3666
  %v3668 = vpop.f32.mrf.mxu0
  %v3669 = vpop.f32.mrf.mxu0
  %v3670 = vpop.f32.mrf.mxu0
  %3671 = vdwg.mxu0
  %v3672 = vpack.c.bf16 %v3307, %v3307
  %v3673 = vpack.c.bf16 %v3352, %v3352
  %v3674 = vpack.c.bf16 %v3397, %v3397
  %v3675 = vpack.c.bf16 %v3442, %v3442
  %v3676 = vpack.c.bf16 %v3487, %v3487
  %v3677 = vpack.c.bf16 %v3532, %v3532
  %v3678 = vpack.c.bf16 %v3577, %v3577
  %v3679 = vpack.c.bf16 %v3622, %v3622
  %v3680 = vpack.c.bf16 %v3667, %v3667
  %v3681 = vld [vmem:[%s10] sm:$0xff]
  %v3682 = vld [vmem:[%s10 + $0x8] sm:$0xff]
  %v3683 = vld [vmem:[%s10 + $0x10] sm:$0xff]
  %v3684 = vld [vmem:[%s10 + $0x18] sm:$0xff]
  %v3685 = vld [vmem:[%s10 + $0x20] sm:$0xff]
  %v3686 = vld [vmem:[%s10 + $0x28] sm:$0xff]
  %v3687 = vld [vmem:[%s10 + $0x30] sm:$0xff]
  %v3688 = vld [vmem:[%s10 + $0x38] sm:$0xff]
  %v3689 = vld [vmem:[%s10 + $0x40] sm:$0xff]
  %v3690 = vld [vmem:[%s10 + $0x48] sm:$0xff]
  %v3691 = vld [vmem:[%s10 + $0x50] sm:$0xff]
  %v3692 = vld [vmem:[%s10 + $0x58] sm:$0xff]
  %v3693 = vld [vmem:[%s10 + $0x60] sm:$0xff]
  %v3694 = vld [vmem:[%s10 + $0x68] sm:$0xff]
  %v3695 = vld [vmem:[%s10 + $0x70] sm:$0xff]
  %v3696 = vld [vmem:[%s10 + $0x78] sm:$0xff]
  %v3697 = vld [vmem:[%s10 + $0x80] sm:$0xff]
  %v3698 = vld [vmem:[%s10 + $0x88] sm:$0xff]
  %v3699 = vld [vmem:[%s10 + $0x90] sm:$0xff]
  %v3700 = vld [vmem:[%s10 + $0x98] sm:$0xff]
  %v3701 = vld [vmem:[%s10 + $0xa0] sm:$0xff]
  %v3702 = vld [vmem:[%s10 + $0xa8] sm:$0xff]
  %v3703 = vld [vmem:[%s10 + $0xb0] sm:$0xff]
  %v3704 = vld [vmem:[%s10 + $0xb8] sm:$0xff]
  %v3705 = vld [vmem:[%s10 + $0xc0] sm:$0xff]
  %v3706 = vld [vmem:[%s10 + $0xc8] sm:$0xff]
  %v3707 = vld [vmem:[%s10 + $0xd0] sm:$0xff]
  %v3708 = vld [vmem:[%s10 + $0xd8] sm:$0xff]
  %v3709 = vld [vmem:[%s10 + $0xe0] sm:$0xff]
  %v3710 = vld [vmem:[%s10 + $0xe8] sm:$0xff]
  %v3711 = vld [vmem:[%s10 + $0xf0] sm:$0xff]
  %v3712 = vld [vmem:[%s10 + $0xf8] sm:$0xff]
  %v3713 = vld [vmem:[%s10 + $0x100] sm:$0xff]
  %v3714 = vld [vmem:[%s10 + $0x108] sm:$0xff]
  %v3715 = vld [vmem:[%s10 + $0x110] sm:$0xff]
  %v3716 = vld [vmem:[%s10 + $0x118] sm:$0xff]
  %v3717 = vld [vmem:[%s10 + $0x120] sm:$0xff]
  %v3718 = vld [vmem:[%s10 + $0x128] sm:$0xff]
  %v3719 = vld [vmem:[%s10 + $0x130] sm:$0xff]
  %v3720 = vld [vmem:[%s10 + $0x138] sm:$0xff]
  %v3721 = vld [vmem:[%s10 + $0x140] sm:$0xff]
  %v3722 = vld [vmem:[%s10 + $0x148] sm:$0xff]
  %v3723 = vld [vmem:[%s10 + $0x150] sm:$0xff]
  %v3724 = vld [vmem:[%s10 + $0x158] sm:$0xff]
  %v3725 = vld [vmem:[%s10 + $0x160] sm:$0xff]
  %v3726 = vld [vmem:[%s10 + $0x168] sm:$0xff]
  %v3727 = vld [vmem:[%s10 + $0x170] sm:$0xff]
  %v3728 = vld [vmem:[%s10 + $0x178] sm:$0xff]
  %v3729 = vld [vmem:[%s10 + $0x180] sm:$0xff]
  %v3730 = vld [vmem:[%s10 + $0x188] sm:$0xff]
  %v3731 = vld [vmem:[%s10 + $0x190] sm:$0xff]
  %v3732 = vld [vmem:[%s10 + $0x198] sm:$0xff]
  %v3733 = vld [vmem:[%s10 + $0x1a0] sm:$0xff]
  %v3734 = vld [vmem:[%s10 + $0x1a8] sm:$0xff]
  %v3735 = vld [vmem:[%s10 + $0x1b0] sm:$0xff]
  %v3736 = vld [vmem:[%s10 + $0x1b8] sm:$0xff]
  %v3737 = vld [vmem:[%s10 + $0x1c0] sm:$0xff]
  %v3738 = vld [vmem:[%s10 + $0x1c8] sm:$0xff]
  %v3739 = vld [vmem:[%s10 + $0x1d0] sm:$0xff]
  %v3740 = vld [vmem:[%s10 + $0x1d8] sm:$0xff]
  %v3741 = vld [vmem:[%s10 + $0x1e0] sm:$0xff]
  %v3742 = vld [vmem:[%s10 + $0x1e8] sm:$0xff]
  %v3743 = vld [vmem:[%s10 + $0x1f0] sm:$0xff]
  %v3744 = vld [vmem:[%s10 + $0x1f8] sm:$0xff]
  %v3745 = vld [vmem:[%s10 + $0x200] sm:$0xff]
  %v3746 = vld [vmem:[%s10 + $0x208] sm:$0xff]
  %v3747 = vld [vmem:[%s10 + $0x210] sm:$0xff]
  %v3748 = vld [vmem:[%s10 + $0x218] sm:$0xff]
  %v3749 = vld [vmem:[%s10 + $0x220] sm:$0xff]
  %v3750 = vld [vmem:[%s10 + $0x228] sm:$0xff]
  %v3751 = vld [vmem:[%s10 + $0x230] sm:$0xff]
  %v3752 = vld [vmem:[%s10 + $0x238] sm:$0xff]
  %v3753 = vld [vmem:[%s10 + $0x240] sm:$0xff]
  %v3754 = vld [vmem:[%s10 + $0x248] sm:$0xff]
  %v3755 = vld [vmem:[%s10 + $0x250] sm:$0xff]
  %v3756 = vld [vmem:[%s10 + $0x258] sm:$0xff]
  %v3757 = vld [vmem:[%s10 + $0x260] sm:$0xff]
  %v3758 = vld [vmem:[%s10 + $0x268] sm:$0xff]
  %v3759 = vld [vmem:[%s10 + $0x270] sm:$0xff]
  %v3760 = vld [vmem:[%s10 + $0x278] sm:$0xff]
  %v3761 = vld [vmem:[%s10 + $0x280] sm:$0xff]
  %v3762 = vld [vmem:[%s10 + $0x288] sm:$0xff]
  %v3763 = vld [vmem:[%s10 + $0x290] sm:$0xff]
  %v3764 = vld [vmem:[%s10 + $0x298] sm:$0xff]
  %v3765 = vld [vmem:[%s10 + $0x2a0] sm:$0xff]
  %v3766 = vld [vmem:[%s10 + $0x2a8] sm:$0xff]
  %v3767 = vld [vmem:[%s10 + $0x2b0] sm:$0xff]
  %v3768 = vld [vmem:[%s10 + $0x2b8] sm:$0xff]
  %v3769 = vld [vmem:[%s10 + $0x2c0] sm:$0xff]
  %v3770 = vld [vmem:[%s10 + $0x2c8] sm:$0xff]
  %v3771 = vld [vmem:[%s10 + $0x2d0] sm:$0xff]
  %v3772 = vld [vmem:[%s10 + $0x2d8] sm:$0xff]
  %v3773 = vld [vmem:[%s10 + $0x2e0] sm:$0xff]
  %v3774 = vld [vmem:[%s10 + $0x2e8] sm:$0xff]
  %v3775 = vld [vmem:[%s10 + $0x2f0] sm:$0xff]
  %v3776 = vld [vmem:[%s10 + $0x2f8] sm:$0xff]
  %v3777 = vld [vmem:[%s10 + $0x300] sm:$0xff]
  %v3778 = vld [vmem:[%s10 + $0x308] sm:$0xff]
  %v3779 = vld [vmem:[%s10 + $0x310] sm:$0xff]
  %v3780 = vld [vmem:[%s10 + $0x318] sm:$0xff]
  %v3781 = vld [vmem:[%s10 + $0x320] sm:$0xff]
  %v3782 = vld [vmem:[%s10 + $0x328] sm:$0xff]
  %v3783 = vld [vmem:[%s10 + $0x330] sm:$0xff]
  %v3784 = vld [vmem:[%s10 + $0x338] sm:$0xff]
  %v3785 = vld [vmem:[%s10 + $0x340] sm:$0xff]
  %v3786 = vld [vmem:[%s10 + $0x348] sm:$0xff]
  %v3787 = vld [vmem:[%s10 + $0x350] sm:$0xff]
  %v3788 = vld [vmem:[%s10 + $0x358] sm:$0xff]
  %v3789 = vld [vmem:[%s10 + $0x360] sm:$0xff]
  %v3790 = vld [vmem:[%s10 + $0x368] sm:$0xff]
  %v3791 = vld [vmem:[%s10 + $0x370] sm:$0xff]
  %v3792 = vld [vmem:[%s10 + $0x378] sm:$0xff]
  %v3793 = vld [vmem:[%s10 + $0x380] sm:$0xff]
  %v3794 = vld [vmem:[%s10 + $0x388] sm:$0xff]
  %v3795 = vld [vmem:[%s10 + $0x390] sm:$0xff]
  %v3796 = vld [vmem:[%s10 + $0x398] sm:$0xff]
  %v3797 = vld [vmem:[%s10 + $0x3a0] sm:$0xff]
  %v3798 = vld [vmem:[%s10 + $0x3a8] sm:$0xff]
  %v3799 = vld [vmem:[%s10 + $0x3b0] sm:$0xff]
  %v3800 = vld [vmem:[%s10 + $0x3b8] sm:$0xff]
  %v3801 = vld [vmem:[%s10 + $0x3c0] sm:$0xff]
  %v3802 = vld [vmem:[%s10 + $0x3c8] sm:$0xff]
  %v3803 = vld [vmem:[%s10 + $0x3d0] sm:$0xff]
  %v3804 = vld [vmem:[%s10 + $0x3d8] sm:$0xff]
  %v3805 = vld [vmem:[%s10 + $0x3e0] sm:$0xff]
  %v3806 = vld [vmem:[%s10 + $0x3e8] sm:$0xff]
  %v3807 = vld [vmem:[%s10 + $0x3f0] sm:$0xff]
  %v3808 = vld [vmem:[%s10 + $0x3f8] sm:$0xff]
  %v3809 = vld [vmem:[%s10 + $0x400] sm:$0xff]
  %v3810 = vld [vmem:[%s10 + $0x408] sm:$0xff]
  %v3811 = vld [vmem:[%s10 + $0x410] sm:$0xff]
  %v3812 = vld [vmem:[%s10 + $0x418] sm:$0xff]
  %v3813 = vld [vmem:[%s10 + $0x420] sm:$0xff]
  %v3814 = vld [vmem:[%s10 + $0x428] sm:$0xff]
  %v3815 = vld [vmem:[%s10 + $0x430] sm:$0xff]
  %v3816 = vld [vmem:[%s10 + $0x438] sm:$0xff]
  %v3817 = vld [vmem:[%s10 + $0x440] sm:$0xff]
  %v3818 = vld [vmem:[%s10 + $0x448] sm:$0xff]
  %v3819 = vld [vmem:[%s10 + $0x450] sm:$0xff]
  %v3820 = vld [vmem:[%s10 + $0x458] sm:$0xff]
  %v3821 = vld [vmem:[%s10 + $0x460] sm:$0xff]
  %v3822 = vld [vmem:[%s10 + $0x468] sm:$0xff]
  %v3823 = vld [vmem:[%s10 + $0x470] sm:$0xff]
  %v3824 = vld [vmem:[%s10 + $0x478] sm:$0xff]
  %v3825 = vld [vmem:[%s11] sm:$0x3]
  %v3827 = vlaneseq
  %v3828 = vshrl.u32 %v3827, 7
  %v3829 = vsub.s32 0, %v3828
  %v3830 = vrot.slane %v3825, %v3829
  %v3831 = vlaneseq
  %v3832 = vshrl.u32 %v3831, 7
  %v3833 = vsub.s32 1, %v3832
  %v3834 = vrot.slane %v3825, %v3833
  %v3981 = vunpack.c.l.b16 %v3681
  %v3982 = vunpack.c.h.b16 %v3681
  %v3983 = vunpack.c.l.b16 %v3682
  %v3984 = vunpack.c.h.b16 %v3682
  %v3985 = vunpack.c.l.b16 %v3683
  %v3986 = vunpack.c.h.b16 %v3683
  %v3987 = vunpack.c.l.b16 %v3684
  %v3988 = vunpack.c.h.b16 %v3684
  %v3989 = vunpack.c.l.b16 %v3685
  %v3990 = vunpack.c.h.b16 %v3685
  %v3991 = vunpack.c.l.b16 %v3686
  %v3992 = vunpack.c.h.b16 %v3686
  %v3993 = vunpack.c.l.b16 %v3687
  %v3994 = vunpack.c.h.b16 %v3687
  %v3995 = vunpack.c.l.b16 %v3688
  %v3996 = vunpack.c.h.b16 %v3688
  %v3997 = vunpack.c.l.b16 %v3689
  %v3998 = vunpack.c.h.b16 %v3689
  %v3999 = vunpack.c.l.b16 %v3690
  %v4000 = vunpack.c.h.b16 %v3690
  %v4001 = vunpack.c.l.b16 %v3691
  %v4002 = vunpack.c.h.b16 %v3691
  %v4003 = vunpack.c.l.b16 %v3692
  %v4004 = vunpack.c.h.b16 %v3692
  %v4005 = vunpack.c.l.b16 %v3693
  %v4006 = vunpack.c.h.b16 %v3693
  %v4007 = vunpack.c.l.b16 %v3694
  %v4008 = vunpack.c.h.b16 %v3694
  %v4009 = vunpack.c.l.b16 %v3695
  %v4010 = vunpack.c.h.b16 %v3695
  %v4011 = vunpack.c.l.b16 %v3696
  %v4012 = vunpack.c.h.b16 %v3696
  %v4013 = vunpack.c.l.b16 %v3697
  %v4014 = vunpack.c.h.b16 %v3697
  %v4015 = vunpack.c.l.b16 %v3698
  %v4016 = vunpack.c.h.b16 %v3698
  %v4017 = vunpack.c.l.b16 %v3699
  %v4018 = vunpack.c.h.b16 %v3699
  %v4019 = vunpack.c.l.b16 %v3700
  %v4020 = vunpack.c.h.b16 %v3700
  %v4021 = vunpack.c.l.b16 %v3701
  %v4022 = vunpack.c.h.b16 %v3701
  %v4023 = vunpack.c.l.b16 %v3702
  %v4024 = vunpack.c.h.b16 %v3702
  %v4025 = vunpack.c.l.b16 %v3703
  %v4026 = vunpack.c.h.b16 %v3703
  %v4027 = vunpack.c.l.b16 %v3704
  %v4028 = vunpack.c.h.b16 %v3704
  %v4029 = vunpack.c.l.b16 %v3705
  %v4030 = vunpack.c.h.b16 %v3705
  %v4031 = vunpack.c.l.b16 %v3706
  %v4032 = vunpack.c.h.b16 %v3706
  %v4033 = vunpack.c.l.b16 %v3707
  %v4034 = vunpack.c.h.b16 %v3707
  %v4035 = vunpack.c.l.b16 %v3708
  %v4036 = vunpack.c.h.b16 %v3708
  %v4037 = vunpack.c.l.b16 %v3709
  %v4038 = vunpack.c.h.b16 %v3709
  %v4039 = vunpack.c.l.b16 %v3710
  %v4040 = vunpack.c.h.b16 %v3710
  %v4041 = vunpack.c.l.b16 %v3711
  %v4042 = vunpack.c.h.b16 %v3711
  %v4043 = vunpack.c.l.b16 %v3712
  %v4044 = vunpack.c.h.b16 %v3712
  %v4045 = vunpack.c.l.b16 %v3713
  %v4046 = vunpack.c.h.b16 %v3713
  %v4047 = vunpack.c.l.b16 %v3714
  %v4048 = vunpack.c.h.b16 %v3714
  %v4049 = vunpack.c.l.b16 %v3715
  %v4050 = vunpack.c.h.b16 %v3715
  %v4051 = vunpack.c.l.b16 %v3716
  %v4052 = vunpack.c.h.b16 %v3716
  %v4053 = vunpack.c.l.b16 %v3717
  %v4054 = vunpack.c.h.b16 %v3717
  %v4055 = vunpack.c.l.b16 %v3718
  %v4056 = vunpack.c.h.b16 %v3718
  %v4057 = vunpack.c.l.b16 %v3719
  %v4058 = vunpack.c.h.b16 %v3719
  %v4059 = vunpack.c.l.b16 %v3720
  %v4060 = vunpack.c.h.b16 %v3720
  %v4061 = vunpack.c.l.b16 %v3721
  %v4062 = vunpack.c.h.b16 %v3721
  %v4063 = vunpack.c.l.b16 %v3722
  %v4064 = vunpack.c.h.b16 %v3722
  %v4065 = vunpack.c.l.b16 %v3723
  %v4066 = vunpack.c.h.b16 %v3723
  %v4067 = vunpack.c.l.b16 %v3724
  %v4068 = vunpack.c.h.b16 %v3724
  %v4069 = vunpack.c.l.b16 %v3725
  %v4070 = vunpack.c.h.b16 %v3725
  %v4071 = vunpack.c.l.b16 %v3726
  %v4072 = vunpack.c.h.b16 %v3726
  %v4073 = vunpack.c.l.b16 %v3727
  %v4074 = vunpack.c.h.b16 %v3727
  %v4075 = vunpack.c.l.b16 %v3728
  %v4076 = vunpack.c.h.b16 %v3728
  %v4077 = vunpack.c.l.b16 %v3729
  %v4078 = vunpack.c.h.b16 %v3729
  %v4079 = vunpack.c.l.b16 %v3730
  %v4080 = vunpack.c.h.b16 %v3730
  %v4081 = vunpack.c.l.b16 %v3731
  %v4082 = vunpack.c.h.b16 %v3731
  %v4083 = vunpack.c.l.b16 %v3732
  %v4084 = vunpack.c.h.b16 %v3732
  %v4085 = vunpack.c.l.b16 %v3733
  %v4086 = vunpack.c.h.b16 %v3733
  %v4087 = vunpack.c.l.b16 %v3734
  %v4088 = vunpack.c.h.b16 %v3734
  %v4089 = vunpack.c.l.b16 %v3735
  %v4090 = vunpack.c.h.b16 %v3735
  %v4091 = vunpack.c.l.b16 %v3736
  %v4092 = vunpack.c.h.b16 %v3736
  %v4093 = vunpack.c.l.b16 %v3737
  %v4094 = vunpack.c.h.b16 %v3737
  %v4095 = vunpack.c.l.b16 %v3738
  %v4096 = vunpack.c.h.b16 %v3738
  %v4097 = vunpack.c.l.b16 %v3739
  %v4098 = vunpack.c.h.b16 %v3739
  %v4099 = vunpack.c.l.b16 %v3740
  %v4100 = vunpack.c.h.b16 %v3740
  %v4101 = vunpack.c.l.b16 %v3741
  %v4102 = vunpack.c.h.b16 %v3741
  %v4103 = vunpack.c.l.b16 %v3742
  %v4104 = vunpack.c.h.b16 %v3742
  %v4105 = vunpack.c.l.b16 %v3743
  %v4106 = vunpack.c.h.b16 %v3743
  %v4107 = vunpack.c.l.b16 %v3744
  %v4108 = vunpack.c.h.b16 %v3744
  %v4109 = vunpack.c.l.b16 %v3745
  %v4110 = vunpack.c.h.b16 %v3745
  %v4111 = vunpack.c.l.b16 %v3746
  %v4112 = vunpack.c.h.b16 %v3746
  %v4113 = vunpack.c.l.b16 %v3747
  %v4114 = vunpack.c.h.b16 %v3747
  %v4115 = vunpack.c.l.b16 %v3748
  %v4116 = vunpack.c.h.b16 %v3748
  %v4117 = vunpack.c.l.b16 %v3749
  %v4118 = vunpack.c.h.b16 %v3749
  %v4119 = vunpack.c.l.b16 %v3750
  %v4120 = vunpack.c.h.b16 %v3750
  %v4121 = vunpack.c.l.b16 %v3751
  %v4122 = vunpack.c.h.b16 %v3751
  %v4123 = vunpack.c.l.b16 %v3752
  %v4124 = vunpack.c.h.b16 %v3752
  %v4125 = vunpack.c.l.b16 %v3753
  %v4126 = vunpack.c.h.b16 %v3753
  %v4127 = vunpack.c.l.b16 %v3754
  %v4128 = vunpack.c.h.b16 %v3754
  %v4129 = vunpack.c.l.b16 %v3755
  %v4130 = vunpack.c.h.b16 %v3755
  %v4131 = vunpack.c.l.b16 %v3756
  %v4132 = vunpack.c.h.b16 %v3756
  %v4133 = vunpack.c.l.b16 %v3757
  %v4134 = vunpack.c.h.b16 %v3757
  %v4135 = vunpack.c.l.b16 %v3758
  %v4136 = vunpack.c.h.b16 %v3758
  %v4137 = vunpack.c.l.b16 %v3759
  %v4138 = vunpack.c.h.b16 %v3759
  %v4139 = vunpack.c.l.b16 %v3760
  %v4140 = vunpack.c.h.b16 %v3760
  %v4141 = vunpack.c.l.b16 %v3761
  %v4142 = vunpack.c.h.b16 %v3761
  %v4143 = vunpack.c.l.b16 %v3762
  %v4144 = vunpack.c.h.b16 %v3762
  %v4145 = vunpack.c.l.b16 %v3763
  %v4146 = vunpack.c.h.b16 %v3763
  %v4147 = vunpack.c.l.b16 %v3764
  %v4148 = vunpack.c.h.b16 %v3764
  %v4149 = vunpack.c.l.b16 %v3765
  %v4150 = vunpack.c.h.b16 %v3765
  %v4151 = vunpack.c.l.b16 %v3766
  %v4152 = vunpack.c.h.b16 %v3766
  %v4153 = vunpack.c.l.b16 %v3767
  %v4154 = vunpack.c.h.b16 %v3767
  %v4155 = vunpack.c.l.b16 %v3768
  %v4156 = vunpack.c.h.b16 %v3768
  %v4157 = vunpack.c.l.b16 %v3769
  %v4158 = vunpack.c.h.b16 %v3769
  %v4159 = vunpack.c.l.b16 %v3770
  %v4160 = vunpack.c.h.b16 %v3770
  %v4161 = vunpack.c.l.b16 %v3771
  %v4162 = vunpack.c.h.b16 %v3771
  %v4163 = vunpack.c.l.b16 %v3772
  %v4164 = vunpack.c.h.b16 %v3772
  %v4165 = vunpack.c.l.b16 %v3773
  %v4166 = vunpack.c.h.b16 %v3773
  %v4167 = vunpack.c.l.b16 %v3774
  %v4168 = vunpack.c.h.b16 %v3774
  %v4169 = vunpack.c.l.b16 %v3775
  %v4170 = vunpack.c.h.b16 %v3775
  %v4171 = vunpack.c.l.b16 %v3776
  %v4172 = vunpack.c.h.b16 %v3776
  %v4173 = vunpack.c.l.b16 %v3777
  %v4174 = vunpack.c.h.b16 %v3777
  %v4175 = vunpack.c.l.b16 %v3778
  %v4176 = vunpack.c.h.b16 %v3778
  %v4177 = vunpack.c.l.b16 %v3779
  %v4178 = vunpack.c.h.b16 %v3779
  %v4179 = vunpack.c.l.b16 %v3780
  %v4180 = vunpack.c.h.b16 %v3780
  %v4181 = vunpack.c.l.b16 %v3781
  %v4182 = vunpack.c.h.b16 %v3781
  %v4183 = vunpack.c.l.b16 %v3782
  %v4184 = vunpack.c.h.b16 %v3782
  %v4185 = vunpack.c.l.b16 %v3783
  %v4186 = vunpack.c.h.b16 %v3783
  %v4187 = vunpack.c.l.b16 %v3784
  %v4188 = vunpack.c.h.b16 %v3784
  %v4189 = vunpack.c.l.b16 %v3785
  %v4190 = vunpack.c.h.b16 %v3785
  %v4191 = vunpack.c.l.b16 %v3786
  %v4192 = vunpack.c.h.b16 %v3786
  %v4193 = vunpack.c.l.b16 %v3787
  %v4194 = vunpack.c.h.b16 %v3787
  %v4195 = vunpack.c.l.b16 %v3788
  %v4196 = vunpack.c.h.b16 %v3788
  %v4197 = vunpack.c.l.b16 %v3789
  %v4198 = vunpack.c.h.b16 %v3789
  %v4199 = vunpack.c.l.b16 %v3790
  %v4200 = vunpack.c.h.b16 %v3790
  %v4201 = vunpack.c.l.b16 %v3791
  %v4202 = vunpack.c.h.b16 %v3791
  %v4203 = vunpack.c.l.b16 %v3792
  %v4204 = vunpack.c.h.b16 %v3792
  %v4205 = vunpack.c.l.b16 %v3793
  %v4206 = vunpack.c.h.b16 %v3793
  %v4207 = vunpack.c.l.b16 %v3794
  %v4208 = vunpack.c.h.b16 %v3794
  %v4209 = vunpack.c.l.b16 %v3795
  %v4210 = vunpack.c.h.b16 %v3795
  %v4211 = vunpack.c.l.b16 %v3796
  %v4212 = vunpack.c.h.b16 %v3796
  %v4213 = vunpack.c.l.b16 %v3797
  %v4214 = vunpack.c.h.b16 %v3797
  %v4215 = vunpack.c.l.b16 %v3798
  %v4216 = vunpack.c.h.b16 %v3798
  %v4217 = vunpack.c.l.b16 %v3799
  %v4218 = vunpack.c.h.b16 %v3799
  %v4219 = vunpack.c.l.b16 %v3800
  %v4220 = vunpack.c.h.b16 %v3800
  %v4221 = vunpack.c.l.b16 %v3801
  %v4222 = vunpack.c.h.b16 %v3801
  %v4223 = vunpack.c.l.b16 %v3802
  %v4224 = vunpack.c.h.b16 %v3802
  %v4225 = vunpack.c.l.b16 %v3803
  %v4226 = vunpack.c.h.b16 %v3803
  %v4227 = vunpack.c.l.b16 %v3804
  %v4228 = vunpack.c.h.b16 %v3804
  %v4229 = vunpack.c.l.b16 %v3805
  %v4230 = vunpack.c.h.b16 %v3805
  %v4231 = vunpack.c.l.b16 %v3806
  %v4232 = vunpack.c.h.b16 %v3806
  %v4233 = vunpack.c.l.b16 %v3807
  %v4234 = vunpack.c.h.b16 %v3807
  %v4235 = vunpack.c.l.b16 %v3808
  %v4236 = vunpack.c.h.b16 %v3808
  %v4237 = vunpack.c.l.b16 %v3809
  %v4238 = vunpack.c.h.b16 %v3809
  %v4239 = vunpack.c.l.b16 %v3810
  %v4240 = vunpack.c.h.b16 %v3810
  %v4241 = vunpack.c.l.b16 %v3811
  %v4242 = vunpack.c.h.b16 %v3811
  %v4243 = vunpack.c.l.b16 %v3812
  %v4244 = vunpack.c.h.b16 %v3812
  %v4245 = vunpack.c.l.b16 %v3813
  %v4246 = vunpack.c.h.b16 %v3813
  %v4247 = vunpack.c.l.b16 %v3814
  %v4248 = vunpack.c.h.b16 %v3814
  %v4249 = vunpack.c.l.b16 %v3815
  %v4250 = vunpack.c.h.b16 %v3815
  %v4251 = vunpack.c.l.b16 %v3816
  %v4252 = vunpack.c.h.b16 %v3816
  %v4253 = vunpack.c.l.b16 %v3817
  %v4254 = vunpack.c.h.b16 %v3817
  %v4255 = vunpack.c.l.b16 %v3818
  %v4256 = vunpack.c.h.b16 %v3818
  %v4257 = vunpack.c.l.b16 %v3819
  %v4258 = vunpack.c.h.b16 %v3819
  %v4259 = vunpack.c.l.b16 %v3820
  %v4260 = vunpack.c.h.b16 %v3820
  %v4261 = vunpack.c.l.b16 %v3821
  %v4262 = vunpack.c.h.b16 %v3821
  %v4263 = vunpack.c.l.b16 %v3822
  %v4264 = vunpack.c.h.b16 %v3822
  %v4265 = vunpack.c.l.b16 %v3823
  %v4266 = vunpack.c.h.b16 %v3823
  %v4267 = vunpack.c.l.b16 %v3824
  %v4268 = vunpack.c.h.b16 %v3824
  %v4269 = vpack.c.b16 %v3983, %v3981
  %v4270 = vpack.c.b16 %v3984, %v3982
  %v4271 = vpack.c.b16 %v3987, %v3985
  %v4272 = vpack.c.b16 %v3988, %v3986
  %v4273 = vpack.c.b16 %v3991, %v3989
  %v4274 = vpack.c.b16 %v3992, %v3990
  %v4275 = vpack.c.b16 %v3995, %v3993
  %v4276 = vpack.c.b16 %v3996, %v3994
  %v4277 = vpack.c.b16 %v3999, %v3997
  %v4278 = vpack.c.b16 %v4000, %v3998
  %v4279 = vpack.c.b16 %v4003, %v4001
  %v4280 = vpack.c.b16 %v4004, %v4002
  %v4281 = vpack.c.b16 %v4007, %v4005
  %v4282 = vpack.c.b16 %v4008, %v4006
  %v4283 = vpack.c.b16 %v4011, %v4009
  %v4284 = vpack.c.b16 %v4012, %v4010
  %v4285 = vpack.c.b16 %v4015, %v4013
  %v4286 = vpack.c.b16 %v4016, %v4014
  %v4287 = vpack.c.b16 %v4019, %v4017
  %v4288 = vpack.c.b16 %v4020, %v4018
  %v4289 = vpack.c.b16 %v4023, %v4021
  %v4290 = vpack.c.b16 %v4024, %v4022
  %v4291 = vpack.c.b16 %v4027, %v4025
  %v4292 = vpack.c.b16 %v4028, %v4026
  %v4293 = vpack.c.b16 %v4031, %v4029
  %v4294 = vpack.c.b16 %v4032, %v4030
  %v4295 = vpack.c.b16 %v4035, %v4033
  %v4296 = vpack.c.b16 %v4036, %v4034
  %v4297 = vpack.c.b16 %v4039, %v4037
  %v4298 = vpack.c.b16 %v4040, %v4038
  %v4299 = vpack.c.b16 %v4043, %v4041
  %v4300 = vpack.c.b16 %v4044, %v4042
  %v4301 = vpack.c.b16 %v4047, %v4045
  %v4302 = vpack.c.b16 %v4048, %v4046
  %v4303 = vpack.c.b16 %v4051, %v4049
  %v4304 = vpack.c.b16 %v4052, %v4050
  %v4305 = vpack.c.b16 %v4055, %v4053
  %v4306 = vpack.c.b16 %v4056, %v4054
  %v4307 = vpack.c.b16 %v4059, %v4057
  %v4308 = vpack.c.b16 %v4060, %v4058
  %v4309 = vpack.c.b16 %v4063, %v4061
  %v4310 = vpack.c.b16 %v4064, %v4062
  %v4311 = vpack.c.b16 %v4067, %v4065
  %v4312 = vpack.c.b16 %v4068, %v4066
  %v4313 = vpack.c.b16 %v4071, %v4069
  %v4314 = vpack.c.b16 %v4072, %v4070
  %v4315 = vpack.c.b16 %v4075, %v4073
  %v4316 = vpack.c.b16 %v4076, %v4074
  %v4317 = vpack.c.b16 %v4079, %v4077
  %v4318 = vpack.c.b16 %v4080, %v4078
  %v4319 = vpack.c.b16 %v4083, %v4081
  %v4320 = vpack.c.b16 %v4084, %v4082
  %v4321 = vpack.c.b16 %v4087, %v4085
  %v4322 = vpack.c.b16 %v4088, %v4086
  %v4323 = vpack.c.b16 %v4091, %v4089
  %v4324 = vpack.c.b16 %v4092, %v4090
  %v4325 = vpack.c.b16 %v4095, %v4093
  %v4326 = vpack.c.b16 %v4096, %v4094
  %v4327 = vpack.c.b16 %v4099, %v4097
  %v4328 = vpack.c.b16 %v4100, %v4098
  %v4329 = vpack.c.b16 %v4103, %v4101
  %v4330 = vpack.c.b16 %v4104, %v4102
  %v4331 = vpack.c.b16 %v4107, %v4105
  %v4332 = vpack.c.b16 %v4108, %v4106
  %v4333 = vpack.c.b16 %v4111, %v4109
  %v4334 = vpack.c.b16 %v4112, %v4110
  %v4335 = vpack.c.b16 %v4115, %v4113
  %v4336 = vpack.c.b16 %v4116, %v4114
  %v4337 = vpack.c.b16 %v4119, %v4117
  %v4338 = vpack.c.b16 %v4120, %v4118
  %v4339 = vpack.c.b16 %v4123, %v4121
  %v4340 = vpack.c.b16 %v4124, %v4122
  %v4341 = vpack.c.b16 %v4127, %v4125
  %v4342 = vpack.c.b16 %v4128, %v4126
  %v4343 = vpack.c.b16 %v4131, %v4129
  %v4344 = vpack.c.b16 %v4132, %v4130
  %v4345 = vpack.c.b16 %v4135, %v4133
  %v4346 = vpack.c.b16 %v4136, %v4134
  %v4347 = vpack.c.b16 %v4139, %v4137
  %v4348 = vpack.c.b16 %v4140, %v4138
  %v4349 = vpack.c.b16 %v4143, %v4141
  %v4350 = vpack.c.b16 %v4144, %v4142
  %v4351 = vpack.c.b16 %v4147, %v4145
  %v4352 = vpack.c.b16 %v4148, %v4146
  %v4353 = vpack.c.b16 %v4151, %v4149
  %v4354 = vpack.c.b16 %v4152, %v4150
  %v4355 = vpack.c.b16 %v4155, %v4153
  %v4356 = vpack.c.b16 %v4156, %v4154
  %v4357 = vpack.c.b16 %v4159, %v4157
  %v4358 = vpack.c.b16 %v4160, %v4158
  %v4359 = vpack.c.b16 %v4163, %v4161
  %v4360 = vpack.c.b16 %v4164, %v4162
  %v4361 = vpack.c.b16 %v4167, %v4165
  %v4362 = vpack.c.b16 %v4168, %v4166
  %v4363 = vpack.c.b16 %v4171, %v4169
  %v4364 = vpack.c.b16 %v4172, %v4170
  %v4365 = vpack.c.b16 %v4175, %v4173
  %v4366 = vpack.c.b16 %v4176, %v4174
  %v4367 = vpack.c.b16 %v4179, %v4177
  %v4368 = vpack.c.b16 %v4180, %v4178
  %v4369 = vpack.c.b16 %v4183, %v4181
  %v4370 = vpack.c.b16 %v4184, %v4182
  %v4371 = vpack.c.b16 %v4187, %v4185
  %v4372 = vpack.c.b16 %v4188, %v4186
  %v4373 = vpack.c.b16 %v4191, %v4189
  %v4374 = vpack.c.b16 %v4192, %v4190
  %v4375 = vpack.c.b16 %v4195, %v4193
  %v4376 = vpack.c.b16 %v4196, %v4194
  %v4377 = vpack.c.b16 %v4199, %v4197
  %v4378 = vpack.c.b16 %v4200, %v4198
  %v4379 = vpack.c.b16 %v4203, %v4201
  %v4380 = vpack.c.b16 %v4204, %v4202
  %v4381 = vpack.c.b16 %v4207, %v4205
  %v4382 = vpack.c.b16 %v4208, %v4206
  %v4383 = vpack.c.b16 %v4211, %v4209
  %v4384 = vpack.c.b16 %v4212, %v4210
  %v4385 = vpack.c.b16 %v4215, %v4213
  %v4386 = vpack.c.b16 %v4216, %v4214
  %v4387 = vpack.c.b16 %v4219, %v4217
  %v4388 = vpack.c.b16 %v4220, %v4218
  %v4389 = vpack.c.b16 %v4223, %v4221
  %v4390 = vpack.c.b16 %v4224, %v4222
  %v4391 = vpack.c.b16 %v4227, %v4225
  %v4392 = vpack.c.b16 %v4228, %v4226
  %v4393 = vpack.c.b16 %v4231, %v4229
  %v4394 = vpack.c.b16 %v4232, %v4230
  %v4395 = vpack.c.b16 %v4235, %v4233
  %v4396 = vpack.c.b16 %v4236, %v4234
  %v4397 = vpack.c.b16 %v4239, %v4237
  %v4398 = vpack.c.b16 %v4240, %v4238
  %v4399 = vpack.c.b16 %v4243, %v4241
  %v4400 = vpack.c.b16 %v4244, %v4242
  %v4401 = vpack.c.b16 %v4247, %v4245
  %v4402 = vpack.c.b16 %v4248, %v4246
  %v4403 = vpack.c.b16 %v4251, %v4249
  %v4404 = vpack.c.b16 %v4252, %v4250
  %v4405 = vpack.c.b16 %v4255, %v4253
  %v4406 = vpack.c.b16 %v4256, %v4254
  %v4407 = vpack.c.b16 %v4259, %v4257
  %v4408 = vpack.c.b16 %v4260, %v4258
  %v4409 = vpack.c.b16 %v4263, %v4261
  %v4410 = vpack.c.b16 %v4264, %v4262
  %v4411 = vpack.c.b16 %v4267, %v4265
  %v4412 = vpack.c.b16 %v4268, %v4266
  %4557 = vmatprep.subr.bf16.mxu0 %v4284
  %4558 = vmatpush1.bf16.msra.mxu0 %v4283
  %4559 = vmatprep.subr.bf16.mxu0 %v4282
  %4560 = vmatpush1.bf16.msra.mxu0 %v4281
  %4561 = vmatprep.subr.bf16.mxu0 %v4280
  %4562 = vmatpush1.bf16.msra.mxu0 %v4279
  %4563 = vmatprep.subr.bf16.mxu0 %v4278
  %4564 = vmatpush1.bf16.msra.mxu0 %v4277
  %4565 = vmatprep.subr.bf16.mxu0 %v4276
  %4566 = vmatpush1.bf16.msra.mxu0 %v4275
  %4567 = vmatprep.subr.bf16.mxu0 %v4274
  %4568 = vmatpush1.bf16.msra.mxu0 %v4273
  %4569 = vmatprep.subr.bf16.mxu0 %v4272
  %4570 = vmatpush1.bf16.msra.mxu0 %v4271
  %4571 = vmatprep.subr.bf16.mxu0 %v4270
  %4572 = vmatpush1.bf16.msra.mxu0 %v4269
  %4573 = vmatprep.subr.bf16.mxu0 %v4300
  %4574 = vmatpush2.bf16.msra.mxu0 %v4299
  %4575 = vmatprep.subr.bf16.mxu0 %v4298
  %4576 = vmatpush2.bf16.msra.mxu0 %v4297
  %4577 = vmatprep.subr.bf16.mxu0 %v4296
  %4578 = vmatpush2.bf16.msra.mxu0 %v4295
  %4579 = vmatprep.subr.bf16.mxu0 %v4294
  %4580 = vmatpush2.bf16.msra.mxu0 %v4293
  %4581 = vmatprep.subr.bf16.mxu0 %v4292
  %4582 = vmatpush2.bf16.msra.mxu0 %v4291
  %4583 = vmatprep.subr.bf16.mxu0 %v4290
  %4584 = vmatpush2.bf16.msra.mxu0 %v4289
  %4585 = vmatprep.subr.bf16.mxu0 %v4288
  %4586 = vmatpush2.bf16.msra.mxu0 %v4287
  %4587 = vmatprep.subr.bf16.mxu0 %v4286
  %4588 = vmatpush2.bf16.msra.mxu0 %v4285
  %4589 = vmatprep.mubr.bf16.mxu0 %v3673
  %4590 = vmatmul.mubr.bf16.gmra.mxu0 %v3672
  %v4591 = vpop.f32.mrf.mxu0
  %v4592 = vadd.f32 %v3830, %v4591
  %v4593 = vpop.f32.mrf.mxu0
  %v4594 = vadd.f32 %v3834, %v4593
  %v4595 = vpop.f32.mrf.mxu0
  %v4596 = vpop.f32.mrf.mxu0
  %4597 = vdwg.mxu0
  %4598 = vmatprep.subr.bf16.mxu0 %v4316
  %4599 = vmatpush1.bf16.msra.mxu0 %v4315
  %4600 = vmatprep.subr.bf16.mxu0 %v4314
  %4601 = vmatpush1.bf16.msra.mxu0 %v4313
  %4602 = vmatprep.subr.bf16.mxu0 %v4312
  %4603 = vmatpush1.bf16.msra.mxu0 %v4311
  %4604 = vmatprep.subr.bf16.mxu0 %v4310
  %4605 = vmatpush1.bf16.msra.mxu0 %v4309
  %4606 = vmatprep.subr.bf16.mxu0 %v4308
  %4607 = vmatpush1.bf16.msra.mxu0 %v4307
  %4608 = vmatprep.subr.bf16.mxu0 %v4306
  %4609 = vmatpush1.bf16.msra.mxu0 %v4305
  %4610 = vmatprep.subr.bf16.mxu0 %v4304
  %4611 = vmatpush1.bf16.msra.mxu0 %v4303
  %4612 = vmatprep.subr.bf16.mxu0 %v4302
  %4613 = vmatpush1.bf16.msra.mxu0 %v4301
  %4614 = vmatprep.subr.bf16.mxu0 %v4332
  %4615 = vmatpush2.bf16.msra.mxu0 %v4331
  %4616 = vmatprep.subr.bf16.mxu0 %v4330
  %4617 = vmatpush2.bf16.msra.mxu0 %v4329
  %4618 = vmatprep.subr.bf16.mxu0 %v4328
  %4619 = vmatpush2.bf16.msra.mxu0 %v4327
  %4620 = vmatprep.subr.bf16.mxu0 %v4326
  %4621 = vmatpush2.bf16.msra.mxu0 %v4325
  %4622 = vmatprep.subr.bf16.mxu0 %v4324
  %4623 = vmatpush2.bf16.msra.mxu0 %v4323
  %4624 = vmatprep.subr.bf16.mxu0 %v4322
  %4625 = vmatpush2.bf16.msra.mxu0 %v4321
  %4626 = vmatprep.subr.bf16.mxu0 %v4320
  %4627 = vmatpush2.bf16.msra.mxu0 %v4319
  %4628 = vmatprep.subr.bf16.mxu0 %v4318
  %4629 = vmatpush2.bf16.msra.mxu0 %v4317
  %4630 = vmatprep.mubr.bf16.mxu0 %v3675
  %4631 = vmatmul.mubr.bf16.gmra.mxu0 %v3674
  %v4632 = vpop.f32.mrf.mxu0
  %v4633 = vadd.f32 %v4592, %v4632
  %v4634 = vpop.f32.mrf.mxu0
  %v4635 = vadd.f32 %v4594, %v4634
  %v4636 = vpop.f32.mrf.mxu0
  %v4637 = vpop.f32.mrf.mxu0
  %4638 = vdwg.mxu0
  %4639 = vmatprep.subr.bf16.mxu0 %v4348
  %4640 = vmatpush1.bf16.msra.mxu0 %v4347
  %4641 = vmatprep.subr.bf16.mxu0 %v4346
  %4642 = vmatpush1.bf16.msra.mxu0 %v4345
  %4643 = vmatprep.subr.bf16.mxu0 %v4344
  %4644 = vmatpush1.bf16.msra.mxu0 %v4343
  %4645 = vmatprep.subr.bf16.mxu0 %v4342
  %4646 = vmatpush1.bf16.msra.mxu0 %v4341
  %4647 = vmatprep.subr.bf16.mxu0 %v4340
  %4648 = vmatpush1.bf16.msra.mxu0 %v4339
  %4649 = vmatprep.subr.bf16.mxu0 %v4338
  %4650 = vmatpush1.bf16.msra.mxu0 %v4337
  %4651 = vmatprep.subr.bf16.mxu0 %v4336
  %4652 = vmatpush1.bf16.msra.mxu0 %v4335
  %4653 = vmatprep.subr.bf16.mxu0 %v4334
  %4654 = vmatpush1.bf16.msra.mxu0 %v4333
  %4655 = vmatprep.subr.bf16.mxu0 %v4364
  %4656 = vmatpush2.bf16.msra.mxu0 %v4363
  %4657 = vmatprep.subr.bf16.mxu0 %v4362
  %4658 = vmatpush2.bf16.msra.mxu0 %v4361
  %4659 = vmatprep.subr.bf16.mxu0 %v4360
  %4660 = vmatpush2.bf16.msra.mxu0 %v4359
  %4661 = vmatprep.subr.bf16.mxu0 %v4358
  %4662 = vmatpush2.bf16.msra.mxu0 %v4357
  %4663 = vmatprep.subr.bf16.mxu0 %v4356
  %4664 = vmatpush2.bf16.msra.mxu0 %v4355
  %4665 = vmatprep.subr.bf16.mxu0 %v4354
  %4666 = vmatpush2.bf16.msra.mxu0 %v4353
  %4667 = vmatprep.subr.bf16.mxu0 %v4352
  %4668 = vmatpush2.bf16.msra.mxu0 %v4351
  %4669 = vmatprep.subr.bf16.mxu0 %v4350
  %4670 = vmatpush2.bf16.msra.mxu0 %v4349
  %4671 = vmatprep.mubr.bf16.mxu0 %v3677
  %4672 = vmatmul.mubr.bf16.gmra.mxu0 %v3676
  %v4673 = vpop.f32.mrf.mxu0
  %v4674 = vadd.f32 %v4633, %v4673
  %v4675 = vpop.f32.mrf.mxu0
  %v4676 = vadd.f32 %v4635, %v4675
  %v4677 = vpop.f32.mrf.mxu0
  %v4678 = vpop.f32.mrf.mxu0
  %4679 = vdwg.mxu0
  %4680 = vmatprep.subr.bf16.mxu0 %v4380
  %4681 = vmatpush1.bf16.msra.mxu0 %v4379
  %4682 = vmatprep.subr.bf16.mxu0 %v4378
  %4683 = vmatpush1.bf16.msra.mxu0 %v4377
  %4684 = vmatprep.subr.bf16.mxu0 %v4376
  %4685 = vmatpush1.bf16.msra.mxu0 %v4375
  %4686 = vmatprep.subr.bf16.mxu0 %v4374
  %4687 = vmatpush1.bf16.msra.mxu0 %v4373
  %4688 = vmatprep.subr.bf16.mxu0 %v4372
  %4689 = vmatpush1.bf16.msra.mxu0 %v4371
  %4690 = vmatprep.subr.bf16.mxu0 %v4370
  %4691 = vmatpush1.bf16.msra.mxu0 %v4369
  %4692 = vmatprep.subr.bf16.mxu0 %v4368
  %4693 = vmatpush1.bf16.msra.mxu0 %v4367
  %4694 = vmatprep.subr.bf16.mxu0 %v4366
  %4695 = vmatpush1.bf16.msra.mxu0 %v4365
  %4696 = vmatprep.subr.bf16.mxu0 %v4396
  %4697 = vmatpush2.bf16.msra.mxu0 %v4395
  %4698 = vmatprep.subr.bf16.mxu0 %v4394
  %4699 = vmatpush2.bf16.msra.mxu0 %v4393
  %4700 = vmatprep.subr.bf16.mxu0 %v4392
  %4701 = vmatpush2.bf16.msra.mxu0 %v4391
  %4702 = vmatprep.subr.bf16.mxu0 %v4390
  %4703 = vmatpush2.bf16.msra.mxu0 %v4389
  %4704 = vmatprep.subr.bf16.mxu0 %v4388
  %4705 = vmatpush2.bf16.msra.mxu0 %v4387
  %4706 = vmatprep.subr.bf16.mxu0 %v4386
  %4707 = vmatpush2.bf16.msra.mxu0 %v4385
  %4708 = vmatprep.subr.bf16.mxu0 %v4384
  %4709 = vmatpush2.bf16.msra.mxu0 %v4383
  %4710 = vmatprep.subr.bf16.mxu0 %v4382
  %4711 = vmatpush2.bf16.msra.mxu0 %v4381
  %4712 = vmatprep.mubr.bf16.mxu0 %v3679
  %4713 = vmatmul.mubr.bf16.gmra.mxu0 %v3678
  %v4714 = vpop.f32.mrf.mxu0
  %v4715 = vadd.f32 %v4674, %v4714
  %v4716 = vpop.f32.mrf.mxu0
  %v4717 = vadd.f32 %v4676, %v4716
  %v4718 = vpop.f32.mrf.mxu0
  %v4719 = vpop.f32.mrf.mxu0
  %4720 = vdwg.mxu0
  %4721 = vmatprep.subr.bf16.mxu0 %v4412
  %4722 = vmatpush1.bf16.msra.mxu0 %v4411
  %4723 = vmatprep.subr.bf16.mxu0 %v4410
  %4724 = vmatpush1.bf16.msra.mxu0 %v4409
  %4725 = vmatprep.subr.bf16.mxu0 %v4408
  %4726 = vmatpush1.bf16.msra.mxu0 %v4407
  %4727 = vmatprep.subr.bf16.mxu0 %v4406
  %4728 = vmatpush1.bf16.msra.mxu0 %v4405
  %4729 = vmatprep.subr.bf16.mxu0 %v4404
  %4730 = vmatpush1.bf16.msra.mxu0 %v4403
  %4731 = vmatprep.subr.bf16.mxu0 %v4402
  %4732 = vmatpush1.bf16.msra.mxu0 %v4401
  %4733 = vmatprep.subr.bf16.mxu0 %v4400
  %4734 = vmatpush1.bf16.msra.mxu0 %v4399
  %4735 = vmatprep.subr.bf16.mxu0 %v4398
  %4736 = vmatpush1.bf16.msra.mxu0 %v4397
  %4737 = vmatprep.subr.bf16.mxu0 0
  %4738 = vmatpush2.bf16.msra.mxu0 0
  %4739 = vmatprep.subr.bf16.mxu0 0
  %4740 = vmatpush2.bf16.msra.mxu0 0
  %4741 = vmatprep.subr.bf16.mxu0 0
  %4742 = vmatpush2.bf16.msra.mxu0 0
  %4743 = vmatprep.subr.bf16.mxu0 0
  %4744 = vmatpush2.bf16.msra.mxu0 0
  %4745 = vmatprep.subr.bf16.mxu0 0
  %4746 = vmatpush2.bf16.msra.mxu0 0
  %4747 = vmatprep.subr.bf16.mxu0 0
  %4748 = vmatpush2.bf16.msra.mxu0 0
  %4749 = vmatprep.subr.bf16.mxu0 0
  %4750 = vmatpush2.bf16.msra.mxu0 0
  %4751 = vmatprep.subr.bf16.mxu0 0
  %4752 = vmatpush2.bf16.msra.mxu0 0
  %4753 = vmatprep.mubr.bf16.mxu0 0
  %4754 = vmatmul.mubr.bf16.gmra.mxu0 %v3680
  %v4755 = vpop.f32.mrf.mxu0
  %v4756 = vadd.f32 %v4715, %v4755
  %v4757 = vpop.f32.mrf.mxu0
  %v4758 = vadd.f32 %v4717, %v4757
  %v4759 = vpop.f32.mrf.mxu0
  %v4760 = vpop.f32.mrf.mxu0
  %4761 = vdwg.mxu0
  %v4762 = vmax.f32 %v4756, 0.0
  %v4763 = vmax.f32 %v4758, 0.0
  %v4764 = vpack.c.bf16 %v4762, %v4762
  %v4765 = vpack.c.bf16 %v4763, %v4763
  %v4766 = vld [vmem:[%s12] sm:$0xf]
  %v4767 = vld [vmem:[%s12 + $0x4] sm:$0xf]
  %v4768 = vld [vmem:[%s12 + $0x8] sm:$0xf]
  %v4769 = vld [vmem:[%s12 + $0xc] sm:$0xf]
  %v4770 = vld [vmem:[%s12 + $0x10] sm:$0xf]
  %v4771 = vld [vmem:[%s12 + $0x14] sm:$0xf]
  %v4772 = vld [vmem:[%s12 + $0x18] sm:$0xf]
  %v4773 = vld [vmem:[%s12 + $0x1c] sm:$0xf]
  %v4774 = vld [vmem:[%s12 + $0x20] sm:$0xf]
  %v4775 = vld [vmem:[%s12 + $0x24] sm:$0xf]
  %v4776 = vld [vmem:[%s12 + $0x28] sm:$0xf]
  %v4777 = vld [vmem:[%s12 + $0x2c] sm:$0xf]
  %v4778 = vld [vmem:[%s12 + $0x30] sm:$0xf]
  %v4779 = vld [vmem:[%s12 + $0x34] sm:$0xf]
  %v4780 = vld [vmem:[%s12 + $0x38] sm:$0xf]
  %v4781 = vld [vmem:[%s12 + $0x3c] sm:$0xf]
  %v4782 = vld [vmem:[%s12 + $0x40] sm:$0xf]
  %v4783 = vld [vmem:[%s12 + $0x44] sm:$0xf]
  %v4784 = vld [vmem:[%s12 + $0x48] sm:$0xf]
  %v4785 = vld [vmem:[%s12 + $0x4c] sm:$0xf]
  %v4786 = vld [vmem:[%s12 + $0x50] sm:$0xf]
  %v4787 = vld [vmem:[%s12 + $0x54] sm:$0xf]
  %v4788 = vld [vmem:[%s12 + $0x58] sm:$0xf]
  %v4789 = vld [vmem:[%s12 + $0x5c] sm:$0xf]
  %v4790 = vld [vmem:[%s12 + $0x60] sm:$0xf]
  %v4791 = vld [vmem:[%s12 + $0x64] sm:$0xf]
  %v4792 = vld [vmem:[%s12 + $0x68] sm:$0xf]
  %v4793 = vld [vmem:[%s12 + $0x6c] sm:$0xf]
  %v4794 = vld [vmem:[%s12 + $0x70] sm:$0xf]
  %v4795 = vld [vmem:[%s12 + $0x74] sm:$0xf]
  %v4796 = vld [vmem:[%s12 + $0x78] sm:$0xf]
  %v4797 = vld [vmem:[%s12 + $0x7c] sm:$0xf]
  %v4798 = vld [vmem:[%s13] sm:$0x1]
  %v4800 = vlaneseq
  %v4801 = vshrl.u32 %v4800, 7
  %v4802 = vsub.s32 0, %v4801
  %v4803 = vrot.slane %v4798, %v4802
  %v4837 = vunpack.c.l.b16 %v4766
  %v4838 = vunpack.c.l.b16 %v4767
  %v4839 = vunpack.c.l.b16 %v4768
  %v4840 = vunpack.c.l.b16 %v4769
  %v4841 = vunpack.c.l.b16 %v4770
  %v4842 = vunpack.c.l.b16 %v4771
  %v4843 = vunpack.c.l.b16 %v4772
  %v4844 = vunpack.c.l.b16 %v4773
  %v4845 = vunpack.c.l.b16 %v4774
  %v4846 = vunpack.c.l.b16 %v4775
  %v4847 = vunpack.c.l.b16 %v4776
  %v4848 = vunpack.c.l.b16 %v4777
  %v4849 = vunpack.c.l.b16 %v4778
  %v4850 = vunpack.c.l.b16 %v4779
  %v4851 = vunpack.c.l.b16 %v4780
  %v4852 = vunpack.c.l.b16 %v4781
  %v4853 = vunpack.c.l.b16 %v4782
  %v4854 = vunpack.c.l.b16 %v4783
  %v4855 = vunpack.c.l.b16 %v4784
  %v4856 = vunpack.c.l.b16 %v4785
  %v4857 = vunpack.c.l.b16 %v4786
  %v4858 = vunpack.c.l.b16 %v4787
  %v4859 = vunpack.c.l.b16 %v4788
  %v4860 = vunpack.c.l.b16 %v4789
  %v4861 = vunpack.c.l.b16 %v4790
  %v4862 = vunpack.c.l.b16 %v4791
  %v4863 = vunpack.c.l.b16 %v4792
  %v4864 = vunpack.c.l.b16 %v4793
  %v4865 = vunpack.c.l.b16 %v4794
  %v4866 = vunpack.c.l.b16 %v4795
  %v4867 = vunpack.c.l.b16 %v4796
  %v4868 = vunpack.c.l.b16 %v4797
  %v4869 = vpack.c.b16 %v4838, %v4837
  %v4870 = vpack.c.b16 %v4840, %v4839
  %v4871 = vpack.c.b16 %v4842, %v4841
  %v4872 = vpack.c.b16 %v4844, %v4843
  %v4873 = vpack.c.b16 %v4846, %v4845
  %v4874 = vpack.c.b16 %v4848, %v4847
  %v4875 = vpack.c.b16 %v4850, %v4849
  %v4876 = vpack.c.b16 %v4852, %v4851
  %v4877 = vpack.c.b16 %v4854, %v4853
  %v4878 = vpack.c.b16 %v4856, %v4855
  %v4879 = vpack.c.b16 %v4858, %v4857
  %v4880 = vpack.c.b16 %v4860, %v4859
  %v4881 = vpack.c.b16 %v4862, %v4861
  %v4882 = vpack.c.b16 %v4864, %v4863
  %v4883 = vpack.c.b16 %v4866, %v4865
  %v4884 = vpack.c.b16 %v4868, %v4867
  %4901 = vmatprep.subr.bf16.mxu0 0
  %4902 = vmatpush1.bf16.msra.mxu0 %v4876
  %4903 = vmatprep.subr.bf16.mxu0 0
  %4904 = vmatpush1.bf16.msra.mxu0 %v4875
  %4905 = vmatprep.subr.bf16.mxu0 0
  %4906 = vmatpush1.bf16.msra.mxu0 %v4874
  %4907 = vmatprep.subr.bf16.mxu0 0
  %4908 = vmatpush1.bf16.msra.mxu0 %v4873
  %4909 = vmatprep.subr.bf16.mxu0 0
  %4910 = vmatpush1.bf16.msra.mxu0 %v4872
  %4911 = vmatprep.subr.bf16.mxu0 0
  %4912 = vmatpush1.bf16.msra.mxu0 %v4871
  %4913 = vmatprep.subr.bf16.mxu0 0
  %4914 = vmatpush1.bf16.msra.mxu0 %v4870
  %4915 = vmatprep.subr.bf16.mxu0 0
  %4916 = vmatpush1.bf16.msra.mxu0 %v4869
  %4917 = vmatprep.subr.bf16.mxu0 0
  %4918 = vmatpush2.bf16.msra.mxu0 %v4884
  %4919 = vmatprep.subr.bf16.mxu0 0
  %4920 = vmatpush2.bf16.msra.mxu0 %v4883
  %4921 = vmatprep.subr.bf16.mxu0 0
  %4922 = vmatpush2.bf16.msra.mxu0 %v4882
  %4923 = vmatprep.subr.bf16.mxu0 0
  %4924 = vmatpush2.bf16.msra.mxu0 %v4881
  %4925 = vmatprep.subr.bf16.mxu0 0
  %4926 = vmatpush2.bf16.msra.mxu0 %v4880
  %4927 = vmatprep.subr.bf16.mxu0 0
  %4928 = vmatpush2.bf16.msra.mxu0 %v4879
  %4929 = vmatprep.subr.bf16.mxu0 0
  %4930 = vmatpush2.bf16.msra.mxu0 %v4878
  %4931 = vmatprep.subr.bf16.mxu0 0
  %4932 = vmatpush2.bf16.msra.mxu0 %v4877
  %4933 = vmatprep.mubr.bf16.mxu0 %v4765
  %4934 = vmatmul.mubr.bf16.gmra.mxu0 %v4764
  %v4935 = vpop.f32.mrf.mxu0
  %v4936 = vadd.f32 %v4803, %v4935
  %v4937 = vpop.f32.mrf.mxu0
  %v4938 = vpop.f32.mrf.mxu0
  %v4939 = vpop.f32.mrf.mxu0
  %4940 = vdwg.mxu0
  %v4941 = vmax.f32 %v4936, 0.0
  %v4942 = vld [vmem:[%s14] sm:$0x1]
  %v4944 = vlaneseq
  %v4945 = vshrl.u32 %v4944, 7
  %v4946 = vsub.s32 0, %v4945
  %v4947 = vrot.slane %v4942, %v4946
  %v4949 = vmul.f32 %v4941, %v4947
  %vm4950 = vcmask 812032
  %v4951 = vsel %vm4950, %v4949, 0.0
  %4952 = vadd.xlane.f32.xlu0 %v4951
  %v4953 = vpop.xlane.xlu0 %4952
  %v4954 = vld [vmem:[#allocation2] sm:$0x1]
  %v4956 = vlaneseq
  %v4957 = vshrl.u32 %v4956, 7
  %v4958 = vsub.s32 0, %v4957
  %v4959 = vrot.slane %v4954, %v4958
  %v4961 = vadd.f32 %v4953, %v4959
  %vm4962 = vcmask 1024
  %4963 = vst.msk [vmem:[%s16] sm:$0x3] %vm4962, %v4961
  // Predicated region
  $region66: #{_lambda_.5} parent=0 // pred_check
    _
  $region67: #{_lambda_.5} parent=0 // pred_check_branch
    %4965 = sbr.rel (0) target = $region69
  $region68: #{_lambda_.5} parent=0 // pred_region
    _
  $region69: #{_lambda_.5} parent=0 // pred_fallthru
    _
  // Predicated region
  $region70: #{_lambda_.5} parent=0 // pred_check
    _
  $region71: #{_lambda_.5} parent=0 // pred_check_branch
    %4967 = sbr.rel (0) target = $region73
  $region72: #{_lambda_.5} parent=0 // pred_region
    _
  $region73: #{_lambda_.5} parent=0 // pred_fallthru
    _

</llo_original>
